<compile_context>
chip_gen: v6e
topology: v6e:2x2x1
jax: 0.10.0
libtpu: 0.0.40
codegen_flags: <defaults>
</compile_context>

<pallas_src>
import functools

import jax
import jax.numpy as jnp
from jax.experimental import pallas as pl
from jax.experimental.pallas import tpu as pltpu

EPS = 1e-5              # torch.nn.BatchNorm2d default
LANE = 128              # TPU lane width
LPAD = 16               # sublane-aligned left pad inside the W-halo staging buffers
_VMEM_BUDGET = 44 << 20  # target live VMEM per grid step (v7x: 64 MiB physical)


def _round_up(x, m):
    return (x + m - 1) // m * m


def _vmem_estimate(TH, W, K1, Cout_p, stem):
    """Conservative live-VMEM bytes for one grid step (sums all temporaries)."""
    bf2, f4 = 2, 4
    if stem:
        inbuf = (TH + 2) * W * K1 * bf2
        patch1 = 0
    else:
        inbuf = (TH + 4) * (W + LPAD + 1) * K1 * bf2
        patch1 = (TH + 2) * W * 9 * K1 * bf2
    ybuf = (TH + 2) * (W + LPAD + 1) * Cout_p * bf2
    patch2 = TH * W * 9 * Cout_p * bf2
    acc = (TH + 2) * W * Cout_p * f4 + TH * W * Cout_p * f4
    y_cast = (TH + 2) * W * Cout_p * bf2
    out_blk = 2 * TH * W * Cout_p * bf2                    # double-buffered output
    k1w = K1 if stem else 9 * K1
    weights = 2 * (k1w * Cout_p + 9 * Cout_p * Cout_p + 4 * Cout_p) * bf2
    return inbuf + patch1 + ybuf + patch2 + acc + y_cast + out_blk + weights


def _choose_tile_h(H, W, K1, Cout_p, stem):
    """Largest divisor of H whose per-step VMEM estimate fits the budget."""
    for d in sorted((d for d in range(1, H + 1) if H % d == 0), reverse=True):
        if _vmem_estimate(d, W, K1, Cout_p, stem) <= _VMEM_BUDGET:
            return d
    return 1


def _double_conv_kernel(x_any, w1_ref, s1_ref, b1_ref, w2_ref, s2_ref, b2_ref,
                        o_ref, inbuf, ybuf, sem, *, stem):
    """Computes TH output rows of one image per grid step (grid = (N, H//TH)).

    x_any : full input, left in HBM (pl.ANY), DMA'd manually.
            stem mode   : (N, H, W, 128) bf16 - 128 lanes hold the 9*Cin im2col
                          taps (conv1's SAME padding is already encoded).
            general mode: (N, H, W, Cin_p) bf16 lane-padded raw input.
    w1_ref: (128, Cout_p) or (9*Cin_p, Cout_p) bf16 conv1 weights.
    s*/b* : (1, Cout_p) f32 folded BN scale / bias (conv bias folded in).
    w2_ref: (9*Cout_p, Cout_p) bf16 conv2 weights.
    o_ref : (1, TH, W, Cout_p) bf16 output block.
    inbuf : VMEM staging buffer for the (TH + 2*halo)-row input window.
    ybuf  : VMEM (TH+2, W+LPAD+1, Cout_p) conv2-input staging buffer (W halo).
    sem   : (5,) DMA semaphores.
    """
    n, h = pl.program_id(0), pl.program_id(1)
    n_h = pl.num_programs(1)
    TH, W, Cout_p = o_ref.shape[1], o_ref.shape[2], o_ref.shape[3]
    H = x_any.shape[1]
    halo = 1 if stem else 2          # extra input rows needed above/below the tile
    Cin = inbuf.shape[-1]
    dt = inbuf.dtype
    row0 = h * TH                    # first output row of this tile

    # ------------------------------------------------------------------
    # Stage the (TH + 2*halo)-row input window into `inbuf`.
    #   inbuf row r  <->  input row (row0 - halo + r); out-of-image rows = 0.
    # ------------------------------------------------------------------
    if stem:
        def dst(r, nrows):
            return inbuf.at[pl.ds(r, nrows), :, :]

        def zero_rows(r, nrows):
            inbuf[r:r + nrows, :, :] = jnp.zeros((nrows, W, Cin), dt)
    else:
        # conv1's SAME padding along W: zero the halo columns for all rows.
        rows_in = TH + 2 * halo
        inbuf[:, LPAD - 1:LPAD, :] = jnp.zeros((rows_in, 1, Cin), dt)
        inbuf[:, LPAD + W:LPAD + W + 1, :] = jnp.zeros((rows_in, 1, Cin), dt)

        def dst(r, nrows):
            return inbuf.at[pl.ds(r, nrows), pl.ds(LPAD, W), :]

        def zero_rows(r, nrows):
            inbuf[r:r + nrows, LPAD:LPAD + W, :] = jnp.zeros((nrows, W, Cin), dt)

    # Bulk rows [row0, row0 + TH) are always inside the image.
    cp_main = pltpu.make_async_copy(x_any.at[n, pl.ds(row0, TH), :, :],
                                    dst(halo, TH), sem.at[0])
    cp_main.start()

    def stage_halo_row(dst_r, src_row, in_bounds, sem_idx):
        @pl.when(in_bounds)
        def _():
            cp = pltpu.make_async_copy(x_any.at[n, pl.ds(src_row, 1), :, :],
                                       dst(dst_r, 1), sem.at[sem_idx])
            cp.start()
            cp.wait()

        @pl.when(jnp.logical_not(in_bounds))
        def _():
            zero_rows(dst_r, 1)      # SAME zero padding outside the image

    for k in range(halo):
        stage_halo_row(k, row0 - halo + k, row0 - halo + k >= 0, 1 + 2 * k)
        stage_halo_row(TH + halo + k, row0 + TH + k, row0 + TH + k < H, 2 + 2 * k)
    cp_main.wait()

    # ------------------------------------------------------------------
    # conv1 (3x3 SAME) + BN1 + ReLU over TH+2 rows (conv2's input window).
    # ------------------------------------------------------------------
    if stem:
        # Taps already packed along the lane axis by the wrapper im2col:
        # a single K=128 matmul (vs K=9*128 with ~99% zero lanes).
        acc1 = jnp.einsum('hwk,ko->hwo', inbuf[...], w1_ref[...],
                          preferred_element_type=jnp.float32)
    else:
        taps = [inbuf[ky:ky + TH + 2, LPAD - 1 + kx:LPAD - 1 + kx + W, :]
                for ky in range(3) for kx in range(3)]
        patch = jnp.concatenate(taps, axis=-1)              # (TH+2, W, 9*Cin_p)
        acc1 = jnp.einsum('hwk,ko->hwo', patch, w1_ref[...],
                          preferred_element_type=jnp.float32)
    y = jnp.maximum(acc1 * s1_ref[0] + b1_ref[0], 0.0)      # (TH+2, W, Cout_p) f32

    # ------------------------------------------------------------------
    # Stage y (+ its SAME padding) for conv2.
    # ------------------------------------------------------------------
    ybuf[:, LPAD - 1:LPAD, :] = jnp.zeros((TH + 2, 1, Cout_p), ybuf.dtype)
    ybuf[:, LPAD + W:LPAD + W + 1, :] = jnp.zeros((TH + 2, 1, Cout_p), ybuf.dtype)
    ybuf[:, LPAD:LPAD + W, :] = y.astype(ybuf.dtype)

    # conv2's zero padding: y rows outside the image must be exactly zero
    # (conv1-of-zero-input is relu(bn_bias) != 0, so overwrite explicitly).
    @pl.when(h == 0)
    def _():
        ybuf[0:1, LPAD:LPAD + W, :] = jnp.zeros((1, W, Cout_p), ybuf.dtype)

    @pl.when(h == n_h - 1)
    def _():
        ybuf[TH + 1:TH + 2, LPAD:LPAD + W, :] = jnp.zeros((1, W, Cout_p), ybuf.dtype)

    # ------------------------------------------------------------------
    # conv2 (3x3 SAME) + BN2 + ReLU -> TH output rows.  Single K=9*Cout_p
    # im2col matmul: the MXU accumulates over K, no per-tap VPU adds.
    # ------------------------------------------------------------------
    taps2 = [ybuf[ky:ky + TH, LPAD - 1 + kx:LPAD - 1 + kx + W, :]
             for ky in range(3) for kx in range(3)]
    patch2 = jnp.concatenate(taps2, axis=-1)                # (TH, W, 9*Cout_p)
    acc2 = jnp.einsum('hwk,ko->hwo', patch2, w2_ref[...],
                      preferred_element_type=jnp.float32)
    o_ref[0] = jnp.maximum(acc2 * s2_ref[0] + b2_ref[0], 0.0).astype(o_ref.dtype)


def _fold_bn(conv_bias, gamma, beta, mean, var):
    scale = gamma / jnp.sqrt(var + EPS)
    bias = (conv_bias - mean) * scale + beta
    return scale.astype(jnp.float32), bias.astype(jnp.float32)


def double_conv_pallas(x_nchw, params, *, tile_h=None):
    """Forward pass of DoubleConv (eval-mode BatchNorm) as a Pallas TPU kernel.

    params: w1 (3,3,Cin,Cout) HWIO, b1, g1, be1, m1, v1 and the matching '2' set.
    """
    N, Cin, H, W = x_nchw.shape
    Cout = params['w1'].shape[-1]
    Cout_p = _round_up(Cout, LANE)
    stem = 9 * Cin <= LANE          # tiny-Cin stem layer: pack taps, not channels

    # NCHW -> NHWC (boundary plumbing that disappears in an end-to-end NHWC model)
    x = jnp.transpose(x_nchw, (0, 2, 3, 1))                  # f32 NHWC

    if stem:
        # Wrapper-side im2col: all 9*Cin taps live in one 128-lane group, so
        # conv1 is a single K=128 matmul.  Same HBM bytes as lane-padding Cin.
        K1 = LANE
        xp = jnp.pad(x, ((0, 0), (1, 1), (1, 1), (0, 0)))
        taps = [xp[:, ky:ky + H, kx:kx + W, :]
                for ky in range(3) for kx in range(3)]
        x_in = jnp.concatenate(taps, axis=-1)                # (N, H, W, 9*Cin)
        x_in = jnp.pad(x_in, ((0, 0), (0, 0), (0, 0), (0, K1 - 9 * Cin)))
        x_in = x_in.astype(jnp.bfloat16)
        w1 = params['w1'].reshape(9 * Cin, Cout)
        w1 = jnp.pad(w1, ((0, K1 - 9 * Cin), (0, Cout_p - Cout))).astype(jnp.bfloat16)
        K1w = K1
    else:
        K1 = _round_up(Cin, LANE)
        x_in = jnp.pad(x, ((0, 0), (0, 0), (0, 0), (0, K1 - Cin))).astype(jnp.bfloat16)
        w1 = jnp.pad(params['w1'],
                     ((0, 0), (0, 0), (0, K1 - Cin), (0, Cout_p - Cout)))
        w1 = w1.astype(jnp.bfloat16).reshape(9 * K1, Cout_p)
        K1w = 9 * K1

    w2 = jnp.pad(params['w2'],
                 ((0, 0), (0, 0), (0, Cout_p - Cout), (0, Cout_p - Cout)))
    w2 = w2.astype(jnp.bfloat16).reshape(9 * Cout_p, Cout_p)

    s1, b1 = _fold_bn(params['b1'], params['g1'], params['be1'],
                      params['m1'], params['v1'])
    s2, b2 = _fold_bn(params['b2'], params['g2'], params['be2'],
                      params['m2'], params['v2'])
    pad_c = (0, Cout_p - Cout)
    s1 = jnp.pad(s1, pad_c).reshape(1, Cout_p)
    b1 = jnp.pad(b1, pad_c).reshape(1, Cout_p)
    s2 = jnp.pad(s2, pad_c).reshape(1, Cout_p)
    b2 = jnp.pad(b2, pad_c).reshape(1, Cout_p)

    TH = tile_h if tile_h is not None else _choose_tile_h(H, W, K1, Cout_p, stem)
    assert H % TH == 0, (H, TH)
    inbuf_shape = (TH + 2, W, K1) if stem else (TH + 4, W + LPAD + 1, K1)

    est = _vmem_estimate(TH, W, K1, Cout_p, stem)
    vmem_limit = int(min(max(1.3 * est + (8 << 20), 32 << 20), 96 << 20))

    def build(single_buffer):
        # Grid-invariant operands: single-buffer them (identical block every
        # step -> double-buffering would only waste VMEM).
        inv = dict(pipeline_mode=pl.Buffered(1)) if single_buffer else {}
        inv_map = lambda n, h: (0, 0)
        return pl.pallas_call(
            functools.partial(_double_conv_kernel, stem=stem),
            out_shape=jax.ShapeDtypeStruct((N, H, W, Cout_p), jnp.bfloat16),
            grid=(N, H // TH),
            in_specs=[
                pl.BlockSpec(memory_space=pl.ANY),           # x: manual DMA w/ halo
                pl.BlockSpec((K1w, Cout_p), inv_map, **inv),
                pl.BlockSpec((1, Cout_p), inv_map, **inv),
                pl.BlockSpec((1, Cout_p), inv_map, **inv),
                pl.BlockSpec((9 * Cout_p, Cout_p), inv_map, **inv),
                pl.BlockSpec((1, Cout_p), inv_map, **inv),
                pl.BlockSpec((1, Cout_p), inv_map, **inv),
            ],
            out_specs=pl.BlockSpec((1, TH, W, Cout_p), lambda n, h: (n, h, 0, 0)),
            scratch_shapes=[
                pltpu.VMEM(inbuf_shape, jnp.bfloat16),
                pltpu.VMEM((TH + 2, W + LPAD + 1, Cout_p), jnp.bfloat16),
                pltpu.SemaphoreType.DMA((5,)),
            ],
            compiler_params=pltpu.CompilerParams(
                # batch images AND H-tiles are independent -> both TCs on v7x
                dimension_semantics=("parallel", "parallel"),
                vmem_limit_bytes=vmem_limit),
        )

    args = (x_in, w1, s1, b1, w2, s2, b2)
    try:
        out_nhwc = build(True)(*args)
    except Exception:
        # pl.Buffered(1) single-buffering not supported by this JAX build:
        # fall back to the default double-buffered grid-invariant blocks.
        out_nhwc = build(False)(*args)

    # Drop channel lane-padding, back to NCHW / f32 (boundary plumbing).
    return jnp.transpose(out_nhwc[..., :Cout], (0, 3, 1, 2)).astype(jnp.float32)


# ---------------------------------------------------------------------------
# Pure-JAX references for correctness checking
# ---------------------------------------------------------------------------
def double_conv_ref_f32(x_nchw, params):
    """Full-f32 reference with the PyTorch-module semantics (eval-mode BN)."""
    x = jnp.transpose(x_nchw, (0, 2, 3, 1)).astype(jnp.float32)

    def block(x, w, b, g, be, m, v):
        y = jax.lax.conv_general_dilated(
            x, w, window_strides=(1, 1), padding='SAME',
            dimension_numbers=('NHWC', 'HWIO', 'NHWC')) + b
        y = (y - m) / jnp.sqrt(v + EPS) * g + be
        return jnp.maximum(y, 0.0)

    y = block(x, params['w1'], params['b1'], params['g1'], params['be1'],
              params['m1'], params['v1'])
    y = block(y, params['w2'], params['b2'], params['g2'], params['be2'],
              params['m2'], params['v2'])
    return jnp.transpose(y, (0, 3, 1, 2))


def double_conv_ref_bf16(x_nchw, params):
    """Reference matching the kernel's precision policy (bf16 conv operands,
    f32 accumulation/epilogue, bf16 intermediate and output)."""
    x = jnp.transpose(x_nchw, (0, 2, 3, 1)).astype(jnp.bfloat16)

    def block(x, w, b, g, be, m, v):
        y = jax.lax.conv_general_dilated(
            x, w.astype(jnp.bfloat16), window_strides=(1, 1), padding='SAME',
            dimension_numbers=('NHWC', 'HWIO', 'NHWC'),
            preferred_element_type=jnp.float32) + b
        y = (y - m) / jnp.sqrt(v + EPS) * g + be
        return jnp.maximum(y, 0.0).astype(jnp.bfloat16)

    y = block(x, params['w1'], params['b1'], params['g1'], params['be1'],
              params['m1'], params['v1'])
    y = block(y, params['w2'], params['b2'], params['g2'], params['be2'],
              params['m2'], params['v2'])
    return jnp.transpose(y.astype(jnp.float32), (0, 3, 1, 2))


def make_params(key, in_channels, out_channels):
    ks = jax.random.split(key, 12)
    C_in, C_out = in_channels, out_channels
    return {
        # conv weights in HWIO layout
        'w1': 0.1 * jax.random.normal(ks[0], (3, 3, C_in, C_out), jnp.float32),
        'b1': 0.1 * jax.random.normal(ks[1], (C_out,), jnp.float32),
        'g1': 1.0 + 0.1 * jax.random.normal(ks[2], (C_out,), jnp.float32),
        'be1': 0.1 * jax.random.normal(ks[3], (C_out,), jnp.float32),
        'm1': 0.05 * jax.random.normal(ks[4], (C_out,), jnp.float32),
        'v1': 0.5 + jax.random.uniform(ks[5], (C_out,), jnp.float32),
        'w2': 0.1 * jax.random.normal(ks[6], (3, 3, C_out, C_out), jnp.float32),
        'b2': 0.1 * jax.random.normal(ks[7], (C_out,), jnp.float32),
        'g2': 1.0 + 0.1 * jax.random.normal(ks[8], (C_out,), jnp.float32),
        'be2': 0.1 * jax.random.normal(ks[9], (C_out,), jnp.float32),
        'm2': 0.05 * jax.random.normal(ks[10], (C_out,), jnp.float32),
        'v2': 0.5 + jax.random.uniform(ks[11], (C_out,), jnp.float32),
    }


if __name__ == "__main__":
    key = jax.random.PRNGKey(0)
    k_x, k_p, k_x2, k_p2 = jax.random.split(key, 4)

    # --- main test: spec shapes (stem path, Cin=4) -------------------------
    N, C_in, C_out, H, W = 2, 4, 8, 16, 16
    x = jax.random.normal(k_x, (N, C_in, H, W), jnp.float32)
    params = make_params(k_p, C_in, C_out)

    out = jax.block_until_ready(double_conv_pallas(x, params))
    assert out.shape == (N, C_out, H, W), out.shape

    ref_bf16 = jax.block_until_ready(double_conv_ref_bf16(x, params))
    ref_f32 = jax.block_until_ready(double_conv_ref_f32(x, params))
    err_bf16 = float(jnp.max(jnp.abs(out - ref_bf16)))   # same precision policy
    err_f32 = float(jnp.max(jnp.abs(out - ref_f32)))     # vs pure-f32 semantics
    assert err_bf16 < 4e-2, f"bf16-matched ref mismatch: {err_bf16}"
    assert err_f32 < 1e-1, f"f32 ref mismatch: {err_f32}"

    # --- multi-tile test: exercises the overlapping-row halo DMAs ----------
    out_tiled = jax.block_until_ready(double_conv_pallas(x, params, tile_h=8))
    err_tile = float(jnp.max(jnp.abs(out_tiled - ref_bf16)))
    assert err_tile < 4e-2, f"tiled-path mismatch: {err_tile}"

    # --- general path (9*Cin > 128): in-kernel conv1 halo, 2-row halo DMA --
    C_in2, C_out2 = 24, 8
    x2 = jax.random.normal(k_x2, (1, C_in2, H, W), jnp.float32)
    params2 = make_params(k_p2, C_in2, C_out2)
    out2 = jax.block_until_ready(double_conv_pallas(x2, params2, tile_h=8))
    ref2 = jax.block_until_ready(double_conv_ref_bf16(x2, params2))
    err2 = float(jnp.max(jnp.abs(out2 - ref2)))
    assert err2 < 6e-2, f"general-path mismatch: {err2}"

    print("KERNEL_OK")
</pallas_src>

<mosaic_0001>
module attributes {stable_mosaic.version = 11 : i64} {
  func.func @_double_conv_kernel(%arg0: i32, %arg1: i32, %arg2: memref<2x16x16x128xbf16, #tpu.memory_space<any>>, %arg3: memref<128x128xbf16, #tpu.memory_space<vmem>>, %arg4: memref<1x128xf32, #tpu.memory_space<vmem>>, %arg5: memref<1x128xf32, #tpu.memory_space<vmem>>, %arg6: memref<1152x128xbf16, #tpu.memory_space<vmem>>, %arg7: memref<1x128xf32, #tpu.memory_space<vmem>>, %arg8: memref<1x128xf32, #tpu.memory_space<vmem>>, %arg9: memref<1x16x16x128xbf16, #tpu.memory_space<vmem>>, %arg10: memref<18x16x128xbf16, #tpu.memory_space<vmem>>, %arg11: memref<18x33x128xbf16, #tpu.memory_space<vmem>>, %arg12: memref<5x!tpu.dma_semaphore, #tpu.memory_space<semaphore_mem>>) attributes {dimension_semantics = [#tpu.dimension_semantics<parallel>, #tpu.dimension_semantics<parallel>], iteration_bounds = array<i64: 2, 1>, scalar_prefetch = 0 : i64, scratch_operands = 3 : i64, tpu.core_type = #tpu.core_type<tc>, window_params = [{}, {pipeline_mode = #tpu.pipeline_mode<synchronous>, transform_indices = @transform_1, window_bounds = array<i64: 128, 128>}, {pipeline_mode = #tpu.pipeline_mode<synchronous>, transform_indices = @transform_2, window_bounds = array<i64: 1, 128>}, {pipeline_mode = #tpu.pipeline_mode<synchronous>, transform_indices = @transform_3, window_bounds = array<i64: 1, 128>}, {pipeline_mode = #tpu.pipeline_mode<synchronous>, transform_indices = @transform_4, window_bounds = array<i64: 1152, 128>}, {pipeline_mode = #tpu.pipeline_mode<synchronous>, transform_indices = @transform_5, window_bounds = array<i64: 1, 128>}, {pipeline_mode = #tpu.pipeline_mode<synchronous>, transform_indices = @transform_6, window_bounds = array<i64: 1, 128>}, {transform_indices = @transform_7, window_bounds = array<i64: 1, 16, 16, 128>}]} {
    %c16_i32 = arith.constant 16 : i32
    %0 = arith.muli %arg1, %c16_i32 : i32
    %c0_i32 = arith.constant 0 : i32
    %c0_i32_0 = arith.constant 0 : i32
    %c0_i32_1 = arith.constant 0 : i32
    %1 = tpu.memref_slice %arg2[%arg0, %0, %c0_i32_0, %c0_i32_1] : memref<2x16x16x128xbf16, #tpu.memory_space<any>> -> memref<1x16x16x128xbf16, #tpu.memory_space<any>>
    %2 = tpu.memref_squeeze %1 : memref<1x16x16x128xbf16, #tpu.memory_space<any>> -> memref<16x16x128xbf16, #tpu.memory_space<any>>
    %c1_i32 = arith.constant 1 : i32
    %c0_i32_2 = arith.constant 0 : i32
    %c0_i32_3 = arith.constant 0 : i32
    %3 = tpu.memref_slice %arg10[%c1_i32, %c0_i32_2, %c0_i32_3] : memref<18x16x128xbf16, #tpu.memory_space<vmem>> -> memref<16x16x128xbf16, #tpu.memory_space<vmem>>
    %4 = tpu.memref_slice %arg12[%c0_i32] : memref<5x!tpu.dma_semaphore, #tpu.memory_space<semaphore_mem>> -> memref<1x!tpu.dma_semaphore, #tpu.memory_space<semaphore_mem>>
    %5 = tpu.memref_squeeze %4 : memref<1x!tpu.dma_semaphore, #tpu.memory_space<semaphore_mem>> -> memref<!tpu.dma_semaphore, #tpu.memory_space<semaphore_mem>>
    tpu.enqueue_dma source(%2 : memref<16x16x128xbf16, #tpu.memory_space<any>>) target(%3 : memref<16x16x128xbf16, #tpu.memory_space<vmem>>) target_semaphore(%5 : memref<!tpu.dma_semaphore, #tpu.memory_space<semaphore_mem>>)
    %c1_i32_4 = arith.constant 1 : i32
    %6 = arith.subi %0, %c1_i32_4 : i32
    %c0_i32_5 = arith.constant 0 : i32
    %7 = arith.addi %6, %c0_i32_5 : i32
    %c1_i32_6 = arith.constant 1 : i32
    %8 = arith.subi %0, %c1_i32_6 : i32
    %c0_i32_7 = arith.constant 0 : i32
    %9 = arith.addi %8, %c0_i32_7 : i32
    %c0_i32_8 = arith.constant 0 : i32
    %10 = arith.cmpi sge, %9, %c0_i32_8 : i32
    %11 = arith.extui %10 : i1 to i32
    %c0_i32_9 = arith.constant 0 : i32
    %12 = arith.cmpi ne, %11, %c0_i32_9 : i32
    scf.if %12 {
      %c1_i32_82 = arith.constant 1 : i32
      %c0_i32_83 = arith.constant 0 : i32
      %c0_i32_84 = arith.constant 0 : i32
      %86 = tpu.memref_slice %arg2[%arg0, %7, %c0_i32_83, %c0_i32_84] : memref<2x16x16x128xbf16, #tpu.memory_space<any>> -> memref<1x1x16x128xbf16, #tpu.memory_space<any>>
      %87 = tpu.memref_squeeze %86 : memref<1x1x16x128xbf16, #tpu.memory_space<any>> -> memref<1x16x128xbf16, #tpu.memory_space<any>>
      %c0_i32_85 = arith.constant 0 : i32
      %c0_i32_86 = arith.constant 0 : i32
      %c0_i32_87 = arith.constant 0 : i32
      %88 = tpu.memref_slice %arg10[%c0_i32_85, %c0_i32_86, %c0_i32_87] : memref<18x16x128xbf16, #tpu.memory_space<vmem>> -> memref<1x16x128xbf16, #tpu.memory_space<vmem>>
      %89 = tpu.memref_slice %arg12[%c1_i32_82] : memref<5x!tpu.dma_semaphore, #tpu.memory_space<semaphore_mem>> -> memref<1x!tpu.dma_semaphore, #tpu.memory_space<semaphore_mem>>
      %90 = tpu.memref_squeeze %89 : memref<1x!tpu.dma_semaphore, #tpu.memory_space<semaphore_mem>> -> memref<!tpu.dma_semaphore, #tpu.memory_space<semaphore_mem>>
      tpu.enqueue_dma source(%87 : memref<1x16x128xbf16, #tpu.memory_space<any>>) target(%88 : memref<1x16x128xbf16, #tpu.memory_space<vmem>>) target_semaphore(%90 : memref<!tpu.dma_semaphore, #tpu.memory_space<semaphore_mem>>)
      %c1_i32_88 = arith.constant 1 : i32
      %c0_i32_89 = arith.constant 0 : i32
      %c0_i32_90 = arith.constant 0 : i32
      %91 = tpu.memref_slice %arg2[%arg0, %7, %c0_i32_89, %c0_i32_90] : memref<2x16x16x128xbf16, #tpu.memory_space<any>> -> memref<1x1x16x128xbf16, #tpu.memory_space<any>>
      %92 = tpu.memref_squeeze %91 : memref<1x1x16x128xbf16, #tpu.memory_space<any>> -> memref<1x16x128xbf16, #tpu.memory_space<any>>
      %c0_i32_91 = arith.constant 0 : i32
      %c0_i32_92 = arith.constant 0 : i32
      %c0_i32_93 = arith.constant 0 : i32
      %93 = tpu.memref_slice %arg10[%c0_i32_91, %c0_i32_92, %c0_i32_93] : memref<18x16x128xbf16, #tpu.memory_space<vmem>> -> memref<1x16x128xbf16, #tpu.memory_space<vmem>>
      %94 = tpu.memref_slice %arg12[%c1_i32_88] : memref<5x!tpu.dma_semaphore, #tpu.memory_space<semaphore_mem>> -> memref<1x!tpu.dma_semaphore, #tpu.memory_space<semaphore_mem>>
      %95 = tpu.memref_squeeze %94 : memref<1x!tpu.dma_semaphore, #tpu.memory_space<semaphore_mem>> -> memref<!tpu.dma_semaphore, #tpu.memory_space<semaphore_mem>>
      tpu.wait_dma2 semaphore(%95 : memref<!tpu.dma_semaphore, #tpu.memory_space<semaphore_mem>>) src(%92 : memref<1x16x128xbf16, #tpu.memory_space<any>>) dst(%93 : memref<1x16x128xbf16, #tpu.memory_space<vmem>>)
    } else {
    }
    %true = arith.constant true
    %13 = arith.xori %10, %true : i1
    %14 = arith.extui %13 : i1 to i32
    %c0_i32_10 = arith.constant 0 : i32
    %15 = arith.cmpi ne, %14, %c0_i32_10 : i32
    scf.if %15 {
      %cst_82 = arith.constant 0.000000e+00 : bf16
      %86 = vector.broadcast %cst_82 : bf16 to vector<1x16x128xbf16>
      %c0_83 = arith.constant 0 : index
      %c0_84 = arith.constant 0 : index
      %c0_85 = arith.constant 0 : index
      %87 = vector.load %arg10[%c0_83, %c0_84, %c0_85] : memref<18x16x128xbf16, #tpu.memory_space<vmem>>, vector<1x16x128xbf16>
      tpu.vector_store %arg10[%c0_83, %c0_84, %c0_85], %86 {strides = array<i32>} : memref<18x16x128xbf16, #tpu.memory_space<vmem>>, vector<1x16x128xbf16>,
    } else {
    }
    %c16_i32_11 = arith.constant 16 : i32
    %16 = arith.addi %0, %c16_i32_11 : i32
    %c0_i32_12 = arith.constant 0 : i32
    %17 = arith.addi %16, %c0_i32_12 : i32
    %c16_i32_13 = arith.constant 16 : i32
    %18 = arith.addi %0, %c16_i32_13 : i32
    %c0_i32_14 = arith.constant 0 : i32
    %19 = arith.addi %18, %c0_i32_14 : i32
    %c16_i32_15 = arith.constant 16 : i32
    %20 = arith.cmpi slt, %19, %c16_i32_15 : i32
    %21 = arith.extui %20 : i1 to i32
    %c0_i32_16 = arith.constant 0 : i32
    %22 = arith.cmpi ne, %21, %c0_i32_16 : i32
    scf.if %22 {
      %c2_i32 = arith.constant 2 : i32
      %c0_i32_82 = arith.constant 0 : i32
      %c0_i32_83 = arith.constant 0 : i32
      %86 = tpu.memref_slice %arg2[%arg0, %17, %c0_i32_82, %c0_i32_83] : memref<2x16x16x128xbf16, #tpu.memory_space<any>> -> memref<1x1x16x128xbf16, #tpu.memory_space<any>>
      %87 = tpu.memref_squeeze %86 : memref<1x1x16x128xbf16, #tpu.memory_space<any>> -> memref<1x16x128xbf16, #tpu.memory_space<any>>
      %c17_i32 = arith.constant 17 : i32
      %c0_i32_84 = arith.constant 0 : i32
      %c0_i32_85 = arith.constant 0 : i32
      %88 = tpu.memref_slice %arg10[%c17_i32, %c0_i32_84, %c0_i32_85] : memref<18x16x128xbf16, #tpu.memory_space<vmem>> -> memref<1x16x128xbf16, #tpu.memory_space<vmem>>
      %89 = tpu.memref_slice %arg12[%c2_i32] : memref<5x!tpu.dma_semaphore, #tpu.memory_space<semaphore_mem>> -> memref<1x!tpu.dma_semaphore, #tpu.memory_space<semaphore_mem>>
      %90 = tpu.memref_squeeze %89 : memref<1x!tpu.dma_semaphore, #tpu.memory_space<semaphore_mem>> -> memref<!tpu.dma_semaphore, #tpu.memory_space<semaphore_mem>>
      tpu.enqueue_dma source(%87 : memref<1x16x128xbf16, #tpu.memory_space<any>>) target(%88 : memref<1x16x128xbf16, #tpu.memory_space<vmem>>) target_semaphore(%90 : memref<!tpu.dma_semaphore, #tpu.memory_space<semaphore_mem>>)
      %c2_i32_86 = arith.constant 2 : i32
      %c0_i32_87 = arith.constant 0 : i32
      %c0_i32_88 = arith.constant 0 : i32
      %91 = tpu.memref_slice %arg2[%arg0, %17, %c0_i32_87, %c0_i32_88] : memref<2x16x16x128xbf16, #tpu.memory_space<any>> -> memref<1x1x16x128xbf16, #tpu.memory_space<any>>
      %92 = tpu.memref_squeeze %91 : memref<1x1x16x128xbf16, #tpu.memory_space<any>> -> memref<1x16x128xbf16, #tpu.memory_space<any>>
      %c17_i32_89 = arith.constant 17 : i32
      %c0_i32_90 = arith.constant 0 : i32
      %c0_i32_91 = arith.constant 0 : i32
      %93 = tpu.memref_slice %arg10[%c17_i32_89, %c0_i32_90, %c0_i32_91] : memref<18x16x128xbf16, #tpu.memory_space<vmem>> -> memref<1x16x128xbf16, #tpu.memory_space<vmem>>
      %94 = tpu.memref_slice %arg12[%c2_i32_86] : memref<5x!tpu.dma_semaphore, #tpu.memory_space<semaphore_mem>> -> memref<1x!tpu.dma_semaphore, #tpu.memory_space<semaphore_mem>>
      %95 = tpu.memref_squeeze %94 : memref<1x!tpu.dma_semaphore, #tpu.memory_space<semaphore_mem>> -> memref<!tpu.dma_semaphore, #tpu.memory_space<semaphore_mem>>
      tpu.wait_dma2 semaphore(%95 : memref<!tpu.dma_semaphore, #tpu.memory_space<semaphore_mem>>) src(%92 : memref<1x16x128xbf16, #tpu.memory_space<any>>) dst(%93 : memref<1x16x128xbf16, #tpu.memory_space<vmem>>)
    } else {
    }
    %true_17 = arith.constant true
    %23 = arith.xori %20, %true_17 : i1
    %24 = arith.extui %23 : i1 to i32
    %c0_i32_18 = arith.constant 0 : i32
    %25 = arith.cmpi ne, %24, %c0_i32_18 : i32
    scf.if %25 {
      %cst_82 = arith.constant 0.000000e+00 : bf16
      %86 = vector.broadcast %cst_82 : bf16 to vector<1x16x128xbf16>
      %c17_83 = arith.constant 17 : index
      %c0_84 = arith.constant 0 : index
      %c0_85 = arith.constant 0 : index
      %87 = vector.load %arg10[%c17_83, %c0_84, %c0_85] : memref<18x16x128xbf16, #tpu.memory_space<vmem>>, vector<1x16x128xbf16>
      tpu.vector_store %arg10[%c17_83, %c0_84, %c0_85], %86 {strides = array<i32>} : memref<18x16x128xbf16, #tpu.memory_space<vmem>>, vector<1x16x128xbf16>,
    } else {
    }
    %c0_i32_19 = arith.constant 0 : i32
    %c0_i32_20 = arith.constant 0 : i32
    %c0_i32_21 = arith.constant 0 : i32
    %26 = tpu.memref_slice %arg2[%arg0, %0, %c0_i32_20, %c0_i32_21] : memref<2x16x16x128xbf16, #tpu.memory_space<any>> -> memref<1x16x16x128xbf16, #tpu.memory_space<any>>
    %27 = tpu.memref_squeeze %26 : memref<1x16x16x128xbf16, #tpu.memory_space<any>> -> memref<16x16x128xbf16, #tpu.memory_space<any>>
    %c1_i32_22 = arith.constant 1 : i32
    %c0_i32_23 = arith.constant 0 : i32
    %c0_i32_24 = arith.constant 0 : i32
    %28 = tpu.memref_slice %arg10[%c1_i32_22, %c0_i32_23, %c0_i32_24] : memref<18x16x128xbf16, #tpu.memory_space<vmem>> -> memref<16x16x128xbf16, #tpu.memory_space<vmem>>
    %29 = tpu.memref_slice %arg12[%c0_i32_19] : memref<5x!tpu.dma_semaphore, #tpu.memory_space<semaphore_mem>> -> memref<1x!tpu.dma_semaphore, #tpu.memory_space<semaphore_mem>>
    %30 = tpu.memref_squeeze %29 : memref<1x!tpu.dma_semaphore, #tpu.memory_space<semaphore_mem>> -> memref<!tpu.dma_semaphore, #tpu.memory_space<semaphore_mem>>
    tpu.wait_dma2 semaphore(%30 : memref<!tpu.dma_semaphore, #tpu.memory_space<semaphore_mem>>) src(%27 : memref<16x16x128xbf16, #tpu.memory_space<any>>) dst(%28 : memref<16x16x128xbf16, #tpu.memory_space<vmem>>)
    %c0 = arith.constant 0 : index
    %c0_25 = arith.constant 0 : index
    %c0_26 = arith.constant 0 : index
    %31 = vector.load %arg10[%c0, %c0_25, %c0_26] : memref<18x16x128xbf16, #tpu.memory_space<vmem>>, vector<18x16x128xbf16>
    %c0_27 = arith.constant 0 : index
    %c0_28 = arith.constant 0 : index
    %32 = vector.load %arg3[%c0_27, %c0_28] : memref<128x128xbf16, #tpu.memory_space<vmem>>, vector<128x128xbf16>
    "tpu.trace_start"() <{level = 10 : i32, message = "hwk,ko->hwo"}> : () -> ()
    %cst = arith.constant dense<0.000000e+00> : vector<18x16x128xf32>
    %33 = tpu.matmul %31, %32, %cst {dimension_numbers = #tpu.dot_dimension_numbers<[2], [0], [0, 1], [1], [0, 0, 0, 1, 1, 1], [], []>} : vector<18x16x128xbf16>, vector<128x128xbf16>, vector<18x16x128xf32> -> vector<18x16x128xf32>
    "tpu.trace_stop"() : () -> ()
    %c0_29 = arith.constant 0 : index
    %c0_30 = arith.constant 0 : index
    %34 = vector.load %arg4[%c0_29, %c0_30] : memref<1x128xf32, #tpu.memory_space<vmem>>, vector<1x128xf32>
    %35 = vector.shape_cast %34 : vector<1x128xf32> to vector<128xf32>
    %36 = vector.shape_cast %35 : vector<128xf32> to vector<1x1x128xf32>
    %37 = vector.broadcast %36 : vector<1x1x128xf32> to vector<18x16x128xf32>
    %38 = arith.mulf %33, %37 : vector<18x16x128xf32>
    %c0_31 = arith.constant 0 : index
    %c0_32 = arith.constant 0 : index
    %39 = vector.load %arg5[%c0_31, %c0_32] : memref<1x128xf32, #tpu.memory_space<vmem>>, vector<1x128xf32>
    %40 = vector.shape_cast %39 : vector<1x128xf32> to vector<128xf32>
    %41 = vector.shape_cast %40 : vector<128xf32> to vector<1x1x128xf32>
    %42 = vector.broadcast %41 : vector<1x1x128xf32> to vector<18x16x128xf32>
    %43 = arith.addf %38, %42 : vector<18x16x128xf32>
    %cst_33 = arith.constant 0.000000e+00 : f32
    %44 = vector.broadcast %cst_33 : f32 to vector<18x16x128xf32>
    %45 = arith.maximumf %43, %44 : vector<18x16x128xf32>
    %cst_34 = arith.constant 0.000000e+00 : bf16
    %46 = vector.broadcast %cst_34 : bf16 to vector<18x1x128xbf16>
    %c0_35 = arith.constant 0 : index
    %c15 = arith.constant 15 : index
    %c0_36 = arith.constant 0 : index
    %47 = vector.load %arg11[%c0_35, %c15, %c0_36] : memref<18x33x128xbf16, #tpu.memory_space<vmem>>, vector<18x1x128xbf16>
    tpu.vector_store %arg11[%c0_35, %c15, %c0_36], %46 {strides = array<i32>} : memref<18x33x128xbf16, #tpu.memory_space<vmem>>, vector<18x1x128xbf16>,
    %cst_37 = arith.constant 0.000000e+00 : bf16
    %48 = vector.broadcast %cst_37 : bf16 to vector<18x1x128xbf16>
    %c0_38 = arith.constant 0 : index
    %c32 = arith.constant 32 : index
    %c0_39 = arith.constant 0 : index
    %49 = vector.load %arg11[%c0_38, %c32, %c0_39] : memref<18x33x128xbf16, #tpu.memory_space<vmem>>, vector<18x1x128xbf16>
    tpu.vector_store %arg11[%c0_38, %c32, %c0_39], %48 {strides = array<i32>} : memref<18x33x128xbf16, #tpu.memory_space<vmem>>, vector<18x1x128xbf16>,
    %50 = arith.truncf %45 : vector<18x16x128xf32> to vector<18x16x128xbf16>
    %c0_40 = arith.constant 0 : index
    %c16 = arith.constant 16 : index
    %c0_41 = arith.constant 0 : index
    %51 = vector.load %arg11[%c0_40, %c16, %c0_41] : memref<18x33x128xbf16, #tpu.memory_space<vmem>>, vector<18x16x128xbf16>
    tpu.vector_store %arg11[%c0_40, %c16, %c0_41], %50 {strides = array<i32>} : memref<18x33x128xbf16, #tpu.memory_space<vmem>>, vector<18x16x128xbf16>,
    %c0_i32_42 = arith.constant 0 : i32
    %52 = arith.cmpi eq, %arg1, %c0_i32_42 : i32
    %53 = arith.extui %52 : i1 to i32
    %c0_i32_43 = arith.constant 0 : i32
    %54 = arith.cmpi ne, %53, %c0_i32_43 : i32
    scf.if %54 {
      %cst_82 = arith.constant 0.000000e+00 : bf16
      %86 = vector.broadcast %cst_82 : bf16 to vector<1x16x128xbf16>
      %c0_83 = arith.constant 0 : index
      %c16_84 = arith.constant 16 : index
      %c0_85 = arith.constant 0 : index
      %87 = vector.load %arg11[%c0_83, %c16_84, %c0_85] : memref<18x33x128xbf16, #tpu.memory_space<vmem>>, vector<1x16x128xbf16>
      tpu.vector_store %arg11[%c0_83, %c16_84, %c0_85], %86 {strides = array<i32>} : memref<18x33x128xbf16, #tpu.memory_space<vmem>>, vector<1x16x128xbf16>,
    } else {
    }
    %c0_i32_44 = arith.constant 0 : i32
    %55 = arith.cmpi eq, %arg1, %c0_i32_44 : i32
    %56 = arith.extui %55 : i1 to i32
    %c0_i32_45 = arith.constant 0 : i32
    %57 = arith.cmpi ne, %56, %c0_i32_45 : i32
    scf.if %57 {
      %cst_82 = arith.constant 0.000000e+00 : bf16
      %86 = vector.broadcast %cst_82 : bf16 to vector<1x16x128xbf16>
      %c17_83 = arith.constant 17 : index
      %c16_84 = arith.constant 16 : index
      %c0_85 = arith.constant 0 : index
      %87 = vector.load %arg11[%c17_83, %c16_84, %c0_85] : memref<18x33x128xbf16, #tpu.memory_space<vmem>>, vector<1x16x128xbf16>
      tpu.vector_store %arg11[%c17_83, %c16_84, %c0_85], %86 {strides = array<i32>} : memref<18x33x128xbf16, #tpu.memory_space<vmem>>, vector<1x16x128xbf16>,
    } else {
    }
    %c0_46 = arith.constant 0 : index
    %c15_47 = arith.constant 15 : index
    %c0_48 = arith.constant 0 : index
    %58 = vector.load %arg11[%c0_46, %c15_47, %c0_48] : memref<18x33x128xbf16, #tpu.memory_space<vmem>>, vector<16x16x128xbf16>
    %c0_49 = arith.constant 0 : index
    %c16_50 = arith.constant 16 : index
    %c0_51 = arith.constant 0 : index
    %59 = vector.load %arg11[%c0_49, %c16_50, %c0_51] : memref<18x33x128xbf16, #tpu.memory_space<vmem>>, vector<16x16x128xbf16>
    %c0_52 = arith.constant 0 : index
    %c17 = arith.constant 17 : index
    %c0_53 = arith.constant 0 : index
    %60 = vector.load %arg11[%c0_52, %c17, %c0_53] : memref<18x33x128xbf16, #tpu.memory_space<vmem>>, vector<16x16x128xbf16>
    %c1 = arith.constant 1 : index
    %c15_54 = arith.constant 15 : index
    %c0_55 = arith.constant 0 : index
    %61 = vector.load %arg11[%c1, %c15_54, %c0_55] : memref<18x33x128xbf16, #tpu.memory_space<vmem>>, vector<16x16x128xbf16>
    %c1_56 = arith.constant 1 : index
    %c16_57 = arith.constant 16 : index
    %c0_58 = arith.constant 0 : index
    %62 = vector.load %arg11[%c1_56, %c16_57, %c0_58] : memref<18x33x128xbf16, #tpu.memory_space<vmem>>, vector<16x16x128xbf16>
    %c1_59 = arith.constant 1 : index
    %c17_60 = arith.constant 17 : index
    %c0_61 = arith.constant 0 : index
    %63 = vector.load %arg11[%c1_59, %c17_60, %c0_61] : memref<18x33x128xbf16, #tpu.memory_space<vmem>>, vector<16x16x128xbf16>
    %c2 = arith.constant 2 : index
    %c15_62 = arith.constant 15 : index
    %c0_63 = arith.constant 0 : index
    %64 = vector.load %arg11[%c2, %c15_62, %c0_63] : memref<18x33x128xbf16, #tpu.memory_space<vmem>>, vector<16x16x128xbf16>
    %c2_64 = arith.constant 2 : index
    %c16_65 = arith.constant 16 : index
    %c0_66 = arith.constant 0 : index
    %65 = vector.load %arg11[%c2_64, %c16_65, %c0_66] : memref<18x33x128xbf16, #tpu.memory_space<vmem>>, vector<16x16x128xbf16>
    %c2_67 = arith.constant 2 : index
    %c17_68 = arith.constant 17 : index
    %c0_69 = arith.constant 0 : index
    %66 = vector.load %arg11[%c2_67, %c17_68, %c0_69] : memref<18x33x128xbf16, #tpu.memory_space<vmem>>, vector<16x16x128xbf16>
    %67 = tpu.concatenate %58, %59, %60, %61, %62, %63, %64, %65, %66 in 2 : vector<16x16x128xbf16>, vector<16x16x128xbf16>, vector<16x16x128xbf16>, vector<16x16x128xbf16>, vector<16x16x128xbf16>, vector<16x16x128xbf16>, vector<16x16x128xbf16>, vector<16x16x128xbf16>, vector<16x16x128xbf16> -> vector<16x16x1152xbf16>
    %c0_70 = arith.constant 0 : index
    %c0_71 = arith.constant 0 : index
    %68 = vector.load %arg6[%c0_70, %c0_71] : memref<1152x128xbf16, #tpu.memory_space<vmem>>, vector<1152x128xbf16>
    "tpu.trace_start"() <{level = 10 : i32, message = "hwk,ko->hwo"}> : () -> ()
    %cst_72 = arith.constant dense<0.000000e+00> : vector<16x16x128xf32>
    %69 = tpu.matmul %67, %68, %cst_72 {dimension_numbers = #tpu.dot_dimension_numbers<[2], [0], [0, 1], [1], [0, 0, 0, 1, 1, 1], [], []>} : vector<16x16x1152xbf16>, vector<1152x128xbf16>, vector<16x16x128xf32> -> vector<16x16x128xf32>
    "tpu.trace_stop"() : () -> ()
    %c0_73 = arith.constant 0 : index
    %c0_74 = arith.constant 0 : index
    %70 = vector.load %arg7[%c0_73, %c0_74] : memref<1x128xf32, #tpu.memory_space<vmem>>, vector<1x128xf32>
    %71 = vector.shape_cast %70 : vector<1x128xf32> to vector<128xf32>
    %72 = vector.shape_cast %71 : vector<128xf32> to vector<1x1x128xf32>
    %73 = vector.broadcast %72 : vector<1x1x128xf32> to vector<16x16x128xf32>
    %74 = arith.mulf %69, %73 : vector<16x16x128xf32>
    %c0_75 = arith.constant 0 : index
    %c0_76 = arith.constant 0 : index
    %75 = vector.load %arg8[%c0_75, %c0_76] : memref<1x128xf32, #tpu.memory_space<vmem>>, vector<1x128xf32>
    %76 = vector.shape_cast %75 : vector<1x128xf32> to vector<128xf32>
    %77 = vector.shape_cast %76 : vector<128xf32> to vector<1x1x128xf32>
    %78 = vector.broadcast %77 : vector<1x1x128xf32> to vector<16x16x128xf32>
    %79 = arith.addf %74, %78 : vector<16x16x128xf32>
    %cst_77 = arith.constant 0.000000e+00 : f32
    %80 = vector.broadcast %cst_77 : f32 to vector<16x16x128xf32>
    %81 = arith.maximumf %79, %80 : vector<16x16x128xf32>
    %82 = arith.truncf %81 : vector<16x16x128xf32> to vector<16x16x128xbf16>
    %c0_78 = arith.constant 0 : index
    %c0_79 = arith.constant 0 : index
    %c0_80 = arith.constant 0 : index
    %c0_81 = arith.constant 0 : index
    %83 = vector.load %arg9[%c0_78, %c0_79, %c0_80, %c0_81] : memref<1x16x16x128xbf16, #tpu.memory_space<vmem>>, vector<1x16x16x128xbf16>
    %84 = vector.shape_cast %83 : vector<1x16x16x128xbf16> to vector<16x16x128xbf16>
    %85 = vector.shape_cast %82 : vector<16x16x128xbf16> to vector<1x16x16x128xbf16>
    tpu.vector_store %arg9[%c0_78, %c0_79, %c0_80, %c0_81], %85 {strides = array<i32>} : memref<1x16x16x128xbf16, #tpu.memory_space<vmem>>, vector<1x16x16x128xbf16>,
    return
  }
  func.func @transform_1(%arg0: i32, %arg1: i32) -> (i32, i32) {
    %c0_i32 = arith.constant 0 : i32
    %c0_i32_0 = arith.constant 0 : i32
    %c0_i32_1 = arith.constant 0 : i32
    return %c0_i32, %c0_i32_0 : i32, i32
  }
  func.func @transform_2(%arg0: i32, %arg1: i32) -> (i32, i32) {
    %c0_i32 = arith.constant 0 : i32
    %c0_i32_0 = arith.constant 0 : i32
    %c0_i32_1 = arith.constant 0 : i32
    return %c0_i32, %c0_i32_0 : i32, i32
  }
  func.func @transform_3(%arg0: i32, %arg1: i32) -> (i32, i32) {
    %c0_i32 = arith.constant 0 : i32
    %c0_i32_0 = arith.constant 0 : i32
    %c0_i32_1 = arith.constant 0 : i32
    return %c0_i32, %c0_i32_0 : i32, i32
  }
  func.func @transform_4(%arg0: i32, %arg1: i32) -> (i32, i32) {
    %c0_i32 = arith.constant 0 : i32
    %c0_i32_0 = arith.constant 0 : i32
    %c0_i32_1 = arith.constant 0 : i32
    return %c0_i32, %c0_i32_0 : i32, i32
  }
  func.func @transform_5(%arg0: i32, %arg1: i32) -> (i32, i32) {
    %c0_i32 = arith.constant 0 : i32
    %c0_i32_0 = arith.constant 0 : i32
    %c0_i32_1 = arith.constant 0 : i32
    return %c0_i32, %c0_i32_0 : i32, i32
  }
  func.func @transform_6(%arg0: i32, %arg1: i32) -> (i32, i32) {
    %c0_i32 = arith.constant 0 : i32
    %c0_i32_0 = arith.constant 0 : i32
    %c0_i32_1 = arith.constant 0 : i32
    return %c0_i32, %c0_i32_0 : i32, i32
  }
  func.func @transform_7(%arg0: i32, %arg1: i32) -> (i32, i32, i32, i32) {
    %c0_i32 = arith.constant 0 : i32
    %c0_i32_0 = arith.constant 0 : i32
    %c0_i32_1 = arith.constant 0 : i32
    return %arg0, %arg1, %c0_i32, %c0_i32_0 : i32, i32, i32, i32
  }
}

module attributes {stable_mosaic.version = 11 : i64} {
  func.func @_double_conv_kernel(%arg0: i32, %arg1: i32, %arg2: memref<2x16x16x128xbf16, #tpu.memory_space<any>>, %arg3: memref<128x128xbf16, #tpu.memory_space<vmem>>, %arg4: memref<1x128xf32, #tpu.memory_space<vmem>>, %arg5: memref<1x128xf32, #tpu.memory_space<vmem>>, %arg6: memref<1152x128xbf16, #tpu.memory_space<vmem>>, %arg7: memref<1x128xf32, #tpu.memory_space<vmem>>, %arg8: memref<1x128xf32, #tpu.memory_space<vmem>>, %arg9: memref<1x16x16x128xbf16, #tpu.memory_space<vmem>>, %arg10: memref<18x16x128xbf16, #tpu.memory_space<vmem>>, %arg11: memref<18x33x128xbf16, #tpu.memory_space<vmem>>, %arg12: memref<5x!tpu.dma_semaphore, #tpu.memory_space<semaphore_mem>>) attributes {dimension_semantics = [#tpu.dimension_semantics<parallel>, #tpu.dimension_semantics<parallel>], iteration_bounds = array<i64: 2, 1>, scalar_prefetch = 0 : i64, scratch_operands = 3 : i64, tpu.core_type = #tpu.core_type<tc>, window_params = [{}, {pipeline_mode = #tpu.pipeline_mode<synchronous>, transform_indices = @transform_1, window_bounds = array<i64: 128, 128>}, {pipeline_mode = #tpu.pipeline_mode<synchronous>, transform_indices = @transform_2, window_bounds = array<i64: 1, 128>}, {pipeline_mode = #tpu.pipeline_mode<synchronous>, transform_indices = @transform_3, window_bounds = array<i64: 1, 128>}, {pipeline_mode = #tpu.pipeline_mode<synchronous>, transform_indices = @transform_4, window_bounds = array<i64: 1152, 128>}, {pipeline_mode = #tpu.pipeline_mode<synchronous>, transform_indices = @transform_5, window_bounds = array<i64: 1, 128>}, {pipeline_mode = #tpu.pipeline_mode<synchronous>, transform_indices = @transform_6, window_bounds = array<i64: 1, 128>}, {transform_indices = @transform_7, window_bounds = array<i64: 1, 16, 16, 128>}]} {
    %c16_i32 = arith.constant 16 : i32
    %0 = arith.muli %arg1, %c16_i32 : i32
    %c0_i32 = arith.constant 0 : i32
    %c0_i32_0 = arith.constant 0 : i32
    %c0_i32_1 = arith.constant 0 : i32
    %1 = tpu.memref_slice %arg2[%arg0, %0, %c0_i32_0, %c0_i32_1] : memref<2x16x16x128xbf16, #tpu.memory_space<any>> -> memref<1x16x16x128xbf16, #tpu.memory_space<any>>
    %2 = tpu.memref_squeeze %1 : memref<1x16x16x128xbf16, #tpu.memory_space<any>> -> memref<16x16x128xbf16, #tpu.memory_space<any>>
    %c1_i32 = arith.constant 1 : i32
    %c0_i32_2 = arith.constant 0 : i32
    %c0_i32_3 = arith.constant 0 : i32
    %3 = tpu.memref_slice %arg10[%c1_i32, %c0_i32_2, %c0_i32_3] : memref<18x16x128xbf16, #tpu.memory_space<vmem>> -> memref<16x16x128xbf16, #tpu.memory_space<vmem>>
    %4 = tpu.memref_slice %arg12[%c0_i32] : memref<5x!tpu.dma_semaphore, #tpu.memory_space<semaphore_mem>> -> memref<1x!tpu.dma_semaphore, #tpu.memory_space<semaphore_mem>>
    %5 = tpu.memref_squeeze %4 : memref<1x!tpu.dma_semaphore, #tpu.memory_space<semaphore_mem>> -> memref<!tpu.dma_semaphore, #tpu.memory_space<semaphore_mem>>
    tpu.enqueue_dma source(%2 : memref<16x16x128xbf16, #tpu.memory_space<any>>) target(%3 : memref<16x16x128xbf16, #tpu.memory_space<vmem>>) target_semaphore(%5 : memref<!tpu.dma_semaphore, #tpu.memory_space<semaphore_mem>>)
    %c1_i32_4 = arith.constant 1 : i32
    %6 = arith.subi %0, %c1_i32_4 : i32
    %c0_i32_5 = arith.constant 0 : i32
    %7 = arith.addi %6, %c0_i32_5 : i32
    %c1_i32_6 = arith.constant 1 : i32
    %8 = arith.subi %0, %c1_i32_6 : i32
    %c0_i32_7 = arith.constant 0 : i32
    %9 = arith.addi %8, %c0_i32_7 : i32
    %c0_i32_8 = arith.constant 0 : i32
    %10 = arith.cmpi sge, %9, %c0_i32_8 : i32
    %11 = arith.extui %10 : i1 to i32
    %c0_i32_9 = arith.constant 0 : i32
    %12 = arith.cmpi ne, %11, %c0_i32_9 : i32
    scf.if %12 {
      %c1_i32_82 = arith.constant 1 : i32
      %c0_i32_83 = arith.constant 0 : i32
      %c0_i32_84 = arith.constant 0 : i32
      %86 = tpu.memref_slice %arg2[%arg0, %7, %c0_i32_83, %c0_i32_84] : memref<2x16x16x128xbf16, #tpu.memory_space<any>> -> memref<1x1x16x128xbf16, #tpu.memory_space<any>>
      %87 = tpu.memref_squeeze %86 : memref<1x1x16x128xbf16, #tpu.memory_space<any>> -> memref<1x16x128xbf16, #tpu.memory_space<any>>
      %c0_i32_85 = arith.constant 0 : i32
      %c0_i32_86 = arith.constant 0 : i32
      %c0_i32_87 = arith.constant 0 : i32
      %88 = tpu.memref_slice %arg10[%c0_i32_85, %c0_i32_86, %c0_i32_87] : memref<18x16x128xbf16, #tpu.memory_space<vmem>> -> memref<1x16x128xbf16, #tpu.memory_space<vmem>>
      %89 = tpu.memref_slice %arg12[%c1_i32_82] : memref<5x!tpu.dma_semaphore, #tpu.memory_space<semaphore_mem>> -> memref<1x!tpu.dma_semaphore, #tpu.memory_space<semaphore_mem>>
      %90 = tpu.memref_squeeze %89 : memref<1x!tpu.dma_semaphore, #tpu.memory_space<semaphore_mem>> -> memref<!tpu.dma_semaphore, #tpu.memory_space<semaphore_mem>>
      tpu.enqueue_dma source(%87 : memref<1x16x128xbf16, #tpu.memory_space<any>>) target(%88 : memref<1x16x128xbf16, #tpu.memory_space<vmem>>) target_semaphore(%90 : memref<!tpu.dma_semaphore, #tpu.memory_space<semaphore_mem>>)
      %c1_i32_88 = arith.constant 1 : i32
      %c0_i32_89 = arith.constant 0 : i32
      %c0_i32_90 = arith.constant 0 : i32
      %91 = tpu.memref_slice %arg2[%arg0, %7, %c0_i32_89, %c0_i32_90] : memref<2x16x16x128xbf16, #tpu.memory_space<any>> -> memref<1x1x16x128xbf16, #tpu.memory_space<any>>
      %92 = tpu.memref_squeeze %91 : memref<1x1x16x128xbf16, #tpu.memory_space<any>> -> memref<1x16x128xbf16, #tpu.memory_space<any>>
      %c0_i32_91 = arith.constant 0 : i32
      %c0_i32_92 = arith.constant 0 : i32
      %c0_i32_93 = arith.constant 0 : i32
      %93 = tpu.memref_slice %arg10[%c0_i32_91, %c0_i32_92, %c0_i32_93] : memref<18x16x128xbf16, #tpu.memory_space<vmem>> -> memref<1x16x128xbf16, #tpu.memory_space<vmem>>
      %94 = tpu.memref_slice %arg12[%c1_i32_88] : memref<5x!tpu.dma_semaphore, #tpu.memory_space<semaphore_mem>> -> memref<1x!tpu.dma_semaphore, #tpu.memory_space<semaphore_mem>>
      %95 = tpu.memref_squeeze %94 : memref<1x!tpu.dma_semaphore, #tpu.memory_space<semaphore_mem>> -> memref<!tpu.dma_semaphore, #tpu.memory_space<semaphore_mem>>
      tpu.wait_dma2 semaphore(%95 : memref<!tpu.dma_semaphore, #tpu.memory_space<semaphore_mem>>) src(%92 : memref<1x16x128xbf16, #tpu.memory_space<any>>) dst(%93 : memref<1x16x128xbf16, #tpu.memory_space<vmem>>)
    } else {
    }
    %true = arith.constant true
    %13 = arith.xori %10, %true : i1
    %14 = arith.extui %13 : i1 to i32
    %c0_i32_10 = arith.constant 0 : i32
    %15 = arith.cmpi ne, %14, %c0_i32_10 : i32
    scf.if %15 {
      %cst_82 = arith.constant 0.000000e+00 : bf16
      %86 = vector.broadcast %cst_82 : bf16 to vector<1x16x128xbf16>
      %c0_83 = arith.constant 0 : index
      %c0_84 = arith.constant 0 : index
      %c0_85 = arith.constant 0 : index
      %87 = vector.load %arg10[%c0_83, %c0_84, %c0_85] : memref<18x16x128xbf16, #tpu.memory_space<vmem>>, vector<1x16x128xbf16>
      tpu.vector_store %arg10[%c0_83, %c0_84, %c0_85], %86 {strides = array<i32>} : memref<18x16x128xbf16, #tpu.memory_space<vmem>>, vector<1x16x128xbf16>,
    } else {
    }
    %c16_i32_11 = arith.constant 16 : i32
    %16 = arith.addi %0, %c16_i32_11 : i32
    %c0_i32_12 = arith.constant 0 : i32
    %17 = arith.addi %16, %c0_i32_12 : i32
    %c16_i32_13 = arith.constant 16 : i32
    %18 = arith.addi %0, %c16_i32_13 : i32
    %c0_i32_14 = arith.constant 0 : i32
    %19 = arith.addi %18, %c0_i32_14 : i32
    %c16_i32_15 = arith.constant 16 : i32
    %20 = arith.cmpi slt, %19, %c16_i32_15 : i32
    %21 = arith.extui %20 : i1 to i32
    %c0_i32_16 = arith.constant 0 : i32
    %22 = arith.cmpi ne, %21, %c0_i32_16 : i32
    scf.if %22 {
      %c2_i32 = arith.constant 2 : i32
      %c0_i32_82 = arith.constant 0 : i32
      %c0_i32_83 = arith.constant 0 : i32
      %86 = tpu.memref_slice %arg2[%arg0, %17, %c0_i32_82, %c0_i32_83] : memref<2x16x16x128xbf16, #tpu.memory_space<any>> -> memref<1x1x16x128xbf16, #tpu.memory_space<any>>
      %87 = tpu.memref_squeeze %86 : memref<1x1x16x128xbf16, #tpu.memory_space<any>> -> memref<1x16x128xbf16, #tpu.memory_space<any>>
      %c17_i32 = arith.constant 17 : i32
      %c0_i32_84 = arith.constant 0 : i32
      %c0_i32_85 = arith.constant 0 : i32
      %88 = tpu.memref_slice %arg10[%c17_i32, %c0_i32_84, %c0_i32_85] : memref<18x16x128xbf16, #tpu.memory_space<vmem>> -> memref<1x16x128xbf16, #tpu.memory_space<vmem>>
      %89 = tpu.memref_slice %arg12[%c2_i32] : memref<5x!tpu.dma_semaphore, #tpu.memory_space<semaphore_mem>> -> memref<1x!tpu.dma_semaphore, #tpu.memory_space<semaphore_mem>>
      %90 = tpu.memref_squeeze %89 : memref<1x!tpu.dma_semaphore, #tpu.memory_space<semaphore_mem>> -> memref<!tpu.dma_semaphore, #tpu.memory_space<semaphore_mem>>
      tpu.enqueue_dma source(%87 : memref<1x16x128xbf16, #tpu.memory_space<any>>) target(%88 : memref<1x16x128xbf16, #tpu.memory_space<vmem>>) target_semaphore(%90 : memref<!tpu.dma_semaphore, #tpu.memory_space<semaphore_mem>>)
      %c2_i32_86 = arith.constant 2 : i32
      %c0_i32_87 = arith.constant 0 : i32
      %c0_i32_88 = arith.constant 0 : i32
      %91 = tpu.memref_slice %arg2[%arg0, %17, %c0_i32_87, %c0_i32_88] : memref<2x16x16x128xbf16, #tpu.memory_space<any>> -> memref<1x1x16x128xbf16, #tpu.memory_space<any>>
      %92 = tpu.memref_squeeze %91 : memref<1x1x16x128xbf16, #tpu.memory_space<any>> -> memref<1x16x128xbf16, #tpu.memory_space<any>>
      %c17_i32_89 = arith.constant 17 : i32
      %c0_i32_90 = arith.constant 0 : i32
      %c0_i32_91 = arith.constant 0 : i32
      %93 = tpu.memref_slice %arg10[%c17_i32_89, %c0_i32_90, %c0_i32_91] : memref<18x16x128xbf16, #tpu.memory_space<vmem>> -> memref<1x16x128xbf16, #tpu.memory_space<vmem>>
      %94 = tpu.memref_slice %arg12[%c2_i32_86] : memref<5x!tpu.dma_semaphore, #tpu.memory_space<semaphore_mem>> -> memref<1x!tpu.dma_semaphore, #tpu.memory_space<semaphore_mem>>
      %95 = tpu.memref_squeeze %94 : memref<1x!tpu.dma_semaphore, #tpu.memory_space<semaphore_mem>> -> memref<!tpu.dma_semaphore, #tpu.memory_space<semaphore_mem>>
      tpu.wait_dma2 semaphore(%95 : memref<!tpu.dma_semaphore, #tpu.memory_space<semaphore_mem>>) src(%92 : memref<1x16x128xbf16, #tpu.memory_space<any>>) dst(%93 : memref<1x16x128xbf16, #tpu.memory_space<vmem>>)
    } else {
    }
    %true_17 = arith.constant true
    %23 = arith.xori %20, %true_17 : i1
    %24 = arith.extui %23 : i1 to i32
    %c0_i32_18 = arith.constant 0 : i32
    %25 = arith.cmpi ne, %24, %c0_i32_18 : i32
    scf.if %25 {
      %cst_82 = arith.constant 0.000000e+00 : bf16
      %86 = vector.broadcast %cst_82 : bf16 to vector<1x16x128xbf16>
      %c17_83 = arith.constant 17 : index
      %c0_84 = arith.constant 0 : index
      %c0_85 = arith.constant 0 : index
      %87 = vector.load %arg10[%c17_83, %c0_84, %c0_85] : memref<18x16x128xbf16, #tpu.memory_space<vmem>>, vector<1x16x128xbf16>
      tpu.vector_store %arg10[%c17_83, %c0_84, %c0_85], %86 {strides = array<i32>} : memref<18x16x128xbf16, #tpu.memory_space<vmem>>, vector<1x16x128xbf16>,
    } else {
    }
    %c0_i32_19 = arith.constant 0 : i32
    %c0_i32_20 = arith.constant 0 : i32
    %c0_i32_21 = arith.constant 0 : i32
    %26 = tpu.memref_slice %arg2[%arg0, %0, %c0_i32_20, %c0_i32_21] : memref<2x16x16x128xbf16, #tpu.memory_space<any>> -> memref<1x16x16x128xbf16, #tpu.memory_space<any>>
    %27 = tpu.memref_squeeze %26 : memref<1x16x16x128xbf16, #tpu.memory_space<any>> -> memref<16x16x128xbf16, #tpu.memory_space<any>>
    %c1_i32_22 = arith.constant 1 : i32
    %c0_i32_23 = arith.constant 0 : i32
    %c0_i32_24 = arith.constant 0 : i32
    %28 = tpu.memref_slice %arg10[%c1_i32_22, %c0_i32_23, %c0_i32_24] : memref<18x16x128xbf16, #tpu.memory_space<vmem>> -> memref<16x16x128xbf16, #tpu.memory_space<vmem>>
    %29 = tpu.memref_slice %arg12[%c0_i32_19] : memref<5x!tpu.dma_semaphore, #tpu.memory_space<semaphore_mem>> -> memref<1x!tpu.dma_semaphore, #tpu.memory_space<semaphore_mem>>
    %30 = tpu.memref_squeeze %29 : memref<1x!tpu.dma_semaphore, #tpu.memory_space<semaphore_mem>> -> memref<!tpu.dma_semaphore, #tpu.memory_space<semaphore_mem>>
    tpu.wait_dma2 semaphore(%30 : memref<!tpu.dma_semaphore, #tpu.memory_space<semaphore_mem>>) src(%27 : memref<16x16x128xbf16, #tpu.memory_space<any>>) dst(%28 : memref<16x16x128xbf16, #tpu.memory_space<vmem>>)
    %c0 = arith.constant 0 : index
    %c0_25 = arith.constant 0 : index
    %c0_26 = arith.constant 0 : index
    %31 = vector.load %arg10[%c0, %c0_25, %c0_26] : memref<18x16x128xbf16, #tpu.memory_space<vmem>>, vector<18x16x128xbf16>
    %c0_27 = arith.constant 0 : index
    %c0_28 = arith.constant 0 : index
    %32 = vector.load %arg3[%c0_27, %c0_28] : memref<128x128xbf16, #tpu.memory_space<vmem>>, vector<128x128xbf16>
    "tpu.trace_start"() <{level = 10 : i32, message = "hwk,ko->hwo"}> : () -> ()
    %cst = arith.constant dense<0.000000e+00> : vector<18x16x128xf32>
    %33 = tpu.matmul %31, %32, %cst {dimension_numbers = #tpu.dot_dimension_numbers<[2], [0], [0, 1], [1], [0, 0, 0, 1, 1, 1], [], []>} : vector<18x16x128xbf16>, vector<128x128xbf16>, vector<18x16x128xf32> -> vector<18x16x128xf32>
    "tpu.trace_stop"() : () -> ()
    %c0_29 = arith.constant 0 : index
    %c0_30 = arith.constant 0 : index
    %34 = vector.load %arg4[%c0_29, %c0_30] : memref<1x128xf32, #tpu.memory_space<vmem>>, vector<1x128xf32>
    %35 = vector.shape_cast %34 : vector<1x128xf32> to vector<128xf32>
    %36 = vector.shape_cast %35 : vector<128xf32> to vector<1x1x128xf32>
    %37 = vector.broadcast %36 : vector<1x1x128xf32> to vector<18x16x128xf32>
    %38 = arith.mulf %33, %37 : vector<18x16x128xf32>
    %c0_31 = arith.constant 0 : index
    %c0_32 = arith.constant 0 : index
    %39 = vector.load %arg5[%c0_31, %c0_32] : memref<1x128xf32, #tpu.memory_space<vmem>>, vector<1x128xf32>
    %40 = vector.shape_cast %39 : vector<1x128xf32> to vector<128xf32>
    %41 = vector.shape_cast %40 : vector<128xf32> to vector<1x1x128xf32>
    %42 = vector.broadcast %41 : vector<1x1x128xf32> to vector<18x16x128xf32>
    %43 = arith.addf %38, %42 : vector<18x16x128xf32>
    %cst_33 = arith.constant 0.000000e+00 : f32
    %44 = vector.broadcast %cst_33 : f32 to vector<18x16x128xf32>
    %45 = arith.maximumf %43, %44 : vector<18x16x128xf32>
    %cst_34 = arith.constant 0.000000e+00 : bf16
    %46 = vector.broadcast %cst_34 : bf16 to vector<18x1x128xbf16>
    %c0_35 = arith.constant 0 : index
    %c15 = arith.constant 15 : index
    %c0_36 = arith.constant 0 : index
    %47 = vector.load %arg11[%c0_35, %c15, %c0_36] : memref<18x33x128xbf16, #tpu.memory_space<vmem>>, vector<18x1x128xbf16>
    tpu.vector_store %arg11[%c0_35, %c15, %c0_36], %46 {strides = array<i32>} : memref<18x33x128xbf16, #tpu.memory_space<vmem>>, vector<18x1x128xbf16>,
    %cst_37 = arith.constant 0.000000e+00 : bf16
    %48 = vector.broadcast %cst_37 : bf16 to vector<18x1x128xbf16>
    %c0_38 = arith.constant 0 : index
    %c32 = arith.constant 32 : index
    %c0_39 = arith.constant 0 : index
    %49 = vector.load %arg11[%c0_38, %c32, %c0_39] : memref<18x33x128xbf16, #tpu.memory_space<vmem>>, vector<18x1x128xbf16>
    tpu.vector_store %arg11[%c0_38, %c32, %c0_39], %48 {strides = array<i32>} : memref<18x33x128xbf16, #tpu.memory_space<vmem>>, vector<18x1x128xbf16>,
    %50 = arith.truncf %45 : vector<18x16x128xf32> to vector<18x16x128xbf16>
    %c0_40 = arith.constant 0 : index
    %c16 = arith.constant 16 : index
    %c0_41 = arith.constant 0 : index
    %51 = vector.load %arg11[%c0_40, %c16, %c0_41] : memref<18x33x128xbf16, #tpu.memory_space<vmem>>, vector<18x16x128xbf16>
    tpu.vector_store %arg11[%c0_40, %c16, %c0_41], %50 {strides = array<i32>} : memref<18x33x128xbf16, #tpu.memory_space<vmem>>, vector<18x16x128xbf16>,
    %c0_i32_42 = arith.constant 0 : i32
    %52 = arith.cmpi eq, %arg1, %c0_i32_42 : i32
    %53 = arith.extui %52 : i1 to i32
    %c0_i32_43 = arith.constant 0 : i32
    %54 = arith.cmpi ne, %53, %c0_i32_43 : i32
    scf.if %54 {
      %cst_82 = arith.constant 0.000000e+00 : bf16
      %86 = vector.broadcast %cst_82 : bf16 to vector<1x16x128xbf16>
      %c0_83 = arith.constant 0 : index
      %c16_84 = arith.constant 16 : index
      %c0_85 = arith.constant 0 : index
      %87 = vector.load %arg11[%c0_83, %c16_84, %c0_85] : memref<18x33x128xbf16, #tpu.memory_space<vmem>>, vector<1x16x128xbf16>
      tpu.vector_store %arg11[%c0_83, %c16_84, %c0_85], %86 {strides = array<i32>} : memref<18x33x128xbf16, #tpu.memory_space<vmem>>, vector<1x16x128xbf16>,
    } else {
    }
    %c0_i32_44 = arith.constant 0 : i32
    %55 = arith.cmpi eq, %arg1, %c0_i32_44 : i32
    %56 = arith.extui %55 : i1 to i32
    %c0_i32_45 = arith.constant 0 : i32
    %57 = arith.cmpi ne, %56, %c0_i32_45 : i32
    scf.if %57 {
      %cst_82 = arith.constant 0.000000e+00 : bf16
      %86 = vector.broadcast %cst_82 : bf16 to vector<1x16x128xbf16>
      %c17_83 = arith.constant 17 : index
      %c16_84 = arith.constant 16 : index
      %c0_85 = arith.constant 0 : index
      %87 = vector.load %arg11[%c17_83, %c16_84, %c0_85] : memref<18x33x128xbf16, #tpu.memory_space<vmem>>, vector<1x16x128xbf16>
      tpu.vector_store %arg11[%c17_83, %c16_84, %c0_85], %86 {strides = array<i32>} : memref<18x33x128xbf16, #tpu.memory_space<vmem>>, vector<1x16x128xbf16>,
    } else {
    }
    %c0_46 = arith.constant 0 : index
    %c15_47 = arith.constant 15 : index
    %c0_48 = arith.constant 0 : index
    %58 = vector.load %arg11[%c0_46, %c15_47, %c0_48] : memref<18x33x128xbf16, #tpu.memory_space<vmem>>, vector<16x16x128xbf16>
    %c0_49 = arith.constant 0 : index
    %c16_50 = arith.constant 16 : index
    %c0_51 = arith.constant 0 : index
    %59 = vector.load %arg11[%c0_49, %c16_50, %c0_51] : memref<18x33x128xbf16, #tpu.memory_space<vmem>>, vector<16x16x128xbf16>
    %c0_52 = arith.constant 0 : index
    %c17 = arith.constant 17 : index
    %c0_53 = arith.constant 0 : index
    %60 = vector.load %arg11[%c0_52, %c17, %c0_53] : memref<18x33x128xbf16, #tpu.memory_space<vmem>>, vector<16x16x128xbf16>
    %c1 = arith.constant 1 : index
    %c15_54 = arith.constant 15 : index
    %c0_55 = arith.constant 0 : index
    %61 = vector.load %arg11[%c1, %c15_54, %c0_55] : memref<18x33x128xbf16, #tpu.memory_space<vmem>>, vector<16x16x128xbf16>
    %c1_56 = arith.constant 1 : index
    %c16_57 = arith.constant 16 : index
    %c0_58 = arith.constant 0 : index
    %62 = vector.load %arg11[%c1_56, %c16_57, %c0_58] : memref<18x33x128xbf16, #tpu.memory_space<vmem>>, vector<16x16x128xbf16>
    %c1_59 = arith.constant 1 : index
    %c17_60 = arith.constant 17 : index
    %c0_61 = arith.constant 0 : index
    %63 = vector.load %arg11[%c1_59, %c17_60, %c0_61] : memref<18x33x128xbf16, #tpu.memory_space<vmem>>, vector<16x16x128xbf16>
    %c2 = arith.constant 2 : index
    %c15_62 = arith.constant 15 : index
    %c0_63 = arith.constant 0 : index
    %64 = vector.load %arg11[%c2, %c15_62, %c0_63] : memref<18x33x128xbf16, #tpu.memory_space<vmem>>, vector<16x16x128xbf16>
    %c2_64 = arith.constant 2 : index
    %c16_65 = arith.constant 16 : index
    %c0_66 = arith.constant 0 : index
    %65 = vector.load %arg11[%c2_64, %c16_65, %c0_66] : memref<18x33x128xbf16, #tpu.memory_space<vmem>>, vector<16x16x128xbf16>
    %c2_67 = arith.constant 2 : index
    %c17_68 = arith.constant 17 : index
    %c0_69 = arith.constant 0 : index
    %66 = vector.load %arg11[%c2_67, %c17_68, %c0_69] : memref<18x33x128xbf16, #tpu.memory_space<vmem>>, vector<16x16x128xbf16>
    %67 = tpu.concatenate %58, %59, %60, %61, %62, %63, %64, %65, %66 in 2 : vector<16x16x128xbf16>, vector<16x16x128xbf16>, vector<16x16x128xbf16>, vector<16x16x128xbf16>, vector<16x16x128xbf16>, vector<16x16x128xbf16>, vector<16x16x128xbf16>, vector<16x16x128xbf16>, vector<16x16x128xbf16> -> vector<16x16x1152xbf16>
    %c0_70 = arith.constant 0 : index
    %c0_71 = arith.constant 0 : index
    %68 = vector.load %arg6[%c0_70, %c0_71] : memref<1152x128xbf16, #tpu.memory_space<vmem>>, vector<1152x128xbf16>
    "tpu.trace_start"() <{level = 10 : i32, message = "hwk,ko->hwo"}> : () -> ()
    %cst_72 = arith.constant dense<0.000000e+00> : vector<16x16x128xf32>
    %69 = tpu.matmul %67, %68, %cst_72 {dimension_numbers = #tpu.dot_dimension_numbers<[2], [0], [0, 1], [1], [0, 0, 0, 1, 1, 1], [], []>} : vector<16x16x1152xbf16>, vector<1152x128xbf16>, vector<16x16x128xf32> -> vector<16x16x128xf32>
    "tpu.trace_stop"() : () -> ()
    %c0_73 = arith.constant 0 : index
    %c0_74 = arith.constant 0 : index
    %70 = vector.load %arg7[%c0_73, %c0_74] : memref<1x128xf32, #tpu.memory_space<vmem>>, vector<1x128xf32>
    %71 = vector.shape_cast %70 : vector<1x128xf32> to vector<128xf32>
    %72 = vector.shape_cast %71 : vector<128xf32> to vector<1x1x128xf32>
    %73 = vector.broadcast %72 : vector<1x1x128xf32> to vector<16x16x128xf32>
    %74 = arith.mulf %69, %73 : vector<16x16x128xf32>
    %c0_75 = arith.constant 0 : index
    %c0_76 = arith.constant 0 : index
    %75 = vector.load %arg8[%c0_75, %c0_76] : memref<1x128xf32, #tpu.memory_space<vmem>>, vector<1x128xf32>
    %76 = vector.shape_cast %75 : vector<1x128xf32> to vector<128xf32>
    %77 = vector.shape_cast %76 : vector<128xf32> to vector<1x1x128xf32>
    %78 = vector.broadcast %77 : vector<1x1x128xf32> to vector<16x16x128xf32>
    %79 = arith.addf %74, %78 : vector<16x16x128xf32>
    %cst_77 = arith.constant 0.000000e+00 : f32
    %80 = vector.broadcast %cst_77 : f32 to vector<16x16x128xf32>
    %81 = arith.maximumf %79, %80 : vector<16x16x128xf32>
    %82 = arith.truncf %81 : vector<16x16x128xf32> to vector<16x16x128xbf16>
    %c0_78 = arith.constant 0 : index
    %c0_79 = arith.constant 0 : index
    %c0_80 = arith.constant 0 : index
    %c0_81 = arith.constant 0 : index
    %83 = vector.load %arg9[%c0_78, %c0_79, %c0_80, %c0_81] : memref<1x16x16x128xbf16, #tpu.memory_space<vmem>>, vector<1x16x16x128xbf16>
    %84 = vector.shape_cast %83 : vector<1x16x16x128xbf16> to vector<16x16x128xbf16>
    %85 = vector.shape_cast %82 : vector<16x16x128xbf16> to vector<1x16x16x128xbf16>
    tpu.vector_store %arg9[%c0_78, %c0_79, %c0_80, %c0_81], %85 {strides = array<i32>} : memref<1x16x16x128xbf16, #tpu.memory_space<vmem>>, vector<1x16x16x128xbf16>,
    return
  }
  func.func @transform_1(%arg0: i32, %arg1: i32) -> (i32, i32) {
    %c0_i32 = arith.constant 0 : i32
    %c0_i32_0 = arith.constant 0 : i32
    %c0_i32_1 = arith.constant 0 : i32
    return %c0_i32, %c0_i32_0 : i32, i32
  }
  func.func @transform_2(%arg0: i32, %arg1: i32) -> (i32, i32) {
    %c0_i32 = arith.constant 0 : i32
    %c0_i32_0 = arith.constant 0 : i32
    %c0_i32_1 = arith.constant 0 : i32
    return %c0_i32, %c0_i32_0 : i32, i32
  }
  func.func @transform_3(%arg0: i32, %arg1: i32) -> (i32, i32) {
    %c0_i32 = arith.constant 0 : i32
    %c0_i32_0 = arith.constant 0 : i32
    %c0_i32_1 = arith.constant 0 : i32
    return %c0_i32, %c0_i32_0 : i32, i32
  }
  func.func @transform_4(%arg0: i32, %arg1: i32) -> (i32, i32) {
    %c0_i32 = arith.constant 0 : i32
    %c0_i32_0 = arith.constant 0 : i32
    %c0_i32_1 = arith.constant 0 : i32
    return %c0_i32, %c0_i32_0 : i32, i32
  }
  func.func @transform_5(%arg0: i32, %arg1: i32) -> (i32, i32) {
    %c0_i32 = arith.constant 0 : i32
    %c0_i32_0 = arith.constant 0 : i32
    %c0_i32_1 = arith.constant 0 : i32
    return %c0_i32, %c0_i32_0 : i32, i32
  }
  func.func @transform_6(%arg0: i32, %arg1: i32) -> (i32, i32) {
    %c0_i32 = arith.constant 0 : i32
    %c0_i32_0 = arith.constant 0 : i32
    %c0_i32_1 = arith.constant 0 : i32
    return %c0_i32, %c0_i32_0 : i32, i32
  }
  func.func @transform_7(%arg0: i32, %arg1: i32) -> (i32, i32, i32, i32) {
    %c0_i32 = arith.constant 0 : i32
    %c0_i32_0 = arith.constant 0 : i32
    %c0_i32_1 = arith.constant 0 : i32
    return %arg0, %arg1, %c0_i32, %c0_i32_0 : i32, i32, i32, i32
  }
}

</mosaic_0001>

<llo_original>
// kernel: tpu_custom_call.1
$region0: #{tpu_custom_call.1}
  #allocation0 [shape = 'u32[]', space=smem, size = 0x4, offset = 0x4, fixed_abs, tag = 'smem constant byte address 0x4 - core index']
  #allocation1 [shape = 'u32[144,128]{1,0:T(1,128)}', space=vmem, size = 0x12000, scoped, tag = 'internal scratch']
  #allocation2 [shape = 'bf16[18,16,128]{2,1,0:T(8,128)(2,1)}', space=vmem, size = 0x12000, scoped, tag = 'scratch operand']
  #allocation3 [shape = 'bf16[18,33,128]{2,1,0:T(8,128)(2,1)}', space=vmem, size = 0x2d000, scoped, tag = 'scratch operand']
  #allocation4 [shape = 's32[5]{0}', space=sflag, size = 0x14, scoped, tag = 'scratch operand']
  #allocation11 [shape = 's32[]', space=sflag, size = 0x4, offset = 0, fixed_abs, tag = 'sflag constant byte address 0x0 - dummy sync flag']
  #allocation12 [shape = 's32[]', space=sflag, size = 0x4, offset = 0, fixed_abs, tag = 'sflag constant byte address 0x0 - dummy sync flag']
  #allocation13 [shape = 'u32[]', space=smem, size = 0x4, offset = 0x44, fixed_abs, tag = 'smem constant byte address 0x44 - assertion arg 0']
  #allocation14 [shape = 'u32[]', space=smem, size = 0x4, offset = 0x48, fixed_abs, tag = 'smem constant byte address 0x48 - assertion arg 1']
  #allocation15 [shape = 's32[]', space=sflag, size = 0x4, offset = 0, fixed_abs, tag = 'sflag constant byte address 0x0 - dummy sync flag']
  #allocation16 [shape = 's32[]', space=sflag, size = 0x4, offset = 0, fixed_abs, tag = 'sflag constant byte address 0x0 - dummy sync flag']
  #allocation17 [shape = 's32[]', space=sflag, size = 0x4, offset = 0, fixed_abs, tag = 'sflag constant byte address 0x0 - dummy sync flag']
  #allocation18 [shape = 's32[]', space=sflag, size = 0x4, offset = 0, fixed_abs, tag = 'sflag constant byte address 0x0 - dummy sync flag']
  %s0 = inlined_call_operand.hbm [shape: bf16[2,16,16,128], index: 0, kind: input, shape index: {}]
  %s1 = inlined_call_operand.hbm [shape: bf16[128,128], index: 1, kind: input, shape index: {}]
  %s2 = inlined_call_operand.vmem [shape: f32[1,128], index: 2, kind: input, shape index: {}]
  %s3 = inlined_call_operand.vmem [shape: f32[1,128], index: 3, kind: input, shape index: {}]
  %s4 = inlined_call_operand.hbm [shape: bf16[1152,128], index: 4, kind: input, shape index: {}]
  %s5 = inlined_call_operand.vmem [shape: f32[1,128], index: 5, kind: input, shape index: {}]
  %s6 = inlined_call_operand.vmem [shape: f32[1,128], index: 6, kind: input, shape index: {}]
  %s7 = inlined_call_operand.hbm [shape: bf16[2,16,16,128], index: 7, kind: output, shape index: {}]
  %s8 = sld [smem:[#allocation0]]
  $region97: #{tpu_custom_call.1} parent=0
    _
  %s10 = ssub.s32 1, %s8
  %s11 = scalar_select 0, %s10, %s8
  $region1: #{tpu_custom_call.1} parent=0
    #allocation5 [shape = 'u8[32768]{0}', space=vmem, size = 0x8000, scoped, tag = 'input window, operand 1, single buffered']
    #allocation6 [shape = 's32[2]{0}', space=sflag, size = 0x8, scoped, tag = 'scoped memory for tpu_custom_call.1']
    #allocation7 [shape = 's32[2]{0}', space=sflag, size = 0x8, scoped, tag = 'scoped memory for tpu_custom_call.1']
    #allocation8 [shape = 'u8[294912]{0}', space=vmem, size = 0x48000, scoped, tag = 'input window, operand 4, single buffered']
    #allocation9 [shape = 's32[1]{0}', space=sflag, size = 0x4, scoped, tag = 'scoped memory for tpu_custom_call.1']
    #allocation10 [shape = 'u8[131072]{0}', space=vmem, size = 0x20000, scoped, tag = 'output window, operand 0']
    %12 = vsyncpa [#allocation6], 0
    %13 = vsyncpa [#allocation9], 0
    %14 = vsyncpa [#allocation7], 0
    %s15 = scalar_lea.sflag [#allocation7], 1
    %16 = vsyncpa %s15, 0
    loop: start=0, step=1, limit=4
    $region2: #{tpu_custom_call.1} parent=1 // loop_pre_header
      _
    $region3: #{tpu_custom_call.1} parent=1 // loop_header
      %s18 = sphi 0, %s22
      %p19 = scmp.ge.s32.totalorder %s18, 4
      %s25 = sphi 0, %s37
      %s26 = sphi 0, %s33
      %s27 = sphi 0, %s25
      %s28 = sphi 0, %s26
      %s29 = sphi 0, %s27
      %s30 = sphi 0, %s28
      %s38 = sphi 0, %s38
      %s40 = sphi 0, %s38
      %s41 = sphi 0, %s40
      %s55 = sphi 0, %s41
      %s59 = sphi 0, %s59
      %s61 = sphi 0, %s59
      %s62 = sphi 0, %s61
      %s76 = sphi 0, %s62
      %s80 = sphi 0, %s80
      %s82 = sphi 0, %s80
      %s83 = sphi 0, %s82
      %s97 = sphi 0, %s83
      %s101 = sphi 0, %s101
      %s103 = sphi 0, %s101
      %s104 = sphi 0, %s103
      %s118 = sphi 0, %s104
      %s122 = sphi 0, %s122
      %s124 = sphi 0, %s122
      %s125 = sphi 0, %s124
      %s139 = sphi 0, %s125
      %s143 = sphi 0, %s143
      %s145 = sphi 0, %s143
      %s146 = sphi 0, %s145
      %s160 = sphi 0, %s146
      %s168 = sphi 0, %s170
      %s171 = sphi 0, %s168
      %s172 = sphi 0, %s171
      %s188 = sphi 0, %s172
    $region4: #{tpu_custom_call.1} parent=1 // loop_header_branch
      %21 = sbr.rel (%p19) target = $region8
    $region5: #{tpu_custom_call.1} parent=1 // loop_body
      %s23 = ssub.s32 %s18, 1
      %s24 = ssub.s32 %s18, 2
      %s31 = sadd.s32 1, %s26
      %p32 = scmp.ge.s32.totalorder %s31, 1
      %s33 = scalar_select %p32, 0, %s31
      %s34 = sadd.s32 1, %s25
      %s35 = scalar_select %p32, %s34, %s25
      %p36 = scmp.ge.s32.totalorder %s35, 2
      %s37 = scalar_select %p36, 0, %s35
      %s39 = sadd.s32 %s38, 1
      %p42 = scmp.eq.s32.totalorder %s18, 1
      %p43 = scmp.ne.s32.totalorder %s38, %s40
      %p44 = scmp.eq.s32.totalorder %s18, 0
      %p45 = por %p43, %p44
      %p46 = scmp.ne.s32.totalorder %s38, %s40
      %p47 = scmp.eq.s32.totalorder %s23, 1
      %p48 = por %p46, %p47
      %p49 = scmp.ne.s32.totalorder %s40, %s41
      %p50 = scmp.eq.s32.totalorder %s23, 0
      %p51 = por %p49, %p50
      %p52 = scmp.ne.s32.totalorder %s40, %s41
      %p53 = scmp.eq.s32.totalorder %s24, 1
      %p54 = por %p52, %p53
      %p56 = scmp.ne.s32.totalorder %s41, %s55
      %p57 = scmp.eq.s32.totalorder %s24, 0
      %p58 = por %p56, %p57
      %s60 = sadd.s32 %s59, 1
      %p63 = scmp.eq.s32.totalorder %s18, 1
      %p64 = scmp.ne.s32.totalorder %s59, %s61
      %p65 = scmp.eq.s32.totalorder %s18, 0
      %p66 = por %p64, %p65
      %p67 = scmp.ne.s32.totalorder %s59, %s61
      %p68 = scmp.eq.s32.totalorder %s23, 1
      %p69 = por %p67, %p68
      %p70 = scmp.ne.s32.totalorder %s61, %s62
      %p71 = scmp.eq.s32.totalorder %s23, 0
      %p72 = por %p70, %p71
      %p73 = scmp.ne.s32.totalorder %s61, %s62
      %p74 = scmp.eq.s32.totalorder %s24, 1
      %p75 = por %p73, %p74
      %p77 = scmp.ne.s32.totalorder %s62, %s76
      %p78 = scmp.eq.s32.totalorder %s24, 0
      %p79 = por %p77, %p78
      %s81 = sadd.s32 %s80, 1
      %p84 = scmp.eq.s32.totalorder %s18, 1
      %p85 = scmp.ne.s32.totalorder %s80, %s82
      %p86 = scmp.eq.s32.totalorder %s18, 0
      %p87 = por %p85, %p86
      %p88 = scmp.ne.s32.totalorder %s80, %s82
      %p89 = scmp.eq.s32.totalorder %s23, 1
      %p90 = por %p88, %p89
      %p91 = scmp.ne.s32.totalorder %s82, %s83
      %p92 = scmp.eq.s32.totalorder %s23, 0
      %p93 = por %p91, %p92
      %p94 = scmp.ne.s32.totalorder %s82, %s83
      %p95 = scmp.eq.s32.totalorder %s24, 1
      %p96 = por %p94, %p95
      %p98 = scmp.ne.s32.totalorder %s83, %s97
      %p99 = scmp.eq.s32.totalorder %s24, 0
      %p100 = por %p98, %p99
      %s102 = sadd.s32 %s101, 1
      %p105 = scmp.eq.s32.totalorder %s18, 1
      %p106 = scmp.ne.s32.totalorder %s101, %s103
      %p107 = scmp.eq.s32.totalorder %s18, 0
      %p108 = por %p106, %p107
      %p109 = scmp.ne.s32.totalorder %s101, %s103
      %p110 = scmp.eq.s32.totalorder %s23, 1
      %p111 = por %p109, %p110
      %p112 = scmp.ne.s32.totalorder %s103, %s104
      %p113 = scmp.eq.s32.totalorder %s23, 0
      %p114 = por %p112, %p113
      %p115 = scmp.ne.s32.totalorder %s103, %s104
      %p116 = scmp.eq.s32.totalorder %s24, 1
      %p117 = por %p115, %p116
      %p119 = scmp.ne.s32.totalorder %s104, %s118
      %p120 = scmp.eq.s32.totalorder %s24, 0
      %p121 = por %p119, %p120
      %s123 = sadd.s32 %s122, 1
      %p126 = scmp.eq.s32.totalorder %s18, 1
      %p127 = scmp.ne.s32.totalorder %s122, %s124
      %p128 = scmp.eq.s32.totalorder %s18, 0
      %p129 = por %p127, %p128
      %p130 = scmp.ne.s32.totalorder %s122, %s124
      %p131 = scmp.eq.s32.totalorder %s23, 1
      %p132 = por %p130, %p131
      %p133 = scmp.ne.s32.totalorder %s124, %s125
      %p134 = scmp.eq.s32.totalorder %s23, 0
      %p135 = por %p133, %p134
      %p136 = scmp.ne.s32.totalorder %s124, %s125
      %p137 = scmp.eq.s32.totalorder %s24, 1
      %p138 = por %p136, %p137
      %p140 = scmp.ne.s32.totalorder %s125, %s139
      %p141 = scmp.eq.s32.totalorder %s24, 0
      %p142 = por %p140, %p141
      %s144 = sadd.s32 %s143, 1
      %p147 = scmp.eq.s32.totalorder %s18, 1
      %p148 = scmp.ne.s32.totalorder %s143, %s145
      %p149 = scmp.eq.s32.totalorder %s18, 0
      %p150 = por %p148, %p149
      %p151 = scmp.ne.s32.totalorder %s143, %s145
      %p152 = scmp.eq.s32.totalorder %s23, 1
      %p153 = por %p151, %p152
      %p154 = scmp.ne.s32.totalorder %s145, %s146
      %p155 = scmp.eq.s32.totalorder %s23, 0
      %p156 = por %p154, %p155
      %p157 = scmp.ne.s32.totalorder %s145, %s146
      %p158 = scmp.eq.s32.totalorder %s24, 1
      %p159 = por %p157, %p158
      %p161 = scmp.ne.s32.totalorder %s146, %s160
      %p162 = scmp.eq.s32.totalorder %s24, 0
      %p163 = por %p161, %p162
      %s164 = ssub.s32 %s25, %s37
      %s165 = ssub.s32 %s26, %s33
      %s166 = sor.u32 %s164, %s165
      %p167 = scmp.eq.s32.totalorder %s166, 0
      %s169 = sadd.s32 %s168, 1
      %s170 = scalar_select %p167, %s168, %s169
      %p173 = pneg %p167
      %p174 = scmp.eq.s32.totalorder %s18, 1
      %p175 = por %p173, %p174
      %p176 = scmp.ne.s32.totalorder %s168, %s171
      %p177 = scmp.eq.s32.totalorder %s18, 0
      %p178 = por %p176, %p177
      %p179 = scmp.ne.s32.totalorder %s168, %s171
      %p180 = scmp.eq.s32.totalorder %s23, 1
      %p181 = por %p179, %p180
      %p182 = scmp.ne.s32.totalorder %s171, %s172
      %p183 = scmp.eq.s32.totalorder %s23, 0
      %p184 = por %p182, %p183
      %p185 = scmp.ne.s32.totalorder %s171, %s172
      %p186 = scmp.eq.s32.totalorder %s24, 1
      %p187 = por %p185, %p186
      %p189 = scmp.ne.s32.totalorder %s172, %s188
      %p190 = scmp.eq.s32.totalorder %s24, 0
      %p191 = por %p189, %p190
      %p192 = scmp.le.s32.totalorder 1, %s18
      %p193 = scmp.lt.s32.totalorder %s18, 3
      %p194 = pnand %p192, %p193
      %p195 = pneg %p194
      // Predicated region
      $region9: #{tpu_custom_call.1} parent=5 // pred_check
        _
      $region10: #{tpu_custom_call.1} parent=5 // pred_check_branch
        %197 = sbr.rel (%p194) target = $region12
      $region11: #{tpu_custom_call.1} parent=5 // pred_region
        %s198 = ssub.s32 %s18, 1
        // Predicated region
        $region13: #{tpu_custom_call.1} parent=11 // pred_check
          %p199 = pneg %p51
        $region14: #{tpu_custom_call.1} parent=11 // pred_check_branch
          %201 = sbr.rel (%p199) target = $region16
        $region15: #{tpu_custom_call.1} parent=11 // pred_region
          %s203 = ssub.s32 1024, 1024
          %204 = vsyncadd [#allocation6], %s203
          %s205 = sshll.u32 [#allocation5], 4
          %s206 = int_to_ptr.vmem [resolvable:$true] %s205
          %211 = dma.hbm_to_vmem [thread:$0]  %s1, 1024, %s206, [#allocation6], 64, 64, 4
        $region16: #{tpu_custom_call.1} parent=11 // pred_fallthru
          _
        // Predicated region
        $region17: #{tpu_custom_call.1} parent=11 // pred_check
          %p212 = pneg %p72
        $region18: #{tpu_custom_call.1} parent=11 // pred_check_branch
          %214 = sbr.rel (%p212) target = $region20
        $region19: #{tpu_custom_call.1} parent=11 // pred_region
          _
        $region20: #{tpu_custom_call.1} parent=11 // pred_fallthru
          _
        // Predicated region
        $region21: #{tpu_custom_call.1} parent=11 // pred_check
          %p215 = pneg %p93
        $region22: #{tpu_custom_call.1} parent=11 // pred_check_branch
          %217 = sbr.rel (%p215) target = $region24
        $region23: #{tpu_custom_call.1} parent=11 // pred_region
          _
        $region24: #{tpu_custom_call.1} parent=11 // pred_fallthru
          _
        // Predicated region
        $region25: #{tpu_custom_call.1} parent=11 // pred_check
          %p218 = pneg %p114
        $region26: #{tpu_custom_call.1} parent=11 // pred_check_branch
          %220 = sbr.rel (%p218) target = $region28
        $region27: #{tpu_custom_call.1} parent=11 // pred_region
          %s222 = ssub.s32 9216, 9216
          %223 = vsyncadd [#allocation9], %s222
          %s224 = sshll.u32 [#allocation8], 4
          %s225 = int_to_ptr.vmem [resolvable:$true] %s224
          %230 = dma.hbm_to_vmem [thread:$0]  %s4, 9216, %s225, [#allocation9], 64, 64, 4
        $region28: #{tpu_custom_call.1} parent=11 // pred_fallthru
          _
        // Predicated region
        $region29: #{tpu_custom_call.1} parent=11 // pred_check
          %p231 = pneg %p135
        $region30: #{tpu_custom_call.1} parent=11 // pred_check_branch
          %233 = sbr.rel (%p231) target = $region32
        $region31: #{tpu_custom_call.1} parent=11 // pred_region
          _
        $region32: #{tpu_custom_call.1} parent=11 // pred_fallthru
          _
        // Predicated region
        $region33: #{tpu_custom_call.1} parent=11 // pred_check
          %p234 = pneg %p156
        $region34: #{tpu_custom_call.1} parent=11 // pred_check_branch
          %236 = sbr.rel (%p234) target = $region36
        $region35: #{tpu_custom_call.1} parent=11 // pred_region
          _
        $region36: #{tpu_custom_call.1} parent=11 // pred_fallthru
          _
      $region12: #{tpu_custom_call.1} parent=5 // pred_fallthru
        _
      %p237 = scmp.lt.s32.totalorder %s18, 2
      // Predicated region
      $region37: #{tpu_custom_call.1} parent=5 // pred_check
        %p238 = pneg %p237
      $region38: #{tpu_custom_call.1} parent=5 // pred_check_branch
        %240 = sbr.rel (%p238) target = $region40
      $region39: #{tpu_custom_call.1} parent=5 // pred_region
        _
      $region40: #{tpu_custom_call.1} parent=5 // pred_fallthru
        _
      %p241 = scmp.le.s32.totalorder 1, %s18
      %p242 = scmp.lt.s32.totalorder %s18, 3
      %p243 = pnand %p241, %p242
      %p244 = pneg %p243
      // Predicated region
      $region41: #{tpu_custom_call.1} parent=5 // pred_check
        _
      $region42: #{tpu_custom_call.1} parent=5 // pred_check_branch
        %246 = sbr.rel (%p243) target = $region44
      $region43: #{tpu_custom_call.1} parent=5 // pred_region
        %s247 = ssub.s32 %s18, 1
        // Predicated region
        $region45: #{tpu_custom_call.1} parent=43 // pred_check
          %p248 = pneg %p51
        $region46: #{tpu_custom_call.1} parent=43 // pred_check_branch
          %250 = sbr.rel (%p248) target = $region48
        $region47: #{tpu_custom_call.1} parent=43 // pred_region
          %251 = dma.done [#allocation6], 1024
        $region48: #{tpu_custom_call.1} parent=43 // pred_fallthru
          _
        // Predicated region
        $region49: #{tpu_custom_call.1} parent=43 // pred_check
          %p252 = pneg %p114
        $region50: #{tpu_custom_call.1} parent=43 // pred_check_branch
          %254 = sbr.rel (%p252) target = $region52
        $region51: #{tpu_custom_call.1} parent=43 // pred_region
          %255 = dma.done [#allocation9], 9216
        $region52: #{tpu_custom_call.1} parent=43 // pred_fallthru
          _
        %p256 = pneg %p51
        %p257 = pneg %p48
        %p258 = pneg %p72
        %p259 = pneg %p69
        %p260 = pneg %p93
        %p261 = pneg %p90
        %p262 = pneg %p114
        %p263 = pneg %p111
        %p264 = pneg %p135
        %p265 = pneg %p132
        %p266 = pneg %p156
        %p267 = pneg %p153
        %p268 = pneg %p184
        %p269 = pneg %p181
        %s270 = sand.u32 %s171, 1
        %s271 = scalar_lea.sflag [#allocation7], %s270
        %s272 = sand.u32 %s171, 1
        %s273 = smul.addr %s272, 128
        %s274 = scalar_lea.vmem [#allocation10], %s273
        %s275 = smul.u32 16, %s28
        %s277 = smul.u32 %s28, 16
        %s278 = smul.u32 %s277, 2
        %s279 = smul.u32 %s27, 32
        %s280 = sadd.s32 %s278, %s279
        %s281 = smul.addr %s280, 64
        %s282 = scalar_lea.hbm %s0, %s281
        %s283 = scalar_lea.vmem [#allocation2], 8
        // Predicated region
        $region53: #{tpu_custom_call.1} parent=43 // pred_check
          _
        $region54: #{tpu_custom_call.1} parent=43 // pred_check_branch
          %285 = sbr.rel target = $region56
        $region55: #{tpu_custom_call.1} parent=43 // pred_region
          %286 = sst [smem:[#allocation13]] [#allocation12]
          %287 = sst [smem:[#allocation14]] [#allocation11]
        $region56: #{tpu_custom_call.1} parent=43 // pred_fallthru
          _
        %289 = shalt.err (0)
        %s291 = sshll.u32 %s283, 4
        %s292 = int_to_ptr.vmem [resolvable:$true] %s291
        %294 = dma.hbm_to_vmem [thread:$0]  %s282, 2048, %s292, [#allocation4]
        %s295 = ssub.s32 %s277, 1
        %p296 = scmp.ge.s32.totalorder %s295, 0
        // Predicated region
        $region57: #{tpu_custom_call.1} parent=43 // pred_check
          %p297 = pneg %p296
        $region58: #{tpu_custom_call.1} parent=43 // pred_check_branch
          %299 = sbr.rel (%p297) target = $region60
        $region59: #{tpu_custom_call.1} parent=43 // pred_region
          %s300 = smul.u32 %s295, 2
          %s301 = sadd.s32 %s300, %s279
          %s302 = smul.addr %s301, 64
          %s303 = scalar_lea.hbm %s0, %s302
          %s304 = scalar_lea.sflag [#allocation4], 1
          // Predicated region
          $region61: #{tpu_custom_call.1} parent=59 // pred_check
            _
          $region62: #{tpu_custom_call.1} parent=59 // pred_check_branch
            %306 = sbr.rel target = $region64
          $region63: #{tpu_custom_call.1} parent=59 // pred_region
            %307 = sst [smem:[#allocation13]] [#allocation16]
            %308 = sst [smem:[#allocation14]] [#allocation15]
          $region64: #{tpu_custom_call.1} parent=59 // pred_fallthru
            _
          %310 = shalt.err (0)
          %s312 = sshll.u32 [#allocation2], 4
          %s313 = int_to_ptr.vmem [resolvable:$true] %s312
          %315 = dma.hbm_to_vmem [thread:$0]  %s303, 128, %s313, %s304
          %s316 = smul.u32 4, 1
          %s317 = smul.u32 %s316, 2
          %s318 = smul.u32 %s317, 1
          %s319 = sshll.u32 %s318, 4
          %320 = dma.done %s304, %s319
        $region60: #{tpu_custom_call.1} parent=43 // pred_fallthru
          _
        %p321 = scmp.lt.s32.totalorder %s295, 0
        // Predicated region
        $region65: #{tpu_custom_call.1} parent=43 // pred_check
          %p322 = pneg %p321
        $region66: #{tpu_custom_call.1} parent=43 // pred_check_branch
          %324 = sbr.rel (%p322) target = $region68
        $region67: #{tpu_custom_call.1} parent=43 // pred_region
          %325 = vst [vmem:[#allocation2] sm:$0xf] 0
          %326 = vst [vmem:[#allocation2 + $0x4] sm:$0xf] 0
        $region68: #{tpu_custom_call.1} parent=43 // pred_fallthru
          _
        %s327 = sadd.s32 %s277, 16
        %p328 = scmp.lt.s32.totalorder %s327, 16
        // Predicated region
        $region69: #{tpu_custom_call.1} parent=43 // pred_check
          %p329 = pneg %p328
        $region70: #{tpu_custom_call.1} parent=43 // pred_check_branch
          %331 = sbr.rel (%p329) target = $region72
        $region71: #{tpu_custom_call.1} parent=43 // pred_region
          %s332 = smul.u32 %s327, 2
          %s333 = sadd.s32 %s332, %s279
          %s334 = smul.addr %s333, 64
          %s335 = scalar_lea.hbm %s0, %s334
          %s336 = scalar_lea.vmem [#allocation2], 136
          %s337 = scalar_lea.sflag [#allocation4], 2
          // Predicated region
          $region73: #{tpu_custom_call.1} parent=71 // pred_check
            _
          $region74: #{tpu_custom_call.1} parent=71 // pred_check_branch
            %339 = sbr.rel target = $region76
          $region75: #{tpu_custom_call.1} parent=71 // pred_region
            %340 = sst [smem:[#allocation13]] [#allocation18]
            %341 = sst [smem:[#allocation14]] [#allocation17]
          $region76: #{tpu_custom_call.1} parent=71 // pred_fallthru
            _
          %343 = shalt.err (0)
          %s345 = sshll.u32 %s336, 4
          %s346 = int_to_ptr.vmem [resolvable:$true] %s345
          %348 = dma.hbm_to_vmem [thread:$0]  %s335, 128, %s346, %s337
          %s349 = smul.u32 4, 1
          %s350 = smul.u32 %s349, 2
          %s351 = smul.u32 %s350, 1
          %s352 = sshll.u32 %s351, 4
          %353 = dma.done %s337, %s352
        $region72: #{tpu_custom_call.1} parent=43 // pred_fallthru
          _
        %p354 = scmp.ge.s32.totalorder %s327, 16
        // Predicated region
        $region77: #{tpu_custom_call.1} parent=43 // pred_check
          %p355 = pneg %p354
        $region78: #{tpu_custom_call.1} parent=43 // pred_check_branch
          %357 = sbr.rel (%p355) target = $region80
        $region79: #{tpu_custom_call.1} parent=43 // pred_region
          %s358 = scalar_lea.vmem [#allocation2], 136
          %359 = vst [vmem:[%s358] sm:$0xf] 0
          %360 = vst [vmem:[%s358 + $0x4] sm:$0xf] 0
        $region80: #{tpu_custom_call.1} parent=43 // pred_fallthru
          _
        %s361 = smul.u32 4, 16
        %s362 = smul.u32 %s361, 2
        %s363 = smul.u32 %s362, 1
        %s364 = sshll.u32 %s363, 4
        %365 = dma.done [#allocation4], %s364
        %v366 = vld [vmem:[#allocation2] sm:$0xf]
        %v367 = vld [vmem:[#allocation2 + $0x4] sm:$0xf]
        %v368 = vld [vmem:[#allocation2 + $0x8] sm:$0xf]
        %v369 = vld [vmem:[#allocation2 + $0xc] sm:$0xf]
        %v370 = vld [vmem:[#allocation2 + $0x10] sm:$0xf]
        %v371 = vld [vmem:[#allocation2 + $0x14] sm:$0xf]
        %v372 = vld [vmem:[#allocation2 + $0x18] sm:$0xf]
        %v373 = vld [vmem:[#allocation2 + $0x1c] sm:$0xf]
        %v374 = vld [vmem:[#allocation2 + $0x20] sm:$0xf]
        %v375 = vld [vmem:[#allocation2 + $0x24] sm:$0xf]
        %v376 = vld [vmem:[#allocation2 + $0x28] sm:$0xf]
        %v377 = vld [vmem:[#allocation2 + $0x2c] sm:$0xf]
        %v378 = vld [vmem:[#allocation2 + $0x30] sm:$0xf]
        %v379 = vld [vmem:[#allocation2 + $0x34] sm:$0xf]
        %v380 = vld [vmem:[#allocation2 + $0x38] sm:$0xf]
        %v381 = vld [vmem:[#allocation2 + $0x3c] sm:$0xf]
        %v382 = vld [vmem:[#allocation2 + $0x40] sm:$0xf]
        %v383 = vld [vmem:[#allocation2 + $0x44] sm:$0xf]
        %v384 = vld [vmem:[#allocation2 + $0x48] sm:$0xf]
        %v385 = vld [vmem:[#allocation2 + $0x4c] sm:$0xf]
        %v386 = vld [vmem:[#allocation2 + $0x50] sm:$0xf]
        %v387 = vld [vmem:[#allocation2 + $0x54] sm:$0xf]
        %v388 = vld [vmem:[#allocation2 + $0x58] sm:$0xf]
        %v389 = vld [vmem:[#allocation2 + $0x5c] sm:$0xf]
        %v390 = vld [vmem:[#allocation2 + $0x60] sm:$0xf]
        %v391 = vld [vmem:[#allocation2 + $0x64] sm:$0xf]
        %v392 = vld [vmem:[#allocation2 + $0x68] sm:$0xf]
        %v393 = vld [vmem:[#allocation2 + $0x6c] sm:$0xf]
        %v394 = vld [vmem:[#allocation2 + $0x70] sm:$0xf]
        %v395 = vld [vmem:[#allocation2 + $0x74] sm:$0xf]
        %v396 = vld [vmem:[#allocation2 + $0x78] sm:$0xf]
        %v397 = vld [vmem:[#allocation2 + $0x7c] sm:$0xf]
        %v398 = vld [vmem:[#allocation2 + $0x80] sm:$0xf]
        %v399 = vld [vmem:[#allocation2 + $0x84] sm:$0xf]
        %v400 = vld [vmem:[#allocation2 + $0x88] sm:$0xf]
        %v401 = vld [vmem:[#allocation2 + $0x8c] sm:$0xf]
        %v402 = vld [vmem:[#allocation5] sm:$0xf]
        %v403 = vld [vmem:[#allocation5 + $0x4] sm:$0xf]
        %v404 = vld [vmem:[#allocation5 + $0x8] sm:$0xf]
        %v405 = vld [vmem:[#allocation5 + $0xc] sm:$0xf]
        %v406 = vld [vmem:[#allocation5 + $0x10] sm:$0xf]
        %v407 = vld [vmem:[#allocation5 + $0x14] sm:$0xf]
        %v408 = vld [vmem:[#allocation5 + $0x18] sm:$0xf]
        %v409 = vld [vmem:[#allocation5 + $0x1c] sm:$0xf]
        %v410 = vld [vmem:[#allocation5 + $0x20] sm:$0xf]
        %v411 = vld [vmem:[#allocation5 + $0x24] sm:$0xf]
        %v412 = vld [vmem:[#allocation5 + $0x28] sm:$0xf]
        %v413 = vld [vmem:[#allocation5 + $0x2c] sm:$0xf]
        %v414 = vld [vmem:[#allocation5 + $0x30] sm:$0xf]
        %v415 = vld [vmem:[#allocation5 + $0x34] sm:$0xf]
        %v416 = vld [vmem:[#allocation5 + $0x38] sm:$0xf]
        %v417 = vld [vmem:[#allocation5 + $0x3c] sm:$0xf]
        %v454 = vunpack.c.l.b16 %v366
        %v455 = vunpack.c.l.b16 %v367
        %v456 = vunpack.c.l.b16 %v368
        %v457 = vunpack.c.l.b16 %v369
        %v458 = vunpack.c.l.b16 %v370
        %v459 = vunpack.c.l.b16 %v371
        %v460 = vunpack.c.l.b16 %v372
        %v461 = vunpack.c.l.b16 %v373
        %v462 = vunpack.c.l.b16 %v374
        %v463 = vunpack.c.l.b16 %v375
        %v464 = vunpack.c.l.b16 %v376
        %v465 = vunpack.c.l.b16 %v377
        %v466 = vunpack.c.l.b16 %v378
        %v467 = vunpack.c.l.b16 %v379
        %v468 = vunpack.c.l.b16 %v380
        %v469 = vunpack.c.l.b16 %v381
        %v470 = vunpack.c.l.b16 %v382
        %v471 = vunpack.c.l.b16 %v383
        %v472 = vunpack.c.l.b16 %v384
        %v473 = vunpack.c.l.b16 %v385
        %v474 = vunpack.c.l.b16 %v386
        %v475 = vunpack.c.l.b16 %v387
        %v476 = vunpack.c.l.b16 %v388
        %v477 = vunpack.c.l.b16 %v389
        %v478 = vunpack.c.l.b16 %v390
        %v479 = vunpack.c.l.b16 %v391
        %v480 = vunpack.c.l.b16 %v392
        %v481 = vunpack.c.l.b16 %v393
        %v482 = vunpack.c.l.b16 %v394
        %v483 = vunpack.c.l.b16 %v395
        %v484 = vunpack.c.l.b16 %v396
        %v485 = vunpack.c.l.b16 %v397
        %v486 = vunpack.c.l.b16 %v398
        %v487 = vunpack.c.l.b16 %v399
        %v488 = vunpack.c.l.b16 %v400
        %v489 = vunpack.c.l.b16 %v401
        %v490 = vpack.c.b16 %v455, %v454
        %v491 = vpack.c.b16 %v457, %v456
        %v492 = vpack.c.b16 %v459, %v458
        %v493 = vpack.c.b16 %v461, %v460
        %v494 = vpack.c.b16 %v463, %v462
        %v495 = vpack.c.b16 %v465, %v464
        %v496 = vpack.c.b16 %v467, %v466
        %v497 = vpack.c.b16 %v469, %v468
        %v498 = vpack.c.b16 %v471, %v470
        %v499 = vpack.c.b16 %v473, %v472
        %v500 = vpack.c.b16 %v475, %v474
        %v501 = vpack.c.b16 %v477, %v476
        %v502 = vpack.c.b16 %v479, %v478
        %v503 = vpack.c.b16 %v481, %v480
        %v504 = vpack.c.b16 %v483, %v482
        %v505 = vpack.c.b16 %v485, %v484
        %v506 = vpack.c.b16 %v487, %v486
        %v507 = vpack.c.b16 %v489, %v488
        %v542 = vunpack.c.l.b16 %v402
        %v543 = vunpack.c.l.b16 %v403
        %v544 = vunpack.c.l.b16 %v404
        %v545 = vunpack.c.l.b16 %v405
        %v546 = vunpack.c.l.b16 %v406
        %v547 = vunpack.c.l.b16 %v407
        %v548 = vunpack.c.l.b16 %v408
        %v549 = vunpack.c.l.b16 %v409
        %v550 = vunpack.c.l.b16 %v410
        %v551 = vunpack.c.l.b16 %v411
        %v552 = vunpack.c.l.b16 %v412
        %v553 = vunpack.c.l.b16 %v413
        %v554 = vunpack.c.l.b16 %v414
        %v555 = vunpack.c.l.b16 %v415
        %v556 = vunpack.c.l.b16 %v416
        %v557 = vunpack.c.l.b16 %v417
        %v558 = vpack.c.b16 %v543, %v542
        %v559 = vpack.c.b16 %v545, %v544
        %v560 = vpack.c.b16 %v547, %v546
        %v561 = vpack.c.b16 %v549, %v548
        %v562 = vpack.c.b16 %v551, %v550
        %v563 = vpack.c.b16 %v553, %v552
        %v564 = vpack.c.b16 %v555, %v554
        %v565 = vpack.c.b16 %v557, %v556
        %574 = vmatprep.subr.bf16.mxu0 0
        %575 = vmatpush1.bf16.msra.mxu0 %v565
        %576 = vmatprep.subr.bf16.mxu0 0
        %577 = vmatpush1.bf16.msra.mxu0 %v564
        %578 = vmatprep.subr.bf16.mxu0 0
        %579 = vmatpush1.bf16.msra.mxu0 %v563
        %580 = vmatprep.subr.bf16.mxu0 0
        %581 = vmatpush1.bf16.msra.mxu0 %v562
        %582 = vmatprep.subr.bf16.mxu0 0
        %583 = vmatpush1.bf16.msra.mxu0 %v561
        %584 = vmatprep.subr.bf16.mxu0 0
        %585 = vmatpush1.bf16.msra.mxu0 %v560
        %586 = vmatprep.subr.bf16.mxu0 0
        %587 = vmatpush1.bf16.msra.mxu0 %v559
        %588 = vmatprep.subr.bf16.mxu0 0
        %589 = vmatpush1.bf16.msra.mxu0 %v558
        %590 = vmatprep.subr.bf16.mxu0 0
        %591 = vmatpush2.bf16.msra.mxu0 0
        %592 = vmatprep.subr.bf16.mxu0 0
        %593 = vmatpush2.bf16.msra.mxu0 0
        %594 = vmatprep.subr.bf16.mxu0 0
        %595 = vmatpush2.bf16.msra.mxu0 0
        %596 = vmatprep.subr.bf16.mxu0 0
        %597 = vmatpush2.bf16.msra.mxu0 0
        %598 = vmatprep.subr.bf16.mxu0 0
        %599 = vmatpush2.bf16.msra.mxu0 0
        %600 = vmatprep.subr.bf16.mxu0 0
        %601 = vmatpush2.bf16.msra.mxu0 0
        %602 = vmatprep.subr.bf16.mxu0 0
        %603 = vmatpush2.bf16.msra.mxu0 0
        %604 = vmatprep.subr.bf16.mxu0 0
        %605 = vmatpush2.bf16.msra.mxu0 0
        %606 = vmatprep.mubr.bf16.mxu0 0
        %607 = vmatmul.mubr.bf16.gmra.mxu0 %v490
        %v608 = vpop.f32.mrf.mxu0
        %v609 = vadd.f32 0.0, %v608
        %v610 = vpop.f32.mrf.mxu0
        %v611 = vpop.f32.mrf.mxu0
        %v612 = vadd.f32 0.0, %v611
        %v613 = vpop.f32.mrf.mxu0
        %614 = vmatprep.mubr.bf16.mxu0 0
        %615 = vmatmul.mubr.bf16.gmra.mxu0 %v491
        %v616 = vpop.f32.mrf.mxu0
        %v617 = vadd.f32 0.0, %v616
        %v618 = vpop.f32.mrf.mxu0
        %v619 = vpop.f32.mrf.mxu0
        %v620 = vadd.f32 0.0, %v619
        %v621 = vpop.f32.mrf.mxu0
        %622 = vmatprep.mubr.bf16.mxu0 0
        %623 = vmatmul.mubr.bf16.gmra.mxu0 %v492
        %v624 = vpop.f32.mrf.mxu0
        %v625 = vadd.f32 0.0, %v624
        %v626 = vpop.f32.mrf.mxu0
        %v627 = vpop.f32.mrf.mxu0
        %v628 = vadd.f32 0.0, %v627
        %v629 = vpop.f32.mrf.mxu0
        %630 = vmatprep.mubr.bf16.mxu0 0
        %631 = vmatmul.mubr.bf16.gmra.mxu0 %v493
        %v632 = vpop.f32.mrf.mxu0
        %v633 = vadd.f32 0.0, %v632
        %v634 = vpop.f32.mrf.mxu0
        %v635 = vpop.f32.mrf.mxu0
        %v636 = vadd.f32 0.0, %v635
        %v637 = vpop.f32.mrf.mxu0
        %638 = vmatprep.mubr.bf16.mxu0 0
        %639 = vmatmul.mubr.bf16.gmra.mxu0 %v494
        %v640 = vpop.f32.mrf.mxu0
        %v641 = vadd.f32 0.0, %v640
        %v642 = vpop.f32.mrf.mxu0
        %v643 = vpop.f32.mrf.mxu0
        %v644 = vadd.f32 0.0, %v643
        %v645 = vpop.f32.mrf.mxu0
        %646 = vmatprep.mubr.bf16.mxu0 0
        %647 = vmatmul.mubr.bf16.gmra.mxu0 %v495
        %v648 = vpop.f32.mrf.mxu0
        %v649 = vadd.f32 0.0, %v648
        %v650 = vpop.f32.mrf.mxu0
        %v651 = vpop.f32.mrf.mxu0
        %v652 = vadd.f32 0.0, %v651
        %v653 = vpop.f32.mrf.mxu0
        %654 = vmatprep.mubr.bf16.mxu0 0
        %655 = vmatmul.mubr.bf16.gmra.mxu0 %v496
        %v656 = vpop.f32.mrf.mxu0
        %v657 = vadd.f32 0.0, %v656
        %v658 = vpop.f32.mrf.mxu0
        %v659 = vpop.f32.mrf.mxu0
        %v660 = vadd.f32 0.0, %v659
        %v661 = vpop.f32.mrf.mxu0
        %662 = vmatprep.mubr.bf16.mxu0 0
        %663 = vmatmul.mubr.bf16.gmra.mxu0 %v497
        %v664 = vpop.f32.mrf.mxu0
        %v665 = vadd.f32 0.0, %v664
        %v666 = vpop.f32.mrf.mxu0
        %v667 = vpop.f32.mrf.mxu0
        %v668 = vadd.f32 0.0, %v667
        %v669 = vpop.f32.mrf.mxu0
        %670 = vmatprep.mubr.bf16.mxu0 0
        %671 = vmatmul.mubr.bf16.gmra.mxu0 %v498
        %v672 = vpop.f32.mrf.mxu0
        %v673 = vadd.f32 0.0, %v672
        %v674 = vpop.f32.mrf.mxu0
        %v675 = vpop.f32.mrf.mxu0
        %v676 = vadd.f32 0.0, %v675
        %v677 = vpop.f32.mrf.mxu0
        %678 = vmatprep.mubr.bf16.mxu0 0
        %679 = vmatmul.mubr.bf16.gmra.mxu0 %v499
        %v680 = vpop.f32.mrf.mxu0
        %v681 = vadd.f32 0.0, %v680
        %v682 = vpop.f32.mrf.mxu0
        %v683 = vpop.f32.mrf.mxu0
        %v684 = vadd.f32 0.0, %v683
        %v685 = vpop.f32.mrf.mxu0
        %686 = vmatprep.mubr.bf16.mxu0 0
        %687 = vmatmul.mubr.bf16.gmra.mxu0 %v500
        %v688 = vpop.f32.mrf.mxu0
        %v689 = vadd.f32 0.0, %v688
        %v690 = vpop.f32.mrf.mxu0
        %v691 = vpop.f32.mrf.mxu0
        %v692 = vadd.f32 0.0, %v691
        %v693 = vpop.f32.mrf.mxu0
        %694 = vmatprep.mubr.bf16.mxu0 0
        %695 = vmatmul.mubr.bf16.gmra.mxu0 %v501
        %v696 = vpop.f32.mrf.mxu0
        %v697 = vadd.f32 0.0, %v696
        %v698 = vpop.f32.mrf.mxu0
        %v699 = vpop.f32.mrf.mxu0
        %v700 = vadd.f32 0.0, %v699
        %v701 = vpop.f32.mrf.mxu0
        %702 = vmatprep.mubr.bf16.mxu0 0
        %703 = vmatmul.mubr.bf16.gmra.mxu0 %v502
        %v704 = vpop.f32.mrf.mxu0
        %v705 = vadd.f32 0.0, %v704
        %v706 = vpop.f32.mrf.mxu0
        %v707 = vpop.f32.mrf.mxu0
        %v708 = vadd.f32 0.0, %v707
        %v709 = vpop.f32.mrf.mxu0
        %710 = vmatprep.mubr.bf16.mxu0 0
        %711 = vmatmul.mubr.bf16.gmra.mxu0 %v503
        %v712 = vpop.f32.mrf.mxu0
        %v713 = vadd.f32 0.0, %v712
        %v714 = vpop.f32.mrf.mxu0
        %v715 = vpop.f32.mrf.mxu0
        %v716 = vadd.f32 0.0, %v715
        %v717 = vpop.f32.mrf.mxu0
        %718 = vmatprep.mubr.bf16.mxu0 0
        %719 = vmatmul.mubr.bf16.gmra.mxu0 %v504
        %v720 = vpop.f32.mrf.mxu0
        %v721 = vadd.f32 0.0, %v720
        %v722 = vpop.f32.mrf.mxu0
        %v723 = vpop.f32.mrf.mxu0
        %v724 = vadd.f32 0.0, %v723
        %v725 = vpop.f32.mrf.mxu0
        %726 = vmatprep.mubr.bf16.mxu0 0
        %727 = vmatmul.mubr.bf16.gmra.mxu0 %v505
        %v728 = vpop.f32.mrf.mxu0
        %v729 = vadd.f32 0.0, %v728
        %v730 = vpop.f32.mrf.mxu0
        %v731 = vpop.f32.mrf.mxu0
        %v732 = vadd.f32 0.0, %v731
        %v733 = vpop.f32.mrf.mxu0
        %734 = vmatprep.mubr.bf16.mxu0 0
        %735 = vmatmul.mubr.bf16.gmra.mxu0 %v506
        %v736 = vpop.f32.mrf.mxu0
        %v737 = vadd.f32 0.0, %v736
        %v738 = vpop.f32.mrf.mxu0
        %v739 = vpop.f32.mrf.mxu0
        %v740 = vadd.f32 0.0, %v739
        %v741 = vpop.f32.mrf.mxu0
        %742 = vmatprep.mubr.bf16.mxu0 0
        %743 = vmatmul.mubr.bf16.gmra.mxu0 %v507
        %v744 = vpop.f32.mrf.mxu0
        %v745 = vadd.f32 0.0, %v744
        %v746 = vpop.f32.mrf.mxu0
        %v747 = vpop.f32.mrf.mxu0
        %v748 = vadd.f32 0.0, %v747
        %v749 = vpop.f32.mrf.mxu0
        %750 = vdwg.mxu0
        %v751 = vld [vmem:[%s2] sm:$0x1]
        %v753 = vlaneseq
        %v754 = vshrl.u32 %v753, 7
        %v755 = vsub.s32 0, %v754
        %v756 = vrot.slane %v751, %v755
        %v758 = vmul.f32 %v609, %v756
        %v759 = vmul.f32 %v612, %v756
        %v760 = vmul.f32 %v617, %v756
        %v761 = vmul.f32 %v620, %v756
        %v762 = vmul.f32 %v625, %v756
        %v763 = vmul.f32 %v628, %v756
        %v764 = vmul.f32 %v633, %v756
        %v765 = vmul.f32 %v636, %v756
        %v766 = vmul.f32 %v641, %v756
        %v767 = vmul.f32 %v644, %v756
        %v768 = vmul.f32 %v649, %v756
        %v769 = vmul.f32 %v652, %v756
        %v770 = vmul.f32 %v657, %v756
        %v771 = vmul.f32 %v660, %v756
        %v772 = vmul.f32 %v665, %v756
        %v773 = vmul.f32 %v668, %v756
        %v774 = vmul.f32 %v673, %v756
        %v775 = vmul.f32 %v676, %v756
        %v776 = vmul.f32 %v681, %v756
        %v777 = vmul.f32 %v684, %v756
        %v778 = vmul.f32 %v689, %v756
        %v779 = vmul.f32 %v692, %v756
        %v780 = vmul.f32 %v697, %v756
        %v781 = vmul.f32 %v700, %v756
        %v782 = vmul.f32 %v705, %v756
        %v783 = vmul.f32 %v708, %v756
        %v784 = vmul.f32 %v713, %v756
        %v785 = vmul.f32 %v716, %v756
        %v786 = vmul.f32 %v721, %v756
        %v787 = vmul.f32 %v724, %v756
        %v788 = vmul.f32 %v729, %v756
        %v789 = vmul.f32 %v732, %v756
        %v790 = vmul.f32 %v737, %v756
        %v791 = vmul.f32 %v740, %v756
        %v792 = vmul.f32 %v745, %v756
        %v793 = vmul.f32 %v748, %v756
        %v794 = vld [vmem:[%s3] sm:$0x1]
        %v796 = vlaneseq
        %v797 = vshrl.u32 %v796, 7
        %v798 = vsub.s32 0, %v797
        %v799 = vrot.slane %v794, %v798
        %v801 = vadd.f32 %v758, %v799
        %v802 = vadd.f32 %v759, %v799
        %v803 = vadd.f32 %v760, %v799
        %v804 = vadd.f32 %v761, %v799
        %v805 = vadd.f32 %v762, %v799
        %v806 = vadd.f32 %v763, %v799
        %v807 = vadd.f32 %v764, %v799
        %v808 = vadd.f32 %v765, %v799
        %v809 = vadd.f32 %v766, %v799
        %v810 = vadd.f32 %v767, %v799
        %v811 = vadd.f32 %v768, %v799
        %v812 = vadd.f32 %v769, %v799
        %v813 = vadd.f32 %v770, %v799
        %v814 = vadd.f32 %v771, %v799
        %v815 = vadd.f32 %v772, %v799
        %v816 = vadd.f32 %v773, %v799
        %v817 = vadd.f32 %v774, %v799
        %v818 = vadd.f32 %v775, %v799
        %v819 = vadd.f32 %v776, %v799
        %v820 = vadd.f32 %v777, %v799
        %v821 = vadd.f32 %v778, %v799
        %v822 = vadd.f32 %v779, %v799
        %v823 = vadd.f32 %v780, %v799
        %v824 = vadd.f32 %v781, %v799
        %v825 = vadd.f32 %v782, %v799
        %v826 = vadd.f32 %v783, %v799
        %v827 = vadd.f32 %v784, %v799
        %v828 = vadd.f32 %v785, %v799
        %v829 = vadd.f32 %v786, %v799
        %v830 = vadd.f32 %v787, %v799
        %v831 = vadd.f32 %v788, %v799
        %v832 = vadd.f32 %v789, %v799
        %v833 = vadd.f32 %v790, %v799
        %v834 = vadd.f32 %v791, %v799
        %v835 = vadd.f32 %v792, %v799
        %v836 = vadd.f32 %v793, %v799
        %v837 = vmax.f32 %v801, 0.0
        %v838 = vmax.f32 %v802, 0.0
        %v839 = vmax.f32 %v803, 0.0
        %v840 = vmax.f32 %v804, 0.0
        %v841 = vmax.f32 %v805, 0.0
        %v842 = vmax.f32 %v806, 0.0
        %v843 = vmax.f32 %v807, 0.0
        %v844 = vmax.f32 %v808, 0.0
        %v845 = vmax.f32 %v809, 0.0
        %v846 = vmax.f32 %v810, 0.0
        %v847 = vmax.f32 %v811, 0.0
        %v848 = vmax.f32 %v812, 0.0
        %v849 = vmax.f32 %v813, 0.0
        %v850 = vmax.f32 %v814, 0.0
        %v851 = vmax.f32 %v815, 0.0
        %v852 = vmax.f32 %v816, 0.0
        %v853 = vmax.f32 %v817, 0.0
        %v854 = vmax.f32 %v818, 0.0
        %v855 = vmax.f32 %v819, 0.0
        %v856 = vmax.f32 %v820, 0.0
        %v857 = vmax.f32 %v821, 0.0
        %v858 = vmax.f32 %v822, 0.0
        %v859 = vmax.f32 %v823, 0.0
        %v860 = vmax.f32 %v824, 0.0
        %v861 = vmax.f32 %v825, 0.0
        %v862 = vmax.f32 %v826, 0.0
        %v863 = vmax.f32 %v827, 0.0
        %v864 = vmax.f32 %v828, 0.0
        %v865 = vmax.f32 %v829, 0.0
        %v866 = vmax.f32 %v830, 0.0
        %v867 = vmax.f32 %v831, 0.0
        %v868 = vmax.f32 %v832, 0.0
        %v869 = vmax.f32 %v833, 0.0
        %v870 = vmax.f32 %v834, 0.0
        %v871 = vmax.f32 %v835, 0.0
        %v872 = vmax.f32 %v836, 0.0
        %vm873 = vcmask 1043459
        %vm874 = vsmask.f32 7950
        %vm875 = vmand %vm873, %vm874
        %v876 = vld [vmem:[#allocation3 + $0x4] sm:$0x8]
        %v877 = vsel %vm875, 0, %v876
        %878 = vst [vmem:[#allocation3 + $0x4] sm:$0x8] %v877
        %v879 = vld [vmem:[#allocation3 + $0x18] sm:$0x8]
        %v880 = vsel %vm875, 0, %v879
        %881 = vst [vmem:[#allocation3 + $0x18] sm:$0x8] %v880
        %v882 = vld [vmem:[#allocation3 + $0x2c] sm:$0x8]
        %v883 = vsel %vm875, 0, %v882
        %884 = vst [vmem:[#allocation3 + $0x2c] sm:$0x8] %v883
        %v885 = vld [vmem:[#allocation3 + $0x40] sm:$0x8]
        %v886 = vsel %vm875, 0, %v885
        %887 = vst [vmem:[#allocation3 + $0x40] sm:$0x8] %v886
        %v888 = vld [vmem:[#allocation3 + $0x54] sm:$0x8]
        %v889 = vsel %vm875, 0, %v888
        %890 = vst [vmem:[#allocation3 + $0x54] sm:$0x8] %v889
        %v891 = vld [vmem:[#allocation3 + $0x68] sm:$0x8]
        %v892 = vsel %vm875, 0, %v891
        %893 = vst [vmem:[#allocation3 + $0x68] sm:$0x8] %v892
        %v894 = vld [vmem:[#allocation3 + $0x7c] sm:$0x8]
        %v895 = vsel %vm875, 0, %v894
        %896 = vst [vmem:[#allocation3 + $0x7c] sm:$0x8] %v895
        %v897 = vld [vmem:[#allocation3 + $0x90] sm:$0x8]
        %v898 = vsel %vm875, 0, %v897
        %899 = vst [vmem:[#allocation3 + $0x90] sm:$0x8] %v898
        %v900 = vld [vmem:[#allocation3 + $0xa4] sm:$0x8]
        %v901 = vsel %vm875, 0, %v900
        %902 = vst [vmem:[#allocation3 + $0xa4] sm:$0x8] %v901
        %v903 = vld [vmem:[#allocation3 + $0xb8] sm:$0x8]
        %v904 = vsel %vm875, 0, %v903
        %905 = vst [vmem:[#allocation3 + $0xb8] sm:$0x8] %v904
        %v906 = vld [vmem:[#allocation3 + $0xcc] sm:$0x8]
        %v907 = vsel %vm875, 0, %v906
        %908 = vst [vmem:[#allocation3 + $0xcc] sm:$0x8] %v907
        %v909 = vld [vmem:[#allocation3 + $0xe0] sm:$0x8]
        %v910 = vsel %vm875, 0, %v909
        %911 = vst [vmem:[#allocation3 + $0xe0] sm:$0x8] %v910
        %v912 = vld [vmem:[#allocation3 + $0xf4] sm:$0x8]
        %v913 = vsel %vm875, 0, %v912
        %914 = vst [vmem:[#allocation3 + $0xf4] sm:$0x8] %v913
        %v915 = vld [vmem:[#allocation3 + $0x108] sm:$0x8]
        %v916 = vsel %vm875, 0, %v915
        %917 = vst [vmem:[#allocation3 + $0x108] sm:$0x8] %v916
        %v918 = vld [vmem:[#allocation3 + $0x11c] sm:$0x8]
        %v919 = vsel %vm875, 0, %v918
        %920 = vst [vmem:[#allocation3 + $0x11c] sm:$0x8] %v919
        %v921 = vld [vmem:[#allocation3 + $0x130] sm:$0x8]
        %v922 = vsel %vm875, 0, %v921
        %923 = vst [vmem:[#allocation3 + $0x130] sm:$0x8] %v922
        %v924 = vld [vmem:[#allocation3 + $0x144] sm:$0x8]
        %v925 = vsel %vm875, 0, %v924
        %926 = vst [vmem:[#allocation3 + $0x144] sm:$0x8] %v925
        %v927 = vld [vmem:[#allocation3 + $0x158] sm:$0x8]
        %v928 = vsel %vm875, 0, %v927
        %929 = vst [vmem:[#allocation3 + $0x158] sm:$0x8] %v928
        %vm930 = vcmask 1040384
        %vm931 = vsmask.f32 256
        %vm932 = vmand %vm930, %vm931
        %v933 = vld [vmem:[#allocation3 + $0x10] sm:$0x1]
        %v934 = vsel %vm932, 0, %v933
        %935 = vst [vmem:[#allocation3 + $0x10] sm:$0x1] %v934
        %v936 = vld [vmem:[#allocation3 + $0x24] sm:$0x1]
        %v937 = vsel %vm932, 0, %v936
        %938 = vst [vmem:[#allocation3 + $0x24] sm:$0x1] %v937
        %v939 = vld [vmem:[#allocation3 + $0x38] sm:$0x1]
        %v940 = vsel %vm932, 0, %v939
        %941 = vst [vmem:[#allocation3 + $0x38] sm:$0x1] %v940
        %v942 = vld [vmem:[#allocation3 + $0x4c] sm:$0x1]
        %v943 = vsel %vm932, 0, %v942
        %944 = vst [vmem:[#allocation3 + $0x4c] sm:$0x1] %v943
        %v945 = vld [vmem:[#allocation3 + $0x60] sm:$0x1]
        %v946 = vsel %vm932, 0, %v945
        %947 = vst [vmem:[#allocation3 + $0x60] sm:$0x1] %v946
        %v948 = vld [vmem:[#allocation3 + $0x74] sm:$0x1]
        %v949 = vsel %vm932, 0, %v948
        %950 = vst [vmem:[#allocation3 + $0x74] sm:$0x1] %v949
        %v951 = vld [vmem:[#allocation3 + $0x88] sm:$0x1]
        %v952 = vsel %vm932, 0, %v951
        %953 = vst [vmem:[#allocation3 + $0x88] sm:$0x1] %v952
        %v954 = vld [vmem:[#allocation3 + $0x9c] sm:$0x1]
        %v955 = vsel %vm932, 0, %v954
        %956 = vst [vmem:[#allocation3 + $0x9c] sm:$0x1] %v955
        %v957 = vld [vmem:[#allocation3 + $0xb0] sm:$0x1]
        %v958 = vsel %vm932, 0, %v957
        %959 = vst [vmem:[#allocation3 + $0xb0] sm:$0x1] %v958
        %v960 = vld [vmem:[#allocation3 + $0xc4] sm:$0x1]
        %v961 = vsel %vm932, 0, %v960
        %962 = vst [vmem:[#allocation3 + $0xc4] sm:$0x1] %v961
        %v963 = vld [vmem:[#allocation3 + $0xd8] sm:$0x1]
        %v964 = vsel %vm932, 0, %v963
        %965 = vst [vmem:[#allocation3 + $0xd8] sm:$0x1] %v964
        %v966 = vld [vmem:[#allocation3 + $0xec] sm:$0x1]
        %v967 = vsel %vm932, 0, %v966
        %968 = vst [vmem:[#allocation3 + $0xec] sm:$0x1] %v967
        %v969 = vld [vmem:[#allocation3 + $0x100] sm:$0x1]
        %v970 = vsel %vm932, 0, %v969
        %971 = vst [vmem:[#allocation3 + $0x100] sm:$0x1] %v970
        %v972 = vld [vmem:[#allocation3 + $0x114] sm:$0x1]
        %v973 = vsel %vm932, 0, %v972
        %974 = vst [vmem:[#allocation3 + $0x114] sm:$0x1] %v973
        %v975 = vld [vmem:[#allocation3 + $0x128] sm:$0x1]
        %v976 = vsel %vm932, 0, %v975
        %977 = vst [vmem:[#allocation3 + $0x128] sm:$0x1] %v976
        %v978 = vld [vmem:[#allocation3 + $0x13c] sm:$0x1]
        %v979 = vsel %vm932, 0, %v978
        %980 = vst [vmem:[#allocation3 + $0x13c] sm:$0x1] %v979
        %v981 = vld [vmem:[#allocation3 + $0x150] sm:$0x1]
        %v982 = vsel %vm932, 0, %v981
        %983 = vst [vmem:[#allocation3 + $0x150] sm:$0x1] %v982
        %v984 = vld [vmem:[#allocation3 + $0x164] sm:$0x1]
        %v985 = vsel %vm932, 0, %v984
        %986 = vst [vmem:[#allocation3 + $0x164] sm:$0x1] %v985
        %v987 = vpack.c.bf16 %v838, %v837
        %v988 = vpack.c.bf16 %v840, %v839
        %v989 = vpack.c.bf16 %v842, %v841
        %v990 = vpack.c.bf16 %v844, %v843
        %v991 = vpack.c.bf16 %v846, %v845
        %v992 = vpack.c.bf16 %v848, %v847
        %v993 = vpack.c.bf16 %v850, %v849
        %v994 = vpack.c.bf16 %v852, %v851
        %v995 = vpack.c.bf16 %v854, %v853
        %v996 = vpack.c.bf16 %v856, %v855
        %v997 = vpack.c.bf16 %v858, %v857
        %v998 = vpack.c.bf16 %v860, %v859
        %v999 = vpack.c.bf16 %v862, %v861
        %v1000 = vpack.c.bf16 %v864, %v863
        %v1001 = vpack.c.bf16 %v866, %v865
        %v1002 = vpack.c.bf16 %v868, %v867
        %v1003 = vpack.c.bf16 %v870, %v869
        %v1004 = vpack.c.bf16 %v872, %v871
        %v1023 = vunpack.c.l.b16 %v987
        %v1024 = vunpack.c.h.b16 %v987
        %v1025 = vunpack.c.l.b16 %v988
        %v1026 = vunpack.c.h.b16 %v988
        %v1027 = vunpack.c.l.b16 %v989
        %v1028 = vunpack.c.h.b16 %v989
        %v1029 = vunpack.c.l.b16 %v990
        %v1030 = vunpack.c.h.b16 %v990
        %v1031 = vunpack.c.l.b16 %v991
        %v1032 = vunpack.c.h.b16 %v991
        %v1033 = vunpack.c.l.b16 %v992
        %v1034 = vunpack.c.h.b16 %v992
        %v1035 = vunpack.c.l.b16 %v993
        %v1036 = vunpack.c.h.b16 %v993
        %v1037 = vunpack.c.l.b16 %v994
        %v1038 = vunpack.c.h.b16 %v994
        %v1039 = vunpack.c.l.b16 %v995
        %v1040 = vunpack.c.h.b16 %v995
        %v1041 = vunpack.c.l.b16 %v996
        %v1042 = vunpack.c.h.b16 %v996
        %v1043 = vunpack.c.l.b16 %v997
        %v1044 = vunpack.c.h.b16 %v997
        %v1045 = vunpack.c.l.b16 %v998
        %v1046 = vunpack.c.h.b16 %v998
        %v1047 = vunpack.c.l.b16 %v999
        %v1048 = vunpack.c.h.b16 %v999
        %v1049 = vunpack.c.l.b16 %v1000
        %v1050 = vunpack.c.h.b16 %v1000
        %v1051 = vunpack.c.l.b16 %v1001
        %v1052 = vunpack.c.h.b16 %v1001
        %v1053 = vunpack.c.l.b16 %v1002
        %v1054 = vunpack.c.h.b16 %v1002
        %v1055 = vunpack.c.l.b16 %v1003
        %v1056 = vunpack.c.h.b16 %v1003
        %v1057 = vunpack.c.l.b16 %v1004
        %v1058 = vunpack.c.h.b16 %v1004
        %v1059 = vpack.c.b16 %v1023, %v1023
        %v1060 = vpack.c.b16 %v1024, %v1024
        %v1061 = vpack.c.b16 %v1025, %v1025
        %v1062 = vpack.c.b16 %v1026, %v1026
        %v1063 = vpack.c.b16 %v1027, %v1027
        %v1064 = vpack.c.b16 %v1028, %v1028
        %v1065 = vpack.c.b16 %v1029, %v1029
        %v1066 = vpack.c.b16 %v1030, %v1030
        %v1067 = vpack.c.b16 %v1031, %v1031
        %v1068 = vpack.c.b16 %v1032, %v1032
        %v1069 = vpack.c.b16 %v1033, %v1033
        %v1070 = vpack.c.b16 %v1034, %v1034
        %v1071 = vpack.c.b16 %v1035, %v1035
        %v1072 = vpack.c.b16 %v1036, %v1036
        %v1073 = vpack.c.b16 %v1037, %v1037
        %v1074 = vpack.c.b16 %v1038, %v1038
        %v1075 = vpack.c.b16 %v1039, %v1039
        %v1076 = vpack.c.b16 %v1040, %v1040
        %v1077 = vpack.c.b16 %v1041, %v1041
        %v1078 = vpack.c.b16 %v1042, %v1042
        %v1079 = vpack.c.b16 %v1043, %v1043
        %v1080 = vpack.c.b16 %v1044, %v1044
        %v1081 = vpack.c.b16 %v1045, %v1045
        %v1082 = vpack.c.b16 %v1046, %v1046
        %v1083 = vpack.c.b16 %v1047, %v1047
        %v1084 = vpack.c.b16 %v1048, %v1048
        %v1085 = vpack.c.b16 %v1049, %v1049
        %v1086 = vpack.c.b16 %v1050, %v1050
        %v1087 = vpack.c.b16 %v1051, %v1051
        %v1088 = vpack.c.b16 %v1052, %v1052
        %v1089 = vpack.c.b16 %v1053, %v1053
        %v1090 = vpack.c.b16 %v1054, %v1054
        %v1091 = vpack.c.b16 %v1055, %v1055
        %v1092 = vpack.c.b16 %v1056, %v1056
        %v1093 = vpack.c.b16 %v1057, %v1057
        %v1094 = vpack.c.b16 %v1058, %v1058
        %1131 = vst [vmem:[#allocation3 + $0x8] sm:$0xf] %v1059
        %1132 = vst [vmem:[#allocation3 + $0xc] sm:$0xf] %v1060
        %1133 = vst [vmem:[#allocation3 + $0x1c] sm:$0xf] %v1061
        %1134 = vst [vmem:[#allocation3 + $0x20] sm:$0xf] %v1062
        %1135 = vst [vmem:[#allocation3 + $0x30] sm:$0xf] %v1063
        %1136 = vst [vmem:[#allocation3 + $0x34] sm:$0xf] %v1064
        %1137 = vst [vmem:[#allocation3 + $0x44] sm:$0xf] %v1065
        %1138 = vst [vmem:[#allocation3 + $0x48] sm:$0xf] %v1066
        %1139 = vst [vmem:[#allocation3 + $0x58] sm:$0xf] %v1067
        %1140 = vst [vmem:[#allocation3 + $0x5c] sm:$0xf] %v1068
        %1141 = vst [vmem:[#allocation3 + $0x6c] sm:$0xf] %v1069
        %1142 = vst [vmem:[#allocation3 + $0x70] sm:$0xf] %v1070
        %1143 = vst [vmem:[#allocation3 + $0x80] sm:$0xf] %v1071
        %1144 = vst [vmem:[#allocation3 + $0x84] sm:$0xf] %v1072
        %1145 = vst [vmem:[#allocation3 + $0x94] sm:$0xf] %v1073
        %1146 = vst [vmem:[#allocation3 + $0x98] sm:$0xf] %v1074
        %1147 = vst [vmem:[#allocation3 + $0xa8] sm:$0xf] %v1075
        %1148 = vst [vmem:[#allocation3 + $0xac] sm:$0xf] %v1076
        %1149 = vst [vmem:[#allocation3 + $0xbc] sm:$0xf] %v1077
        %1150 = vst [vmem:[#allocation3 + $0xc0] sm:$0xf] %v1078
        %1151 = vst [vmem:[#allocation3 + $0xd0] sm:$0xf] %v1079
        %1152 = vst [vmem:[#allocation3 + $0xd4] sm:$0xf] %v1080
        %1153 = vst [vmem:[#allocation3 + $0xe4] sm:$0xf] %v1081
        %1154 = vst [vmem:[#allocation3 + $0xe8] sm:$0xf] %v1082
        %1155 = vst [vmem:[#allocation3 + $0xf8] sm:$0xf] %v1083
        %1156 = vst [vmem:[#allocation3 + $0xfc] sm:$0xf] %v1084
        %1157 = vst [vmem:[#allocation3 + $0x10c] sm:$0xf] %v1085
        %1158 = vst [vmem:[#allocation3 + $0x110] sm:$0xf] %v1086
        %1159 = vst [vmem:[#allocation3 + $0x120] sm:$0xf] %v1087
        %1160 = vst [vmem:[#allocation3 + $0x124] sm:$0xf] %v1088
        %1161 = vst [vmem:[#allocation3 + $0x134] sm:$0xf] %v1089
        %1162 = vst [vmem:[#allocation3 + $0x138] sm:$0xf] %v1090
        %1163 = vst [vmem:[#allocation3 + $0x148] sm:$0xf] %v1091
        %1164 = vst [vmem:[#allocation3 + $0x14c] sm:$0xf] %v1092
        %1165 = vst [vmem:[#allocation3 + $0x15c] sm:$0xf] %v1093
        %1166 = vst [vmem:[#allocation3 + $0x160] sm:$0xf] %v1094
        %p1167 = scmp.eq.s32.totalorder %s28, 0
        // Predicated region
        $region81: #{tpu_custom_call.1} parent=43 // pred_check
          %p1168 = pneg %p1167
        $region82: #{tpu_custom_call.1} parent=43 // pred_check_branch
          %1170 = sbr.rel (%p1168) target = $region84
        $region83: #{tpu_custom_call.1} parent=43 // pred_region
          %1171 = vst [vmem:[#allocation3 + $0x8] sm:$0xf] 0
          %1172 = vst [vmem:[#allocation3 + $0xc] sm:$0xf] 0
          %s1173 = scalar_lea.vmem [#allocation3], 340
          %1174 = vst [vmem:[%s1173 + $0x8] sm:$0xf] 0
          %1175 = vst [vmem:[%s1173 + $0xc] sm:$0xf] 0
        $region84: #{tpu_custom_call.1} parent=43 // pred_fallthru
          _
        %v1176 = vld [vmem:[#allocation3 + $0x4] sm:$0x8]
        %v1177 = vld [vmem:[#allocation3 + $0x8] sm:$0xf]
        %v1178 = vld [vmem:[#allocation3 + $0xc] sm:$0xf]
        %v1179 = vld [vmem:[#allocation3 + $0x18] sm:$0x8]
        %v1180 = vld [vmem:[#allocation3 + $0x1c] sm:$0xf]
        %v1181 = vld [vmem:[#allocation3 + $0x20] sm:$0xf]
        %v1182 = vld [vmem:[#allocation3 + $0x2c] sm:$0x8]
        %v1183 = vld [vmem:[#allocation3 + $0x30] sm:$0xf]
        %v1184 = vld [vmem:[#allocation3 + $0x34] sm:$0xf]
        %v1185 = vld [vmem:[#allocation3 + $0x40] sm:$0x8]
        %v1186 = vld [vmem:[#allocation3 + $0x44] sm:$0xf]
        %v1187 = vld [vmem:[#allocation3 + $0x48] sm:$0xf]
        %v1188 = vld [vmem:[#allocation3 + $0x54] sm:$0x8]
        %v1189 = vld [vmem:[#allocation3 + $0x58] sm:$0xf]
        %v1190 = vld [vmem:[#allocation3 + $0x5c] sm:$0xf]
        %v1191 = vld [vmem:[#allocation3 + $0x68] sm:$0x8]
        %v1192 = vld [vmem:[#allocation3 + $0x6c] sm:$0xf]
        %v1193 = vld [vmem:[#allocation3 + $0x70] sm:$0xf]
        %v1194 = vld [vmem:[#allocation3 + $0x7c] sm:$0x8]
        %v1195 = vld [vmem:[#allocation3 + $0x80] sm:$0xf]
        %v1196 = vld [vmem:[#allocation3 + $0x84] sm:$0xf]
        %v1197 = vld [vmem:[#allocation3 + $0x90] sm:$0x8]
        %v1198 = vld [vmem:[#allocation3 + $0x94] sm:$0xf]
        %v1199 = vld [vmem:[#allocation3 + $0x98] sm:$0xf]
        %v1200 = vld [vmem:[#allocation3 + $0xa4] sm:$0x8]
        %v1201 = vld [vmem:[#allocation3 + $0xa8] sm:$0xf]
        %v1202 = vld [vmem:[#allocation3 + $0xac] sm:$0xf]
        %v1203 = vld [vmem:[#allocation3 + $0xb8] sm:$0x8]
        %v1204 = vld [vmem:[#allocation3 + $0xbc] sm:$0xf]
        %v1205 = vld [vmem:[#allocation3 + $0xc0] sm:$0xf]
        %v1206 = vld [vmem:[#allocation3 + $0xcc] sm:$0x8]
        %v1207 = vld [vmem:[#allocation3 + $0xd0] sm:$0xf]
        %v1208 = vld [vmem:[#allocation3 + $0xd4] sm:$0xf]
        %v1209 = vld [vmem:[#allocation3 + $0xe0] sm:$0x8]
        %v1210 = vld [vmem:[#allocation3 + $0xe4] sm:$0xf]
        %v1211 = vld [vmem:[#allocation3 + $0xe8] sm:$0xf]
        %v1212 = vld [vmem:[#allocation3 + $0xf4] sm:$0x8]
        %v1213 = vld [vmem:[#allocation3 + $0xf8] sm:$0xf]
        %v1214 = vld [vmem:[#allocation3 + $0xfc] sm:$0xf]
        %v1215 = vld [vmem:[#allocation3 + $0x108] sm:$0x8]
        %v1216 = vld [vmem:[#allocation3 + $0x10c] sm:$0xf]
        %v1217 = vld [vmem:[#allocation3 + $0x110] sm:$0xf]
        %v1218 = vld [vmem:[#allocation3 + $0x11c] sm:$0x8]
        %v1219 = vld [vmem:[#allocation3 + $0x120] sm:$0xf]
        %v1220 = vld [vmem:[#allocation3 + $0x124] sm:$0xf]
        %v1221 = vld [vmem:[#allocation3 + $0x130] sm:$0x8]
        %v1222 = vld [vmem:[#allocation3 + $0x134] sm:$0xf]
        %v1223 = vld [vmem:[#allocation3 + $0x138] sm:$0xf]
        %v1224 = vld [vmem:[#allocation3 + $0x10] sm:$0x1]
        %v1225 = vld [vmem:[#allocation3 + $0x24] sm:$0x1]
        %v1226 = vld [vmem:[#allocation3 + $0x38] sm:$0x1]
        %v1227 = vld [vmem:[#allocation3 + $0x4c] sm:$0x1]
        %v1228 = vld [vmem:[#allocation3 + $0x60] sm:$0x1]
        %v1229 = vld [vmem:[#allocation3 + $0x74] sm:$0x1]
        %v1230 = vld [vmem:[#allocation3 + $0x88] sm:$0x1]
        %v1231 = vld [vmem:[#allocation3 + $0x9c] sm:$0x1]
        %v1232 = vld [vmem:[#allocation3 + $0xb0] sm:$0x1]
        %v1233 = vld [vmem:[#allocation3 + $0xc4] sm:$0x1]
        %v1234 = vld [vmem:[#allocation3 + $0xd8] sm:$0x1]
        %v1235 = vld [vmem:[#allocation3 + $0xec] sm:$0x1]
        %v1236 = vld [vmem:[#allocation3 + $0x100] sm:$0x1]
        %v1237 = vld [vmem:[#allocation3 + $0x114] sm:$0x1]
        %v1238 = vld [vmem:[#allocation3 + $0x128] sm:$0x1]
        %v1239 = vld [vmem:[#allocation3 + $0x13c] sm:$0x1]
        %s1240 = scalar_lea.vmem [#allocation3], 20
        %v1241 = vld [vmem:[%s1240 + $0x4] sm:$0x8]
        %v1242 = vld [vmem:[%s1240 + $0x8] sm:$0xf]
        %v1243 = vld [vmem:[%s1240 + $0xc] sm:$0xf]
        %v1244 = vld [vmem:[%s1240 + $0x18] sm:$0x8]
        %v1245 = vld [vmem:[%s1240 + $0x1c] sm:$0xf]
        %v1246 = vld [vmem:[%s1240 + $0x20] sm:$0xf]
        %v1247 = vld [vmem:[%s1240 + $0x2c] sm:$0x8]
        %v1248 = vld [vmem:[%s1240 + $0x30] sm:$0xf]
        %v1249 = vld [vmem:[%s1240 + $0x34] sm:$0xf]
        %v1250 = vld [vmem:[%s1240 + $0x40] sm:$0x8]
        %v1251 = vld [vmem:[%s1240 + $0x44] sm:$0xf]
        %v1252 = vld [vmem:[%s1240 + $0x48] sm:$0xf]
        %v1253 = vld [vmem:[%s1240 + $0x54] sm:$0x8]
        %v1254 = vld [vmem:[%s1240 + $0x58] sm:$0xf]
        %v1255 = vld [vmem:[%s1240 + $0x5c] sm:$0xf]
        %v1256 = vld [vmem:[%s1240 + $0x68] sm:$0x8]
        %v1257 = vld [vmem:[%s1240 + $0x6c] sm:$0xf]
        %v1258 = vld [vmem:[%s1240 + $0x70] sm:$0xf]
        %v1259 = vld [vmem:[%s1240 + $0x7c] sm:$0x8]
        %v1260 = vld [vmem:[%s1240 + $0x80] sm:$0xf]
        %v1261 = vld [vmem:[%s1240 + $0x84] sm:$0xf]
        %v1262 = vld [vmem:[%s1240 + $0x90] sm:$0x8]
        %v1263 = vld [vmem:[%s1240 + $0x94] sm:$0xf]
        %v1264 = vld [vmem:[%s1240 + $0x98] sm:$0xf]
        %v1265 = vld [vmem:[%s1240 + $0xa4] sm:$0x8]
        %v1266 = vld [vmem:[%s1240 + $0xa8] sm:$0xf]
        %v1267 = vld [vmem:[%s1240 + $0xac] sm:$0xf]
        %v1268 = vld [vmem:[%s1240 + $0xb8] sm:$0x8]
        %v1269 = vld [vmem:[%s1240 + $0xbc] sm:$0xf]
        %v1270 = vld [vmem:[%s1240 + $0xc0] sm:$0xf]
        %v1271 = vld [vmem:[%s1240 + $0xcc] sm:$0x8]
        %v1272 = vld [vmem:[%s1240 + $0xd0] sm:$0xf]
        %v1273 = vld [vmem:[%s1240 + $0xd4] sm:$0xf]
        %v1274 = vld [vmem:[%s1240 + $0xe0] sm:$0x8]
        %v1275 = vld [vmem:[%s1240 + $0xe4] sm:$0xf]
        %v1276 = vld [vmem:[%s1240 + $0xe8] sm:$0xf]
        %v1277 = vld [vmem:[%s1240 + $0xf4] sm:$0x8]
        %v1278 = vld [vmem:[%s1240 + $0xf8] sm:$0xf]
        %v1279 = vld [vmem:[%s1240 + $0xfc] sm:$0xf]
        %v1280 = vld [vmem:[%s1240 + $0x108] sm:$0x8]
        %v1281 = vld [vmem:[%s1240 + $0x10c] sm:$0xf]
        %v1282 = vld [vmem:[%s1240 + $0x110] sm:$0xf]
        %v1283 = vld [vmem:[%s1240 + $0x11c] sm:$0x8]
        %v1284 = vld [vmem:[%s1240 + $0x120] sm:$0xf]
        %v1285 = vld [vmem:[%s1240 + $0x124] sm:$0xf]
        %v1286 = vld [vmem:[%s1240 + $0x130] sm:$0x8]
        %v1287 = vld [vmem:[%s1240 + $0x134] sm:$0xf]
        %v1288 = vld [vmem:[%s1240 + $0x138] sm:$0xf]
        %v1289 = vld [vmem:[%s1240 + $0x10] sm:$0x1]
        %v1290 = vld [vmem:[%s1240 + $0x24] sm:$0x1]
        %v1291 = vld [vmem:[%s1240 + $0x38] sm:$0x1]
        %v1292 = vld [vmem:[%s1240 + $0x4c] sm:$0x1]
        %v1293 = vld [vmem:[%s1240 + $0x60] sm:$0x1]
        %v1294 = vld [vmem:[%s1240 + $0x74] sm:$0x1]
        %v1295 = vld [vmem:[%s1240 + $0x88] sm:$0x1]
        %v1296 = vld [vmem:[%s1240 + $0x9c] sm:$0x1]
        %v1297 = vld [vmem:[%s1240 + $0xb0] sm:$0x1]
        %v1298 = vld [vmem:[%s1240 + $0xc4] sm:$0x1]
        %v1299 = vld [vmem:[%s1240 + $0xd8] sm:$0x1]
        %v1300 = vld [vmem:[%s1240 + $0xec] sm:$0x1]
        %v1301 = vld [vmem:[%s1240 + $0x100] sm:$0x1]
        %v1302 = vld [vmem:[%s1240 + $0x114] sm:$0x1]
        %v1303 = vld [vmem:[%s1240 + $0x128] sm:$0x1]
        %v1304 = vld [vmem:[%s1240 + $0x13c] sm:$0x1]
        %s1305 = scalar_lea.vmem [#allocation3], 40
        %v1306 = vld [vmem:[%s1305 + $0x4] sm:$0x8]
        %v1307 = vld [vmem:[%s1305 + $0x8] sm:$0xf]
        %v1308 = vld [vmem:[%s1305 + $0xc] sm:$0xf]
        %v1309 = vld [vmem:[%s1305 + $0x18] sm:$0x8]
        %v1310 = vld [vmem:[%s1305 + $0x1c] sm:$0xf]
        %v1311 = vld [vmem:[%s1305 + $0x20] sm:$0xf]
        %v1312 = vld [vmem:[%s1305 + $0x2c] sm:$0x8]
        %v1313 = vld [vmem:[%s1305 + $0x30] sm:$0xf]
        %v1314 = vld [vmem:[%s1305 + $0x34] sm:$0xf]
        %v1315 = vld [vmem:[%s1305 + $0x40] sm:$0x8]
        %v1316 = vld [vmem:[%s1305 + $0x44] sm:$0xf]
        %v1317 = vld [vmem:[%s1305 + $0x48] sm:$0xf]
        %v1318 = vld [vmem:[%s1305 + $0x54] sm:$0x8]
        %v1319 = vld [vmem:[%s1305 + $0x58] sm:$0xf]
        %v1320 = vld [vmem:[%s1305 + $0x5c] sm:$0xf]
        %v1321 = vld [vmem:[%s1305 + $0x68] sm:$0x8]
        %v1322 = vld [vmem:[%s1305 + $0x6c] sm:$0xf]
        %v1323 = vld [vmem:[%s1305 + $0x70] sm:$0xf]
        %v1324 = vld [vmem:[%s1305 + $0x7c] sm:$0x8]
        %v1325 = vld [vmem:[%s1305 + $0x80] sm:$0xf]
        %v1326 = vld [vmem:[%s1305 + $0x84] sm:$0xf]
        %v1327 = vld [vmem:[%s1305 + $0x90] sm:$0x8]
        %v1328 = vld [vmem:[%s1305 + $0x94] sm:$0xf]
        %v1329 = vld [vmem:[%s1305 + $0x98] sm:$0xf]
        %v1330 = vld [vmem:[%s1305 + $0xa4] sm:$0x8]
        %v1331 = vld [vmem:[%s1305 + $0xa8] sm:$0xf]
        %v1332 = vld [vmem:[%s1305 + $0xac] sm:$0xf]
        %v1333 = vld [vmem:[%s1305 + $0xb8] sm:$0x8]
        %v1334 = vld [vmem:[%s1305 + $0xbc] sm:$0xf]
        %v1335 = vld [vmem:[%s1305 + $0xc0] sm:$0xf]
        %v1336 = vld [vmem:[%s1305 + $0xcc] sm:$0x8]
        %v1337 = vld [vmem:[%s1305 + $0xd0] sm:$0xf]
        %v1338 = vld [vmem:[%s1305 + $0xd4] sm:$0xf]
        %v1339 = vld [vmem:[%s1305 + $0xe0] sm:$0x8]
        %v1340 = vld [vmem:[%s1305 + $0xe4] sm:$0xf]
        %v1341 = vld [vmem:[%s1305 + $0xe8] sm:$0xf]
        %v1342 = vld [vmem:[%s1305 + $0xf4] sm:$0x8]
        %v1343 = vld [vmem:[%s1305 + $0xf8] sm:$0xf]
        %v1344 = vld [vmem:[%s1305 + $0xfc] sm:$0xf]
        %v1345 = vld [vmem:[%s1305 + $0x108] sm:$0x8]
        %v1346 = vld [vmem:[%s1305 + $0x10c] sm:$0xf]
        %v1347 = vld [vmem:[%s1305 + $0x110] sm:$0xf]
        %v1348 = vld [vmem:[%s1305 + $0x11c] sm:$0x8]
        %v1349 = vld [vmem:[%s1305 + $0x120] sm:$0xf]
        %v1350 = vld [vmem:[%s1305 + $0x124] sm:$0xf]
        %v1351 = vld [vmem:[%s1305 + $0x130] sm:$0x8]
        %v1352 = vld [vmem:[%s1305 + $0x134] sm:$0xf]
        %v1353 = vld [vmem:[%s1305 + $0x138] sm:$0xf]
        %v1354 = vld [vmem:[%s1305 + $0x10] sm:$0x1]
        %v1355 = vld [vmem:[%s1305 + $0x24] sm:$0x1]
        %v1356 = vld [vmem:[%s1305 + $0x38] sm:$0x1]
        %v1357 = vld [vmem:[%s1305 + $0x4c] sm:$0x1]
        %v1358 = vld [vmem:[%s1305 + $0x60] sm:$0x1]
        %v1359 = vld [vmem:[%s1305 + $0x74] sm:$0x1]
        %v1360 = vld [vmem:[%s1305 + $0x88] sm:$0x1]
        %v1361 = vld [vmem:[%s1305 + $0x9c] sm:$0x1]
        %v1362 = vld [vmem:[%s1305 + $0xb0] sm:$0x1]
        %v1363 = vld [vmem:[%s1305 + $0xc4] sm:$0x1]
        %v1364 = vld [vmem:[%s1305 + $0xd8] sm:$0x1]
        %v1365 = vld [vmem:[%s1305 + $0xec] sm:$0x1]
        %v1366 = vld [vmem:[%s1305 + $0x100] sm:$0x1]
        %v1367 = vld [vmem:[%s1305 + $0x114] sm:$0x1]
        %v1368 = vld [vmem:[%s1305 + $0x128] sm:$0x1]
        %v1369 = vld [vmem:[%s1305 + $0x13c] sm:$0x1]
        %v1418 = vunpack.c.l.b16 %v1176
        %v1419 = vunpack.c.l.b16 %v1177
        %v1420 = vunpack.c.l.b16 %v1178
        %v1421 = vunpack.c.l.b16 %v1179
        %v1422 = vunpack.c.l.b16 %v1180
        %v1423 = vunpack.c.l.b16 %v1181
        %v1424 = vunpack.c.l.b16 %v1182
        %v1425 = vunpack.c.l.b16 %v1183
        %v1426 = vunpack.c.l.b16 %v1184
        %v1427 = vunpack.c.l.b16 %v1185
        %v1428 = vunpack.c.l.b16 %v1186
        %v1429 = vunpack.c.l.b16 %v1187
        %v1430 = vunpack.c.l.b16 %v1188
        %v1431 = vunpack.c.l.b16 %v1189
        %v1432 = vunpack.c.l.b16 %v1190
        %v1433 = vunpack.c.l.b16 %v1191
        %v1434 = vunpack.c.l.b16 %v1192
        %v1435 = vunpack.c.l.b16 %v1193
        %v1436 = vunpack.c.l.b16 %v1194
        %v1437 = vunpack.c.l.b16 %v1195
        %v1438 = vunpack.c.l.b16 %v1196
        %v1439 = vunpack.c.l.b16 %v1197
        %v1440 = vunpack.c.l.b16 %v1198
        %v1441 = vunpack.c.l.b16 %v1199
        %v1442 = vunpack.c.l.b16 %v1200
        %v1443 = vunpack.c.l.b16 %v1201
        %v1444 = vunpack.c.l.b16 %v1202
        %v1445 = vunpack.c.l.b16 %v1203
        %v1446 = vunpack.c.l.b16 %v1204
        %v1447 = vunpack.c.l.b16 %v1205
        %v1448 = vunpack.c.l.b16 %v1206
        %v1449 = vunpack.c.l.b16 %v1207
        %v1450 = vunpack.c.l.b16 %v1208
        %v1451 = vunpack.c.l.b16 %v1209
        %v1452 = vunpack.c.l.b16 %v1210
        %v1453 = vunpack.c.l.b16 %v1211
        %v1454 = vunpack.c.l.b16 %v1212
        %v1455 = vunpack.c.l.b16 %v1213
        %v1456 = vunpack.c.l.b16 %v1214
        %v1457 = vunpack.c.l.b16 %v1215
        %v1458 = vunpack.c.l.b16 %v1216
        %v1459 = vunpack.c.l.b16 %v1217
        %v1460 = vunpack.c.l.b16 %v1218
        %v1461 = vunpack.c.l.b16 %v1219
        %v1462 = vunpack.c.l.b16 %v1220
        %v1463 = vunpack.c.l.b16 %v1221
        %v1464 = vunpack.c.l.b16 %v1222
        %v1465 = vunpack.c.l.b16 %v1223
        %v1466 = vpack.c.b16 %v1419, %v1418
        %v1467 = vpack.c.b16 %v1420, %v1420
        %v1468 = vpack.c.b16 %v1422, %v1421
        %v1469 = vpack.c.b16 %v1423, %v1423
        %v1470 = vpack.c.b16 %v1425, %v1424
        %v1471 = vpack.c.b16 %v1426, %v1426
        %v1472 = vpack.c.b16 %v1428, %v1427
        %v1473 = vpack.c.b16 %v1429, %v1429
        %v1474 = vpack.c.b16 %v1431, %v1430
        %v1475 = vpack.c.b16 %v1432, %v1432
        %v1476 = vpack.c.b16 %v1434, %v1433
        %v1477 = vpack.c.b16 %v1435, %v1435
        %v1478 = vpack.c.b16 %v1437, %v1436
        %v1479 = vpack.c.b16 %v1438, %v1438
        %v1480 = vpack.c.b16 %v1440, %v1439
        %v1481 = vpack.c.b16 %v1441, %v1441
        %v1482 = vpack.c.b16 %v1443, %v1442
        %v1483 = vpack.c.b16 %v1444, %v1444
        %v1484 = vpack.c.b16 %v1446, %v1445
        %v1485 = vpack.c.b16 %v1447, %v1447
        %v1486 = vpack.c.b16 %v1449, %v1448
        %v1487 = vpack.c.b16 %v1450, %v1450
        %v1488 = vpack.c.b16 %v1452, %v1451
        %v1489 = vpack.c.b16 %v1453, %v1453
        %v1490 = vpack.c.b16 %v1455, %v1454
        %v1491 = vpack.c.b16 %v1456, %v1456
        %v1492 = vpack.c.b16 %v1458, %v1457
        %v1493 = vpack.c.b16 %v1459, %v1459
        %v1494 = vpack.c.b16 %v1461, %v1460
        %v1495 = vpack.c.b16 %v1462, %v1462
        %v1496 = vpack.c.b16 %v1464, %v1463
        %v1497 = vpack.c.b16 %v1465, %v1465
        %v1498 = vpack.c.b16 %v1420, %v1419
        %v1499 = vpack.c.b16 %v1423, %v1422
        %v1500 = vpack.c.b16 %v1426, %v1425
        %v1501 = vpack.c.b16 %v1429, %v1428
        %v1502 = vpack.c.b16 %v1432, %v1431
        %v1503 = vpack.c.b16 %v1435, %v1434
        %v1504 = vpack.c.b16 %v1438, %v1437
        %v1505 = vpack.c.b16 %v1441, %v1440
        %v1506 = vpack.c.b16 %v1444, %v1443
        %v1507 = vpack.c.b16 %v1447, %v1446
        %v1508 = vpack.c.b16 %v1450, %v1449
        %v1509 = vpack.c.b16 %v1453, %v1452
        %v1510 = vpack.c.b16 %v1456, %v1455
        %v1511 = vpack.c.b16 %v1459, %v1458
        %v1512 = vpack.c.b16 %v1462, %v1461
        %v1513 = vpack.c.b16 %v1465, %v1464
        %v1515 = vshrl.u32 %v1498, 16
        %v1517 = vrot.slane %v1515, 4
        %v1518 = vshll.u32 %v1498, 16
        %v1520 = vrot.slane %v1518, 5
        %v1521 = vor.u32 %v1517, %v1520
        %v1523 = vshrl.u32 %v1499, 16
        %v1525 = vrot.slane %v1523, 4
        %v1526 = vshll.u32 %v1499, 16
        %v1528 = vrot.slane %v1526, 5
        %v1529 = vor.u32 %v1525, %v1528
        %v1531 = vshrl.u32 %v1500, 16
        %v1533 = vrot.slane %v1531, 4
        %v1534 = vshll.u32 %v1500, 16
        %v1536 = vrot.slane %v1534, 5
        %v1537 = vor.u32 %v1533, %v1536
        %v1539 = vshrl.u32 %v1501, 16
        %v1541 = vrot.slane %v1539, 4
        %v1542 = vshll.u32 %v1501, 16
        %v1544 = vrot.slane %v1542, 5
        %v1545 = vor.u32 %v1541, %v1544
        %v1547 = vshrl.u32 %v1502, 16
        %v1549 = vrot.slane %v1547, 4
        %v1550 = vshll.u32 %v1502, 16
        %v1552 = vrot.slane %v1550, 5
        %v1553 = vor.u32 %v1549, %v1552
        %v1555 = vshrl.u32 %v1503, 16
        %v1557 = vrot.slane %v1555, 4
        %v1558 = vshll.u32 %v1503, 16
        %v1560 = vrot.slane %v1558, 5
        %v1561 = vor.u32 %v1557, %v1560
        %v1563 = vshrl.u32 %v1504, 16
        %v1565 = vrot.slane %v1563, 4
        %v1566 = vshll.u32 %v1504, 16
        %v1568 = vrot.slane %v1566, 5
        %v1569 = vor.u32 %v1565, %v1568
        %v1571 = vshrl.u32 %v1505, 16
        %v1573 = vrot.slane %v1571, 4
        %v1574 = vshll.u32 %v1505, 16
        %v1576 = vrot.slane %v1574, 5
        %v1577 = vor.u32 %v1573, %v1576
        %v1579 = vshrl.u32 %v1506, 16
        %v1581 = vrot.slane %v1579, 4
        %v1582 = vshll.u32 %v1506, 16
        %v1584 = vrot.slane %v1582, 5
        %v1585 = vor.u32 %v1581, %v1584
        %v1587 = vshrl.u32 %v1507, 16
        %v1589 = vrot.slane %v1587, 4
        %v1590 = vshll.u32 %v1507, 16
        %v1592 = vrot.slane %v1590, 5
        %v1593 = vor.u32 %v1589, %v1592
        %v1595 = vshrl.u32 %v1508, 16
        %v1597 = vrot.slane %v1595, 4
        %v1598 = vshll.u32 %v1508, 16
        %v1600 = vrot.slane %v1598, 5
        %v1601 = vor.u32 %v1597, %v1600
        %v1603 = vshrl.u32 %v1509, 16
        %v1605 = vrot.slane %v1603, 4
        %v1606 = vshll.u32 %v1509, 16
        %v1608 = vrot.slane %v1606, 5
        %v1609 = vor.u32 %v1605, %v1608
        %v1611 = vshrl.u32 %v1510, 16
        %v1613 = vrot.slane %v1611, 4
        %v1614 = vshll.u32 %v1510, 16
        %v1616 = vrot.slane %v1614, 5
        %v1617 = vor.u32 %v1613, %v1616
        %v1619 = vshrl.u32 %v1511, 16
        %v1621 = vrot.slane %v1619, 4
        %v1622 = vshll.u32 %v1511, 16
        %v1624 = vrot.slane %v1622, 5
        %v1625 = vor.u32 %v1621, %v1624
        %v1627 = vshrl.u32 %v1512, 16
        %v1629 = vrot.slane %v1627, 4
        %v1630 = vshll.u32 %v1512, 16
        %v1632 = vrot.slane %v1630, 5
        %v1633 = vor.u32 %v1629, %v1632
        %v1635 = vshrl.u32 %v1513, 16
        %v1637 = vrot.slane %v1635, 4
        %v1638 = vshll.u32 %v1513, 16
        %v1640 = vrot.slane %v1638, 5
        %v1641 = vor.u32 %v1637, %v1640
        %v1658 = vunpack.c.l.b16 %v1224
        %v1659 = vunpack.c.l.b16 %v1225
        %v1660 = vunpack.c.l.b16 %v1226
        %v1661 = vunpack.c.l.b16 %v1227
        %v1662 = vunpack.c.l.b16 %v1228
        %v1663 = vunpack.c.l.b16 %v1229
        %v1664 = vunpack.c.l.b16 %v1230
        %v1665 = vunpack.c.l.b16 %v1231
        %v1666 = vunpack.c.l.b16 %v1232
        %v1667 = vunpack.c.l.b16 %v1233
        %v1668 = vunpack.c.l.b16 %v1234
        %v1669 = vunpack.c.l.b16 %v1235
        %v1670 = vunpack.c.l.b16 %v1236
        %v1671 = vunpack.c.l.b16 %v1237
        %v1672 = vunpack.c.l.b16 %v1238
        %v1673 = vunpack.c.l.b16 %v1239
        %v1674 = vpack.c.b16 %v1658, %v1658
        %v1675 = vpack.c.b16 %v1659, %v1659
        %v1676 = vpack.c.b16 %v1660, %v1660
        %v1677 = vpack.c.b16 %v1661, %v1661
        %v1678 = vpack.c.b16 %v1662, %v1662
        %v1679 = vpack.c.b16 %v1663, %v1663
        %v1680 = vpack.c.b16 %v1664, %v1664
        %v1681 = vpack.c.b16 %v1665, %v1665
        %v1682 = vpack.c.b16 %v1666, %v1666
        %v1683 = vpack.c.b16 %v1667, %v1667
        %v1684 = vpack.c.b16 %v1668, %v1668
        %v1685 = vpack.c.b16 %v1669, %v1669
        %v1686 = vpack.c.b16 %v1670, %v1670
        %v1687 = vpack.c.b16 %v1671, %v1671
        %v1688 = vpack.c.b16 %v1672, %v1672
        %v1689 = vpack.c.b16 %v1673, %v1673
        %vm1690 = vcmask 1042432
        %v1691 = vrot.slane %v1498, 5
        %v1692 = vrot.slane %v1674, 5
        %v1693 = vsel %vm1690, %v1691, %v1692
        %v1694 = vrot.slane %v1499, 5
        %v1695 = vrot.slane %v1675, 5
        %v1696 = vsel %vm1690, %v1694, %v1695
        %v1697 = vrot.slane %v1500, 5
        %v1698 = vrot.slane %v1676, 5
        %v1699 = vsel %vm1690, %v1697, %v1698
        %v1700 = vrot.slane %v1501, 5
        %v1701 = vrot.slane %v1677, 5
        %v1702 = vsel %vm1690, %v1700, %v1701
        %v1703 = vrot.slane %v1502, 5
        %v1704 = vrot.slane %v1678, 5
        %v1705 = vsel %vm1690, %v1703, %v1704
        %v1706 = vrot.slane %v1503, 5
        %v1707 = vrot.slane %v1679, 5
        %v1708 = vsel %vm1690, %v1706, %v1707
        %v1709 = vrot.slane %v1504, 5
        %v1710 = vrot.slane %v1680, 5
        %v1711 = vsel %vm1690, %v1709, %v1710
        %v1712 = vrot.slane %v1505, 5
        %v1713 = vrot.slane %v1681, 5
        %v1714 = vsel %vm1690, %v1712, %v1713
        %v1715 = vrot.slane %v1506, 5
        %v1716 = vrot.slane %v1682, 5
        %v1717 = vsel %vm1690, %v1715, %v1716
        %v1718 = vrot.slane %v1507, 5
        %v1719 = vrot.slane %v1683, 5
        %v1720 = vsel %vm1690, %v1718, %v1719
        %v1721 = vrot.slane %v1508, 5
        %v1722 = vrot.slane %v1684, 5
        %v1723 = vsel %vm1690, %v1721, %v1722
        %v1724 = vrot.slane %v1509, 5
        %v1725 = vrot.slane %v1685, 5
        %v1726 = vsel %vm1690, %v1724, %v1725
        %v1727 = vrot.slane %v1510, 5
        %v1728 = vrot.slane %v1686, 5
        %v1729 = vsel %vm1690, %v1727, %v1728
        %v1730 = vrot.slane %v1511, 5
        %v1731 = vrot.slane %v1687, 5
        %v1732 = vsel %vm1690, %v1730, %v1731
        %v1733 = vrot.slane %v1512, 5
        %v1734 = vrot.slane %v1688, 5
        %v1735 = vsel %vm1690, %v1733, %v1734
        %v1736 = vrot.slane %v1513, 5
        %v1737 = vrot.slane %v1689, 5
        %v1738 = vsel %vm1690, %v1736, %v1737
        %v1787 = vunpack.c.l.b16 %v1241
        %v1788 = vunpack.c.l.b16 %v1242
        %v1789 = vunpack.c.l.b16 %v1243
        %v1790 = vunpack.c.l.b16 %v1244
        %v1791 = vunpack.c.l.b16 %v1245
        %v1792 = vunpack.c.l.b16 %v1246
        %v1793 = vunpack.c.l.b16 %v1247
        %v1794 = vunpack.c.l.b16 %v1248
        %v1795 = vunpack.c.l.b16 %v1249
        %v1796 = vunpack.c.l.b16 %v1250
        %v1797 = vunpack.c.l.b16 %v1251
        %v1798 = vunpack.c.l.b16 %v1252
        %v1799 = vunpack.c.l.b16 %v1253
        %v1800 = vunpack.c.l.b16 %v1254
        %v1801 = vunpack.c.l.b16 %v1255
        %v1802 = vunpack.c.l.b16 %v1256
        %v1803 = vunpack.c.l.b16 %v1257
        %v1804 = vunpack.c.l.b16 %v1258
        %v1805 = vunpack.c.l.b16 %v1259
        %v1806 = vunpack.c.l.b16 %v1260
        %v1807 = vunpack.c.l.b16 %v1261
        %v1808 = vunpack.c.l.b16 %v1262
        %v1809 = vunpack.c.l.b16 %v1263
        %v1810 = vunpack.c.l.b16 %v1264
        %v1811 = vunpack.c.l.b16 %v1265
        %v1812 = vunpack.c.l.b16 %v1266
        %v1813 = vunpack.c.l.b16 %v1267
        %v1814 = vunpack.c.l.b16 %v1268
        %v1815 = vunpack.c.l.b16 %v1269
        %v1816 = vunpack.c.l.b16 %v1270
        %v1817 = vunpack.c.l.b16 %v1271
        %v1818 = vunpack.c.l.b16 %v1272
        %v1819 = vunpack.c.l.b16 %v1273
        %v1820 = vunpack.c.l.b16 %v1274
        %v1821 = vunpack.c.l.b16 %v1275
        %v1822 = vunpack.c.l.b16 %v1276
        %v1823 = vunpack.c.l.b16 %v1277
        %v1824 = vunpack.c.l.b16 %v1278
        %v1825 = vunpack.c.l.b16 %v1279
        %v1826 = vunpack.c.l.b16 %v1280
        %v1827 = vunpack.c.l.b16 %v1281
        %v1828 = vunpack.c.l.b16 %v1282
        %v1829 = vunpack.c.l.b16 %v1283
        %v1830 = vunpack.c.l.b16 %v1284
        %v1831 = vunpack.c.l.b16 %v1285
        %v1832 = vunpack.c.l.b16 %v1286
        %v1833 = vunpack.c.l.b16 %v1287
        %v1834 = vunpack.c.l.b16 %v1288
        %v1835 = vpack.c.b16 %v1788, %v1787
        %v1836 = vpack.c.b16 %v1789, %v1789
        %v1837 = vpack.c.b16 %v1791, %v1790
        %v1838 = vpack.c.b16 %v1792, %v1792
        %v1839 = vpack.c.b16 %v1794, %v1793
        %v1840 = vpack.c.b16 %v1795, %v1795
        %v1841 = vpack.c.b16 %v1797, %v1796
        %v1842 = vpack.c.b16 %v1798, %v1798
        %v1843 = vpack.c.b16 %v1800, %v1799
        %v1844 = vpack.c.b16 %v1801, %v1801
        %v1845 = vpack.c.b16 %v1803, %v1802
        %v1846 = vpack.c.b16 %v1804, %v1804
        %v1847 = vpack.c.b16 %v1806, %v1805
        %v1848 = vpack.c.b16 %v1807, %v1807
        %v1849 = vpack.c.b16 %v1809, %v1808
        %v1850 = vpack.c.b16 %v1810, %v1810
        %v1851 = vpack.c.b16 %v1812, %v1811
        %v1852 = vpack.c.b16 %v1813, %v1813
        %v1853 = vpack.c.b16 %v1815, %v1814
        %v1854 = vpack.c.b16 %v1816, %v1816
        %v1855 = vpack.c.b16 %v1818, %v1817
        %v1856 = vpack.c.b16 %v1819, %v1819
        %v1857 = vpack.c.b16 %v1821, %v1820
        %v1858 = vpack.c.b16 %v1822, %v1822
        %v1859 = vpack.c.b16 %v1824, %v1823
        %v1860 = vpack.c.b16 %v1825, %v1825
        %v1861 = vpack.c.b16 %v1827, %v1826
        %v1862 = vpack.c.b16 %v1828, %v1828
        %v1863 = vpack.c.b16 %v1830, %v1829
        %v1864 = vpack.c.b16 %v1831, %v1831
        %v1865 = vpack.c.b16 %v1833, %v1832
        %v1866 = vpack.c.b16 %v1834, %v1834
        %v1867 = vpack.c.b16 %v1789, %v1788
        %v1868 = vpack.c.b16 %v1792, %v1791
        %v1869 = vpack.c.b16 %v1795, %v1794
        %v1870 = vpack.c.b16 %v1798, %v1797
        %v1871 = vpack.c.b16 %v1801, %v1800
        %v1872 = vpack.c.b16 %v1804, %v1803
        %v1873 = vpack.c.b16 %v1807, %v1806
        %v1874 = vpack.c.b16 %v1810, %v1809
        %v1875 = vpack.c.b16 %v1813, %v1812
        %v1876 = vpack.c.b16 %v1816, %v1815
        %v1877 = vpack.c.b16 %v1819, %v1818
        %v1878 = vpack.c.b16 %v1822, %v1821
        %v1879 = vpack.c.b16 %v1825, %v1824
        %v1880 = vpack.c.b16 %v1828, %v1827
        %v1881 = vpack.c.b16 %v1831, %v1830
        %v1882 = vpack.c.b16 %v1834, %v1833
        %v1884 = vshrl.u32 %v1867, 16
        %v1886 = vrot.slane %v1884, 4
        %v1887 = vshll.u32 %v1867, 16
        %v1889 = vrot.slane %v1887, 5
        %v1890 = vor.u32 %v1886, %v1889
        %v1892 = vshrl.u32 %v1868, 16
        %v1894 = vrot.slane %v1892, 4
        %v1895 = vshll.u32 %v1868, 16
        %v1897 = vrot.slane %v1895, 5
        %v1898 = vor.u32 %v1894, %v1897
        %v1900 = vshrl.u32 %v1869, 16
        %v1902 = vrot.slane %v1900, 4
        %v1903 = vshll.u32 %v1869, 16
        %v1905 = vrot.slane %v1903, 5
        %v1906 = vor.u32 %v1902, %v1905
        %v1908 = vshrl.u32 %v1870, 16
        %v1910 = vrot.slane %v1908, 4
        %v1911 = vshll.u32 %v1870, 16
        %v1913 = vrot.slane %v1911, 5
        %v1914 = vor.u32 %v1910, %v1913
        %v1916 = vshrl.u32 %v1871, 16
        %v1918 = vrot.slane %v1916, 4
        %v1919 = vshll.u32 %v1871, 16
        %v1921 = vrot.slane %v1919, 5
        %v1922 = vor.u32 %v1918, %v1921
        %v1924 = vshrl.u32 %v1872, 16
        %v1926 = vrot.slane %v1924, 4
        %v1927 = vshll.u32 %v1872, 16
        %v1929 = vrot.slane %v1927, 5
        %v1930 = vor.u32 %v1926, %v1929
        %v1932 = vshrl.u32 %v1873, 16
        %v1934 = vrot.slane %v1932, 4
        %v1935 = vshll.u32 %v1873, 16
        %v1937 = vrot.slane %v1935, 5
        %v1938 = vor.u32 %v1934, %v1937
        %v1940 = vshrl.u32 %v1874, 16
        %v1942 = vrot.slane %v1940, 4
        %v1943 = vshll.u32 %v1874, 16
        %v1945 = vrot.slane %v1943, 5
        %v1946 = vor.u32 %v1942, %v1945
        %v1948 = vshrl.u32 %v1875, 16
        %v1950 = vrot.slane %v1948, 4
        %v1951 = vshll.u32 %v1875, 16
        %v1953 = vrot.slane %v1951, 5
        %v1954 = vor.u32 %v1950, %v1953
        %v1956 = vshrl.u32 %v1876, 16
        %v1958 = vrot.slane %v1956, 4
        %v1959 = vshll.u32 %v1876, 16
        %v1961 = vrot.slane %v1959, 5
        %v1962 = vor.u32 %v1958, %v1961
        %v1964 = vshrl.u32 %v1877, 16
        %v1966 = vrot.slane %v1964, 4
        %v1967 = vshll.u32 %v1877, 16
        %v1969 = vrot.slane %v1967, 5
        %v1970 = vor.u32 %v1966, %v1969
        %v1972 = vshrl.u32 %v1878, 16
        %v1974 = vrot.slane %v1972, 4
        %v1975 = vshll.u32 %v1878, 16
        %v1977 = vrot.slane %v1975, 5
        %v1978 = vor.u32 %v1974, %v1977
        %v1980 = vshrl.u32 %v1879, 16
        %v1982 = vrot.slane %v1980, 4
        %v1983 = vshll.u32 %v1879, 16
        %v1985 = vrot.slane %v1983, 5
        %v1986 = vor.u32 %v1982, %v1985
        %v1988 = vshrl.u32 %v1880, 16
        %v1990 = vrot.slane %v1988, 4
        %v1991 = vshll.u32 %v1880, 16
        %v1993 = vrot.slane %v1991, 5
        %v1994 = vor.u32 %v1990, %v1993
        %v1996 = vshrl.u32 %v1881, 16
        %v1998 = vrot.slane %v1996, 4
        %v1999 = vshll.u32 %v1881, 16
        %v2001 = vrot.slane %v1999, 5
        %v2002 = vor.u32 %v1998, %v2001
        %v2004 = vshrl.u32 %v1882, 16
        %v2006 = vrot.slane %v2004, 4
        %v2007 = vshll.u32 %v1882, 16
        %v2009 = vrot.slane %v2007, 5
        %v2010 = vor.u32 %v2006, %v2009
        %v2027 = vunpack.c.l.b16 %v1289
        %v2028 = vunpack.c.l.b16 %v1290
        %v2029 = vunpack.c.l.b16 %v1291
        %v2030 = vunpack.c.l.b16 %v1292
        %v2031 = vunpack.c.l.b16 %v1293
        %v2032 = vunpack.c.l.b16 %v1294
        %v2033 = vunpack.c.l.b16 %v1295
        %v2034 = vunpack.c.l.b16 %v1296
        %v2035 = vunpack.c.l.b16 %v1297
        %v2036 = vunpack.c.l.b16 %v1298
        %v2037 = vunpack.c.l.b16 %v1299
        %v2038 = vunpack.c.l.b16 %v1300
        %v2039 = vunpack.c.l.b16 %v1301
        %v2040 = vunpack.c.l.b16 %v1302
        %v2041 = vunpack.c.l.b16 %v1303
        %v2042 = vunpack.c.l.b16 %v1304
        %v2043 = vpack.c.b16 %v2027, %v2027
        %v2044 = vpack.c.b16 %v2028, %v2028
        %v2045 = vpack.c.b16 %v2029, %v2029
        %v2046 = vpack.c.b16 %v2030, %v2030
        %v2047 = vpack.c.b16 %v2031, %v2031
        %v2048 = vpack.c.b16 %v2032, %v2032
        %v2049 = vpack.c.b16 %v2033, %v2033
        %v2050 = vpack.c.b16 %v2034, %v2034
        %v2051 = vpack.c.b16 %v2035, %v2035
        %v2052 = vpack.c.b16 %v2036, %v2036
        %v2053 = vpack.c.b16 %v2037, %v2037
        %v2054 = vpack.c.b16 %v2038, %v2038
        %v2055 = vpack.c.b16 %v2039, %v2039
        %v2056 = vpack.c.b16 %v2040, %v2040
        %v2057 = vpack.c.b16 %v2041, %v2041
        %v2058 = vpack.c.b16 %v2042, %v2042
        %v2059 = vrot.slane %v1867, 5
        %v2060 = vrot.slane %v2043, 5
        %v2061 = vsel %vm1690, %v2059, %v2060
        %v2062 = vrot.slane %v1868, 5
        %v2063 = vrot.slane %v2044, 5
        %v2064 = vsel %vm1690, %v2062, %v2063
        %v2065 = vrot.slane %v1869, 5
        %v2066 = vrot.slane %v2045, 5
        %v2067 = vsel %vm1690, %v2065, %v2066
        %v2068 = vrot.slane %v1870, 5
        %v2069 = vrot.slane %v2046, 5
        %v2070 = vsel %vm1690, %v2068, %v2069
        %v2071 = vrot.slane %v1871, 5
        %v2072 = vrot.slane %v2047, 5
        %v2073 = vsel %vm1690, %v2071, %v2072
        %v2074 = vrot.slane %v1872, 5
        %v2075 = vrot.slane %v2048, 5
        %v2076 = vsel %vm1690, %v2074, %v2075
        %v2077 = vrot.slane %v1873, 5
        %v2078 = vrot.slane %v2049, 5
        %v2079 = vsel %vm1690, %v2077, %v2078
        %v2080 = vrot.slane %v1874, 5
        %v2081 = vrot.slane %v2050, 5
        %v2082 = vsel %vm1690, %v2080, %v2081
        %v2083 = vrot.slane %v1875, 5
        %v2084 = vrot.slane %v2051, 5
        %v2085 = vsel %vm1690, %v2083, %v2084
        %v2086 = vrot.slane %v1876, 5
        %v2087 = vrot.slane %v2052, 5
        %v2088 = vsel %vm1690, %v2086, %v2087
        %v2089 = vrot.slane %v1877, 5
        %v2090 = vrot.slane %v2053, 5
        %v2091 = vsel %vm1690, %v2089, %v2090
        %v2092 = vrot.slane %v1878, 5
        %v2093 = vrot.slane %v2054, 5
        %v2094 = vsel %vm1690, %v2092, %v2093
        %v2095 = vrot.slane %v1879, 5
        %v2096 = vrot.slane %v2055, 5
        %v2097 = vsel %vm1690, %v2095, %v2096
        %v2098 = vrot.slane %v1880, 5
        %v2099 = vrot.slane %v2056, 5
        %v2100 = vsel %vm1690, %v2098, %v2099
        %v2101 = vrot.slane %v1881, 5
        %v2102 = vrot.slane %v2057, 5
        %v2103 = vsel %vm1690, %v2101, %v2102
        %v2104 = vrot.slane %v1882, 5
        %v2105 = vrot.slane %v2058, 5
        %v2106 = vsel %vm1690, %v2104, %v2105
        %v2155 = vunpack.c.l.b16 %v1306
        %v2156 = vunpack.c.l.b16 %v1307
        %v2157 = vunpack.c.l.b16 %v1308
        %v2158 = vunpack.c.l.b16 %v1309
        %v2159 = vunpack.c.l.b16 %v1310
        %v2160 = vunpack.c.l.b16 %v1311
        %v2161 = vunpack.c.l.b16 %v1312
        %v2162 = vunpack.c.l.b16 %v1313
        %v2163 = vunpack.c.l.b16 %v1314
        %v2164 = vunpack.c.l.b16 %v1315
        %v2165 = vunpack.c.l.b16 %v1316
        %v2166 = vunpack.c.l.b16 %v1317
        %v2167 = vunpack.c.l.b16 %v1318
        %v2168 = vunpack.c.l.b16 %v1319
        %v2169 = vunpack.c.l.b16 %v1320
        %v2170 = vunpack.c.l.b16 %v1321
        %v2171 = vunpack.c.l.b16 %v1322
        %v2172 = vunpack.c.l.b16 %v1323
        %v2173 = vunpack.c.l.b16 %v1324
        %v2174 = vunpack.c.l.b16 %v1325
        %v2175 = vunpack.c.l.b16 %v1326
        %v2176 = vunpack.c.l.b16 %v1327
        %v2177 = vunpack.c.l.b16 %v1328
        %v2178 = vunpack.c.l.b16 %v1329
        %v2179 = vunpack.c.l.b16 %v1330
        %v2180 = vunpack.c.l.b16 %v1331
        %v2181 = vunpack.c.l.b16 %v1332
        %v2182 = vunpack.c.l.b16 %v1333
        %v2183 = vunpack.c.l.b16 %v1334
        %v2184 = vunpack.c.l.b16 %v1335
        %v2185 = vunpack.c.l.b16 %v1336
        %v2186 = vunpack.c.l.b16 %v1337
        %v2187 = vunpack.c.l.b16 %v1338
        %v2188 = vunpack.c.l.b16 %v1339
        %v2189 = vunpack.c.l.b16 %v1340
        %v2190 = vunpack.c.l.b16 %v1341
        %v2191 = vunpack.c.l.b16 %v1342
        %v2192 = vunpack.c.l.b16 %v1343
        %v2193 = vunpack.c.l.b16 %v1344
        %v2194 = vunpack.c.l.b16 %v1345
        %v2195 = vunpack.c.l.b16 %v1346
        %v2196 = vunpack.c.l.b16 %v1347
        %v2197 = vunpack.c.l.b16 %v1348
        %v2198 = vunpack.c.l.b16 %v1349
        %v2199 = vunpack.c.l.b16 %v1350
        %v2200 = vunpack.c.l.b16 %v1351
        %v2201 = vunpack.c.l.b16 %v1352
        %v2202 = vunpack.c.l.b16 %v1353
        %v2203 = vpack.c.b16 %v2156, %v2155
        %v2204 = vpack.c.b16 %v2157, %v2157
        %v2205 = vpack.c.b16 %v2159, %v2158
        %v2206 = vpack.c.b16 %v2160, %v2160
        %v2207 = vpack.c.b16 %v2162, %v2161
        %v2208 = vpack.c.b16 %v2163, %v2163
        %v2209 = vpack.c.b16 %v2165, %v2164
        %v2210 = vpack.c.b16 %v2166, %v2166
        %v2211 = vpack.c.b16 %v2168, %v2167
        %v2212 = vpack.c.b16 %v2169, %v2169
        %v2213 = vpack.c.b16 %v2171, %v2170
        %v2214 = vpack.c.b16 %v2172, %v2172
        %v2215 = vpack.c.b16 %v2174, %v2173
        %v2216 = vpack.c.b16 %v2175, %v2175
        %v2217 = vpack.c.b16 %v2177, %v2176
        %v2218 = vpack.c.b16 %v2178, %v2178
        %v2219 = vpack.c.b16 %v2180, %v2179
        %v2220 = vpack.c.b16 %v2181, %v2181
        %v2221 = vpack.c.b16 %v2183, %v2182
        %v2222 = vpack.c.b16 %v2184, %v2184
        %v2223 = vpack.c.b16 %v2186, %v2185
        %v2224 = vpack.c.b16 %v2187, %v2187
        %v2225 = vpack.c.b16 %v2189, %v2188
        %v2226 = vpack.c.b16 %v2190, %v2190
        %v2227 = vpack.c.b16 %v2192, %v2191
        %v2228 = vpack.c.b16 %v2193, %v2193
        %v2229 = vpack.c.b16 %v2195, %v2194
        %v2230 = vpack.c.b16 %v2196, %v2196
        %v2231 = vpack.c.b16 %v2198, %v2197
        %v2232 = vpack.c.b16 %v2199, %v2199
        %v2233 = vpack.c.b16 %v2201, %v2200
        %v2234 = vpack.c.b16 %v2202, %v2202
        %v2235 = vpack.c.b16 %v2157, %v2156
        %v2236 = vpack.c.b16 %v2160, %v2159
        %v2237 = vpack.c.b16 %v2163, %v2162
        %v2238 = vpack.c.b16 %v2166, %v2165
        %v2239 = vpack.c.b16 %v2169, %v2168
        %v2240 = vpack.c.b16 %v2172, %v2171
        %v2241 = vpack.c.b16 %v2175, %v2174
        %v2242 = vpack.c.b16 %v2178, %v2177
        %v2243 = vpack.c.b16 %v2181, %v2180
        %v2244 = vpack.c.b16 %v2184, %v2183
        %v2245 = vpack.c.b16 %v2187, %v2186
        %v2246 = vpack.c.b16 %v2190, %v2189
        %v2247 = vpack.c.b16 %v2193, %v2192
        %v2248 = vpack.c.b16 %v2196, %v2195
        %v2249 = vpack.c.b16 %v2199, %v2198
        %v2250 = vpack.c.b16 %v2202, %v2201
        %v2252 = vshrl.u32 %v2235, 16
        %v2254 = vrot.slane %v2252, 4
        %v2255 = vshll.u32 %v2235, 16
        %v2257 = vrot.slane %v2255, 5
        %v2258 = vor.u32 %v2254, %v2257
        %v2260 = vshrl.u32 %v2236, 16
        %v2262 = vrot.slane %v2260, 4
        %v2263 = vshll.u32 %v2236, 16
        %v2265 = vrot.slane %v2263, 5
        %v2266 = vor.u32 %v2262, %v2265
        %v2268 = vshrl.u32 %v2237, 16
        %v2270 = vrot.slane %v2268, 4
        %v2271 = vshll.u32 %v2237, 16
        %v2273 = vrot.slane %v2271, 5
        %v2274 = vor.u32 %v2270, %v2273
        %v2276 = vshrl.u32 %v2238, 16
        %v2278 = vrot.slane %v2276, 4
        %v2279 = vshll.u32 %v2238, 16
        %v2281 = vrot.slane %v2279, 5
        %v2282 = vor.u32 %v2278, %v2281
        %v2284 = vshrl.u32 %v2239, 16
        %v2286 = vrot.slane %v2284, 4
        %v2287 = vshll.u32 %v2239, 16
        %v2289 = vrot.slane %v2287, 5
        %v2290 = vor.u32 %v2286, %v2289
        %v2292 = vshrl.u32 %v2240, 16
        %v2294 = vrot.slane %v2292, 4
        %v2295 = vshll.u32 %v2240, 16
        %v2297 = vrot.slane %v2295, 5
        %v2298 = vor.u32 %v2294, %v2297
        %v2300 = vshrl.u32 %v2241, 16
        %v2302 = vrot.slane %v2300, 4
        %v2303 = vshll.u32 %v2241, 16
        %v2305 = vrot.slane %v2303, 5
        %v2306 = vor.u32 %v2302, %v2305
        %v2308 = vshrl.u32 %v2242, 16
        %v2310 = vrot.slane %v2308, 4
        %v2311 = vshll.u32 %v2242, 16
        %v2313 = vrot.slane %v2311, 5
        %v2314 = vor.u32 %v2310, %v2313
        %v2316 = vshrl.u32 %v2243, 16
        %v2318 = vrot.slane %v2316, 4
        %v2319 = vshll.u32 %v2243, 16
        %v2321 = vrot.slane %v2319, 5
        %v2322 = vor.u32 %v2318, %v2321
        %v2324 = vshrl.u32 %v2244, 16
        %v2326 = vrot.slane %v2324, 4
        %v2327 = vshll.u32 %v2244, 16
        %v2329 = vrot.slane %v2327, 5
        %v2330 = vor.u32 %v2326, %v2329
        %v2332 = vshrl.u32 %v2245, 16
        %v2334 = vrot.slane %v2332, 4
        %v2335 = vshll.u32 %v2245, 16
        %v2337 = vrot.slane %v2335, 5
        %v2338 = vor.u32 %v2334, %v2337
        %v2340 = vshrl.u32 %v2246, 16
        %v2342 = vrot.slane %v2340, 4
        %v2343 = vshll.u32 %v2246, 16
        %v2345 = vrot.slane %v2343, 5
        %v2346 = vor.u32 %v2342, %v2345
        %v2348 = vshrl.u32 %v2247, 16
        %v2350 = vrot.slane %v2348, 4
        %v2351 = vshll.u32 %v2247, 16
        %v2353 = vrot.slane %v2351, 5
        %v2354 = vor.u32 %v2350, %v2353
        %v2356 = vshrl.u32 %v2248, 16
        %v2358 = vrot.slane %v2356, 4
        %v2359 = vshll.u32 %v2248, 16
        %v2361 = vrot.slane %v2359, 5
        %v2362 = vor.u32 %v2358, %v2361
        %v2364 = vshrl.u32 %v2249, 16
        %v2366 = vrot.slane %v2364, 4
        %v2367 = vshll.u32 %v2249, 16
        %v2369 = vrot.slane %v2367, 5
        %v2370 = vor.u32 %v2366, %v2369
        %v2372 = vshrl.u32 %v2250, 16
        %v2374 = vrot.slane %v2372, 4
        %v2375 = vshll.u32 %v2250, 16
        %v2377 = vrot.slane %v2375, 5
        %v2378 = vor.u32 %v2374, %v2377
        %v2395 = vunpack.c.l.b16 %v1354
        %v2396 = vunpack.c.l.b16 %v1355
        %v2397 = vunpack.c.l.b16 %v1356
        %v2398 = vunpack.c.l.b16 %v1357
        %v2399 = vunpack.c.l.b16 %v1358
        %v2400 = vunpack.c.l.b16 %v1359
        %v2401 = vunpack.c.l.b16 %v1360
        %v2402 = vunpack.c.l.b16 %v1361
        %v2403 = vunpack.c.l.b16 %v1362
        %v2404 = vunpack.c.l.b16 %v1363
        %v2405 = vunpack.c.l.b16 %v1364
        %v2406 = vunpack.c.l.b16 %v1365
        %v2407 = vunpack.c.l.b16 %v1366
        %v2408 = vunpack.c.l.b16 %v1367
        %v2409 = vunpack.c.l.b16 %v1368
        %v2410 = vunpack.c.l.b16 %v1369
        %v2411 = vpack.c.b16 %v2395, %v2395
        %v2412 = vpack.c.b16 %v2396, %v2396
        %v2413 = vpack.c.b16 %v2397, %v2397
        %v2414 = vpack.c.b16 %v2398, %v2398
        %v2415 = vpack.c.b16 %v2399, %v2399
        %v2416 = vpack.c.b16 %v2400, %v2400
        %v2417 = vpack.c.b16 %v2401, %v2401
        %v2418 = vpack.c.b16 %v2402, %v2402
        %v2419 = vpack.c.b16 %v2403, %v2403
        %v2420 = vpack.c.b16 %v2404, %v2404
        %v2421 = vpack.c.b16 %v2405, %v2405
        %v2422 = vpack.c.b16 %v2406, %v2406
        %v2423 = vpack.c.b16 %v2407, %v2407
        %v2424 = vpack.c.b16 %v2408, %v2408
        %v2425 = vpack.c.b16 %v2409, %v2409
        %v2426 = vpack.c.b16 %v2410, %v2410
        %v2427 = vrot.slane %v2235, 5
        %v2428 = vrot.slane %v2411, 5
        %v2429 = vsel %vm1690, %v2427, %v2428
        %v2430 = vrot.slane %v2236, 5
        %v2431 = vrot.slane %v2412, 5
        %v2432 = vsel %vm1690, %v2430, %v2431
        %v2433 = vrot.slane %v2237, 5
        %v2434 = vrot.slane %v2413, 5
        %v2435 = vsel %vm1690, %v2433, %v2434
        %v2436 = vrot.slane %v2238, 5
        %v2437 = vrot.slane %v2414, 5
        %v2438 = vsel %vm1690, %v2436, %v2437
        %v2439 = vrot.slane %v2239, 5
        %v2440 = vrot.slane %v2415, 5
        %v2441 = vsel %vm1690, %v2439, %v2440
        %v2442 = vrot.slane %v2240, 5
        %v2443 = vrot.slane %v2416, 5
        %v2444 = vsel %vm1690, %v2442, %v2443
        %v2445 = vrot.slane %v2241, 5
        %v2446 = vrot.slane %v2417, 5
        %v2447 = vsel %vm1690, %v2445, %v2446
        %v2448 = vrot.slane %v2242, 5
        %v2449 = vrot.slane %v2418, 5
        %v2450 = vsel %vm1690, %v2448, %v2449
        %v2451 = vrot.slane %v2243, 5
        %v2452 = vrot.slane %v2419, 5
        %v2453 = vsel %vm1690, %v2451, %v2452
        %v2454 = vrot.slane %v2244, 5
        %v2455 = vrot.slane %v2420, 5
        %v2456 = vsel %vm1690, %v2454, %v2455
        %v2457 = vrot.slane %v2245, 5
        %v2458 = vrot.slane %v2421, 5
        %v2459 = vsel %vm1690, %v2457, %v2458
        %v2460 = vrot.slane %v2246, 5
        %v2461 = vrot.slane %v2422, 5
        %v2462 = vsel %vm1690, %v2460, %v2461
        %v2463 = vrot.slane %v2247, 5
        %v2464 = vrot.slane %v2423, 5
        %v2465 = vsel %vm1690, %v2463, %v2464
        %v2466 = vrot.slane %v2248, 5
        %v2467 = vrot.slane %v2424, 5
        %v2468 = vsel %vm1690, %v2466, %v2467
        %v2469 = vrot.slane %v2249, 5
        %v2470 = vrot.slane %v2425, 5
        %v2471 = vsel %vm1690, %v2469, %v2470
        %v2472 = vrot.slane %v2250, 5
        %v2473 = vrot.slane %v2426, 5
        %v2474 = vsel %vm1690, %v2472, %v2473
        %v2475 = vld [vmem:[#allocation8] sm:$0xf]
        %v2476 = vld [vmem:[#allocation8 + $0x4] sm:$0xf]
        %v2477 = vld [vmem:[#allocation8 + $0x8] sm:$0xf]
        %v2478 = vld [vmem:[#allocation8 + $0xc] sm:$0xf]
        %v2479 = vld [vmem:[#allocation8 + $0x10] sm:$0xf]
        %v2480 = vld [vmem:[#allocation8 + $0x14] sm:$0xf]
        %v2481 = vld [vmem:[#allocation8 + $0x18] sm:$0xf]
        %v2482 = vld [vmem:[#allocation8 + $0x1c] sm:$0xf]
        %v2483 = vld [vmem:[#allocation8 + $0x20] sm:$0xf]
        %v2484 = vld [vmem:[#allocation8 + $0x24] sm:$0xf]
        %v2485 = vld [vmem:[#allocation8 + $0x28] sm:$0xf]
        %v2486 = vld [vmem:[#allocation8 + $0x2c] sm:$0xf]
        %v2487 = vld [vmem:[#allocation8 + $0x30] sm:$0xf]
        %v2488 = vld [vmem:[#allocation8 + $0x34] sm:$0xf]
        %v2489 = vld [vmem:[#allocation8 + $0x38] sm:$0xf]
        %v2490 = vld [vmem:[#allocation8 + $0x3c] sm:$0xf]
        %v2491 = vld [vmem:[#allocation8 + $0x40] sm:$0xf]
        %v2492 = vld [vmem:[#allocation8 + $0x44] sm:$0xf]
        %v2493 = vld [vmem:[#allocation8 + $0x48] sm:$0xf]
        %v2494 = vld [vmem:[#allocation8 + $0x4c] sm:$0xf]
        %v2495 = vld [vmem:[#allocation8 + $0x50] sm:$0xf]
        %v2496 = vld [vmem:[#allocation8 + $0x54] sm:$0xf]
        %v2497 = vld [vmem:[#allocation8 + $0x58] sm:$0xf]
        %v2498 = vld [vmem:[#allocation8 + $0x5c] sm:$0xf]
        %v2499 = vld [vmem:[#allocation8 + $0x60] sm:$0xf]
        %v2500 = vld [vmem:[#allocation8 + $0x64] sm:$0xf]
        %v2501 = vld [vmem:[#allocation8 + $0x68] sm:$0xf]
        %v2502 = vld [vmem:[#allocation8 + $0x6c] sm:$0xf]
        %v2503 = vld [vmem:[#allocation8 + $0x70] sm:$0xf]
        %v2504 = vld [vmem:[#allocation8 + $0x74] sm:$0xf]
        %v2505 = vld [vmem:[#allocation8 + $0x78] sm:$0xf]
        %v2506 = vld [vmem:[#allocation8 + $0x7c] sm:$0xf]
        %v2507 = vld [vmem:[#allocation8 + $0x80] sm:$0xf]
        %v2508 = vld [vmem:[#allocation8 + $0x84] sm:$0xf]
        %v2509 = vld [vmem:[#allocation8 + $0x88] sm:$0xf]
        %v2510 = vld [vmem:[#allocation8 + $0x8c] sm:$0xf]
        %v2511 = vld [vmem:[#allocation8 + $0x90] sm:$0xf]
        %v2512 = vld [vmem:[#allocation8 + $0x94] sm:$0xf]
        %v2513 = vld [vmem:[#allocation8 + $0x98] sm:$0xf]
        %v2514 = vld [vmem:[#allocation8 + $0x9c] sm:$0xf]
        %v2515 = vld [vmem:[#allocation8 + $0xa0] sm:$0xf]
        %v2516 = vld [vmem:[#allocation8 + $0xa4] sm:$0xf]
        %v2517 = vld [vmem:[#allocation8 + $0xa8] sm:$0xf]
        %v2518 = vld [vmem:[#allocation8 + $0xac] sm:$0xf]
        %v2519 = vld [vmem:[#allocation8 + $0xb0] sm:$0xf]
        %v2520 = vld [vmem:[#allocation8 + $0xb4] sm:$0xf]
        %v2521 = vld [vmem:[#allocation8 + $0xb8] sm:$0xf]
        %v2522 = vld [vmem:[#allocation8 + $0xbc] sm:$0xf]
        %v2523 = vld [vmem:[#allocation8 + $0xc0] sm:$0xf]
        %v2524 = vld [vmem:[#allocation8 + $0xc4] sm:$0xf]
        %v2525 = vld [vmem:[#allocation8 + $0xc8] sm:$0xf]
        %v2526 = vld [vmem:[#allocation8 + $0xcc] sm:$0xf]
        %v2527 = vld [vmem:[#allocation8 + $0xd0] sm:$0xf]
        %v2528 = vld [vmem:[#allocation8 + $0xd4] sm:$0xf]
        %v2529 = vld [vmem:[#allocation8 + $0xd8] sm:$0xf]
        %v2530 = vld [vmem:[#allocation8 + $0xdc] sm:$0xf]
        %v2531 = vld [vmem:[#allocation8 + $0xe0] sm:$0xf]
        %v2532 = vld [vmem:[#allocation8 + $0xe4] sm:$0xf]
        %v2533 = vld [vmem:[#allocation8 + $0xe8] sm:$0xf]
        %v2534 = vld [vmem:[#allocation8 + $0xec] sm:$0xf]
        %v2535 = vld [vmem:[#allocation8 + $0xf0] sm:$0xf]
        %v2536 = vld [vmem:[#allocation8 + $0xf4] sm:$0xf]
        %v2537 = vld [vmem:[#allocation8 + $0xf8] sm:$0xf]
        %v2538 = vld [vmem:[#allocation8 + $0xfc] sm:$0xf]
        %v2539 = vld [vmem:[#allocation8 + $0x100] sm:$0xf]
        %v2540 = vld [vmem:[#allocation8 + $0x104] sm:$0xf]
        %v2541 = vld [vmem:[#allocation8 + $0x108] sm:$0xf]
        %v2542 = vld [vmem:[#allocation8 + $0x10c] sm:$0xf]
        %v2543 = vld [vmem:[#allocation8 + $0x110] sm:$0xf]
        %v2544 = vld [vmem:[#allocation8 + $0x114] sm:$0xf]
        %v2545 = vld [vmem:[#allocation8 + $0x118] sm:$0xf]
        %v2546 = vld [vmem:[#allocation8 + $0x11c] sm:$0xf]
        %v2547 = vld [vmem:[#allocation8 + $0x120] sm:$0xf]
        %v2548 = vld [vmem:[#allocation8 + $0x124] sm:$0xf]
        %v2549 = vld [vmem:[#allocation8 + $0x128] sm:$0xf]
        %v2550 = vld [vmem:[#allocation8 + $0x12c] sm:$0xf]
        %v2551 = vld [vmem:[#allocation8 + $0x130] sm:$0xf]
        %v2552 = vld [vmem:[#allocation8 + $0x134] sm:$0xf]
        %v2553 = vld [vmem:[#allocation8 + $0x138] sm:$0xf]
        %v2554 = vld [vmem:[#allocation8 + $0x13c] sm:$0xf]
        %v2555 = vld [vmem:[#allocation8 + $0x140] sm:$0xf]
        %v2556 = vld [vmem:[#allocation8 + $0x144] sm:$0xf]
        %v2557 = vld [vmem:[#allocation8 + $0x148] sm:$0xf]
        %v2558 = vld [vmem:[#allocation8 + $0x14c] sm:$0xf]
        %v2559 = vld [vmem:[#allocation8 + $0x150] sm:$0xf]
        %v2560 = vld [vmem:[#allocation8 + $0x154] sm:$0xf]
        %v2561 = vld [vmem:[#allocation8 + $0x158] sm:$0xf]
        %v2562 = vld [vmem:[#allocation8 + $0x15c] sm:$0xf]
        %v2563 = vld [vmem:[#allocation8 + $0x160] sm:$0xf]
        %v2564 = vld [vmem:[#allocation8 + $0x164] sm:$0xf]
        %v2565 = vld [vmem:[#allocation8 + $0x168] sm:$0xf]
        %v2566 = vld [vmem:[#allocation8 + $0x16c] sm:$0xf]
        %v2567 = vld [vmem:[#allocation8 + $0x170] sm:$0xf]
        %v2568 = vld [vmem:[#allocation8 + $0x174] sm:$0xf]
        %v2569 = vld [vmem:[#allocation8 + $0x178] sm:$0xf]
        %v2570 = vld [vmem:[#allocation8 + $0x17c] sm:$0xf]
        %v2571 = vld [vmem:[#allocation8 + $0x180] sm:$0xf]
        %v2572 = vld [vmem:[#allocation8 + $0x184] sm:$0xf]
        %v2573 = vld [vmem:[#allocation8 + $0x188] sm:$0xf]
        %v2574 = vld [vmem:[#allocation8 + $0x18c] sm:$0xf]
        %v2575 = vld [vmem:[#allocation8 + $0x190] sm:$0xf]
        %v2576 = vld [vmem:[#allocation8 + $0x194] sm:$0xf]
        %v2577 = vld [vmem:[#allocation8 + $0x198] sm:$0xf]
        %v2578 = vld [vmem:[#allocation8 + $0x19c] sm:$0xf]
        %v2579 = vld [vmem:[#allocation8 + $0x1a0] sm:$0xf]
        %v2580 = vld [vmem:[#allocation8 + $0x1a4] sm:$0xf]
        %v2581 = vld [vmem:[#allocation8 + $0x1a8] sm:$0xf]
        %v2582 = vld [vmem:[#allocation8 + $0x1ac] sm:$0xf]
        %v2583 = vld [vmem:[#allocation8 + $0x1b0] sm:$0xf]
        %v2584 = vld [vmem:[#allocation8 + $0x1b4] sm:$0xf]
        %v2585 = vld [vmem:[#allocation8 + $0x1b8] sm:$0xf]
        %v2586 = vld [vmem:[#allocation8 + $0x1bc] sm:$0xf]
        %v2587 = vld [vmem:[#allocation8 + $0x1c0] sm:$0xf]
        %v2588 = vld [vmem:[#allocation8 + $0x1c4] sm:$0xf]
        %v2589 = vld [vmem:[#allocation8 + $0x1c8] sm:$0xf]
        %v2590 = vld [vmem:[#allocation8 + $0x1cc] sm:$0xf]
        %v2591 = vld [vmem:[#allocation8 + $0x1d0] sm:$0xf]
        %v2592 = vld [vmem:[#allocation8 + $0x1d4] sm:$0xf]
        %v2593 = vld [vmem:[#allocation8 + $0x1d8] sm:$0xf]
        %v2594 = vld [vmem:[#allocation8 + $0x1dc] sm:$0xf]
        %v2595 = vld [vmem:[#allocation8 + $0x1e0] sm:$0xf]
        %v2596 = vld [vmem:[#allocation8 + $0x1e4] sm:$0xf]
        %v2597 = vld [vmem:[#allocation8 + $0x1e8] sm:$0xf]
        %v2598 = vld [vmem:[#allocation8 + $0x1ec] sm:$0xf]
        %v2599 = vld [vmem:[#allocation8 + $0x1f0] sm:$0xf]
        %v2600 = vld [vmem:[#allocation8 + $0x1f4] sm:$0xf]
        %v2601 = vld [vmem:[#allocation8 + $0x1f8] sm:$0xf]
        %v2602 = vld [vmem:[#allocation8 + $0x1fc] sm:$0xf]
        %v2603 = vld [vmem:[#allocation8 + $0x200] sm:$0xf]
        %v2604 = vld [vmem:[#allocation8 + $0x204] sm:$0xf]
        %v2605 = vld [vmem:[#allocation8 + $0x208] sm:$0xf]
        %v2606 = vld [vmem:[#allocation8 + $0x20c] sm:$0xf]
        %v2607 = vld [vmem:[#allocation8 + $0x210] sm:$0xf]
        %v2608 = vld [vmem:[#allocation8 + $0x214] sm:$0xf]
        %v2609 = vld [vmem:[#allocation8 + $0x218] sm:$0xf]
        %v2610 = vld [vmem:[#allocation8 + $0x21c] sm:$0xf]
        %v2611 = vld [vmem:[#allocation8 + $0x220] sm:$0xf]
        %v2612 = vld [vmem:[#allocation8 + $0x224] sm:$0xf]
        %v2613 = vld [vmem:[#allocation8 + $0x228] sm:$0xf]
        %v2614 = vld [vmem:[#allocation8 + $0x22c] sm:$0xf]
        %v2615 = vld [vmem:[#allocation8 + $0x230] sm:$0xf]
        %v2616 = vld [vmem:[#allocation8 + $0x234] sm:$0xf]
        %v2617 = vld [vmem:[#allocation8 + $0x238] sm:$0xf]
        %v2618 = vld [vmem:[#allocation8 + $0x23c] sm:$0xf]
        %vm2619 = vsmask.f32 4352
        %v2621 = vshrl.u32 %v1466, 16
        %v2623 = vrot.slane %v2621, 3
        %v2624 = vshll.u32 %v1466, 16
        %v2626 = vrot.slane %v2624, 4
        %v2627 = vor.u32 %v2623, %v2626
        %v2629 = vshrl.u32 %v1467, 16
        %v2631 = vrot.slane %v2629, 3
        %v2632 = vshll.u32 %v1467, 16
        %v2634 = vrot.slane %v2632, 4
        %v2635 = vor.u32 %v2631, %v2634
        %v2636 = vsel %vm2619, %v2627, %v2635
        %v2638 = vshrl.u32 %v1521, 16
        %v2640 = vrot.slane %v2638, 3
        %v2641 = vshll.u32 %v1521, 16
        %v2643 = vrot.slane %v2641, 4
        %v2644 = vor.u32 %v2640, %v2643
        %v2645 = vsel %vm2619, %v2644, %v2644
        %v2647 = vshrl.u32 %v1691, 16
        %v2649 = vrot.slane %v2647, 3
        %v2650 = vshll.u32 %v1691, 16
        %v2652 = vrot.slane %v2650, 4
        %v2653 = vor.u32 %v2649, %v2652
        %v2655 = vshrl.u32 %v1693, 16
        %v2657 = vrot.slane %v2655, 3
        %v2658 = vshll.u32 %v1693, 16
        %v2660 = vrot.slane %v2658, 4
        %v2661 = vor.u32 %v2657, %v2660
        %v2662 = vsel %vm2619, %v2653, %v2661
        %v2664 = vshrl.u32 %v1835, 16
        %v2666 = vrot.slane %v2664, 3
        %v2667 = vshll.u32 %v1835, 16
        %v2669 = vrot.slane %v2667, 4
        %v2670 = vor.u32 %v2666, %v2669
        %v2672 = vshrl.u32 %v1836, 16
        %v2674 = vrot.slane %v2672, 3
        %v2675 = vshll.u32 %v1836, 16
        %v2677 = vrot.slane %v2675, 4
        %v2678 = vor.u32 %v2674, %v2677
        %v2679 = vsel %vm2619, %v2670, %v2678
        %v2681 = vshrl.u32 %v1890, 16
        %v2683 = vrot.slane %v2681, 3
        %v2684 = vshll.u32 %v1890, 16
        %v2686 = vrot.slane %v2684, 4
        %v2687 = vor.u32 %v2683, %v2686
        %v2688 = vsel %vm2619, %v2687, %v2687
        %v2690 = vshrl.u32 %v2059, 16
        %v2692 = vrot.slane %v2690, 3
        %v2693 = vshll.u32 %v2059, 16
        %v2695 = vrot.slane %v2693, 4
        %v2696 = vor.u32 %v2692, %v2695
        %v2698 = vshrl.u32 %v2061, 16
        %v2700 = vrot.slane %v2698, 3
        %v2701 = vshll.u32 %v2061, 16
        %v2703 = vrot.slane %v2701, 4
        %v2704 = vor.u32 %v2700, %v2703
        %v2705 = vsel %vm2619, %v2696, %v2704
        %v2707 = vshrl.u32 %v2203, 16
        %v2709 = vrot.slane %v2707, 3
        %v2710 = vshll.u32 %v2203, 16
        %v2712 = vrot.slane %v2710, 4
        %v2713 = vor.u32 %v2709, %v2712
        %v2715 = vshrl.u32 %v2204, 16
        %v2717 = vrot.slane %v2715, 3
        %v2718 = vshll.u32 %v2204, 16
        %v2720 = vrot.slane %v2718, 4
        %v2721 = vor.u32 %v2717, %v2720
        %v2722 = vsel %vm2619, %v2713, %v2721
        %v2724 = vshrl.u32 %v2258, 16
        %v2726 = vrot.slane %v2724, 3
        %v2727 = vshll.u32 %v2258, 16
        %v2729 = vrot.slane %v2727, 4
        %v2730 = vor.u32 %v2726, %v2729
        %v2731 = vsel %vm2619, %v2730, %v2730
        %v2733 = vshrl.u32 %v2427, 16
        %v2735 = vrot.slane %v2733, 3
        %v2736 = vshll.u32 %v2427, 16
        %v2738 = vrot.slane %v2736, 4
        %v2739 = vor.u32 %v2735, %v2738
        %v2741 = vshrl.u32 %v2429, 16
        %v2743 = vrot.slane %v2741, 3
        %v2744 = vshll.u32 %v2429, 16
        %v2746 = vrot.slane %v2744, 4
        %v2747 = vor.u32 %v2743, %v2746
        %v2748 = vsel %vm2619, %v2739, %v2747
        %v2750 = vshrl.u32 %v1468, 16
        %v2752 = vrot.slane %v2750, 3
        %v2753 = vshll.u32 %v1468, 16
        %v2755 = vrot.slane %v2753, 4
        %v2756 = vor.u32 %v2752, %v2755
        %v2758 = vshrl.u32 %v1469, 16
        %v2760 = vrot.slane %v2758, 3
        %v2761 = vshll.u32 %v1469, 16
        %v2763 = vrot.slane %v2761, 4
        %v2764 = vor.u32 %v2760, %v2763
        %v2765 = vsel %vm2619, %v2756, %v2764
        %v2767 = vshrl.u32 %v1529, 16
        %v2769 = vrot.slane %v2767, 3
        %v2770 = vshll.u32 %v1529, 16
        %v2772 = vrot.slane %v2770, 4
        %v2773 = vor.u32 %v2769, %v2772
        %v2774 = vsel %vm2619, %v2773, %v2773
        %v2776 = vshrl.u32 %v1694, 16
        %v2778 = vrot.slane %v2776, 3
        %v2779 = vshll.u32 %v1694, 16
        %v2781 = vrot.slane %v2779, 4
        %v2782 = vor.u32 %v2778, %v2781
        %v2784 = vshrl.u32 %v1696, 16
        %v2786 = vrot.slane %v2784, 3
        %v2787 = vshll.u32 %v1696, 16
        %v2789 = vrot.slane %v2787, 4
        %v2790 = vor.u32 %v2786, %v2789
        %v2791 = vsel %vm2619, %v2782, %v2790
        %v2793 = vshrl.u32 %v1837, 16
        %v2795 = vrot.slane %v2793, 3
        %v2796 = vshll.u32 %v1837, 16
        %v2798 = vrot.slane %v2796, 4
        %v2799 = vor.u32 %v2795, %v2798
        %v2801 = vshrl.u32 %v1838, 16
        %v2803 = vrot.slane %v2801, 3
        %v2804 = vshll.u32 %v1838, 16
        %v2806 = vrot.slane %v2804, 4
        %v2807 = vor.u32 %v2803, %v2806
        %v2808 = vsel %vm2619, %v2799, %v2807
        %v2810 = vshrl.u32 %v1898, 16
        %v2812 = vrot.slane %v2810, 3
        %v2813 = vshll.u32 %v1898, 16
        %v2815 = vrot.slane %v2813, 4
        %v2816 = vor.u32 %v2812, %v2815
        %v2817 = vsel %vm2619, %v2816, %v2816
        %v2819 = vshrl.u32 %v2062, 16
        %v2821 = vrot.slane %v2819, 3
        %v2822 = vshll.u32 %v2062, 16
        %v2824 = vrot.slane %v2822, 4
        %v2825 = vor.u32 %v2821, %v2824
        %v2827 = vshrl.u32 %v2064, 16
        %v2829 = vrot.slane %v2827, 3
        %v2830 = vshll.u32 %v2064, 16
        %v2832 = vrot.slane %v2830, 4
        %v2833 = vor.u32 %v2829, %v2832
        %v2834 = vsel %vm2619, %v2825, %v2833
        %v2836 = vshrl.u32 %v2205, 16
        %v2838 = vrot.slane %v2836, 3
        %v2839 = vshll.u32 %v2205, 16
        %v2841 = vrot.slane %v2839, 4
        %v2842 = vor.u32 %v2838, %v2841
        %v2844 = vshrl.u32 %v2206, 16
        %v2846 = vrot.slane %v2844, 3
        %v2847 = vshll.u32 %v2206, 16
        %v2849 = vrot.slane %v2847, 4
        %v2850 = vor.u32 %v2846, %v2849
        %v2851 = vsel %vm2619, %v2842, %v2850
        %v2853 = vshrl.u32 %v2266, 16
        %v2855 = vrot.slane %v2853, 3
        %v2856 = vshll.u32 %v2266, 16
        %v2858 = vrot.slane %v2856, 4
        %v2859 = vor.u32 %v2855, %v2858
        %v2860 = vsel %vm2619, %v2859, %v2859
        %v2862 = vshrl.u32 %v2430, 16
        %v2864 = vrot.slane %v2862, 3
        %v2865 = vshll.u32 %v2430, 16
        %v2867 = vrot.slane %v2865, 4
        %v2868 = vor.u32 %v2864, %v2867
        %v2870 = vshrl.u32 %v2432, 16
        %v2872 = vrot.slane %v2870, 3
        %v2873 = vshll.u32 %v2432, 16
        %v2875 = vrot.slane %v2873, 4
        %v2876 = vor.u32 %v2872, %v2875
        %v2877 = vsel %vm2619, %v2868, %v2876
        %v2879 = vshrl.u32 %v1470, 16
        %v2881 = vrot.slane %v2879, 3
        %v2882 = vshll.u32 %v1470, 16
        %v2884 = vrot.slane %v2882, 4
        %v2885 = vor.u32 %v2881, %v2884
        %v2887 = vshrl.u32 %v1471, 16
        %v2889 = vrot.slane %v2887, 3
        %v2890 = vshll.u32 %v1471, 16
        %v2892 = vrot.slane %v2890, 4
        %v2893 = vor.u32 %v2889, %v2892
        %v2894 = vsel %vm2619, %v2885, %v2893
        %v2896 = vshrl.u32 %v1537, 16
        %v2898 = vrot.slane %v2896, 3
        %v2899 = vshll.u32 %v1537, 16
        %v2901 = vrot.slane %v2899, 4
        %v2902 = vor.u32 %v2898, %v2901
        %v2903 = vsel %vm2619, %v2902, %v2902
        %v2905 = vshrl.u32 %v1697, 16
        %v2907 = vrot.slane %v2905, 3
        %v2908 = vshll.u32 %v1697, 16
        %v2910 = vrot.slane %v2908, 4
        %v2911 = vor.u32 %v2907, %v2910
        %v2913 = vshrl.u32 %v1699, 16
        %v2915 = vrot.slane %v2913, 3
        %v2916 = vshll.u32 %v1699, 16
        %v2918 = vrot.slane %v2916, 4
        %v2919 = vor.u32 %v2915, %v2918
        %v2920 = vsel %vm2619, %v2911, %v2919
        %v2922 = vshrl.u32 %v1839, 16
        %v2924 = vrot.slane %v2922, 3
        %v2925 = vshll.u32 %v1839, 16
        %v2927 = vrot.slane %v2925, 4
        %v2928 = vor.u32 %v2924, %v2927
        %v2930 = vshrl.u32 %v1840, 16
        %v2932 = vrot.slane %v2930, 3
        %v2933 = vshll.u32 %v1840, 16
        %v2935 = vrot.slane %v2933, 4
        %v2936 = vor.u32 %v2932, %v2935
        %v2937 = vsel %vm2619, %v2928, %v2936
        %v2939 = vshrl.u32 %v1906, 16
        %v2941 = vrot.slane %v2939, 3
        %v2942 = vshll.u32 %v1906, 16
        %v2944 = vrot.slane %v2942, 4
        %v2945 = vor.u32 %v2941, %v2944
        %v2946 = vsel %vm2619, %v2945, %v2945
        %v2948 = vshrl.u32 %v2065, 16
        %v2950 = vrot.slane %v2948, 3
        %v2951 = vshll.u32 %v2065, 16
        %v2953 = vrot.slane %v2951, 4
        %v2954 = vor.u32 %v2950, %v2953
        %v2956 = vshrl.u32 %v2067, 16
        %v2958 = vrot.slane %v2956, 3
        %v2959 = vshll.u32 %v2067, 16
        %v2961 = vrot.slane %v2959, 4
        %v2962 = vor.u32 %v2958, %v2961
        %v2963 = vsel %vm2619, %v2954, %v2962
        %v2965 = vshrl.u32 %v2207, 16
        %v2967 = vrot.slane %v2965, 3
        %v2968 = vshll.u32 %v2207, 16
        %v2970 = vrot.slane %v2968, 4
        %v2971 = vor.u32 %v2967, %v2970
        %v2973 = vshrl.u32 %v2208, 16
        %v2975 = vrot.slane %v2973, 3
        %v2976 = vshll.u32 %v2208, 16
        %v2978 = vrot.slane %v2976, 4
        %v2979 = vor.u32 %v2975, %v2978
        %v2980 = vsel %vm2619, %v2971, %v2979
        %v2982 = vshrl.u32 %v2274, 16
        %v2984 = vrot.slane %v2982, 3
        %v2985 = vshll.u32 %v2274, 16
        %v2987 = vrot.slane %v2985, 4
        %v2988 = vor.u32 %v2984, %v2987
        %v2989 = vsel %vm2619, %v2988, %v2988
        %v2991 = vshrl.u32 %v2433, 16
        %v2993 = vrot.slane %v2991, 3
        %v2994 = vshll.u32 %v2433, 16
        %v2996 = vrot.slane %v2994, 4
        %v2997 = vor.u32 %v2993, %v2996
        %v2999 = vshrl.u32 %v2435, 16
        %v3001 = vrot.slane %v2999, 3
        %v3002 = vshll.u32 %v2435, 16
        %v3004 = vrot.slane %v3002, 4
        %v3005 = vor.u32 %v3001, %v3004
        %v3006 = vsel %vm2619, %v2997, %v3005
        %v3008 = vshrl.u32 %v1472, 16
        %v3010 = vrot.slane %v3008, 3
        %v3011 = vshll.u32 %v1472, 16
        %v3013 = vrot.slane %v3011, 4
        %v3014 = vor.u32 %v3010, %v3013
        %v3016 = vshrl.u32 %v1473, 16
        %v3018 = vrot.slane %v3016, 3
        %v3019 = vshll.u32 %v1473, 16
        %v3021 = vrot.slane %v3019, 4
        %v3022 = vor.u32 %v3018, %v3021
        %v3023 = vsel %vm2619, %v3014, %v3022
        %v3025 = vshrl.u32 %v1545, 16
        %v3027 = vrot.slane %v3025, 3
        %v3028 = vshll.u32 %v1545, 16
        %v3030 = vrot.slane %v3028, 4
        %v3031 = vor.u32 %v3027, %v3030
        %v3032 = vsel %vm2619, %v3031, %v3031
        %v3034 = vshrl.u32 %v1700, 16
        %v3036 = vrot.slane %v3034, 3
        %v3037 = vshll.u32 %v1700, 16
        %v3039 = vrot.slane %v3037, 4
        %v3040 = vor.u32 %v3036, %v3039
        %v3042 = vshrl.u32 %v1702, 16
        %v3044 = vrot.slane %v3042, 3
        %v3045 = vshll.u32 %v1702, 16
        %v3047 = vrot.slane %v3045, 4
        %v3048 = vor.u32 %v3044, %v3047
        %v3049 = vsel %vm2619, %v3040, %v3048
        %v3051 = vshrl.u32 %v1841, 16
        %v3053 = vrot.slane %v3051, 3
        %v3054 = vshll.u32 %v1841, 16
        %v3056 = vrot.slane %v3054, 4
        %v3057 = vor.u32 %v3053, %v3056
        %v3059 = vshrl.u32 %v1842, 16
        %v3061 = vrot.slane %v3059, 3
        %v3062 = vshll.u32 %v1842, 16
        %v3064 = vrot.slane %v3062, 4
        %v3065 = vor.u32 %v3061, %v3064
        %v3066 = vsel %vm2619, %v3057, %v3065
        %v3068 = vshrl.u32 %v1914, 16
        %v3070 = vrot.slane %v3068, 3
        %v3071 = vshll.u32 %v1914, 16
        %v3073 = vrot.slane %v3071, 4
        %v3074 = vor.u32 %v3070, %v3073
        %v3075 = vsel %vm2619, %v3074, %v3074
        %v3077 = vshrl.u32 %v2068, 16
        %v3079 = vrot.slane %v3077, 3
        %v3080 = vshll.u32 %v2068, 16
        %v3082 = vrot.slane %v3080, 4
        %v3083 = vor.u32 %v3079, %v3082
        %v3085 = vshrl.u32 %v2070, 16
        %v3087 = vrot.slane %v3085, 3
        %v3088 = vshll.u32 %v2070, 16
        %v3090 = vrot.slane %v3088, 4
        %v3091 = vor.u32 %v3087, %v3090
        %v3092 = vsel %vm2619, %v3083, %v3091
        %v3094 = vshrl.u32 %v2209, 16
        %v3096 = vrot.slane %v3094, 3
        %v3097 = vshll.u32 %v2209, 16
        %v3099 = vrot.slane %v3097, 4
        %v3100 = vor.u32 %v3096, %v3099
        %v3102 = vshrl.u32 %v2210, 16
        %v3104 = vrot.slane %v3102, 3
        %v3105 = vshll.u32 %v2210, 16
        %v3107 = vrot.slane %v3105, 4
        %v3108 = vor.u32 %v3104, %v3107
        %v3109 = vsel %vm2619, %v3100, %v3108
        %v3111 = vshrl.u32 %v2282, 16
        %v3113 = vrot.slane %v3111, 3
        %v3114 = vshll.u32 %v2282, 16
        %v3116 = vrot.slane %v3114, 4
        %v3117 = vor.u32 %v3113, %v3116
        %v3118 = vsel %vm2619, %v3117, %v3117
        %v3120 = vshrl.u32 %v2436, 16
        %v3122 = vrot.slane %v3120, 3
        %v3123 = vshll.u32 %v2436, 16
        %v3125 = vrot.slane %v3123, 4
        %v3126 = vor.u32 %v3122, %v3125
        %v3128 = vshrl.u32 %v2438, 16
        %v3130 = vrot.slane %v3128, 3
        %v3131 = vshll.u32 %v2438, 16
        %v3133 = vrot.slane %v3131, 4
        %v3134 = vor.u32 %v3130, %v3133
        %v3135 = vsel %vm2619, %v3126, %v3134
        %v3137 = vshrl.u32 %v1474, 16
        %v3139 = vrot.slane %v3137, 3
        %v3140 = vshll.u32 %v1474, 16
        %v3142 = vrot.slane %v3140, 4
        %v3143 = vor.u32 %v3139, %v3142
        %v3145 = vshrl.u32 %v1475, 16
        %v3147 = vrot.slane %v3145, 3
        %v3148 = vshll.u32 %v1475, 16
        %v3150 = vrot.slane %v3148, 4
        %v3151 = vor.u32 %v3147, %v3150
        %v3152 = vsel %vm2619, %v3143, %v3151
        %v3154 = vshrl.u32 %v1553, 16
        %v3156 = vrot.slane %v3154, 3
        %v3157 = vshll.u32 %v1553, 16
        %v3159 = vrot.slane %v3157, 4
        %v3160 = vor.u32 %v3156, %v3159
        %v3161 = vsel %vm2619, %v3160, %v3160
        %v3163 = vshrl.u32 %v1703, 16
        %v3165 = vrot.slane %v3163, 3
        %v3166 = vshll.u32 %v1703, 16
        %v3168 = vrot.slane %v3166, 4
        %v3169 = vor.u32 %v3165, %v3168
        %v3171 = vshrl.u32 %v1705, 16
        %v3173 = vrot.slane %v3171, 3
        %v3174 = vshll.u32 %v1705, 16
        %v3176 = vrot.slane %v3174, 4
        %v3177 = vor.u32 %v3173, %v3176
        %v3178 = vsel %vm2619, %v3169, %v3177
        %v3180 = vshrl.u32 %v1843, 16
        %v3182 = vrot.slane %v3180, 3
        %v3183 = vshll.u32 %v1843, 16
        %v3185 = vrot.slane %v3183, 4
        %v3186 = vor.u32 %v3182, %v3185
        %v3188 = vshrl.u32 %v1844, 16
        %v3190 = vrot.slane %v3188, 3
        %v3191 = vshll.u32 %v1844, 16
        %v3193 = vrot.slane %v3191, 4
        %v3194 = vor.u32 %v3190, %v3193
        %v3195 = vsel %vm2619, %v3186, %v3194
        %v3197 = vshrl.u32 %v1922, 16
        %v3199 = vrot.slane %v3197, 3
        %v3200 = vshll.u32 %v1922, 16
        %v3202 = vrot.slane %v3200, 4
        %v3203 = vor.u32 %v3199, %v3202
        %v3204 = vsel %vm2619, %v3203, %v3203
        %v3206 = vshrl.u32 %v2071, 16
        %v3208 = vrot.slane %v3206, 3
        %v3209 = vshll.u32 %v2071, 16
        %v3211 = vrot.slane %v3209, 4
        %v3212 = vor.u32 %v3208, %v3211
        %v3214 = vshrl.u32 %v2073, 16
        %v3216 = vrot.slane %v3214, 3
        %v3217 = vshll.u32 %v2073, 16
        %v3219 = vrot.slane %v3217, 4
        %v3220 = vor.u32 %v3216, %v3219
        %v3221 = vsel %vm2619, %v3212, %v3220
        %v3223 = vshrl.u32 %v2211, 16
        %v3225 = vrot.slane %v3223, 3
        %v3226 = vshll.u32 %v2211, 16
        %v3228 = vrot.slane %v3226, 4
        %v3229 = vor.u32 %v3225, %v3228
        %v3231 = vshrl.u32 %v2212, 16
        %v3233 = vrot.slane %v3231, 3
        %v3234 = vshll.u32 %v2212, 16
        %v3236 = vrot.slane %v3234, 4
        %v3237 = vor.u32 %v3233, %v3236
        %v3238 = vsel %vm2619, %v3229, %v3237
        %v3240 = vshrl.u32 %v2290, 16
        %v3242 = vrot.slane %v3240, 3
        %v3243 = vshll.u32 %v2290, 16
        %v3245 = vrot.slane %v3243, 4
        %v3246 = vor.u32 %v3242, %v3245
        %v3247 = vsel %vm2619, %v3246, %v3246
        %v3249 = vshrl.u32 %v2439, 16
        %v3251 = vrot.slane %v3249, 3
        %v3252 = vshll.u32 %v2439, 16
        %v3254 = vrot.slane %v3252, 4
        %v3255 = vor.u32 %v3251, %v3254
        %v3257 = vshrl.u32 %v2441, 16
        %v3259 = vrot.slane %v3257, 3
        %v3260 = vshll.u32 %v2441, 16
        %v3262 = vrot.slane %v3260, 4
        %v3263 = vor.u32 %v3259, %v3262
        %v3264 = vsel %vm2619, %v3255, %v3263
        %v3266 = vshrl.u32 %v1476, 16
        %v3268 = vrot.slane %v3266, 3
        %v3269 = vshll.u32 %v1476, 16
        %v3271 = vrot.slane %v3269, 4
        %v3272 = vor.u32 %v3268, %v3271
        %v3274 = vshrl.u32 %v1477, 16
        %v3276 = vrot.slane %v3274, 3
        %v3277 = vshll.u32 %v1477, 16
        %v3279 = vrot.slane %v3277, 4
        %v3280 = vor.u32 %v3276, %v3279
        %v3281 = vsel %vm2619, %v3272, %v3280
        %v3283 = vshrl.u32 %v1561, 16
        %v3285 = vrot.slane %v3283, 3
        %v3286 = vshll.u32 %v1561, 16
        %v3288 = vrot.slane %v3286, 4
        %v3289 = vor.u32 %v3285, %v3288
        %v3290 = vsel %vm2619, %v3289, %v3289
        %v3292 = vshrl.u32 %v1706, 16
        %v3294 = vrot.slane %v3292, 3
        %v3295 = vshll.u32 %v1706, 16
        %v3297 = vrot.slane %v3295, 4
        %v3298 = vor.u32 %v3294, %v3297
        %v3300 = vshrl.u32 %v1708, 16
        %v3302 = vrot.slane %v3300, 3
        %v3303 = vshll.u32 %v1708, 16
        %v3305 = vrot.slane %v3303, 4
        %v3306 = vor.u32 %v3302, %v3305
        %v3307 = vsel %vm2619, %v3298, %v3306
        %v3309 = vshrl.u32 %v1845, 16
        %v3311 = vrot.slane %v3309, 3
        %v3312 = vshll.u32 %v1845, 16
        %v3314 = vrot.slane %v3312, 4
        %v3315 = vor.u32 %v3311, %v3314
        %v3317 = vshrl.u32 %v1846, 16
        %v3319 = vrot.slane %v3317, 3
        %v3320 = vshll.u32 %v1846, 16
        %v3322 = vrot.slane %v3320, 4
        %v3323 = vor.u32 %v3319, %v3322
        %v3324 = vsel %vm2619, %v3315, %v3323
        %v3326 = vshrl.u32 %v1930, 16
        %v3328 = vrot.slane %v3326, 3
        %v3329 = vshll.u32 %v1930, 16
        %v3331 = vrot.slane %v3329, 4
        %v3332 = vor.u32 %v3328, %v3331
        %v3333 = vsel %vm2619, %v3332, %v3332
        %v3335 = vshrl.u32 %v2074, 16
        %v3337 = vrot.slane %v3335, 3
        %v3338 = vshll.u32 %v2074, 16
        %v3340 = vrot.slane %v3338, 4
        %v3341 = vor.u32 %v3337, %v3340
        %v3343 = vshrl.u32 %v2076, 16
        %v3345 = vrot.slane %v3343, 3
        %v3346 = vshll.u32 %v2076, 16
        %v3348 = vrot.slane %v3346, 4
        %v3349 = vor.u32 %v3345, %v3348
        %v3350 = vsel %vm2619, %v3341, %v3349
        %v3352 = vshrl.u32 %v2213, 16
        %v3354 = vrot.slane %v3352, 3
        %v3355 = vshll.u32 %v2213, 16
        %v3357 = vrot.slane %v3355, 4
        %v3358 = vor.u32 %v3354, %v3357
        %v3360 = vshrl.u32 %v2214, 16
        %v3362 = vrot.slane %v3360, 3
        %v3363 = vshll.u32 %v2214, 16
        %v3365 = vrot.slane %v3363, 4
        %v3366 = vor.u32 %v3362, %v3365
        %v3367 = vsel %vm2619, %v3358, %v3366
        %v3369 = vshrl.u32 %v2298, 16
        %v3371 = vrot.slane %v3369, 3
        %v3372 = vshll.u32 %v2298, 16
        %v3374 = vrot.slane %v3372, 4
        %v3375 = vor.u32 %v3371, %v3374
        %v3376 = vsel %vm2619, %v3375, %v3375
        %v3378 = vshrl.u32 %v2442, 16
        %v3380 = vrot.slane %v3378, 3
        %v3381 = vshll.u32 %v2442, 16
        %v3383 = vrot.slane %v3381, 4
        %v3384 = vor.u32 %v3380, %v3383
        %v3386 = vshrl.u32 %v2444, 16
        %v3388 = vrot.slane %v3386, 3
        %v3389 = vshll.u32 %v2444, 16
        %v3391 = vrot.slane %v3389, 4
        %v3392 = vor.u32 %v3388, %v3391
        %v3393 = vsel %vm2619, %v3384, %v3392
        %v3395 = vshrl.u32 %v1478, 16
        %v3397 = vrot.slane %v3395, 3
        %v3398 = vshll.u32 %v1478, 16
        %v3400 = vrot.slane %v3398, 4
        %v3401 = vor.u32 %v3397, %v3400
        %v3403 = vshrl.u32 %v1479, 16
        %v3405 = vrot.slane %v3403, 3
        %v3406 = vshll.u32 %v1479, 16
        %v3408 = vrot.slane %v3406, 4
        %v3409 = vor.u32 %v3405, %v3408
        %v3410 = vsel %vm2619, %v3401, %v3409
        %v3412 = vshrl.u32 %v1569, 16
        %v3414 = vrot.slane %v3412, 3
        %v3415 = vshll.u32 %v1569, 16
        %v3417 = vrot.slane %v3415, 4
        %v3418 = vor.u32 %v3414, %v3417
        %v3419 = vsel %vm2619, %v3418, %v3418
        %v3421 = vshrl.u32 %v1709, 16
        %v3423 = vrot.slane %v3421, 3
        %v3424 = vshll.u32 %v1709, 16
        %v3426 = vrot.slane %v3424, 4
        %v3427 = vor.u32 %v3423, %v3426
        %v3429 = vshrl.u32 %v1711, 16
        %v3431 = vrot.slane %v3429, 3
        %v3432 = vshll.u32 %v1711, 16
        %v3434 = vrot.slane %v3432, 4
        %v3435 = vor.u32 %v3431, %v3434
        %v3436 = vsel %vm2619, %v3427, %v3435
        %v3438 = vshrl.u32 %v1847, 16
        %v3440 = vrot.slane %v3438, 3
        %v3441 = vshll.u32 %v1847, 16
        %v3443 = vrot.slane %v3441, 4
        %v3444 = vor.u32 %v3440, %v3443
        %v3446 = vshrl.u32 %v1848, 16
        %v3448 = vrot.slane %v3446, 3
        %v3449 = vshll.u32 %v1848, 16
        %v3451 = vrot.slane %v3449, 4
        %v3452 = vor.u32 %v3448, %v3451
        %v3453 = vsel %vm2619, %v3444, %v3452
        %v3455 = vshrl.u32 %v1938, 16
        %v3457 = vrot.slane %v3455, 3
        %v3458 = vshll.u32 %v1938, 16
        %v3460 = vrot.slane %v3458, 4
        %v3461 = vor.u32 %v3457, %v3460
        %v3462 = vsel %vm2619, %v3461, %v3461
        %v3464 = vshrl.u32 %v2077, 16
        %v3466 = vrot.slane %v3464, 3
        %v3467 = vshll.u32 %v2077, 16
        %v3469 = vrot.slane %v3467, 4
        %v3470 = vor.u32 %v3466, %v3469
        %v3472 = vshrl.u32 %v2079, 16
        %v3474 = vrot.slane %v3472, 3
        %v3475 = vshll.u32 %v2079, 16
        %v3477 = vrot.slane %v3475, 4
        %v3478 = vor.u32 %v3474, %v3477
        %v3479 = vsel %vm2619, %v3470, %v3478
        %v3481 = vshrl.u32 %v2215, 16
        %v3483 = vrot.slane %v3481, 3
        %v3484 = vshll.u32 %v2215, 16
        %v3486 = vrot.slane %v3484, 4
        %v3487 = vor.u32 %v3483, %v3486
        %v3489 = vshrl.u32 %v2216, 16
        %v3491 = vrot.slane %v3489, 3
        %v3492 = vshll.u32 %v2216, 16
        %v3494 = vrot.slane %v3492, 4
        %v3495 = vor.u32 %v3491, %v3494
        %v3496 = vsel %vm2619, %v3487, %v3495
        %v3498 = vshrl.u32 %v2306, 16
        %v3500 = vrot.slane %v3498, 3
        %v3501 = vshll.u32 %v2306, 16
        %v3503 = vrot.slane %v3501, 4
        %v3504 = vor.u32 %v3500, %v3503
        %v3505 = vsel %vm2619, %v3504, %v3504
        %v3507 = vshrl.u32 %v2445, 16
        %v3509 = vrot.slane %v3507, 3
        %v3510 = vshll.u32 %v2445, 16
        %v3512 = vrot.slane %v3510, 4
        %v3513 = vor.u32 %v3509, %v3512
        %v3515 = vshrl.u32 %v2447, 16
        %v3517 = vrot.slane %v3515, 3
        %v3518 = vshll.u32 %v2447, 16
        %v3520 = vrot.slane %v3518, 4
        %v3521 = vor.u32 %v3517, %v3520
        %v3522 = vsel %vm2619, %v3513, %v3521
        %v3524 = vshrl.u32 %v1480, 16
        %v3526 = vrot.slane %v3524, 3
        %v3527 = vshll.u32 %v1480, 16
        %v3529 = vrot.slane %v3527, 4
        %v3530 = vor.u32 %v3526, %v3529
        %v3532 = vshrl.u32 %v1481, 16
        %v3534 = vrot.slane %v3532, 3
        %v3535 = vshll.u32 %v1481, 16
        %v3537 = vrot.slane %v3535, 4
        %v3538 = vor.u32 %v3534, %v3537
        %v3539 = vsel %vm2619, %v3530, %v3538
        %v3541 = vshrl.u32 %v1577, 16
        %v3543 = vrot.slane %v3541, 3
        %v3544 = vshll.u32 %v1577, 16
        %v3546 = vrot.slane %v3544, 4
        %v3547 = vor.u32 %v3543, %v3546
        %v3548 = vsel %vm2619, %v3547, %v3547
        %v3550 = vshrl.u32 %v1712, 16
        %v3552 = vrot.slane %v3550, 3
        %v3553 = vshll.u32 %v1712, 16
        %v3555 = vrot.slane %v3553, 4
        %v3556 = vor.u32 %v3552, %v3555
        %v3558 = vshrl.u32 %v1714, 16
        %v3560 = vrot.slane %v3558, 3
        %v3561 = vshll.u32 %v1714, 16
        %v3563 = vrot.slane %v3561, 4
        %v3564 = vor.u32 %v3560, %v3563
        %v3565 = vsel %vm2619, %v3556, %v3564
        %v3567 = vshrl.u32 %v1849, 16
        %v3569 = vrot.slane %v3567, 3
        %v3570 = vshll.u32 %v1849, 16
        %v3572 = vrot.slane %v3570, 4
        %v3573 = vor.u32 %v3569, %v3572
        %v3575 = vshrl.u32 %v1850, 16
        %v3577 = vrot.slane %v3575, 3
        %v3578 = vshll.u32 %v1850, 16
        %v3580 = vrot.slane %v3578, 4
        %v3581 = vor.u32 %v3577, %v3580
        %v3582 = vsel %vm2619, %v3573, %v3581
        %v3584 = vshrl.u32 %v1946, 16
        %v3586 = vrot.slane %v3584, 3
        %v3587 = vshll.u32 %v1946, 16
        %v3589 = vrot.slane %v3587, 4
        %v3590 = vor.u32 %v3586, %v3589
        %v3591 = vsel %vm2619, %v3590, %v3590
        %v3593 = vshrl.u32 %v2080, 16
        %v3595 = vrot.slane %v3593, 3
        %v3596 = vshll.u32 %v2080, 16
        %v3598 = vrot.slane %v3596, 4
        %v3599 = vor.u32 %v3595, %v3598
        %v3601 = vshrl.u32 %v2082, 16
        %v3603 = vrot.slane %v3601, 3
        %v3604 = vshll.u32 %v2082, 16
        %v3606 = vrot.slane %v3604, 4
        %v3607 = vor.u32 %v3603, %v3606
        %v3608 = vsel %vm2619, %v3599, %v3607
        %v3610 = vshrl.u32 %v2217, 16
        %v3612 = vrot.slane %v3610, 3
        %v3613 = vshll.u32 %v2217, 16
        %v3615 = vrot.slane %v3613, 4
        %v3616 = vor.u32 %v3612, %v3615
        %v3618 = vshrl.u32 %v2218, 16
        %v3620 = vrot.slane %v3618, 3
        %v3621 = vshll.u32 %v2218, 16
        %v3623 = vrot.slane %v3621, 4
        %v3624 = vor.u32 %v3620, %v3623
        %v3625 = vsel %vm2619, %v3616, %v3624
        %v3627 = vshrl.u32 %v2314, 16
        %v3629 = vrot.slane %v3627, 3
        %v3630 = vshll.u32 %v2314, 16
        %v3632 = vrot.slane %v3630, 4
        %v3633 = vor.u32 %v3629, %v3632
        %v3634 = vsel %vm2619, %v3633, %v3633
        %v3636 = vshrl.u32 %v2448, 16
        %v3638 = vrot.slane %v3636, 3
        %v3639 = vshll.u32 %v2448, 16
        %v3641 = vrot.slane %v3639, 4
        %v3642 = vor.u32 %v3638, %v3641
        %v3644 = vshrl.u32 %v2450, 16
        %v3646 = vrot.slane %v3644, 3
        %v3647 = vshll.u32 %v2450, 16
        %v3649 = vrot.slane %v3647, 4
        %v3650 = vor.u32 %v3646, %v3649
        %v3651 = vsel %vm2619, %v3642, %v3650
        %v3653 = vshrl.u32 %v1482, 16
        %v3655 = vrot.slane %v3653, 3
        %v3656 = vshll.u32 %v1482, 16
        %v3658 = vrot.slane %v3656, 4
        %v3659 = vor.u32 %v3655, %v3658
        %v3661 = vshrl.u32 %v1483, 16
        %v3663 = vrot.slane %v3661, 3
        %v3664 = vshll.u32 %v1483, 16
        %v3666 = vrot.slane %v3664, 4
        %v3667 = vor.u32 %v3663, %v3666
        %v3668 = vsel %vm2619, %v3659, %v3667
        %v3670 = vshrl.u32 %v1585, 16
        %v3672 = vrot.slane %v3670, 3
        %v3673 = vshll.u32 %v1585, 16
        %v3675 = vrot.slane %v3673, 4
        %v3676 = vor.u32 %v3672, %v3675
        %v3677 = vsel %vm2619, %v3676, %v3676
        %v3679 = vshrl.u32 %v1715, 16
        %v3681 = vrot.slane %v3679, 3
        %v3682 = vshll.u32 %v1715, 16
        %v3684 = vrot.slane %v3682, 4
        %v3685 = vor.u32 %v3681, %v3684
        %v3687 = vshrl.u32 %v1717, 16
        %v3689 = vrot.slane %v3687, 3
        %v3690 = vshll.u32 %v1717, 16
        %v3692 = vrot.slane %v3690, 4
        %v3693 = vor.u32 %v3689, %v3692
        %v3694 = vsel %vm2619, %v3685, %v3693
        %v3696 = vshrl.u32 %v1851, 16
        %v3698 = vrot.slane %v3696, 3
        %v3699 = vshll.u32 %v1851, 16
        %v3701 = vrot.slane %v3699, 4
        %v3702 = vor.u32 %v3698, %v3701
        %v3704 = vshrl.u32 %v1852, 16
        %v3706 = vrot.slane %v3704, 3
        %v3707 = vshll.u32 %v1852, 16
        %v3709 = vrot.slane %v3707, 4
        %v3710 = vor.u32 %v3706, %v3709
        %v3711 = vsel %vm2619, %v3702, %v3710
        %v3713 = vshrl.u32 %v1954, 16
        %v3715 = vrot.slane %v3713, 3
        %v3716 = vshll.u32 %v1954, 16
        %v3718 = vrot.slane %v3716, 4
        %v3719 = vor.u32 %v3715, %v3718
        %v3720 = vsel %vm2619, %v3719, %v3719
        %v3722 = vshrl.u32 %v2083, 16
        %v3724 = vrot.slane %v3722, 3
        %v3725 = vshll.u32 %v2083, 16
        %v3727 = vrot.slane %v3725, 4
        %v3728 = vor.u32 %v3724, %v3727
        %v3730 = vshrl.u32 %v2085, 16
        %v3732 = vrot.slane %v3730, 3
        %v3733 = vshll.u32 %v2085, 16
        %v3735 = vrot.slane %v3733, 4
        %v3736 = vor.u32 %v3732, %v3735
        %v3737 = vsel %vm2619, %v3728, %v3736
        %v3739 = vshrl.u32 %v2219, 16
        %v3741 = vrot.slane %v3739, 3
        %v3742 = vshll.u32 %v2219, 16
        %v3744 = vrot.slane %v3742, 4
        %v3745 = vor.u32 %v3741, %v3744
        %v3747 = vshrl.u32 %v2220, 16
        %v3749 = vrot.slane %v3747, 3
        %v3750 = vshll.u32 %v2220, 16
        %v3752 = vrot.slane %v3750, 4
        %v3753 = vor.u32 %v3749, %v3752
        %v3754 = vsel %vm2619, %v3745, %v3753
        %v3756 = vshrl.u32 %v2322, 16
        %v3758 = vrot.slane %v3756, 3
        %v3759 = vshll.u32 %v2322, 16
        %v3761 = vrot.slane %v3759, 4
        %v3762 = vor.u32 %v3758, %v3761
        %v3763 = vsel %vm2619, %v3762, %v3762
        %v3765 = vshrl.u32 %v2451, 16
        %v3767 = vrot.slane %v3765, 3
        %v3768 = vshll.u32 %v2451, 16
        %v3770 = vrot.slane %v3768, 4
        %v3771 = vor.u32 %v3767, %v3770
        %v3773 = vshrl.u32 %v2453, 16
        %v3775 = vrot.slane %v3773, 3
        %v3776 = vshll.u32 %v2453, 16
        %v3778 = vrot.slane %v3776, 4
        %v3779 = vor.u32 %v3775, %v3778
        %v3780 = vsel %vm2619, %v3771, %v3779
        %v3782 = vshrl.u32 %v1484, 16
        %v3784 = vrot.slane %v3782, 3
        %v3785 = vshll.u32 %v1484, 16
        %v3787 = vrot.slane %v3785, 4
        %v3788 = vor.u32 %v3784, %v3787
        %v3790 = vshrl.u32 %v1485, 16
        %v3792 = vrot.slane %v3790, 3
        %v3793 = vshll.u32 %v1485, 16
        %v3795 = vrot.slane %v3793, 4
        %v3796 = vor.u32 %v3792, %v3795
        %v3797 = vsel %vm2619, %v3788, %v3796
        %v3799 = vshrl.u32 %v1593, 16
        %v3801 = vrot.slane %v3799, 3
        %v3802 = vshll.u32 %v1593, 16
        %v3804 = vrot.slane %v3802, 4
        %v3805 = vor.u32 %v3801, %v3804
        %v3806 = vsel %vm2619, %v3805, %v3805
        %v3808 = vshrl.u32 %v1718, 16
        %v3810 = vrot.slane %v3808, 3
        %v3811 = vshll.u32 %v1718, 16
        %v3813 = vrot.slane %v3811, 4
        %v3814 = vor.u32 %v3810, %v3813
        %v3816 = vshrl.u32 %v1720, 16
        %v3818 = vrot.slane %v3816, 3
        %v3819 = vshll.u32 %v1720, 16
        %v3821 = vrot.slane %v3819, 4
        %v3822 = vor.u32 %v3818, %v3821
        %v3823 = vsel %vm2619, %v3814, %v3822
        %v3825 = vshrl.u32 %v1853, 16
        %v3827 = vrot.slane %v3825, 3
        %v3828 = vshll.u32 %v1853, 16
        %v3830 = vrot.slane %v3828, 4
        %v3831 = vor.u32 %v3827, %v3830
        %v3833 = vshrl.u32 %v1854, 16
        %v3835 = vrot.slane %v3833, 3
        %v3836 = vshll.u32 %v1854, 16
        %v3838 = vrot.slane %v3836, 4
        %v3839 = vor.u32 %v3835, %v3838
        %v3840 = vsel %vm2619, %v3831, %v3839
        %v3842 = vshrl.u32 %v1962, 16
        %v3844 = vrot.slane %v3842, 3
        %v3845 = vshll.u32 %v1962, 16
        %v3847 = vrot.slane %v3845, 4
        %v3848 = vor.u32 %v3844, %v3847
        %v3849 = vsel %vm2619, %v3848, %v3848
        %v3851 = vshrl.u32 %v2086, 16
        %v3853 = vrot.slane %v3851, 3
        %v3854 = vshll.u32 %v2086, 16
        %v3856 = vrot.slane %v3854, 4
        %v3857 = vor.u32 %v3853, %v3856
        %v3859 = vshrl.u32 %v2088, 16
        %v3861 = vrot.slane %v3859, 3
        %v3862 = vshll.u32 %v2088, 16
        %v3864 = vrot.slane %v3862, 4
        %v3865 = vor.u32 %v3861, %v3864
        %v3866 = vsel %vm2619, %v3857, %v3865
        %v3868 = vshrl.u32 %v2221, 16
        %v3870 = vrot.slane %v3868, 3
        %v3871 = vshll.u32 %v2221, 16
        %v3873 = vrot.slane %v3871, 4
        %v3874 = vor.u32 %v3870, %v3873
        %v3876 = vshrl.u32 %v2222, 16
        %v3878 = vrot.slane %v3876, 3
        %v3879 = vshll.u32 %v2222, 16
        %v3881 = vrot.slane %v3879, 4
        %v3882 = vor.u32 %v3878, %v3881
        %v3883 = vsel %vm2619, %v3874, %v3882
        %v3885 = vshrl.u32 %v2330, 16
        %v3887 = vrot.slane %v3885, 3
        %v3888 = vshll.u32 %v2330, 16
        %v3890 = vrot.slane %v3888, 4
        %v3891 = vor.u32 %v3887, %v3890
        %v3892 = vsel %vm2619, %v3891, %v3891
        %v3894 = vshrl.u32 %v2454, 16
        %v3896 = vrot.slane %v3894, 3
        %v3897 = vshll.u32 %v2454, 16
        %v3899 = vrot.slane %v3897, 4
        %v3900 = vor.u32 %v3896, %v3899
        %v3902 = vshrl.u32 %v2456, 16
        %v3904 = vrot.slane %v3902, 3
        %v3905 = vshll.u32 %v2456, 16
        %v3907 = vrot.slane %v3905, 4
        %v3908 = vor.u32 %v3904, %v3907
        %v3909 = vsel %vm2619, %v3900, %v3908
        %v3911 = vshrl.u32 %v1486, 16
        %v3913 = vrot.slane %v3911, 3
        %v3914 = vshll.u32 %v1486, 16
        %v3916 = vrot.slane %v3914, 4
        %v3917 = vor.u32 %v3913, %v3916
        %v3919 = vshrl.u32 %v1487, 16
        %v3921 = vrot.slane %v3919, 3
        %v3922 = vshll.u32 %v1487, 16
        %v3924 = vrot.slane %v3922, 4
        %v3925 = vor.u32 %v3921, %v3924
        %v3926 = vsel %vm2619, %v3917, %v3925
        %v3928 = vshrl.u32 %v1601, 16
        %v3930 = vrot.slane %v3928, 3
        %v3931 = vshll.u32 %v1601, 16
        %v3933 = vrot.slane %v3931, 4
        %v3934 = vor.u32 %v3930, %v3933
        %v3935 = vsel %vm2619, %v3934, %v3934
        %v3937 = vshrl.u32 %v1721, 16
        %v3939 = vrot.slane %v3937, 3
        %v3940 = vshll.u32 %v1721, 16
        %v3942 = vrot.slane %v3940, 4
        %v3943 = vor.u32 %v3939, %v3942
        %v3945 = vshrl.u32 %v1723, 16
        %v3947 = vrot.slane %v3945, 3
        %v3948 = vshll.u32 %v1723, 16
        %v3950 = vrot.slane %v3948, 4
        %v3951 = vor.u32 %v3947, %v3950
        %v3952 = vsel %vm2619, %v3943, %v3951
        %v3954 = vshrl.u32 %v1855, 16
        %v3956 = vrot.slane %v3954, 3
        %v3957 = vshll.u32 %v1855, 16
        %v3959 = vrot.slane %v3957, 4
        %v3960 = vor.u32 %v3956, %v3959
        %v3962 = vshrl.u32 %v1856, 16
        %v3964 = vrot.slane %v3962, 3
        %v3965 = vshll.u32 %v1856, 16
        %v3967 = vrot.slane %v3965, 4
        %v3968 = vor.u32 %v3964, %v3967
        %v3969 = vsel %vm2619, %v3960, %v3968
        %v3971 = vshrl.u32 %v1970, 16
        %v3973 = vrot.slane %v3971, 3
        %v3974 = vshll.u32 %v1970, 16
        %v3976 = vrot.slane %v3974, 4
        %v3977 = vor.u32 %v3973, %v3976
        %v3978 = vsel %vm2619, %v3977, %v3977
        %v3980 = vshrl.u32 %v2089, 16
        %v3982 = vrot.slane %v3980, 3
        %v3983 = vshll.u32 %v2089, 16
        %v3985 = vrot.slane %v3983, 4
        %v3986 = vor.u32 %v3982, %v3985
        %v3988 = vshrl.u32 %v2091, 16
        %v3990 = vrot.slane %v3988, 3
        %v3991 = vshll.u32 %v2091, 16
        %v3993 = vrot.slane %v3991, 4
        %v3994 = vor.u32 %v3990, %v3993
        %v3995 = vsel %vm2619, %v3986, %v3994
        %v3997 = vshrl.u32 %v2223, 16
        %v3999 = vrot.slane %v3997, 3
        %v4000 = vshll.u32 %v2223, 16
        %v4002 = vrot.slane %v4000, 4
        %v4003 = vor.u32 %v3999, %v4002
        %v4005 = vshrl.u32 %v2224, 16
        %v4007 = vrot.slane %v4005, 3
        %v4008 = vshll.u32 %v2224, 16
        %v4010 = vrot.slane %v4008, 4
        %v4011 = vor.u32 %v4007, %v4010
        %v4012 = vsel %vm2619, %v4003, %v4011
        %v4014 = vshrl.u32 %v2338, 16
        %v4016 = vrot.slane %v4014, 3
        %v4017 = vshll.u32 %v2338, 16
        %v4019 = vrot.slane %v4017, 4
        %v4020 = vor.u32 %v4016, %v4019
        %v4021 = vsel %vm2619, %v4020, %v4020
        %v4023 = vshrl.u32 %v2457, 16
        %v4025 = vrot.slane %v4023, 3
        %v4026 = vshll.u32 %v2457, 16
        %v4028 = vrot.slane %v4026, 4
        %v4029 = vor.u32 %v4025, %v4028
        %v4031 = vshrl.u32 %v2459, 16
        %v4033 = vrot.slane %v4031, 3
        %v4034 = vshll.u32 %v2459, 16
        %v4036 = vrot.slane %v4034, 4
        %v4037 = vor.u32 %v4033, %v4036
        %v4038 = vsel %vm2619, %v4029, %v4037
        %v4040 = vshrl.u32 %v1488, 16
        %v4042 = vrot.slane %v4040, 3
        %v4043 = vshll.u32 %v1488, 16
        %v4045 = vrot.slane %v4043, 4
        %v4046 = vor.u32 %v4042, %v4045
        %v4048 = vshrl.u32 %v1489, 16
        %v4050 = vrot.slane %v4048, 3
        %v4051 = vshll.u32 %v1489, 16
        %v4053 = vrot.slane %v4051, 4
        %v4054 = vor.u32 %v4050, %v4053
        %v4055 = vsel %vm2619, %v4046, %v4054
        %v4057 = vshrl.u32 %v1609, 16
        %v4059 = vrot.slane %v4057, 3
        %v4060 = vshll.u32 %v1609, 16
        %v4062 = vrot.slane %v4060, 4
        %v4063 = vor.u32 %v4059, %v4062
        %v4064 = vsel %vm2619, %v4063, %v4063
        %v4066 = vshrl.u32 %v1724, 16
        %v4068 = vrot.slane %v4066, 3
        %v4069 = vshll.u32 %v1724, 16
        %v4071 = vrot.slane %v4069, 4
        %v4072 = vor.u32 %v4068, %v4071
        %v4074 = vshrl.u32 %v1726, 16
        %v4076 = vrot.slane %v4074, 3
        %v4077 = vshll.u32 %v1726, 16
        %v4079 = vrot.slane %v4077, 4
        %v4080 = vor.u32 %v4076, %v4079
        %v4081 = vsel %vm2619, %v4072, %v4080
        %v4083 = vshrl.u32 %v1857, 16
        %v4085 = vrot.slane %v4083, 3
        %v4086 = vshll.u32 %v1857, 16
        %v4088 = vrot.slane %v4086, 4
        %v4089 = vor.u32 %v4085, %v4088
        %v4091 = vshrl.u32 %v1858, 16
        %v4093 = vrot.slane %v4091, 3
        %v4094 = vshll.u32 %v1858, 16
        %v4096 = vrot.slane %v4094, 4
        %v4097 = vor.u32 %v4093, %v4096
        %v4098 = vsel %vm2619, %v4089, %v4097
        %v4100 = vshrl.u32 %v1978, 16
        %v4102 = vrot.slane %v4100, 3
        %v4103 = vshll.u32 %v1978, 16
        %v4105 = vrot.slane %v4103, 4
        %v4106 = vor.u32 %v4102, %v4105
        %v4107 = vsel %vm2619, %v4106, %v4106
        %v4109 = vshrl.u32 %v2092, 16
        %v4111 = vrot.slane %v4109, 3
        %v4112 = vshll.u32 %v2092, 16
        %v4114 = vrot.slane %v4112, 4
        %v4115 = vor.u32 %v4111, %v4114
        %v4117 = vshrl.u32 %v2094, 16
        %v4119 = vrot.slane %v4117, 3
        %v4120 = vshll.u32 %v2094, 16
        %v4122 = vrot.slane %v4120, 4
        %v4123 = vor.u32 %v4119, %v4122
        %v4124 = vsel %vm2619, %v4115, %v4123
        %v4126 = vshrl.u32 %v2225, 16
        %v4128 = vrot.slane %v4126, 3
        %v4129 = vshll.u32 %v2225, 16
        %v4131 = vrot.slane %v4129, 4
        %v4132 = vor.u32 %v4128, %v4131
        %v4134 = vshrl.u32 %v2226, 16
        %v4136 = vrot.slane %v4134, 3
        %v4137 = vshll.u32 %v2226, 16
        %v4139 = vrot.slane %v4137, 4
        %v4140 = vor.u32 %v4136, %v4139
        %v4141 = vsel %vm2619, %v4132, %v4140
        %v4143 = vshrl.u32 %v2346, 16
        %v4145 = vrot.slane %v4143, 3
        %v4146 = vshll.u32 %v2346, 16
        %v4148 = vrot.slane %v4146, 4
        %v4149 = vor.u32 %v4145, %v4148
        %v4150 = vsel %vm2619, %v4149, %v4149
        %v4152 = vshrl.u32 %v2460, 16
        %v4154 = vrot.slane %v4152, 3
        %v4155 = vshll.u32 %v2460, 16
        %v4157 = vrot.slane %v4155, 4
        %v4158 = vor.u32 %v4154, %v4157
        %v4160 = vshrl.u32 %v2462, 16
        %v4162 = vrot.slane %v4160, 3
        %v4163 = vshll.u32 %v2462, 16
        %v4165 = vrot.slane %v4163, 4
        %v4166 = vor.u32 %v4162, %v4165
        %v4167 = vsel %vm2619, %v4158, %v4166
        %v4169 = vshrl.u32 %v1490, 16
        %v4171 = vrot.slane %v4169, 3
        %v4172 = vshll.u32 %v1490, 16
        %v4174 = vrot.slane %v4172, 4
        %v4175 = vor.u32 %v4171, %v4174
        %v4177 = vshrl.u32 %v1491, 16
        %v4179 = vrot.slane %v4177, 3
        %v4180 = vshll.u32 %v1491, 16
        %v4182 = vrot.slane %v4180, 4
        %v4183 = vor.u32 %v4179, %v4182
        %v4184 = vsel %vm2619, %v4175, %v4183
        %v4186 = vshrl.u32 %v1617, 16
        %v4188 = vrot.slane %v4186, 3
        %v4189 = vshll.u32 %v1617, 16
        %v4191 = vrot.slane %v4189, 4
        %v4192 = vor.u32 %v4188, %v4191
        %v4193 = vsel %vm2619, %v4192, %v4192
        %v4195 = vshrl.u32 %v1727, 16
        %v4197 = vrot.slane %v4195, 3
        %v4198 = vshll.u32 %v1727, 16
        %v4200 = vrot.slane %v4198, 4
        %v4201 = vor.u32 %v4197, %v4200
        %v4203 = vshrl.u32 %v1729, 16
        %v4205 = vrot.slane %v4203, 3
        %v4206 = vshll.u32 %v1729, 16
        %v4208 = vrot.slane %v4206, 4
        %v4209 = vor.u32 %v4205, %v4208
        %v4210 = vsel %vm2619, %v4201, %v4209
        %v4212 = vshrl.u32 %v1859, 16
        %v4214 = vrot.slane %v4212, 3
        %v4215 = vshll.u32 %v1859, 16
        %v4217 = vrot.slane %v4215, 4
        %v4218 = vor.u32 %v4214, %v4217
        %v4220 = vshrl.u32 %v1860, 16
        %v4222 = vrot.slane %v4220, 3
        %v4223 = vshll.u32 %v1860, 16
        %v4225 = vrot.slane %v4223, 4
        %v4226 = vor.u32 %v4222, %v4225
        %v4227 = vsel %vm2619, %v4218, %v4226
        %v4229 = vshrl.u32 %v1986, 16
        %v4231 = vrot.slane %v4229, 3
        %v4232 = vshll.u32 %v1986, 16
        %v4234 = vrot.slane %v4232, 4
        %v4235 = vor.u32 %v4231, %v4234
        %v4236 = vsel %vm2619, %v4235, %v4235
        %v4238 = vshrl.u32 %v2095, 16
        %v4240 = vrot.slane %v4238, 3
        %v4241 = vshll.u32 %v2095, 16
        %v4243 = vrot.slane %v4241, 4
        %v4244 = vor.u32 %v4240, %v4243
        %v4246 = vshrl.u32 %v2097, 16
        %v4248 = vrot.slane %v4246, 3
        %v4249 = vshll.u32 %v2097, 16
        %v4251 = vrot.slane %v4249, 4
        %v4252 = vor.u32 %v4248, %v4251
        %v4253 = vsel %vm2619, %v4244, %v4252
        %v4255 = vshrl.u32 %v2227, 16
        %v4257 = vrot.slane %v4255, 3
        %v4258 = vshll.u32 %v2227, 16
        %v4260 = vrot.slane %v4258, 4
        %v4261 = vor.u32 %v4257, %v4260
        %v4263 = vshrl.u32 %v2228, 16
        %v4265 = vrot.slane %v4263, 3
        %v4266 = vshll.u32 %v2228, 16
        %v4268 = vrot.slane %v4266, 4
        %v4269 = vor.u32 %v4265, %v4268
        %v4270 = vsel %vm2619, %v4261, %v4269
        %v4272 = vshrl.u32 %v2354, 16
        %v4274 = vrot.slane %v4272, 3
        %v4275 = vshll.u32 %v2354, 16
        %v4277 = vrot.slane %v4275, 4
        %v4278 = vor.u32 %v4274, %v4277
        %v4279 = vsel %vm2619, %v4278, %v4278
        %v4281 = vshrl.u32 %v2463, 16
        %v4283 = vrot.slane %v4281, 3
        %v4284 = vshll.u32 %v2463, 16
        %v4286 = vrot.slane %v4284, 4
        %v4287 = vor.u32 %v4283, %v4286
        %v4289 = vshrl.u32 %v2465, 16
        %v4291 = vrot.slane %v4289, 3
        %v4292 = vshll.u32 %v2465, 16
        %v4294 = vrot.slane %v4292, 4
        %v4295 = vor.u32 %v4291, %v4294
        %v4296 = vsel %vm2619, %v4287, %v4295
        %v4298 = vshrl.u32 %v1492, 16
        %v4300 = vrot.slane %v4298, 3
        %v4301 = vshll.u32 %v1492, 16
        %v4303 = vrot.slane %v4301, 4
        %v4304 = vor.u32 %v4300, %v4303
        %v4306 = vshrl.u32 %v1493, 16
        %v4308 = vrot.slane %v4306, 3
        %v4309 = vshll.u32 %v1493, 16
        %v4311 = vrot.slane %v4309, 4
        %v4312 = vor.u32 %v4308, %v4311
        %v4313 = vsel %vm2619, %v4304, %v4312
        %v4315 = vshrl.u32 %v1625, 16
        %v4317 = vrot.slane %v4315, 3
        %v4318 = vshll.u32 %v1625, 16
        %v4320 = vrot.slane %v4318, 4
        %v4321 = vor.u32 %v4317, %v4320
        %v4322 = vsel %vm2619, %v4321, %v4321
        %v4324 = vshrl.u32 %v1730, 16
        %v4326 = vrot.slane %v4324, 3
        %v4327 = vshll.u32 %v1730, 16
        %v4329 = vrot.slane %v4327, 4
        %v4330 = vor.u32 %v4326, %v4329
        %v4332 = vshrl.u32 %v1732, 16
        %v4334 = vrot.slane %v4332, 3
        %v4335 = vshll.u32 %v1732, 16
        %v4337 = vrot.slane %v4335, 4
        %v4338 = vor.u32 %v4334, %v4337
        %v4339 = vsel %vm2619, %v4330, %v4338
        %v4341 = vshrl.u32 %v1861, 16
        %v4343 = vrot.slane %v4341, 3
        %v4344 = vshll.u32 %v1861, 16
        %v4346 = vrot.slane %v4344, 4
        %v4347 = vor.u32 %v4343, %v4346
        %v4349 = vshrl.u32 %v1862, 16
        %v4351 = vrot.slane %v4349, 3
        %v4352 = vshll.u32 %v1862, 16
        %v4354 = vrot.slane %v4352, 4
        %v4355 = vor.u32 %v4351, %v4354
        %v4356 = vsel %vm2619, %v4347, %v4355
        %v4358 = vshrl.u32 %v1994, 16
        %v4360 = vrot.slane %v4358, 3
        %v4361 = vshll.u32 %v1994, 16
        %v4363 = vrot.slane %v4361, 4
        %v4364 = vor.u32 %v4360, %v4363
        %v4365 = vsel %vm2619, %v4364, %v4364
        %v4367 = vshrl.u32 %v2098, 16
        %v4369 = vrot.slane %v4367, 3
        %v4370 = vshll.u32 %v2098, 16
        %v4372 = vrot.slane %v4370, 4
        %v4373 = vor.u32 %v4369, %v4372
        %v4375 = vshrl.u32 %v2100, 16
        %v4377 = vrot.slane %v4375, 3
        %v4378 = vshll.u32 %v2100, 16
        %v4380 = vrot.slane %v4378, 4
        %v4381 = vor.u32 %v4377, %v4380
        %v4382 = vsel %vm2619, %v4373, %v4381
        %v4384 = vshrl.u32 %v2229, 16
        %v4386 = vrot.slane %v4384, 3
        %v4387 = vshll.u32 %v2229, 16
        %v4389 = vrot.slane %v4387, 4
        %v4390 = vor.u32 %v4386, %v4389
        %v4392 = vshrl.u32 %v2230, 16
        %v4394 = vrot.slane %v4392, 3
        %v4395 = vshll.u32 %v2230, 16
        %v4397 = vrot.slane %v4395, 4
        %v4398 = vor.u32 %v4394, %v4397
        %v4399 = vsel %vm2619, %v4390, %v4398
        %v4401 = vshrl.u32 %v2362, 16
        %v4403 = vrot.slane %v4401, 3
        %v4404 = vshll.u32 %v2362, 16
        %v4406 = vrot.slane %v4404, 4
        %v4407 = vor.u32 %v4403, %v4406
        %v4408 = vsel %vm2619, %v4407, %v4407
        %v4410 = vshrl.u32 %v2466, 16
        %v4412 = vrot.slane %v4410, 3
        %v4413 = vshll.u32 %v2466, 16
        %v4415 = vrot.slane %v4413, 4
        %v4416 = vor.u32 %v4412, %v4415
        %v4418 = vshrl.u32 %v2468, 16
        %v4420 = vrot.slane %v4418, 3
        %v4421 = vshll.u32 %v2468, 16
        %v4423 = vrot.slane %v4421, 4
        %v4424 = vor.u32 %v4420, %v4423
        %v4425 = vsel %vm2619, %v4416, %v4424
        %v4427 = vshrl.u32 %v1494, 16
        %v4429 = vrot.slane %v4427, 3
        %v4430 = vshll.u32 %v1494, 16
        %v4432 = vrot.slane %v4430, 4
        %v4433 = vor.u32 %v4429, %v4432
        %v4435 = vshrl.u32 %v1495, 16
        %v4437 = vrot.slane %v4435, 3
        %v4438 = vshll.u32 %v1495, 16
        %v4440 = vrot.slane %v4438, 4
        %v4441 = vor.u32 %v4437, %v4440
        %v4442 = vsel %vm2619, %v4433, %v4441
        %v4444 = vshrl.u32 %v1633, 16
        %v4446 = vrot.slane %v4444, 3
        %v4447 = vshll.u32 %v1633, 16
        %v4449 = vrot.slane %v4447, 4
        %v4450 = vor.u32 %v4446, %v4449
        %v4451 = vsel %vm2619, %v4450, %v4450
        %v4453 = vshrl.u32 %v1733, 16
        %v4455 = vrot.slane %v4453, 3
        %v4456 = vshll.u32 %v1733, 16
        %v4458 = vrot.slane %v4456, 4
        %v4459 = vor.u32 %v4455, %v4458
        %v4461 = vshrl.u32 %v1735, 16
        %v4463 = vrot.slane %v4461, 3
        %v4464 = vshll.u32 %v1735, 16
        %v4466 = vrot.slane %v4464, 4
        %v4467 = vor.u32 %v4463, %v4466
        %v4468 = vsel %vm2619, %v4459, %v4467
        %v4470 = vshrl.u32 %v1863, 16
        %v4472 = vrot.slane %v4470, 3
        %v4473 = vshll.u32 %v1863, 16
        %v4475 = vrot.slane %v4473, 4
        %v4476 = vor.u32 %v4472, %v4475
        %v4478 = vshrl.u32 %v1864, 16
        %v4480 = vrot.slane %v4478, 3
        %v4481 = vshll.u32 %v1864, 16
        %v4483 = vrot.slane %v4481, 4
        %v4484 = vor.u32 %v4480, %v4483
        %v4485 = vsel %vm2619, %v4476, %v4484
        %v4487 = vshrl.u32 %v2002, 16
        %v4489 = vrot.slane %v4487, 3
        %v4490 = vshll.u32 %v2002, 16
        %v4492 = vrot.slane %v4490, 4
        %v4493 = vor.u32 %v4489, %v4492
        %v4494 = vsel %vm2619, %v4493, %v4493
        %v4496 = vshrl.u32 %v2101, 16
        %v4498 = vrot.slane %v4496, 3
        %v4499 = vshll.u32 %v2101, 16
        %v4501 = vrot.slane %v4499, 4
        %v4502 = vor.u32 %v4498, %v4501
        %v4504 = vshrl.u32 %v2103, 16
        %v4506 = vrot.slane %v4504, 3
        %v4507 = vshll.u32 %v2103, 16
        %v4509 = vrot.slane %v4507, 4
        %v4510 = vor.u32 %v4506, %v4509
        %v4511 = vsel %vm2619, %v4502, %v4510
        %v4513 = vshrl.u32 %v2231, 16
        %v4515 = vrot.slane %v4513, 3
        %v4516 = vshll.u32 %v2231, 16
        %v4518 = vrot.slane %v4516, 4
        %v4519 = vor.u32 %v4515, %v4518
        %v4521 = vshrl.u32 %v2232, 16
        %v4523 = vrot.slane %v4521, 3
        %v4524 = vshll.u32 %v2232, 16
        %v4526 = vrot.slane %v4524, 4
        %v4527 = vor.u32 %v4523, %v4526
        %v4528 = vsel %vm2619, %v4519, %v4527
        %v4530 = vshrl.u32 %v2370, 16
        %v4532 = vrot.slane %v4530, 3
        %v4533 = vshll.u32 %v2370, 16
        %v4535 = vrot.slane %v4533, 4
        %v4536 = vor.u32 %v4532, %v4535
        %v4537 = vsel %vm2619, %v4536, %v4536
        %v4539 = vshrl.u32 %v2469, 16
        %v4541 = vrot.slane %v4539, 3
        %v4542 = vshll.u32 %v2469, 16
        %v4544 = vrot.slane %v4542, 4
        %v4545 = vor.u32 %v4541, %v4544
        %v4547 = vshrl.u32 %v2471, 16
        %v4549 = vrot.slane %v4547, 3
        %v4550 = vshll.u32 %v2471, 16
        %v4552 = vrot.slane %v4550, 4
        %v4553 = vor.u32 %v4549, %v4552
        %v4554 = vsel %vm2619, %v4545, %v4553
        %v4556 = vshrl.u32 %v1496, 16
        %v4558 = vrot.slane %v4556, 3
        %v4559 = vshll.u32 %v1496, 16
        %v4561 = vrot.slane %v4559, 4
        %v4562 = vor.u32 %v4558, %v4561
        %v4564 = vshrl.u32 %v1497, 16
        %v4566 = vrot.slane %v4564, 3
        %v4567 = vshll.u32 %v1497, 16
        %v4569 = vrot.slane %v4567, 4
        %v4570 = vor.u32 %v4566, %v4569
        %v4571 = vsel %vm2619, %v4562, %v4570
        %v4573 = vshrl.u32 %v1641, 16
        %v4575 = vrot.slane %v4573, 3
        %v4576 = vshll.u32 %v1641, 16
        %v4578 = vrot.slane %v4576, 4
        %v4579 = vor.u32 %v4575, %v4578
        %v4580 = vsel %vm2619, %v4579, %v4579
        %v4582 = vshrl.u32 %v1736, 16
        %v4584 = vrot.slane %v4582, 3
        %v4585 = vshll.u32 %v1736, 16
        %v4587 = vrot.slane %v4585, 4
        %v4588 = vor.u32 %v4584, %v4587
        %v4590 = vshrl.u32 %v1738, 16
        %v4592 = vrot.slane %v4590, 3
        %v4593 = vshll.u32 %v1738, 16
        %v4595 = vrot.slane %v4593, 4
        %v4596 = vor.u32 %v4592, %v4595
        %v4597 = vsel %vm2619, %v4588, %v4596
        %v4599 = vshrl.u32 %v1865, 16
        %v4601 = vrot.slane %v4599, 3
        %v4602 = vshll.u32 %v1865, 16
        %v4604 = vrot.slane %v4602, 4
        %v4605 = vor.u32 %v4601, %v4604
        %v4607 = vshrl.u32 %v1866, 16
        %v4609 = vrot.slane %v4607, 3
        %v4610 = vshll.u32 %v1866, 16
        %v4612 = vrot.slane %v4610, 4
        %v4613 = vor.u32 %v4609, %v4612
        %v4614 = vsel %vm2619, %v4605, %v4613
        %v4616 = vshrl.u32 %v2010, 16
        %v4618 = vrot.slane %v4616, 3
        %v4619 = vshll.u32 %v2010, 16
        %v4621 = vrot.slane %v4619, 4
        %v4622 = vor.u32 %v4618, %v4621
        %v4623 = vsel %vm2619, %v4622, %v4622
        %v4625 = vshrl.u32 %v2104, 16
        %v4627 = vrot.slane %v4625, 3
        %v4628 = vshll.u32 %v2104, 16
        %v4630 = vrot.slane %v4628, 4
        %v4631 = vor.u32 %v4627, %v4630
        %v4633 = vshrl.u32 %v2106, 16
        %v4635 = vrot.slane %v4633, 3
        %v4636 = vshll.u32 %v2106, 16
        %v4638 = vrot.slane %v4636, 4
        %v4639 = vor.u32 %v4635, %v4638
        %v4640 = vsel %vm2619, %v4631, %v4639
        %v4642 = vshrl.u32 %v2233, 16
        %v4644 = vrot.slane %v4642, 3
        %v4645 = vshll.u32 %v2233, 16
        %v4647 = vrot.slane %v4645, 4
        %v4648 = vor.u32 %v4644, %v4647
        %v4650 = vshrl.u32 %v2234, 16
        %v4652 = vrot.slane %v4650, 3
        %v4653 = vshll.u32 %v2234, 16
        %v4655 = vrot.slane %v4653, 4
        %v4656 = vor.u32 %v4652, %v4655
        %v4657 = vsel %vm2619, %v4648, %v4656
        %v4659 = vshrl.u32 %v2378, 16
        %v4661 = vrot.slane %v4659, 3
        %v4662 = vshll.u32 %v2378, 16
        %v4664 = vrot.slane %v4662, 4
        %v4665 = vor.u32 %v4661, %v4664
        %v4666 = vsel %vm2619, %v4665, %v4665
        %v4668 = vshrl.u32 %v2472, 16
        %v4670 = vrot.slane %v4668, 3
        %v4671 = vshll.u32 %v2472, 16
        %v4673 = vrot.slane %v4671, 4
        %v4674 = vor.u32 %v4670, %v4673
        %v4676 = vshrl.u32 %v2474, 16
        %v4678 = vrot.slane %v4676, 3
        %v4679 = vshll.u32 %v2474, 16
        %v4681 = vrot.slane %v4679, 4
        %v4682 = vor.u32 %v4678, %v4681
        %v4683 = vsel %vm2619, %v4674, %v4682
        %v4972 = vunpack.c.l.b16 %v2475
        %v4973 = vunpack.c.l.b16 %v2476
        %v4974 = vunpack.c.l.b16 %v2477
        %v4975 = vunpack.c.l.b16 %v2478
        %v4976 = vunpack.c.l.b16 %v2479
        %v4977 = vunpack.c.l.b16 %v2480
        %v4978 = vunpack.c.l.b16 %v2481
        %v4979 = vunpack.c.l.b16 %v2482
        %v4980 = vunpack.c.l.b16 %v2483
        %v4981 = vunpack.c.l.b16 %v2484
        %v4982 = vunpack.c.l.b16 %v2485
        %v4983 = vunpack.c.l.b16 %v2486
        %v4984 = vunpack.c.l.b16 %v2487
        %v4985 = vunpack.c.l.b16 %v2488
        %v4986 = vunpack.c.l.b16 %v2489
        %v4987 = vunpack.c.l.b16 %v2490
        %v4988 = vunpack.c.l.b16 %v2491
        %v4989 = vunpack.c.l.b16 %v2492
        %v4990 = vunpack.c.l.b16 %v2493
        %v4991 = vunpack.c.l.b16 %v2494
        %v4992 = vunpack.c.l.b16 %v2495
        %v4993 = vunpack.c.l.b16 %v2496
        %v4994 = vunpack.c.l.b16 %v2497
        %v4995 = vunpack.c.l.b16 %v2498
        %v4996 = vunpack.c.l.b16 %v2499
        %v4997 = vunpack.c.l.b16 %v2500
        %v4998 = vunpack.c.l.b16 %v2501
        %v4999 = vunpack.c.l.b16 %v2502
        %v5000 = vunpack.c.l.b16 %v2503
        %v5001 = vunpack.c.l.b16 %v2504
        %v5002 = vunpack.c.l.b16 %v2505
        %v5003 = vunpack.c.l.b16 %v2506
        %v5004 = vunpack.c.l.b16 %v2507
        %v5005 = vunpack.c.l.b16 %v2508
        %v5006 = vunpack.c.l.b16 %v2509
        %v5007 = vunpack.c.l.b16 %v2510
        %v5008 = vunpack.c.l.b16 %v2511
        %v5009 = vunpack.c.l.b16 %v2512
        %v5010 = vunpack.c.l.b16 %v2513
        %v5011 = vunpack.c.l.b16 %v2514
        %v5012 = vunpack.c.l.b16 %v2515
        %v5013 = vunpack.c.l.b16 %v2516
        %v5014 = vunpack.c.l.b16 %v2517
        %v5015 = vunpack.c.l.b16 %v2518
        %v5016 = vunpack.c.l.b16 %v2519
        %v5017 = vunpack.c.l.b16 %v2520
        %v5018 = vunpack.c.l.b16 %v2521
        %v5019 = vunpack.c.l.b16 %v2522
        %v5020 = vunpack.c.l.b16 %v2523
        %v5021 = vunpack.c.l.b16 %v2524
        %v5022 = vunpack.c.l.b16 %v2525
        %v5023 = vunpack.c.l.b16 %v2526
        %v5024 = vunpack.c.l.b16 %v2527
        %v5025 = vunpack.c.l.b16 %v2528
        %v5026 = vunpack.c.l.b16 %v2529
        %v5027 = vunpack.c.l.b16 %v2530
        %v5028 = vunpack.c.l.b16 %v2531
        %v5029 = vunpack.c.l.b16 %v2532
        %v5030 = vunpack.c.l.b16 %v2533
        %v5031 = vunpack.c.l.b16 %v2534
        %v5032 = vunpack.c.l.b16 %v2535
        %v5033 = vunpack.c.l.b16 %v2536
        %v5034 = vunpack.c.l.b16 %v2537
        %v5035 = vunpack.c.l.b16 %v2538
        %v5036 = vunpack.c.l.b16 %v2539
        %v5037 = vunpack.c.l.b16 %v2540
        %v5038 = vunpack.c.l.b16 %v2541
        %v5039 = vunpack.c.l.b16 %v2542
        %v5040 = vunpack.c.l.b16 %v2543
        %v5041 = vunpack.c.l.b16 %v2544
        %v5042 = vunpack.c.l.b16 %v2545
        %v5043 = vunpack.c.l.b16 %v2546
        %v5044 = vunpack.c.l.b16 %v2547
        %v5045 = vunpack.c.l.b16 %v2548
        %v5046 = vunpack.c.l.b16 %v2549
        %v5047 = vunpack.c.l.b16 %v2550
        %v5048 = vunpack.c.l.b16 %v2551
        %v5049 = vunpack.c.l.b16 %v2552
        %v5050 = vunpack.c.l.b16 %v2553
        %v5051 = vunpack.c.l.b16 %v2554
        %v5052 = vunpack.c.l.b16 %v2555
        %v5053 = vunpack.c.l.b16 %v2556
        %v5054 = vunpack.c.l.b16 %v2557
        %v5055 = vunpack.c.l.b16 %v2558
        %v5056 = vunpack.c.l.b16 %v2559
        %v5057 = vunpack.c.l.b16 %v2560
        %v5058 = vunpack.c.l.b16 %v2561
        %v5059 = vunpack.c.l.b16 %v2562
        %v5060 = vunpack.c.l.b16 %v2563
        %v5061 = vunpack.c.l.b16 %v2564
        %v5062 = vunpack.c.l.b16 %v2565
        %v5063 = vunpack.c.l.b16 %v2566
        %v5064 = vunpack.c.l.b16 %v2567
        %v5065 = vunpack.c.l.b16 %v2568
        %v5066 = vunpack.c.l.b16 %v2569
        %v5067 = vunpack.c.l.b16 %v2570
        %v5068 = vunpack.c.l.b16 %v2571
        %v5069 = vunpack.c.l.b16 %v2572
        %v5070 = vunpack.c.l.b16 %v2573
        %v5071 = vunpack.c.l.b16 %v2574
        %v5072 = vunpack.c.l.b16 %v2575
        %v5073 = vunpack.c.l.b16 %v2576
        %v5074 = vunpack.c.l.b16 %v2577
        %v5075 = vunpack.c.l.b16 %v2578
        %v5076 = vunpack.c.l.b16 %v2579
        %v5077 = vunpack.c.l.b16 %v2580
        %v5078 = vunpack.c.l.b16 %v2581
        %v5079 = vunpack.c.l.b16 %v2582
        %v5080 = vunpack.c.l.b16 %v2583
        %v5081 = vunpack.c.l.b16 %v2584
        %v5082 = vunpack.c.l.b16 %v2585
        %v5083 = vunpack.c.l.b16 %v2586
        %v5084 = vunpack.c.l.b16 %v2587
        %v5085 = vunpack.c.l.b16 %v2588
        %v5086 = vunpack.c.l.b16 %v2589
        %v5087 = vunpack.c.l.b16 %v2590
        %v5088 = vunpack.c.l.b16 %v2591
        %v5089 = vunpack.c.l.b16 %v2592
        %v5090 = vunpack.c.l.b16 %v2593
        %v5091 = vunpack.c.l.b16 %v2594
        %v5092 = vunpack.c.l.b16 %v2595
        %v5093 = vunpack.c.l.b16 %v2596
        %v5094 = vunpack.c.l.b16 %v2597
        %v5095 = vunpack.c.l.b16 %v2598
        %v5096 = vunpack.c.l.b16 %v2599
        %v5097 = vunpack.c.l.b16 %v2600
        %v5098 = vunpack.c.l.b16 %v2601
        %v5099 = vunpack.c.l.b16 %v2602
        %v5100 = vunpack.c.l.b16 %v2603
        %v5101 = vunpack.c.l.b16 %v2604
        %v5102 = vunpack.c.l.b16 %v2605
        %v5103 = vunpack.c.l.b16 %v2606
        %v5104 = vunpack.c.l.b16 %v2607
        %v5105 = vunpack.c.l.b16 %v2608
        %v5106 = vunpack.c.l.b16 %v2609
        %v5107 = vunpack.c.l.b16 %v2610
        %v5108 = vunpack.c.l.b16 %v2611
        %v5109 = vunpack.c.l.b16 %v2612
        %v5110 = vunpack.c.l.b16 %v2613
        %v5111 = vunpack.c.l.b16 %v2614
        %v5112 = vunpack.c.l.b16 %v2615
        %v5113 = vunpack.c.l.b16 %v2616
        %v5114 = vunpack.c.l.b16 %v2617
        %v5115 = vunpack.c.l.b16 %v2618
        %v5116 = vpack.c.b16 %v4973, %v4972
        %v5117 = vpack.c.b16 %v4975, %v4974
        %v5118 = vpack.c.b16 %v4977, %v4976
        %v5119 = vpack.c.b16 %v4979, %v4978
        %v5120 = vpack.c.b16 %v4981, %v4980
        %v5121 = vpack.c.b16 %v4983, %v4982
        %v5122 = vpack.c.b16 %v4985, %v4984
        %v5123 = vpack.c.b16 %v4987, %v4986
        %v5124 = vpack.c.b16 %v4989, %v4988
        %v5125 = vpack.c.b16 %v4991, %v4990
        %v5126 = vpack.c.b16 %v4993, %v4992
        %v5127 = vpack.c.b16 %v4995, %v4994
        %v5128 = vpack.c.b16 %v4997, %v4996
        %v5129 = vpack.c.b16 %v4999, %v4998
        %v5130 = vpack.c.b16 %v5001, %v5000
        %v5131 = vpack.c.b16 %v5003, %v5002
        %v5132 = vpack.c.b16 %v5005, %v5004
        %v5133 = vpack.c.b16 %v5007, %v5006
        %v5134 = vpack.c.b16 %v5009, %v5008
        %v5135 = vpack.c.b16 %v5011, %v5010
        %v5136 = vpack.c.b16 %v5013, %v5012
        %v5137 = vpack.c.b16 %v5015, %v5014
        %v5138 = vpack.c.b16 %v5017, %v5016
        %v5139 = vpack.c.b16 %v5019, %v5018
        %v5140 = vpack.c.b16 %v5021, %v5020
        %v5141 = vpack.c.b16 %v5023, %v5022
        %v5142 = vpack.c.b16 %v5025, %v5024
        %v5143 = vpack.c.b16 %v5027, %v5026
        %v5144 = vpack.c.b16 %v5029, %v5028
        %v5145 = vpack.c.b16 %v5031, %v5030
        %v5146 = vpack.c.b16 %v5033, %v5032
        %v5147 = vpack.c.b16 %v5035, %v5034
        %v5148 = vpack.c.b16 %v5037, %v5036
        %v5149 = vpack.c.b16 %v5039, %v5038
        %v5150 = vpack.c.b16 %v5041, %v5040
        %v5151 = vpack.c.b16 %v5043, %v5042
        %v5152 = vpack.c.b16 %v5045, %v5044
        %v5153 = vpack.c.b16 %v5047, %v5046
        %v5154 = vpack.c.b16 %v5049, %v5048
        %v5155 = vpack.c.b16 %v5051, %v5050
        %v5156 = vpack.c.b16 %v5053, %v5052
        %v5157 = vpack.c.b16 %v5055, %v5054
        %v5158 = vpack.c.b16 %v5057, %v5056
        %v5159 = vpack.c.b16 %v5059, %v5058
        %v5160 = vpack.c.b16 %v5061, %v5060
        %v5161 = vpack.c.b16 %v5063, %v5062
        %v5162 = vpack.c.b16 %v5065, %v5064
        %v5163 = vpack.c.b16 %v5067, %v5066
        %v5164 = vpack.c.b16 %v5069, %v5068
        %v5165 = vpack.c.b16 %v5071, %v5070
        %v5166 = vpack.c.b16 %v5073, %v5072
        %v5167 = vpack.c.b16 %v5075, %v5074
        %v5168 = vpack.c.b16 %v5077, %v5076
        %v5169 = vpack.c.b16 %v5079, %v5078
        %v5170 = vpack.c.b16 %v5081, %v5080
        %v5171 = vpack.c.b16 %v5083, %v5082
        %v5172 = vpack.c.b16 %v5085, %v5084
        %v5173 = vpack.c.b16 %v5087, %v5086
        %v5174 = vpack.c.b16 %v5089, %v5088
        %v5175 = vpack.c.b16 %v5091, %v5090
        %v5176 = vpack.c.b16 %v5093, %v5092
        %v5177 = vpack.c.b16 %v5095, %v5094
        %v5178 = vpack.c.b16 %v5097, %v5096
        %v5179 = vpack.c.b16 %v5099, %v5098
        %v5180 = vpack.c.b16 %v5101, %v5100
        %v5181 = vpack.c.b16 %v5103, %v5102
        %v5182 = vpack.c.b16 %v5105, %v5104
        %v5183 = vpack.c.b16 %v5107, %v5106
        %v5184 = vpack.c.b16 %v5109, %v5108
        %v5185 = vpack.c.b16 %v5111, %v5110
        %v5186 = vpack.c.b16 %v5113, %v5112
        %v5187 = vpack.c.b16 %v5115, %v5114
        %5260 = vmatprep.subr.bf16.mxu0 0
        %5261 = vmatpush1.bf16.msra.mxu0 %v5123
        %5262 = vmatprep.subr.bf16.mxu0 0
        %5263 = vmatpush1.bf16.msra.mxu0 %v5122
        %5264 = vmatprep.subr.bf16.mxu0 0
        %5265 = vmatpush1.bf16.msra.mxu0 %v5121
        %5266 = vmatprep.subr.bf16.mxu0 0
        %5267 = vmatpush1.bf16.msra.mxu0 %v5120
        %5268 = vmatprep.subr.bf16.mxu0 0
        %5269 = vmatpush1.bf16.msra.mxu0 %v5119
        %5270 = vmatprep.subr.bf16.mxu0 0
        %5271 = vmatpush1.bf16.msra.mxu0 %v5118
        %5272 = vmatprep.subr.bf16.mxu0 0
        %5273 = vmatpush1.bf16.msra.mxu0 %v5117
        %5274 = vmatprep.subr.bf16.mxu0 0
        %5275 = vmatpush1.bf16.msra.mxu0 %v5116
        %5276 = vmatprep.subr.bf16.mxu0 0
        %5277 = vmatpush2.bf16.msra.mxu0 %v5131
        %5278 = vmatprep.subr.bf16.mxu0 0
        %5279 = vmatpush2.bf16.msra.mxu0 %v5130
        %5280 = vmatprep.subr.bf16.mxu0 0
        %5281 = vmatpush2.bf16.msra.mxu0 %v5129
        %5282 = vmatprep.subr.bf16.mxu0 0
        %5283 = vmatpush2.bf16.msra.mxu0 %v5128
        %5284 = vmatprep.subr.bf16.mxu0 0
        %5285 = vmatpush2.bf16.msra.mxu0 %v5127
        %5286 = vmatprep.subr.bf16.mxu0 0
        %5287 = vmatpush2.bf16.msra.mxu0 %v5126
        %5288 = vmatprep.subr.bf16.mxu0 0
        %5289 = vmatpush2.bf16.msra.mxu0 %v5125
        %5290 = vmatprep.subr.bf16.mxu0 0
        %5291 = vmatpush2.bf16.msra.mxu0 %v5124
        %5292 = vmatprep.mubr.bf16.mxu0 %v2645
        %5293 = vmatmul.mubr.bf16.gmra.mxu0 %v2636
        %v5294 = vpop.f32.mrf.mxu0
        %v5295 = vadd.f32 0.0, %v5294
        %v5296 = vpop.f32.mrf.mxu0
        %v5297 = vpop.f32.mrf.mxu0
        %v5298 = vadd.f32 0.0, %v5297
        %v5299 = vpop.f32.mrf.mxu0
        %5300 = vmatprep.mubr.bf16.mxu0 %v2774
        %5301 = vmatmul.mubr.bf16.gmra.mxu0 %v2765
        %v5302 = vpop.f32.mrf.mxu0
        %v5303 = vadd.f32 0.0, %v5302
        %v5304 = vpop.f32.mrf.mxu0
        %v5305 = vpop.f32.mrf.mxu0
        %v5306 = vadd.f32 0.0, %v5305
        %v5307 = vpop.f32.mrf.mxu0
        %5308 = vmatprep.mubr.bf16.mxu0 %v2903
        %5309 = vmatmul.mubr.bf16.gmra.mxu0 %v2894
        %v5310 = vpop.f32.mrf.mxu0
        %v5311 = vadd.f32 0.0, %v5310
        %v5312 = vpop.f32.mrf.mxu0
        %v5313 = vpop.f32.mrf.mxu0
        %v5314 = vadd.f32 0.0, %v5313
        %v5315 = vpop.f32.mrf.mxu0
        %5316 = vmatprep.mubr.bf16.mxu0 %v3032
        %5317 = vmatmul.mubr.bf16.gmra.mxu0 %v3023
        %v5318 = vpop.f32.mrf.mxu0
        %v5319 = vadd.f32 0.0, %v5318
        %v5320 = vpop.f32.mrf.mxu0
        %v5321 = vpop.f32.mrf.mxu0
        %v5322 = vadd.f32 0.0, %v5321
        %v5323 = vpop.f32.mrf.mxu0
        %5324 = vmatprep.mubr.bf16.mxu0 %v3161
        %5325 = vmatmul.mubr.bf16.gmra.mxu0 %v3152
        %v5326 = vpop.f32.mrf.mxu0
        %v5327 = vadd.f32 0.0, %v5326
        %v5328 = vpop.f32.mrf.mxu0
        %v5329 = vpop.f32.mrf.mxu0
        %v5330 = vadd.f32 0.0, %v5329
        %v5331 = vpop.f32.mrf.mxu0
        %5332 = vmatprep.mubr.bf16.mxu0 %v3290
        %5333 = vmatmul.mubr.bf16.gmra.mxu0 %v3281
        %v5334 = vpop.f32.mrf.mxu0
        %v5335 = vadd.f32 0.0, %v5334
        %v5336 = vpop.f32.mrf.mxu0
        %v5337 = vpop.f32.mrf.mxu0
        %v5338 = vadd.f32 0.0, %v5337
        %v5339 = vpop.f32.mrf.mxu0
        %5340 = vmatprep.mubr.bf16.mxu0 %v3419
        %5341 = vmatmul.mubr.bf16.gmra.mxu0 %v3410
        %v5342 = vpop.f32.mrf.mxu0
        %v5343 = vadd.f32 0.0, %v5342
        %v5344 = vpop.f32.mrf.mxu0
        %v5345 = vpop.f32.mrf.mxu0
        %v5346 = vadd.f32 0.0, %v5345
        %v5347 = vpop.f32.mrf.mxu0
        %5348 = vmatprep.mubr.bf16.mxu0 %v3548
        %5349 = vmatmul.mubr.bf16.gmra.mxu0 %v3539
        %v5350 = vpop.f32.mrf.mxu0
        %v5351 = vadd.f32 0.0, %v5350
        %v5352 = vpop.f32.mrf.mxu0
        %v5353 = vpop.f32.mrf.mxu0
        %v5354 = vadd.f32 0.0, %v5353
        %v5355 = vpop.f32.mrf.mxu0
        %5356 = vmatprep.mubr.bf16.mxu0 %v3677
        %5357 = vmatmul.mubr.bf16.gmra.mxu0 %v3668
        %v5358 = vpop.f32.mrf.mxu0
        %v5359 = vadd.f32 0.0, %v5358
        %v5360 = vpop.f32.mrf.mxu0
        %v5361 = vpop.f32.mrf.mxu0
        %v5362 = vadd.f32 0.0, %v5361
        %v5363 = vpop.f32.mrf.mxu0
        %5364 = vmatprep.mubr.bf16.mxu0 %v3806
        %5365 = vmatmul.mubr.bf16.gmra.mxu0 %v3797
        %v5366 = vpop.f32.mrf.mxu0
        %v5367 = vadd.f32 0.0, %v5366
        %v5368 = vpop.f32.mrf.mxu0
        %v5369 = vpop.f32.mrf.mxu0
        %v5370 = vadd.f32 0.0, %v5369
        %v5371 = vpop.f32.mrf.mxu0
        %5372 = vmatprep.mubr.bf16.mxu0 %v3935
        %5373 = vmatmul.mubr.bf16.gmra.mxu0 %v3926
        %v5374 = vpop.f32.mrf.mxu0
        %v5375 = vadd.f32 0.0, %v5374
        %v5376 = vpop.f32.mrf.mxu0
        %v5377 = vpop.f32.mrf.mxu0
        %v5378 = vadd.f32 0.0, %v5377
        %v5379 = vpop.f32.mrf.mxu0
        %5380 = vmatprep.mubr.bf16.mxu0 %v4064
        %5381 = vmatmul.mubr.bf16.gmra.mxu0 %v4055
        %v5382 = vpop.f32.mrf.mxu0
        %v5383 = vadd.f32 0.0, %v5382
        %v5384 = vpop.f32.mrf.mxu0
        %v5385 = vpop.f32.mrf.mxu0
        %v5386 = vadd.f32 0.0, %v5385
        %v5387 = vpop.f32.mrf.mxu0
        %5388 = vmatprep.mubr.bf16.mxu0 %v4193
        %5389 = vmatmul.mubr.bf16.gmra.mxu0 %v4184
        %v5390 = vpop.f32.mrf.mxu0
        %v5391 = vadd.f32 0.0, %v5390
        %v5392 = vpop.f32.mrf.mxu0
        %v5393 = vpop.f32.mrf.mxu0
        %v5394 = vadd.f32 0.0, %v5393
        %v5395 = vpop.f32.mrf.mxu0
        %5396 = vmatprep.mubr.bf16.mxu0 %v4322
        %5397 = vmatmul.mubr.bf16.gmra.mxu0 %v4313
        %v5398 = vpop.f32.mrf.mxu0
        %v5399 = vadd.f32 0.0, %v5398
        %v5400 = vpop.f32.mrf.mxu0
        %v5401 = vpop.f32.mrf.mxu0
        %v5402 = vadd.f32 0.0, %v5401
        %v5403 = vpop.f32.mrf.mxu0
        %5404 = vmatprep.mubr.bf16.mxu0 %v4451
        %5405 = vmatmul.mubr.bf16.gmra.mxu0 %v4442
        %v5406 = vpop.f32.mrf.mxu0
        %v5407 = vadd.f32 0.0, %v5406
        %v5408 = vpop.f32.mrf.mxu0
        %v5409 = vpop.f32.mrf.mxu0
        %v5410 = vadd.f32 0.0, %v5409
        %v5411 = vpop.f32.mrf.mxu0
        %5412 = vmatprep.mubr.bf16.mxu0 %v4580
        %5413 = vmatmul.mubr.bf16.gmra.mxu0 %v4571
        %v5414 = vpop.f32.mrf.mxu0
        %v5415 = vadd.f32 0.0, %v5414
        %v5416 = vpop.f32.mrf.mxu0
        %v5417 = vpop.f32.mrf.mxu0
        %v5418 = vadd.f32 0.0, %v5417
        %v5419 = vpop.f32.mrf.mxu0
        %5420 = vdwg.mxu0
        %5421 = vmatprep.subr.bf16.mxu0 0
        %5422 = vmatpush1.bf16.msra.mxu0 %v5139
        %5423 = vmatprep.subr.bf16.mxu0 0
        %5424 = vmatpush1.bf16.msra.mxu0 %v5138
        %5425 = vmatprep.subr.bf16.mxu0 0
        %5426 = vmatpush1.bf16.msra.mxu0 %v5137
        %5427 = vmatprep.subr.bf16.mxu0 0
        %5428 = vmatpush1.bf16.msra.mxu0 %v5136
        %5429 = vmatprep.subr.bf16.mxu0 0
        %5430 = vmatpush1.bf16.msra.mxu0 %v5135
        %5431 = vmatprep.subr.bf16.mxu0 0
        %5432 = vmatpush1.bf16.msra.mxu0 %v5134
        %5433 = vmatprep.subr.bf16.mxu0 0
        %5434 = vmatpush1.bf16.msra.mxu0 %v5133
        %5435 = vmatprep.subr.bf16.mxu0 0
        %5436 = vmatpush1.bf16.msra.mxu0 %v5132
        %5437 = vmatprep.subr.bf16.mxu0 0
        %5438 = vmatpush2.bf16.msra.mxu0 %v5147
        %5439 = vmatprep.subr.bf16.mxu0 0
        %5440 = vmatpush2.bf16.msra.mxu0 %v5146
        %5441 = vmatprep.subr.bf16.mxu0 0
        %5442 = vmatpush2.bf16.msra.mxu0 %v5145
        %5443 = vmatprep.subr.bf16.mxu0 0
        %5444 = vmatpush2.bf16.msra.mxu0 %v5144
        %5445 = vmatprep.subr.bf16.mxu0 0
        %5446 = vmatpush2.bf16.msra.mxu0 %v5143
        %5447 = vmatprep.subr.bf16.mxu0 0
        %5448 = vmatpush2.bf16.msra.mxu0 %v5142
        %5449 = vmatprep.subr.bf16.mxu0 0
        %5450 = vmatpush2.bf16.msra.mxu0 %v5141
        %5451 = vmatprep.subr.bf16.mxu0 0
        %5452 = vmatpush2.bf16.msra.mxu0 %v5140
        %5453 = vmatprep.mubr.bf16.mxu0 %v2679
        %5454 = vmatmul.mubr.bf16.gmra.mxu0 %v2662
        %v5455 = vpop.f32.mrf.mxu0
        %v5456 = vadd.f32 %v5295, %v5455
        %v5457 = vpop.f32.mrf.mxu0
        %v5458 = vpop.f32.mrf.mxu0
        %v5459 = vadd.f32 %v5298, %v5458
        %v5460 = vpop.f32.mrf.mxu0
        %5461 = vmatprep.mubr.bf16.mxu0 %v2808
        %5462 = vmatmul.mubr.bf16.gmra.mxu0 %v2791
        %v5463 = vpop.f32.mrf.mxu0
        %v5464 = vadd.f32 %v5303, %v5463
        %v5465 = vpop.f32.mrf.mxu0
        %v5466 = vpop.f32.mrf.mxu0
        %v5467 = vadd.f32 %v5306, %v5466
        %v5468 = vpop.f32.mrf.mxu0
        %5469 = vmatprep.mubr.bf16.mxu0 %v2937
        %5470 = vmatmul.mubr.bf16.gmra.mxu0 %v2920
        %v5471 = vpop.f32.mrf.mxu0
        %v5472 = vadd.f32 %v5311, %v5471
        %v5473 = vpop.f32.mrf.mxu0
        %v5474 = vpop.f32.mrf.mxu0
        %v5475 = vadd.f32 %v5314, %v5474
        %v5476 = vpop.f32.mrf.mxu0
        %5477 = vmatprep.mubr.bf16.mxu0 %v3066
        %5478 = vmatmul.mubr.bf16.gmra.mxu0 %v3049
        %v5479 = vpop.f32.mrf.mxu0
        %v5480 = vadd.f32 %v5319, %v5479
        %v5481 = vpop.f32.mrf.mxu0
        %v5482 = vpop.f32.mrf.mxu0
        %v5483 = vadd.f32 %v5322, %v5482
        %v5484 = vpop.f32.mrf.mxu0
        %5485 = vmatprep.mubr.bf16.mxu0 %v3195
        %5486 = vmatmul.mubr.bf16.gmra.mxu0 %v3178
        %v5487 = vpop.f32.mrf.mxu0
        %v5488 = vadd.f32 %v5327, %v5487
        %v5489 = vpop.f32.mrf.mxu0
        %v5490 = vpop.f32.mrf.mxu0
        %v5491 = vadd.f32 %v5330, %v5490
        %v5492 = vpop.f32.mrf.mxu0
        %5493 = vmatprep.mubr.bf16.mxu0 %v3324
        %5494 = vmatmul.mubr.bf16.gmra.mxu0 %v3307
        %v5495 = vpop.f32.mrf.mxu0
        %v5496 = vadd.f32 %v5335, %v5495
        %v5497 = vpop.f32.mrf.mxu0
        %v5498 = vpop.f32.mrf.mxu0
        %v5499 = vadd.f32 %v5338, %v5498
        %v5500 = vpop.f32.mrf.mxu0
        %5501 = vmatprep.mubr.bf16.mxu0 %v3453
        %5502 = vmatmul.mubr.bf16.gmra.mxu0 %v3436
        %v5503 = vpop.f32.mrf.mxu0
        %v5504 = vadd.f32 %v5343, %v5503
        %v5505 = vpop.f32.mrf.mxu0
        %v5506 = vpop.f32.mrf.mxu0
        %v5507 = vadd.f32 %v5346, %v5506
        %v5508 = vpop.f32.mrf.mxu0
        %5509 = vmatprep.mubr.bf16.mxu0 %v3582
        %5510 = vmatmul.mubr.bf16.gmra.mxu0 %v3565
        %v5511 = vpop.f32.mrf.mxu0
        %v5512 = vadd.f32 %v5351, %v5511
        %v5513 = vpop.f32.mrf.mxu0
        %v5514 = vpop.f32.mrf.mxu0
        %v5515 = vadd.f32 %v5354, %v5514
        %v5516 = vpop.f32.mrf.mxu0
        %5517 = vmatprep.mubr.bf16.mxu0 %v3711
        %5518 = vmatmul.mubr.bf16.gmra.mxu0 %v3694
        %v5519 = vpop.f32.mrf.mxu0
        %v5520 = vadd.f32 %v5359, %v5519
        %v5521 = vpop.f32.mrf.mxu0
        %v5522 = vpop.f32.mrf.mxu0
        %v5523 = vadd.f32 %v5362, %v5522
        %v5524 = vpop.f32.mrf.mxu0
        %5525 = vmatprep.mubr.bf16.mxu0 %v3840
        %5526 = vmatmul.mubr.bf16.gmra.mxu0 %v3823
        %v5527 = vpop.f32.mrf.mxu0
        %v5528 = vadd.f32 %v5367, %v5527
        %v5529 = vpop.f32.mrf.mxu0
        %v5530 = vpop.f32.mrf.mxu0
        %v5531 = vadd.f32 %v5370, %v5530
        %v5532 = vpop.f32.mrf.mxu0
        %5533 = vmatprep.mubr.bf16.mxu0 %v3969
        %5534 = vmatmul.mubr.bf16.gmra.mxu0 %v3952
        %v5535 = vpop.f32.mrf.mxu0
        %v5536 = vadd.f32 %v5375, %v5535
        %v5537 = vpop.f32.mrf.mxu0
        %v5538 = vpop.f32.mrf.mxu0
        %v5539 = vadd.f32 %v5378, %v5538
        %v5540 = vpop.f32.mrf.mxu0
        %5541 = vmatprep.mubr.bf16.mxu0 %v4098
        %5542 = vmatmul.mubr.bf16.gmra.mxu0 %v4081
        %v5543 = vpop.f32.mrf.mxu0
        %v5544 = vadd.f32 %v5383, %v5543
        %v5545 = vpop.f32.mrf.mxu0
        %v5546 = vpop.f32.mrf.mxu0
        %v5547 = vadd.f32 %v5386, %v5546
        %v5548 = vpop.f32.mrf.mxu0
        %5549 = vmatprep.mubr.bf16.mxu0 %v4227
        %5550 = vmatmul.mubr.bf16.gmra.mxu0 %v4210
        %v5551 = vpop.f32.mrf.mxu0
        %v5552 = vadd.f32 %v5391, %v5551
        %v5553 = vpop.f32.mrf.mxu0
        %v5554 = vpop.f32.mrf.mxu0
        %v5555 = vadd.f32 %v5394, %v5554
        %v5556 = vpop.f32.mrf.mxu0
        %5557 = vmatprep.mubr.bf16.mxu0 %v4356
        %5558 = vmatmul.mubr.bf16.gmra.mxu0 %v4339
        %v5559 = vpop.f32.mrf.mxu0
        %v5560 = vadd.f32 %v5399, %v5559
        %v5561 = vpop.f32.mrf.mxu0
        %v5562 = vpop.f32.mrf.mxu0
        %v5563 = vadd.f32 %v5402, %v5562
        %v5564 = vpop.f32.mrf.mxu0
        %5565 = vmatprep.mubr.bf16.mxu0 %v4485
        %5566 = vmatmul.mubr.bf16.gmra.mxu0 %v4468
        %v5567 = vpop.f32.mrf.mxu0
        %v5568 = vadd.f32 %v5407, %v5567
        %v5569 = vpop.f32.mrf.mxu0
        %v5570 = vpop.f32.mrf.mxu0
        %v5571 = vadd.f32 %v5410, %v5570
        %v5572 = vpop.f32.mrf.mxu0
        %5573 = vmatprep.mubr.bf16.mxu0 %v4614
        %5574 = vmatmul.mubr.bf16.gmra.mxu0 %v4597
        %v5575 = vpop.f32.mrf.mxu0
        %v5576 = vadd.f32 %v5415, %v5575
        %v5577 = vpop.f32.mrf.mxu0
        %v5578 = vpop.f32.mrf.mxu0
        %v5579 = vadd.f32 %v5418, %v5578
        %v5580 = vpop.f32.mrf.mxu0
        %5581 = vdwg.mxu0
        %5582 = vmatprep.subr.bf16.mxu0 0
        %5583 = vmatpush1.bf16.msra.mxu0 %v5155
        %5584 = vmatprep.subr.bf16.mxu0 0
        %5585 = vmatpush1.bf16.msra.mxu0 %v5154
        %5586 = vmatprep.subr.bf16.mxu0 0
        %5587 = vmatpush1.bf16.msra.mxu0 %v5153
        %5588 = vmatprep.subr.bf16.mxu0 0
        %5589 = vmatpush1.bf16.msra.mxu0 %v5152
        %5590 = vmatprep.subr.bf16.mxu0 0
        %5591 = vmatpush1.bf16.msra.mxu0 %v5151
        %5592 = vmatprep.subr.bf16.mxu0 0
        %5593 = vmatpush1.bf16.msra.mxu0 %v5150
        %5594 = vmatprep.subr.bf16.mxu0 0
        %5595 = vmatpush1.bf16.msra.mxu0 %v5149
        %5596 = vmatprep.subr.bf16.mxu0 0
        %5597 = vmatpush1.bf16.msra.mxu0 %v5148
        %5598 = vmatprep.subr.bf16.mxu0 0
        %5599 = vmatpush2.bf16.msra.mxu0 %v5163
        %5600 = vmatprep.subr.bf16.mxu0 0
        %5601 = vmatpush2.bf16.msra.mxu0 %v5162
        %5602 = vmatprep.subr.bf16.mxu0 0
        %5603 = vmatpush2.bf16.msra.mxu0 %v5161
        %5604 = vmatprep.subr.bf16.mxu0 0
        %5605 = vmatpush2.bf16.msra.mxu0 %v5160
        %5606 = vmatprep.subr.bf16.mxu0 0
        %5607 = vmatpush2.bf16.msra.mxu0 %v5159
        %5608 = vmatprep.subr.bf16.mxu0 0
        %5609 = vmatpush2.bf16.msra.mxu0 %v5158
        %5610 = vmatprep.subr.bf16.mxu0 0
        %5611 = vmatpush2.bf16.msra.mxu0 %v5157
        %5612 = vmatprep.subr.bf16.mxu0 0
        %5613 = vmatpush2.bf16.msra.mxu0 %v5156
        %5614 = vmatprep.mubr.bf16.mxu0 %v2705
        %5615 = vmatmul.mubr.bf16.gmra.mxu0 %v2688
        %v5616 = vpop.f32.mrf.mxu0
        %v5617 = vadd.f32 %v5456, %v5616
        %v5618 = vpop.f32.mrf.mxu0
        %v5619 = vpop.f32.mrf.mxu0
        %v5620 = vadd.f32 %v5459, %v5619
        %v5621 = vpop.f32.mrf.mxu0
        %5622 = vmatprep.mubr.bf16.mxu0 %v2834
        %5623 = vmatmul.mubr.bf16.gmra.mxu0 %v2817
        %v5624 = vpop.f32.mrf.mxu0
        %v5625 = vadd.f32 %v5464, %v5624
        %v5626 = vpop.f32.mrf.mxu0
        %v5627 = vpop.f32.mrf.mxu0
        %v5628 = vadd.f32 %v5467, %v5627
        %v5629 = vpop.f32.mrf.mxu0
        %5630 = vmatprep.mubr.bf16.mxu0 %v2963
        %5631 = vmatmul.mubr.bf16.gmra.mxu0 %v2946
        %v5632 = vpop.f32.mrf.mxu0
        %v5633 = vadd.f32 %v5472, %v5632
        %v5634 = vpop.f32.mrf.mxu0
        %v5635 = vpop.f32.mrf.mxu0
        %v5636 = vadd.f32 %v5475, %v5635
        %v5637 = vpop.f32.mrf.mxu0
        %5638 = vmatprep.mubr.bf16.mxu0 %v3092
        %5639 = vmatmul.mubr.bf16.gmra.mxu0 %v3075
        %v5640 = vpop.f32.mrf.mxu0
        %v5641 = vadd.f32 %v5480, %v5640
        %v5642 = vpop.f32.mrf.mxu0
        %v5643 = vpop.f32.mrf.mxu0
        %v5644 = vadd.f32 %v5483, %v5643
        %v5645 = vpop.f32.mrf.mxu0
        %5646 = vmatprep.mubr.bf16.mxu0 %v3221
        %5647 = vmatmul.mubr.bf16.gmra.mxu0 %v3204
        %v5648 = vpop.f32.mrf.mxu0
        %v5649 = vadd.f32 %v5488, %v5648
        %v5650 = vpop.f32.mrf.mxu0
        %v5651 = vpop.f32.mrf.mxu0
        %v5652 = vadd.f32 %v5491, %v5651
        %v5653 = vpop.f32.mrf.mxu0
        %5654 = vmatprep.mubr.bf16.mxu0 %v3350
        %5655 = vmatmul.mubr.bf16.gmra.mxu0 %v3333
        %v5656 = vpop.f32.mrf.mxu0
        %v5657 = vadd.f32 %v5496, %v5656
        %v5658 = vpop.f32.mrf.mxu0
        %v5659 = vpop.f32.mrf.mxu0
        %v5660 = vadd.f32 %v5499, %v5659
        %v5661 = vpop.f32.mrf.mxu0
        %5662 = vmatprep.mubr.bf16.mxu0 %v3479
        %5663 = vmatmul.mubr.bf16.gmra.mxu0 %v3462
        %v5664 = vpop.f32.mrf.mxu0
        %v5665 = vadd.f32 %v5504, %v5664
        %v5666 = vpop.f32.mrf.mxu0
        %v5667 = vpop.f32.mrf.mxu0
        %v5668 = vadd.f32 %v5507, %v5667
        %v5669 = vpop.f32.mrf.mxu0
        %5670 = vmatprep.mubr.bf16.mxu0 %v3608
        %5671 = vmatmul.mubr.bf16.gmra.mxu0 %v3591
        %v5672 = vpop.f32.mrf.mxu0
        %v5673 = vadd.f32 %v5512, %v5672
        %v5674 = vpop.f32.mrf.mxu0
        %v5675 = vpop.f32.mrf.mxu0
        %v5676 = vadd.f32 %v5515, %v5675
        %v5677 = vpop.f32.mrf.mxu0
        %5678 = vmatprep.mubr.bf16.mxu0 %v3737
        %5679 = vmatmul.mubr.bf16.gmra.mxu0 %v3720
        %v5680 = vpop.f32.mrf.mxu0
        %v5681 = vadd.f32 %v5520, %v5680
        %v5682 = vpop.f32.mrf.mxu0
        %v5683 = vpop.f32.mrf.mxu0
        %v5684 = vadd.f32 %v5523, %v5683
        %v5685 = vpop.f32.mrf.mxu0
        %5686 = vmatprep.mubr.bf16.mxu0 %v3866
        %5687 = vmatmul.mubr.bf16.gmra.mxu0 %v3849
        %v5688 = vpop.f32.mrf.mxu0
        %v5689 = vadd.f32 %v5528, %v5688
        %v5690 = vpop.f32.mrf.mxu0
        %v5691 = vpop.f32.mrf.mxu0
        %v5692 = vadd.f32 %v5531, %v5691
        %v5693 = vpop.f32.mrf.mxu0
        %5694 = vmatprep.mubr.bf16.mxu0 %v3995
        %5695 = vmatmul.mubr.bf16.gmra.mxu0 %v3978
        %v5696 = vpop.f32.mrf.mxu0
        %v5697 = vadd.f32 %v5536, %v5696
        %v5698 = vpop.f32.mrf.mxu0
        %v5699 = vpop.f32.mrf.mxu0
        %v5700 = vadd.f32 %v5539, %v5699
        %v5701 = vpop.f32.mrf.mxu0
        %5702 = vmatprep.mubr.bf16.mxu0 %v4124
        %5703 = vmatmul.mubr.bf16.gmra.mxu0 %v4107
        %v5704 = vpop.f32.mrf.mxu0
        %v5705 = vadd.f32 %v5544, %v5704
        %v5706 = vpop.f32.mrf.mxu0
        %v5707 = vpop.f32.mrf.mxu0
        %v5708 = vadd.f32 %v5547, %v5707
        %v5709 = vpop.f32.mrf.mxu0
        %5710 = vmatprep.mubr.bf16.mxu0 %v4253
        %5711 = vmatmul.mubr.bf16.gmra.mxu0 %v4236
        %v5712 = vpop.f32.mrf.mxu0
        %v5713 = vadd.f32 %v5552, %v5712
        %v5714 = vpop.f32.mrf.mxu0
        %v5715 = vpop.f32.mrf.mxu0
        %v5716 = vadd.f32 %v5555, %v5715
        %v5717 = vpop.f32.mrf.mxu0
        %5718 = vmatprep.mubr.bf16.mxu0 %v4382
        %5719 = vmatmul.mubr.bf16.gmra.mxu0 %v4365
        %v5720 = vpop.f32.mrf.mxu0
        %v5721 = vadd.f32 %v5560, %v5720
        %v5722 = vpop.f32.mrf.mxu0
        %v5723 = vpop.f32.mrf.mxu0
        %v5724 = vadd.f32 %v5563, %v5723
        %v5725 = vpop.f32.mrf.mxu0
        %5726 = vmatprep.mubr.bf16.mxu0 %v4511
        %5727 = vmatmul.mubr.bf16.gmra.mxu0 %v4494
        %v5728 = vpop.f32.mrf.mxu0
        %v5729 = vadd.f32 %v5568, %v5728
        %v5730 = vpop.f32.mrf.mxu0
        %v5731 = vpop.f32.mrf.mxu0
        %v5732 = vadd.f32 %v5571, %v5731
        %v5733 = vpop.f32.mrf.mxu0
        %5734 = vmatprep.mubr.bf16.mxu0 %v4640
        %5735 = vmatmul.mubr.bf16.gmra.mxu0 %v4623
        %v5736 = vpop.f32.mrf.mxu0
        %v5737 = vadd.f32 %v5576, %v5736
        %v5738 = vpop.f32.mrf.mxu0
        %v5739 = vpop.f32.mrf.mxu0
        %v5740 = vadd.f32 %v5579, %v5739
        %v5741 = vpop.f32.mrf.mxu0
        %5742 = vdwg.mxu0
        %5743 = vmatprep.subr.bf16.mxu0 0
        %5744 = vmatpush1.bf16.msra.mxu0 %v5171
        %5745 = vmatprep.subr.bf16.mxu0 0
        %5746 = vmatpush1.bf16.msra.mxu0 %v5170
        %5747 = vmatprep.subr.bf16.mxu0 0
        %5748 = vmatpush1.bf16.msra.mxu0 %v5169
        %5749 = vmatprep.subr.bf16.mxu0 0
        %5750 = vmatpush1.bf16.msra.mxu0 %v5168
        %5751 = vmatprep.subr.bf16.mxu0 0
        %5752 = vmatpush1.bf16.msra.mxu0 %v5167
        %5753 = vmatprep.subr.bf16.mxu0 0
        %5754 = vmatpush1.bf16.msra.mxu0 %v5166
        %5755 = vmatprep.subr.bf16.mxu0 0
        %5756 = vmatpush1.bf16.msra.mxu0 %v5165
        %5757 = vmatprep.subr.bf16.mxu0 0
        %5758 = vmatpush1.bf16.msra.mxu0 %v5164
        %5759 = vmatprep.subr.bf16.mxu0 0
        %5760 = vmatpush2.bf16.msra.mxu0 %v5179
        %5761 = vmatprep.subr.bf16.mxu0 0
        %5762 = vmatpush2.bf16.msra.mxu0 %v5178
        %5763 = vmatprep.subr.bf16.mxu0 0
        %5764 = vmatpush2.bf16.msra.mxu0 %v5177
        %5765 = vmatprep.subr.bf16.mxu0 0
        %5766 = vmatpush2.bf16.msra.mxu0 %v5176
        %5767 = vmatprep.subr.bf16.mxu0 0
        %5768 = vmatpush2.bf16.msra.mxu0 %v5175
        %5769 = vmatprep.subr.bf16.mxu0 0
        %5770 = vmatpush2.bf16.msra.mxu0 %v5174
        %5771 = vmatprep.subr.bf16.mxu0 0
        %5772 = vmatpush2.bf16.msra.mxu0 %v5173
        %5773 = vmatprep.subr.bf16.mxu0 0
        %5774 = vmatpush2.bf16.msra.mxu0 %v5172
        %5775 = vmatprep.mubr.bf16.mxu0 %v2731
        %5776 = vmatmul.mubr.bf16.gmra.mxu0 %v2722
        %v5777 = vpop.f32.mrf.mxu0
        %v5778 = vadd.f32 %v5617, %v5777
        %v5779 = vpop.f32.mrf.mxu0
        %v5780 = vpop.f32.mrf.mxu0
        %v5781 = vadd.f32 %v5620, %v5780
        %v5782 = vpop.f32.mrf.mxu0
        %5783 = vmatprep.mubr.bf16.mxu0 %v2860
        %5784 = vmatmul.mubr.bf16.gmra.mxu0 %v2851
        %v5785 = vpop.f32.mrf.mxu0
        %v5786 = vadd.f32 %v5625, %v5785
        %v5787 = vpop.f32.mrf.mxu0
        %v5788 = vpop.f32.mrf.mxu0
        %v5789 = vadd.f32 %v5628, %v5788
        %v5790 = vpop.f32.mrf.mxu0
        %5791 = vmatprep.mubr.bf16.mxu0 %v2989
        %5792 = vmatmul.mubr.bf16.gmra.mxu0 %v2980
        %v5793 = vpop.f32.mrf.mxu0
        %v5794 = vadd.f32 %v5633, %v5793
        %v5795 = vpop.f32.mrf.mxu0
        %v5796 = vpop.f32.mrf.mxu0
        %v5797 = vadd.f32 %v5636, %v5796
        %v5798 = vpop.f32.mrf.mxu0
        %5799 = vmatprep.mubr.bf16.mxu0 %v3118
        %5800 = vmatmul.mubr.bf16.gmra.mxu0 %v3109
        %v5801 = vpop.f32.mrf.mxu0
        %v5802 = vadd.f32 %v5641, %v5801
        %v5803 = vpop.f32.mrf.mxu0
        %v5804 = vpop.f32.mrf.mxu0
        %v5805 = vadd.f32 %v5644, %v5804
        %v5806 = vpop.f32.mrf.mxu0
        %5807 = vmatprep.mubr.bf16.mxu0 %v3247
        %5808 = vmatmul.mubr.bf16.gmra.mxu0 %v3238
        %v5809 = vpop.f32.mrf.mxu0
        %v5810 = vadd.f32 %v5649, %v5809
        %v5811 = vpop.f32.mrf.mxu0
        %v5812 = vpop.f32.mrf.mxu0
        %v5813 = vadd.f32 %v5652, %v5812
        %v5814 = vpop.f32.mrf.mxu0
        %5815 = vmatprep.mubr.bf16.mxu0 %v3376
        %5816 = vmatmul.mubr.bf16.gmra.mxu0 %v3367
        %v5817 = vpop.f32.mrf.mxu0
        %v5818 = vadd.f32 %v5657, %v5817
        %v5819 = vpop.f32.mrf.mxu0
        %v5820 = vpop.f32.mrf.mxu0
        %v5821 = vadd.f32 %v5660, %v5820
        %v5822 = vpop.f32.mrf.mxu0
        %5823 = vmatprep.mubr.bf16.mxu0 %v3505
        %5824 = vmatmul.mubr.bf16.gmra.mxu0 %v3496
        %v5825 = vpop.f32.mrf.mxu0
        %v5826 = vadd.f32 %v5665, %v5825
        %v5827 = vpop.f32.mrf.mxu0
        %v5828 = vpop.f32.mrf.mxu0
        %v5829 = vadd.f32 %v5668, %v5828
        %v5830 = vpop.f32.mrf.mxu0
        %5831 = vmatprep.mubr.bf16.mxu0 %v3634
        %5832 = vmatmul.mubr.bf16.gmra.mxu0 %v3625
        %v5833 = vpop.f32.mrf.mxu0
        %v5834 = vadd.f32 %v5673, %v5833
        %v5835 = vpop.f32.mrf.mxu0
        %v5836 = vpop.f32.mrf.mxu0
        %v5837 = vadd.f32 %v5676, %v5836
        %v5838 = vpop.f32.mrf.mxu0
        %5839 = vmatprep.mubr.bf16.mxu0 %v3763
        %5840 = vmatmul.mubr.bf16.gmra.mxu0 %v3754
        %v5841 = vpop.f32.mrf.mxu0
        %v5842 = vadd.f32 %v5681, %v5841
        %v5843 = vpop.f32.mrf.mxu0
        %v5844 = vpop.f32.mrf.mxu0
        %v5845 = vadd.f32 %v5684, %v5844
        %v5846 = vpop.f32.mrf.mxu0
        %5847 = vmatprep.mubr.bf16.mxu0 %v3892
        %5848 = vmatmul.mubr.bf16.gmra.mxu0 %v3883
        %v5849 = vpop.f32.mrf.mxu0
        %v5850 = vadd.f32 %v5689, %v5849
        %v5851 = vpop.f32.mrf.mxu0
        %v5852 = vpop.f32.mrf.mxu0
        %v5853 = vadd.f32 %v5692, %v5852
        %v5854 = vpop.f32.mrf.mxu0
        %5855 = vmatprep.mubr.bf16.mxu0 %v4021
        %5856 = vmatmul.mubr.bf16.gmra.mxu0 %v4012
        %v5857 = vpop.f32.mrf.mxu0
        %v5858 = vadd.f32 %v5697, %v5857
        %v5859 = vpop.f32.mrf.mxu0
        %v5860 = vpop.f32.mrf.mxu0
        %v5861 = vadd.f32 %v5700, %v5860
        %v5862 = vpop.f32.mrf.mxu0
        %5863 = vmatprep.mubr.bf16.mxu0 %v4150
        %5864 = vmatmul.mubr.bf16.gmra.mxu0 %v4141
        %v5865 = vpop.f32.mrf.mxu0
        %v5866 = vadd.f32 %v5705, %v5865
        %v5867 = vpop.f32.mrf.mxu0
        %v5868 = vpop.f32.mrf.mxu0
        %v5869 = vadd.f32 %v5708, %v5868
        %v5870 = vpop.f32.mrf.mxu0
        %5871 = vmatprep.mubr.bf16.mxu0 %v4279
        %5872 = vmatmul.mubr.bf16.gmra.mxu0 %v4270
        %v5873 = vpop.f32.mrf.mxu0
        %v5874 = vadd.f32 %v5713, %v5873
        %v5875 = vpop.f32.mrf.mxu0
        %v5876 = vpop.f32.mrf.mxu0
        %v5877 = vadd.f32 %v5716, %v5876
        %v5878 = vpop.f32.mrf.mxu0
        %5879 = vmatprep.mubr.bf16.mxu0 %v4408
        %5880 = vmatmul.mubr.bf16.gmra.mxu0 %v4399
        %v5881 = vpop.f32.mrf.mxu0
        %v5882 = vadd.f32 %v5721, %v5881
        %v5883 = vpop.f32.mrf.mxu0
        %v5884 = vpop.f32.mrf.mxu0
        %v5885 = vadd.f32 %v5724, %v5884
        %v5886 = vpop.f32.mrf.mxu0
        %5887 = vmatprep.mubr.bf16.mxu0 %v4537
        %5888 = vmatmul.mubr.bf16.gmra.mxu0 %v4528
        %v5889 = vpop.f32.mrf.mxu0
        %v5890 = vadd.f32 %v5729, %v5889
        %v5891 = vpop.f32.mrf.mxu0
        %v5892 = vpop.f32.mrf.mxu0
        %v5893 = vadd.f32 %v5732, %v5892
        %v5894 = vpop.f32.mrf.mxu0
        %5895 = vmatprep.mubr.bf16.mxu0 %v4666
        %5896 = vmatmul.mubr.bf16.gmra.mxu0 %v4657
        %v5897 = vpop.f32.mrf.mxu0
        %v5898 = vadd.f32 %v5737, %v5897
        %v5899 = vpop.f32.mrf.mxu0
        %v5900 = vpop.f32.mrf.mxu0
        %v5901 = vadd.f32 %v5740, %v5900
        %v5902 = vpop.f32.mrf.mxu0
        %5903 = vdwg.mxu0
        %5904 = vmatprep.subr.bf16.mxu0 0
        %5905 = vmatpush1.bf16.msra.mxu0 %v5187
        %5906 = vmatprep.subr.bf16.mxu0 0
        %5907 = vmatpush1.bf16.msra.mxu0 %v5186
        %5908 = vmatprep.subr.bf16.mxu0 0
        %5909 = vmatpush1.bf16.msra.mxu0 %v5185
        %5910 = vmatprep.subr.bf16.mxu0 0
        %5911 = vmatpush1.bf16.msra.mxu0 %v5184
        %5912 = vmatprep.subr.bf16.mxu0 0
        %5913 = vmatpush1.bf16.msra.mxu0 %v5183
        %5914 = vmatprep.subr.bf16.mxu0 0
        %5915 = vmatpush1.bf16.msra.mxu0 %v5182
        %5916 = vmatprep.subr.bf16.mxu0 0
        %5917 = vmatpush1.bf16.msra.mxu0 %v5181
        %5918 = vmatprep.subr.bf16.mxu0 0
        %5919 = vmatpush1.bf16.msra.mxu0 %v5180
        %5920 = vmatprep.subr.bf16.mxu0 0
        %5921 = vmatpush2.bf16.msra.mxu0 0
        %5922 = vmatprep.subr.bf16.mxu0 0
        %5923 = vmatpush2.bf16.msra.mxu0 0
        %5924 = vmatprep.subr.bf16.mxu0 0
        %5925 = vmatpush2.bf16.msra.mxu0 0
        %5926 = vmatprep.subr.bf16.mxu0 0
        %5927 = vmatpush2.bf16.msra.mxu0 0
        %5928 = vmatprep.subr.bf16.mxu0 0
        %5929 = vmatpush2.bf16.msra.mxu0 0
        %5930 = vmatprep.subr.bf16.mxu0 0
        %5931 = vmatpush2.bf16.msra.mxu0 0
        %5932 = vmatprep.subr.bf16.mxu0 0
        %5933 = vmatpush2.bf16.msra.mxu0 0
        %5934 = vmatprep.subr.bf16.mxu0 0
        %5935 = vmatpush2.bf16.msra.mxu0 0
        %5936 = vmatprep.mubr.bf16.mxu0 0
        %5937 = vmatmul.mubr.bf16.gmra.mxu0 %v2748
        %v5938 = vpop.f32.mrf.mxu0
        %v5939 = vadd.f32 %v5778, %v5938
        %v5940 = vpop.f32.mrf.mxu0
        %v5941 = vpop.f32.mrf.mxu0
        %v5942 = vadd.f32 %v5781, %v5941
        %v5943 = vpop.f32.mrf.mxu0
        %5944 = vmatprep.mubr.bf16.mxu0 0
        %5945 = vmatmul.mubr.bf16.gmra.mxu0 %v2877
        %v5946 = vpop.f32.mrf.mxu0
        %v5947 = vadd.f32 %v5786, %v5946
        %v5948 = vpop.f32.mrf.mxu0
        %v5949 = vpop.f32.mrf.mxu0
        %v5950 = vadd.f32 %v5789, %v5949
        %v5951 = vpop.f32.mrf.mxu0
        %5952 = vmatprep.mubr.bf16.mxu0 0
        %5953 = vmatmul.mubr.bf16.gmra.mxu0 %v3006
        %v5954 = vpop.f32.mrf.mxu0
        %v5955 = vadd.f32 %v5794, %v5954
        %v5956 = vpop.f32.mrf.mxu0
        %v5957 = vpop.f32.mrf.mxu0
        %v5958 = vadd.f32 %v5797, %v5957
        %v5959 = vpop.f32.mrf.mxu0
        %5960 = vmatprep.mubr.bf16.mxu0 0
        %5961 = vmatmul.mubr.bf16.gmra.mxu0 %v3135
        %v5962 = vpop.f32.mrf.mxu0
        %v5963 = vadd.f32 %v5802, %v5962
        %v5964 = vpop.f32.mrf.mxu0
        %v5965 = vpop.f32.mrf.mxu0
        %v5966 = vadd.f32 %v5805, %v5965
        %v5967 = vpop.f32.mrf.mxu0
        %5968 = vmatprep.mubr.bf16.mxu0 0
        %5969 = vmatmul.mubr.bf16.gmra.mxu0 %v3264
        %v5970 = vpop.f32.mrf.mxu0
        %v5971 = vadd.f32 %v5810, %v5970
        %v5972 = vpop.f32.mrf.mxu0
        %v5973 = vpop.f32.mrf.mxu0
        %v5974 = vadd.f32 %v5813, %v5973
        %v5975 = vpop.f32.mrf.mxu0
        %5976 = vmatprep.mubr.bf16.mxu0 0
        %5977 = vmatmul.mubr.bf16.gmra.mxu0 %v3393
        %v5978 = vpop.f32.mrf.mxu0
        %v5979 = vadd.f32 %v5818, %v5978
        %v5980 = vpop.f32.mrf.mxu0
        %v5981 = vpop.f32.mrf.mxu0
        %v5982 = vadd.f32 %v5821, %v5981
        %v5983 = vpop.f32.mrf.mxu0
        %5984 = vmatprep.mubr.bf16.mxu0 0
        %5985 = vmatmul.mubr.bf16.gmra.mxu0 %v3522
        %v5986 = vpop.f32.mrf.mxu0
        %v5987 = vadd.f32 %v5826, %v5986
        %v5988 = vpop.f32.mrf.mxu0
        %v5989 = vpop.f32.mrf.mxu0
        %v5990 = vadd.f32 %v5829, %v5989
        %v5991 = vpop.f32.mrf.mxu0
        %5992 = vmatprep.mubr.bf16.mxu0 0
        %5993 = vmatmul.mubr.bf16.gmra.mxu0 %v3651
        %v5994 = vpop.f32.mrf.mxu0
        %v5995 = vadd.f32 %v5834, %v5994
        %v5996 = vpop.f32.mrf.mxu0
        %v5997 = vpop.f32.mrf.mxu0
        %v5998 = vadd.f32 %v5837, %v5997
        %v5999 = vpop.f32.mrf.mxu0
        %6000 = vmatprep.mubr.bf16.mxu0 0
        %6001 = vmatmul.mubr.bf16.gmra.mxu0 %v3780
        %v6002 = vpop.f32.mrf.mxu0
        %v6003 = vadd.f32 %v5842, %v6002
        %v6004 = vpop.f32.mrf.mxu0
        %v6005 = vpop.f32.mrf.mxu0
        %v6006 = vadd.f32 %v5845, %v6005
        %v6007 = vpop.f32.mrf.mxu0
        %6008 = vmatprep.mubr.bf16.mxu0 0
        %6009 = vmatmul.mubr.bf16.gmra.mxu0 %v3909
        %v6010 = vpop.f32.mrf.mxu0
        %v6011 = vadd.f32 %v5850, %v6010
        %v6012 = vpop.f32.mrf.mxu0
        %v6013 = vpop.f32.mrf.mxu0
        %v6014 = vadd.f32 %v5853, %v6013
        %v6015 = vpop.f32.mrf.mxu0
        %6016 = vmatprep.mubr.bf16.mxu0 0
        %6017 = vmatmul.mubr.bf16.gmra.mxu0 %v4038
        %v6018 = vpop.f32.mrf.mxu0
        %v6019 = vadd.f32 %v5858, %v6018
        %v6020 = vpop.f32.mrf.mxu0
        %v6021 = vpop.f32.mrf.mxu0
        %v6022 = vadd.f32 %v5861, %v6021
        %v6023 = vpop.f32.mrf.mxu0
        %6024 = vmatprep.mubr.bf16.mxu0 0
        %6025 = vmatmul.mubr.bf16.gmra.mxu0 %v4167
        %v6026 = vpop.f32.mrf.mxu0
        %v6027 = vadd.f32 %v5866, %v6026
        %v6028 = vpop.f32.mrf.mxu0
        %v6029 = vpop.f32.mrf.mxu0
        %v6030 = vadd.f32 %v5869, %v6029
        %v6031 = vpop.f32.mrf.mxu0
        %6032 = vmatprep.mubr.bf16.mxu0 0
        %6033 = vmatmul.mubr.bf16.gmra.mxu0 %v4296
        %v6034 = vpop.f32.mrf.mxu0
        %v6035 = vadd.f32 %v5874, %v6034
        %v6036 = vpop.f32.mrf.mxu0
        %v6037 = vpop.f32.mrf.mxu0
        %v6038 = vadd.f32 %v5877, %v6037
        %v6039 = vpop.f32.mrf.mxu0
        %6040 = vmatprep.mubr.bf16.mxu0 0
        %6041 = vmatmul.mubr.bf16.gmra.mxu0 %v4425
        %v6042 = vpop.f32.mrf.mxu0
        %v6043 = vadd.f32 %v5882, %v6042
        %v6044 = vpop.f32.mrf.mxu0
        %v6045 = vpop.f32.mrf.mxu0
        %v6046 = vadd.f32 %v5885, %v6045
        %v6047 = vpop.f32.mrf.mxu0
        %6048 = vmatprep.mubr.bf16.mxu0 0
        %6049 = vmatmul.mubr.bf16.gmra.mxu0 %v4554
        %v6050 = vpop.f32.mrf.mxu0
        %v6051 = vadd.f32 %v5890, %v6050
        %v6052 = vpop.f32.mrf.mxu0
        %v6053 = vpop.f32.mrf.mxu0
        %v6054 = vadd.f32 %v5893, %v6053
        %v6055 = vpop.f32.mrf.mxu0
        %6056 = vmatprep.mubr.bf16.mxu0 0
        %6057 = vmatmul.mubr.bf16.gmra.mxu0 %v4683
        %v6058 = vpop.f32.mrf.mxu0
        %v6059 = vadd.f32 %v5898, %v6058
        %v6060 = vpop.f32.mrf.mxu0
        %v6061 = vpop.f32.mrf.mxu0
        %v6062 = vadd.f32 %v5901, %v6061
        %v6063 = vpop.f32.mrf.mxu0
        %6064 = vdwg.mxu0
        %v6065 = vld [vmem:[%s5] sm:$0x1]
        %v6067 = vlaneseq
        %v6068 = vshrl.u32 %v6067, 7
        %v6069 = vsub.s32 0, %v6068
        %v6070 = vrot.slane %v6065, %v6069
        %v6072 = vmul.f32 %v5939, %v6070
        %v6073 = vmul.f32 %v5942, %v6070
        %v6074 = vmul.f32 %v5947, %v6070
        %v6075 = vmul.f32 %v5950, %v6070
        %v6076 = vmul.f32 %v5955, %v6070
        %v6077 = vmul.f32 %v5958, %v6070
        %v6078 = vmul.f32 %v5963, %v6070
        %v6079 = vmul.f32 %v5966, %v6070
        %v6080 = vmul.f32 %v5971, %v6070
        %v6081 = vmul.f32 %v5974, %v6070
        %v6082 = vmul.f32 %v5979, %v6070
        %v6083 = vmul.f32 %v5982, %v6070
        %v6084 = vmul.f32 %v5987, %v6070
        %v6085 = vmul.f32 %v5990, %v6070
        %v6086 = vmul.f32 %v5995, %v6070
        %v6087 = vmul.f32 %v5998, %v6070
        %v6088 = vmul.f32 %v6003, %v6070
        %v6089 = vmul.f32 %v6006, %v6070
        %v6090 = vmul.f32 %v6011, %v6070
        %v6091 = vmul.f32 %v6014, %v6070
        %v6092 = vmul.f32 %v6019, %v6070
        %v6093 = vmul.f32 %v6022, %v6070
        %v6094 = vmul.f32 %v6027, %v6070
        %v6095 = vmul.f32 %v6030, %v6070
        %v6096 = vmul.f32 %v6035, %v6070
        %v6097 = vmul.f32 %v6038, %v6070
        %v6098 = vmul.f32 %v6043, %v6070
        %v6099 = vmul.f32 %v6046, %v6070
        %v6100 = vmul.f32 %v6051, %v6070
        %v6101 = vmul.f32 %v6054, %v6070
        %v6102 = vmul.f32 %v6059, %v6070
        %v6103 = vmul.f32 %v6062, %v6070
        %v6104 = vld [vmem:[%s6] sm:$0x1]
        %v6106 = vlaneseq
        %v6107 = vshrl.u32 %v6106, 7
        %v6108 = vsub.s32 0, %v6107
        %v6109 = vrot.slane %v6104, %v6108
        %v6111 = vadd.f32 %v6072, %v6109
        %v6112 = vadd.f32 %v6073, %v6109
        %v6113 = vadd.f32 %v6074, %v6109
        %v6114 = vadd.f32 %v6075, %v6109
        %v6115 = vadd.f32 %v6076, %v6109
        %v6116 = vadd.f32 %v6077, %v6109
        %v6117 = vadd.f32 %v6078, %v6109
        %v6118 = vadd.f32 %v6079, %v6109
        %v6119 = vadd.f32 %v6080, %v6109
        %v6120 = vadd.f32 %v6081, %v6109
        %v6121 = vadd.f32 %v6082, %v6109
        %v6122 = vadd.f32 %v6083, %v6109
        %v6123 = vadd.f32 %v6084, %v6109
        %v6124 = vadd.f32 %v6085, %v6109
        %v6125 = vadd.f32 %v6086, %v6109
        %v6126 = vadd.f32 %v6087, %v6109
        %v6127 = vadd.f32 %v6088, %v6109
        %v6128 = vadd.f32 %v6089, %v6109
        %v6129 = vadd.f32 %v6090, %v6109
        %v6130 = vadd.f32 %v6091, %v6109
        %v6131 = vadd.f32 %v6092, %v6109
        %v6132 = vadd.f32 %v6093, %v6109
        %v6133 = vadd.f32 %v6094, %v6109
        %v6134 = vadd.f32 %v6095, %v6109
        %v6135 = vadd.f32 %v6096, %v6109
        %v6136 = vadd.f32 %v6097, %v6109
        %v6137 = vadd.f32 %v6098, %v6109
        %v6138 = vadd.f32 %v6099, %v6109
        %v6139 = vadd.f32 %v6100, %v6109
        %v6140 = vadd.f32 %v6101, %v6109
        %v6141 = vadd.f32 %v6102, %v6109
        %v6142 = vadd.f32 %v6103, %v6109
        %v6143 = vmax.f32 %v6111, 0.0
        %v6144 = vmax.f32 %v6112, 0.0
        %v6145 = vmax.f32 %v6113, 0.0
        %v6146 = vmax.f32 %v6114, 0.0
        %v6147 = vmax.f32 %v6115, 0.0
        %v6148 = vmax.f32 %v6116, 0.0
        %v6149 = vmax.f32 %v6117, 0.0
        %v6150 = vmax.f32 %v6118, 0.0
        %v6151 = vmax.f32 %v6119, 0.0
        %v6152 = vmax.f32 %v6120, 0.0
        %v6153 = vmax.f32 %v6121, 0.0
        %v6154 = vmax.f32 %v6122, 0.0
        %v6155 = vmax.f32 %v6123, 0.0
        %v6156 = vmax.f32 %v6124, 0.0
        %v6157 = vmax.f32 %v6125, 0.0
        %v6158 = vmax.f32 %v6126, 0.0
        %v6159 = vmax.f32 %v6127, 0.0
        %v6160 = vmax.f32 %v6128, 0.0
        %v6161 = vmax.f32 %v6129, 0.0
        %v6162 = vmax.f32 %v6130, 0.0
        %v6163 = vmax.f32 %v6131, 0.0
        %v6164 = vmax.f32 %v6132, 0.0
        %v6165 = vmax.f32 %v6133, 0.0
        %v6166 = vmax.f32 %v6134, 0.0
        %v6167 = vmax.f32 %v6135, 0.0
        %v6168 = vmax.f32 %v6136, 0.0
        %v6169 = vmax.f32 %v6137, 0.0
        %v6170 = vmax.f32 %v6138, 0.0
        %v6171 = vmax.f32 %v6139, 0.0
        %v6172 = vmax.f32 %v6140, 0.0
        %v6173 = vmax.f32 %v6141, 0.0
        %v6174 = vmax.f32 %v6142, 0.0
        %v6175 = vpack.c.bf16 %v6144, %v6143
        %v6176 = vpack.c.bf16 %v6146, %v6145
        %v6177 = vpack.c.bf16 %v6148, %v6147
        %v6178 = vpack.c.bf16 %v6150, %v6149
        %v6179 = vpack.c.bf16 %v6152, %v6151
        %v6180 = vpack.c.bf16 %v6154, %v6153
        %v6181 = vpack.c.bf16 %v6156, %v6155
        %v6182 = vpack.c.bf16 %v6158, %v6157
        %v6183 = vpack.c.bf16 %v6160, %v6159
        %v6184 = vpack.c.bf16 %v6162, %v6161
        %v6185 = vpack.c.bf16 %v6164, %v6163
        %v6186 = vpack.c.bf16 %v6166, %v6165
        %v6187 = vpack.c.bf16 %v6168, %v6167
        %v6188 = vpack.c.bf16 %v6170, %v6169
        %v6189 = vpack.c.bf16 %v6172, %v6171
        %v6190 = vpack.c.bf16 %v6174, %v6173
        %v6207 = vunpack.c.l.b16 %v6175
        %v6208 = vunpack.c.h.b16 %v6175
        %v6209 = vunpack.c.l.b16 %v6176
        %v6210 = vunpack.c.h.b16 %v6176
        %v6211 = vunpack.c.l.b16 %v6177
        %v6212 = vunpack.c.h.b16 %v6177
        %v6213 = vunpack.c.l.b16 %v6178
        %v6214 = vunpack.c.h.b16 %v6178
        %v6215 = vunpack.c.l.b16 %v6179
        %v6216 = vunpack.c.h.b16 %v6179
        %v6217 = vunpack.c.l.b16 %v6180
        %v6218 = vunpack.c.h.b16 %v6180
        %v6219 = vunpack.c.l.b16 %v6181
        %v6220 = vunpack.c.h.b16 %v6181
        %v6221 = vunpack.c.l.b16 %v6182
        %v6222 = vunpack.c.h.b16 %v6182
        %v6223 = vunpack.c.l.b16 %v6183
        %v6224 = vunpack.c.h.b16 %v6183
        %v6225 = vunpack.c.l.b16 %v6184
        %v6226 = vunpack.c.h.b16 %v6184
        %v6227 = vunpack.c.l.b16 %v6185
        %v6228 = vunpack.c.h.b16 %v6185
        %v6229 = vunpack.c.l.b16 %v6186
        %v6230 = vunpack.c.h.b16 %v6186
        %v6231 = vunpack.c.l.b16 %v6187
        %v6232 = vunpack.c.h.b16 %v6187
        %v6233 = vunpack.c.l.b16 %v6188
        %v6234 = vunpack.c.h.b16 %v6188
        %v6235 = vunpack.c.l.b16 %v6189
        %v6236 = vunpack.c.h.b16 %v6189
        %v6237 = vunpack.c.l.b16 %v6190
        %v6238 = vunpack.c.h.b16 %v6190
        %v6239 = vpack.c.b16 %v6207, %v6207
        %v6240 = vpack.c.b16 %v6208, %v6208
        %v6241 = vpack.c.b16 %v6209, %v6209
        %v6242 = vpack.c.b16 %v6210, %v6210
        %v6243 = vpack.c.b16 %v6211, %v6211
        %v6244 = vpack.c.b16 %v6212, %v6212
        %v6245 = vpack.c.b16 %v6213, %v6213
        %v6246 = vpack.c.b16 %v6214, %v6214
        %v6247 = vpack.c.b16 %v6215, %v6215
        %v6248 = vpack.c.b16 %v6216, %v6216
        %v6249 = vpack.c.b16 %v6217, %v6217
        %v6250 = vpack.c.b16 %v6218, %v6218
        %v6251 = vpack.c.b16 %v6219, %v6219
        %v6252 = vpack.c.b16 %v6220, %v6220
        %v6253 = vpack.c.b16 %v6221, %v6221
        %v6254 = vpack.c.b16 %v6222, %v6222
        %v6255 = vpack.c.b16 %v6223, %v6223
        %v6256 = vpack.c.b16 %v6224, %v6224
        %v6257 = vpack.c.b16 %v6225, %v6225
        %v6258 = vpack.c.b16 %v6226, %v6226
        %v6259 = vpack.c.b16 %v6227, %v6227
        %v6260 = vpack.c.b16 %v6228, %v6228
        %v6261 = vpack.c.b16 %v6229, %v6229
        %v6262 = vpack.c.b16 %v6230, %v6230
        %v6263 = vpack.c.b16 %v6231, %v6231
        %v6264 = vpack.c.b16 %v6232, %v6232
        %v6265 = vpack.c.b16 %v6233, %v6233
        %v6266 = vpack.c.b16 %v6234, %v6234
        %v6267 = vpack.c.b16 %v6235, %v6235
        %v6268 = vpack.c.b16 %v6236, %v6236
        %v6269 = vpack.c.b16 %v6237, %v6237
        %v6270 = vpack.c.b16 %v6238, %v6238
        %6303 = vst [vmem:[%s274] sm:$0xf] %v6239
        %6304 = vst [vmem:[%s274 + $0x4] sm:$0xf] %v6240
        %6305 = vst [vmem:[%s274 + $0x8] sm:$0xf] %v6241
        %6306 = vst [vmem:[%s274 + $0xc] sm:$0xf] %v6242
        %6307 = vst [vmem:[%s274 + $0x10] sm:$0xf] %v6243
        %6308 = vst [vmem:[%s274 + $0x14] sm:$0xf] %v6244
        %6309 = vst [vmem:[%s274 + $0x18] sm:$0xf] %v6245
        %6310 = vst [vmem:[%s274 + $0x1c] sm:$0xf] %v6246
        %6311 = vst [vmem:[%s274 + $0x20] sm:$0xf] %v6247
        %6312 = vst [vmem:[%s274 + $0x24] sm:$0xf] %v6248
        %6313 = vst [vmem:[%s274 + $0x28] sm:$0xf] %v6249
        %6314 = vst [vmem:[%s274 + $0x2c] sm:$0xf] %v6250
        %6315 = vst [vmem:[%s274 + $0x30] sm:$0xf] %v6251
        %6316 = vst [vmem:[%s274 + $0x34] sm:$0xf] %v6252
        %6317 = vst [vmem:[%s274 + $0x38] sm:$0xf] %v6253
        %6318 = vst [vmem:[%s274 + $0x3c] sm:$0xf] %v6254
        %6319 = vst [vmem:[%s274 + $0x40] sm:$0xf] %v6255
        %6320 = vst [vmem:[%s274 + $0x44] sm:$0xf] %v6256
        %6321 = vst [vmem:[%s274 + $0x48] sm:$0xf] %v6257
        %6322 = vst [vmem:[%s274 + $0x4c] sm:$0xf] %v6258
        %6323 = vst [vmem:[%s274 + $0x50] sm:$0xf] %v6259
        %6324 = vst [vmem:[%s274 + $0x54] sm:$0xf] %v6260
        %6325 = vst [vmem:[%s274 + $0x58] sm:$0xf] %v6261
        %6326 = vst [vmem:[%s274 + $0x5c] sm:$0xf] %v6262
        %6327 = vst [vmem:[%s274 + $0x60] sm:$0xf] %v6263
        %6328 = vst [vmem:[%s274 + $0x64] sm:$0xf] %v6264
        %6329 = vst [vmem:[%s274 + $0x68] sm:$0xf] %v6265
        %6330 = vst [vmem:[%s274 + $0x6c] sm:$0xf] %v6266
        %6331 = vst [vmem:[%s274 + $0x70] sm:$0xf] %v6267
        %6332 = vst [vmem:[%s274 + $0x74] sm:$0xf] %v6268
        %6333 = vst [vmem:[%s274 + $0x78] sm:$0xf] %v6269
        %6334 = vst [vmem:[%s274 + $0x7c] sm:$0xf] %v6270
        %s6335 = sand.u32 %s171, 1
        %s6336 = scalar_lea.sflag [#allocation7], %s6335
        %s6337 = sand.u32 %s171, 1
        %s6338 = smul.addr %s6337, 128
        %s6339 = scalar_lea.vmem [#allocation10], %s6338
        // Predicated region
        $region85: #{tpu_custom_call.1} parent=43 // pred_check
          %p6340 = pneg %p181
        $region86: #{tpu_custom_call.1} parent=43 // pred_check_branch
          %6342 = sbr.rel (%p6340) target = $region88
        $region87: #{tpu_custom_call.1} parent=43 // pred_region
          %s6343 = smul.u32 16, %s28
          %s6345 = ssub.s32 2048, 2048
          %6346 = vsyncadd %s6336, %s6345
          %s6347 = smul.addr %s6343, 2
          %s6348 = smul.addr %s27, 32
          %s6349 = sadd.s32 %s6347, %s6348
          %s6350 = smul.addr %s6349, 64
          %s6351 = scalar_lea.hbm %s7, %s6350
          %s6352 = sshll.u32 %s6339, 4
          %s6353 = int_to_ptr.vmem [resolvable:$true] %s6352
          %6358 = dma.vmem_to_hbm [thread:$0]  %s6353, 2048, %s6351, %s6336, 64, 64, 4
        $region88: #{tpu_custom_call.1} parent=43 // pred_fallthru
          _
      $region44: #{tpu_custom_call.1} parent=5 // pred_fallthru
        _
      %p6359 = scmp.le.s32.totalorder 2, %s18
      // Predicated region
      $region89: #{tpu_custom_call.1} parent=5 // pred_check
        %p6360 = pneg %p6359
      $region90: #{tpu_custom_call.1} parent=5 // pred_check_branch
        %6362 = sbr.rel (%p6360) target = $region92
      $region91: #{tpu_custom_call.1} parent=5 // pred_region
        %s6363 = ssub.s32 %s18, 2
        // Predicated region
        $region93: #{tpu_custom_call.1} parent=91 // pred_check
          %p6364 = pneg %p187
        $region94: #{tpu_custom_call.1} parent=91 // pred_check_branch
          %6366 = sbr.rel (%p6364) target = $region96
        $region95: #{tpu_custom_call.1} parent=91 // pred_region
          %s6367 = sand.u32 %s172, 1
          %s6368 = scalar_lea.sflag [#allocation7], %s6367
          %s6369 = sand.u32 %s172, 1
          %s6370 = smul.addr %s6369, 128
          %s6371 = scalar_lea.vmem [#allocation10], %s6370
          %6372 = dma.done %s6368, 2048
        $region96: #{tpu_custom_call.1} parent=91 // pred_fallthru
          _
      $region92: #{tpu_custom_call.1} parent=5 // pred_fallthru
        _
    $region6: #{tpu_custom_call.1} parent=1 // loop_footer
      %s22 = sadd.s32 1, %s18
    $region7: #{tpu_custom_call.1} parent=1 // loop_footer_branch
      %17 = sbr.rel target = $region3
    $region8: #{tpu_custom_call.1} parent=1 // loop_exit
      _
    %6373 = vsyncpa [#allocation6], 1
    %s6374 = scalar_lea.sflag [#allocation6], 1
    %6375 = vsyncpa %s6374, 1
    %6376 = vsyncpa [#allocation9], 1
    %6377 = vsyncpa [#allocation7], 1
    %s6378 = scalar_lea.sflag [#allocation7], 1
    %6379 = vsyncpa %s6378, 1
  %6380 = vsyncmov [#allocation4]
  %s6381 = vpop.sfrf %6380
  %p6382 = scmp.eq.s32.totalorder %s6381, 0
  %p6383 = pneg %p6382
  %6385 = shalt.err (%p6383)
  %s6386 = scalar_lea.sflag [#allocation4], 1
  %6387 = vsyncmov %s6386
  %s6388 = vpop.sfrf %6387
  %p6389 = scmp.eq.s32.totalorder %s6388, 0
  %p6390 = pneg %p6389
  %6392 = shalt.err (%p6390)
  %s6393 = scalar_lea.sflag [#allocation4], 2
  %6394 = vsyncmov %s6393
  %s6395 = vpop.sfrf %6394
  %p6396 = scmp.eq.s32.totalorder %s6395, 0
  %p6397 = pneg %p6396
  %6399 = shalt.err (%p6397)
  %s6400 = scalar_lea.sflag [#allocation4], 3
  %6401 = vsyncmov %s6400
  %s6402 = vpop.sfrf %6401
  %p6403 = scmp.eq.s32.totalorder %s6402, 0
  %p6404 = pneg %p6403
  %6406 = shalt.err (%p6404)
  %s6407 = scalar_lea.sflag [#allocation4], 4
  %6408 = vsyncmov %s6407
  %s6409 = vpop.sfrf %6408
  %p6410 = scmp.eq.s32.totalorder %s6409, 0
  %p6411 = pneg %p6410
  %6413 = shalt.err (%p6411)

// kernel: tpu_custom_call.1
$region0: #{tpu_custom_call.1}
  #allocation0 [shape = 'u32[]', space=smem, size = 0x4, offset = 0x4, fixed_abs, tag = 'smem constant byte address 0x4 - core index']
  #allocation1 [shape = 'u32[144,128]{1,0:T(1,128)}', space=vmem, size = 0x12000, scoped, tag = 'internal scratch']
  #allocation2 [shape = 'bf16[18,16,128]{2,1,0:T(8,128)(2,1)}', space=vmem, size = 0x12000, scoped, tag = 'scratch operand']
  #allocation3 [shape = 'bf16[18,33,128]{2,1,0:T(8,128)(2,1)}', space=vmem, size = 0x2d000, scoped, tag = 'scratch operand']
  #allocation4 [shape = 's32[5]{0}', space=sflag, size = 0x14, scoped, tag = 'scratch operand']
  #allocation11 [shape = 's32[]', space=sflag, size = 0x4, offset = 0, fixed_abs, tag = 'sflag constant byte address 0x0 - dummy sync flag']
  #allocation12 [shape = 's32[]', space=sflag, size = 0x4, offset = 0, fixed_abs, tag = 'sflag constant byte address 0x0 - dummy sync flag']
  #allocation13 [shape = 'u32[]', space=smem, size = 0x4, offset = 0x44, fixed_abs, tag = 'smem constant byte address 0x44 - assertion arg 0']
  #allocation14 [shape = 'u32[]', space=smem, size = 0x4, offset = 0x48, fixed_abs, tag = 'smem constant byte address 0x48 - assertion arg 1']
  #allocation15 [shape = 's32[]', space=sflag, size = 0x4, offset = 0, fixed_abs, tag = 'sflag constant byte address 0x0 - dummy sync flag']
  #allocation16 [shape = 's32[]', space=sflag, size = 0x4, offset = 0, fixed_abs, tag = 'sflag constant byte address 0x0 - dummy sync flag']
  #allocation17 [shape = 's32[]', space=sflag, size = 0x4, offset = 0, fixed_abs, tag = 'sflag constant byte address 0x0 - dummy sync flag']
  #allocation18 [shape = 's32[]', space=sflag, size = 0x4, offset = 0, fixed_abs, tag = 'sflag constant byte address 0x0 - dummy sync flag']
  %s0 = inlined_call_operand.hbm [shape: bf16[2,16,16,128], index: 0, kind: input, shape index: {}]
  %s1 = inlined_call_operand.hbm [shape: bf16[128,128], index: 1, kind: input, shape index: {}]
  %s2 = inlined_call_operand.vmem [shape: f32[1,128], index: 2, kind: input, shape index: {}]
  %s3 = inlined_call_operand.vmem [shape: f32[1,128], index: 3, kind: input, shape index: {}]
  %s4 = inlined_call_operand.hbm [shape: bf16[1152,128], index: 4, kind: input, shape index: {}]
  %s5 = inlined_call_operand.vmem [shape: f32[1,128], index: 5, kind: input, shape index: {}]
  %s6 = inlined_call_operand.vmem [shape: f32[1,128], index: 6, kind: input, shape index: {}]
  %s7 = inlined_call_operand.hbm [shape: bf16[2,16,16,128], index: 7, kind: output, shape index: {}]
  %s8 = sld [smem:[#allocation0]]
  $region97: #{tpu_custom_call.1} parent=0
    _
  %s10 = ssub.s32 1, %s8
  %s11 = scalar_select 0, %s10, %s8
  $region1: #{tpu_custom_call.1} parent=0
    #allocation5 [shape = 'u8[32768]{0}', space=vmem, size = 0x8000, scoped, tag = 'input window, operand 1, single buffered']
    #allocation6 [shape = 's32[2]{0}', space=sflag, size = 0x8, scoped, tag = 'scoped memory for tpu_custom_call.1']
    #allocation7 [shape = 's32[2]{0}', space=sflag, size = 0x8, scoped, tag = 'scoped memory for tpu_custom_call.1']
    #allocation8 [shape = 'u8[294912]{0}', space=vmem, size = 0x48000, scoped, tag = 'input window, operand 4, single buffered']
    #allocation9 [shape = 's32[1]{0}', space=sflag, size = 0x4, scoped, tag = 'scoped memory for tpu_custom_call.1']
    #allocation10 [shape = 'u8[131072]{0}', space=vmem, size = 0x20000, scoped, tag = 'output window, operand 0']
    %12 = vsyncpa [#allocation6], 0
    %13 = vsyncpa [#allocation9], 0
    %14 = vsyncpa [#allocation7], 0
    %s15 = scalar_lea.sflag [#allocation7], 1
    %16 = vsyncpa %s15, 0
    loop: start=0, step=1, limit=4
    $region2: #{tpu_custom_call.1} parent=1 // loop_pre_header
      _
    $region3: #{tpu_custom_call.1} parent=1 // loop_header
      %s18 = sphi 0, %s22
      %p19 = scmp.ge.s32.totalorder %s18, 4
      %s25 = sphi 0, %s37
      %s26 = sphi 0, %s33
      %s27 = sphi 0, %s25
      %s28 = sphi 0, %s26
      %s29 = sphi 0, %s27
      %s30 = sphi 0, %s28
      %s38 = sphi 0, %s38
      %s40 = sphi 0, %s38
      %s41 = sphi 0, %s40
      %s55 = sphi 0, %s41
      %s59 = sphi 0, %s59
      %s61 = sphi 0, %s59
      %s62 = sphi 0, %s61
      %s76 = sphi 0, %s62
      %s80 = sphi 0, %s80
      %s82 = sphi 0, %s80
      %s83 = sphi 0, %s82
      %s97 = sphi 0, %s83
      %s101 = sphi 0, %s101
      %s103 = sphi 0, %s101
      %s104 = sphi 0, %s103
      %s118 = sphi 0, %s104
      %s122 = sphi 0, %s122
      %s124 = sphi 0, %s122
      %s125 = sphi 0, %s124
      %s139 = sphi 0, %s125
      %s143 = sphi 0, %s143
      %s145 = sphi 0, %s143
      %s146 = sphi 0, %s145
      %s160 = sphi 0, %s146
      %s168 = sphi 0, %s170
      %s171 = sphi 0, %s168
      %s172 = sphi 0, %s171
      %s188 = sphi 0, %s172
    $region4: #{tpu_custom_call.1} parent=1 // loop_header_branch
      %21 = sbr.rel (%p19) target = $region8
    $region5: #{tpu_custom_call.1} parent=1 // loop_body
      %s23 = ssub.s32 %s18, 1
      %s24 = ssub.s32 %s18, 2
      %s31 = sadd.s32 1, %s26
      %p32 = scmp.ge.s32.totalorder %s31, 1
      %s33 = scalar_select %p32, 0, %s31
      %s34 = sadd.s32 1, %s25
      %s35 = scalar_select %p32, %s34, %s25
      %p36 = scmp.ge.s32.totalorder %s35, 2
      %s37 = scalar_select %p36, 0, %s35
      %s39 = sadd.s32 %s38, 1
      %p42 = scmp.eq.s32.totalorder %s18, 1
      %p43 = scmp.ne.s32.totalorder %s38, %s40
      %p44 = scmp.eq.s32.totalorder %s18, 0
      %p45 = por %p43, %p44
      %p46 = scmp.ne.s32.totalorder %s38, %s40
      %p47 = scmp.eq.s32.totalorder %s23, 1
      %p48 = por %p46, %p47
      %p49 = scmp.ne.s32.totalorder %s40, %s41
      %p50 = scmp.eq.s32.totalorder %s23, 0
      %p51 = por %p49, %p50
      %p52 = scmp.ne.s32.totalorder %s40, %s41
      %p53 = scmp.eq.s32.totalorder %s24, 1
      %p54 = por %p52, %p53
      %p56 = scmp.ne.s32.totalorder %s41, %s55
      %p57 = scmp.eq.s32.totalorder %s24, 0
      %p58 = por %p56, %p57
      %s60 = sadd.s32 %s59, 1
      %p63 = scmp.eq.s32.totalorder %s18, 1
      %p64 = scmp.ne.s32.totalorder %s59, %s61
      %p65 = scmp.eq.s32.totalorder %s18, 0
      %p66 = por %p64, %p65
      %p67 = scmp.ne.s32.totalorder %s59, %s61
      %p68 = scmp.eq.s32.totalorder %s23, 1
      %p69 = por %p67, %p68
      %p70 = scmp.ne.s32.totalorder %s61, %s62
      %p71 = scmp.eq.s32.totalorder %s23, 0
      %p72 = por %p70, %p71
      %p73 = scmp.ne.s32.totalorder %s61, %s62
      %p74 = scmp.eq.s32.totalorder %s24, 1
      %p75 = por %p73, %p74
      %p77 = scmp.ne.s32.totalorder %s62, %s76
      %p78 = scmp.eq.s32.totalorder %s24, 0
      %p79 = por %p77, %p78
      %s81 = sadd.s32 %s80, 1
      %p84 = scmp.eq.s32.totalorder %s18, 1
      %p85 = scmp.ne.s32.totalorder %s80, %s82
      %p86 = scmp.eq.s32.totalorder %s18, 0
      %p87 = por %p85, %p86
      %p88 = scmp.ne.s32.totalorder %s80, %s82
      %p89 = scmp.eq.s32.totalorder %s23, 1
      %p90 = por %p88, %p89
      %p91 = scmp.ne.s32.totalorder %s82, %s83
      %p92 = scmp.eq.s32.totalorder %s23, 0
      %p93 = por %p91, %p92
      %p94 = scmp.ne.s32.totalorder %s82, %s83
      %p95 = scmp.eq.s32.totalorder %s24, 1
      %p96 = por %p94, %p95
      %p98 = scmp.ne.s32.totalorder %s83, %s97
      %p99 = scmp.eq.s32.totalorder %s24, 0
      %p100 = por %p98, %p99
      %s102 = sadd.s32 %s101, 1
      %p105 = scmp.eq.s32.totalorder %s18, 1
      %p106 = scmp.ne.s32.totalorder %s101, %s103
      %p107 = scmp.eq.s32.totalorder %s18, 0
      %p108 = por %p106, %p107
      %p109 = scmp.ne.s32.totalorder %s101, %s103
      %p110 = scmp.eq.s32.totalorder %s23, 1
      %p111 = por %p109, %p110
      %p112 = scmp.ne.s32.totalorder %s103, %s104
      %p113 = scmp.eq.s32.totalorder %s23, 0
      %p114 = por %p112, %p113
      %p115 = scmp.ne.s32.totalorder %s103, %s104
      %p116 = scmp.eq.s32.totalorder %s24, 1
      %p117 = por %p115, %p116
      %p119 = scmp.ne.s32.totalorder %s104, %s118
      %p120 = scmp.eq.s32.totalorder %s24, 0
      %p121 = por %p119, %p120
      %s123 = sadd.s32 %s122, 1
      %p126 = scmp.eq.s32.totalorder %s18, 1
      %p127 = scmp.ne.s32.totalorder %s122, %s124
      %p128 = scmp.eq.s32.totalorder %s18, 0
      %p129 = por %p127, %p128
      %p130 = scmp.ne.s32.totalorder %s122, %s124
      %p131 = scmp.eq.s32.totalorder %s23, 1
      %p132 = por %p130, %p131
      %p133 = scmp.ne.s32.totalorder %s124, %s125
      %p134 = scmp.eq.s32.totalorder %s23, 0
      %p135 = por %p133, %p134
      %p136 = scmp.ne.s32.totalorder %s124, %s125
      %p137 = scmp.eq.s32.totalorder %s24, 1
      %p138 = por %p136, %p137
      %p140 = scmp.ne.s32.totalorder %s125, %s139
      %p141 = scmp.eq.s32.totalorder %s24, 0
      %p142 = por %p140, %p141
      %s144 = sadd.s32 %s143, 1
      %p147 = scmp.eq.s32.totalorder %s18, 1
      %p148 = scmp.ne.s32.totalorder %s143, %s145
      %p149 = scmp.eq.s32.totalorder %s18, 0
      %p150 = por %p148, %p149
      %p151 = scmp.ne.s32.totalorder %s143, %s145
      %p152 = scmp.eq.s32.totalorder %s23, 1
      %p153 = por %p151, %p152
      %p154 = scmp.ne.s32.totalorder %s145, %s146
      %p155 = scmp.eq.s32.totalorder %s23, 0
      %p156 = por %p154, %p155
      %p157 = scmp.ne.s32.totalorder %s145, %s146
      %p158 = scmp.eq.s32.totalorder %s24, 1
      %p159 = por %p157, %p158
      %p161 = scmp.ne.s32.totalorder %s146, %s160
      %p162 = scmp.eq.s32.totalorder %s24, 0
      %p163 = por %p161, %p162
      %s164 = ssub.s32 %s25, %s37
      %s165 = ssub.s32 %s26, %s33
      %s166 = sor.u32 %s164, %s165
      %p167 = scmp.eq.s32.totalorder %s166, 0
      %s169 = sadd.s32 %s168, 1
      %s170 = scalar_select %p167, %s168, %s169
      %p173 = pneg %p167
      %p174 = scmp.eq.s32.totalorder %s18, 1
      %p175 = por %p173, %p174
      %p176 = scmp.ne.s32.totalorder %s168, %s171
      %p177 = scmp.eq.s32.totalorder %s18, 0
      %p178 = por %p176, %p177
      %p179 = scmp.ne.s32.totalorder %s168, %s171
      %p180 = scmp.eq.s32.totalorder %s23, 1
      %p181 = por %p179, %p180
      %p182 = scmp.ne.s32.totalorder %s171, %s172
      %p183 = scmp.eq.s32.totalorder %s23, 0
      %p184 = por %p182, %p183
      %p185 = scmp.ne.s32.totalorder %s171, %s172
      %p186 = scmp.eq.s32.totalorder %s24, 1
      %p187 = por %p185, %p186
      %p189 = scmp.ne.s32.totalorder %s172, %s188
      %p190 = scmp.eq.s32.totalorder %s24, 0
      %p191 = por %p189, %p190
      %p192 = scmp.le.s32.totalorder 1, %s18
      %p193 = scmp.lt.s32.totalorder %s18, 3
      %p194 = pnand %p192, %p193
      %p195 = pneg %p194
      // Predicated region
      $region9: #{tpu_custom_call.1} parent=5 // pred_check
        _
      $region10: #{tpu_custom_call.1} parent=5 // pred_check_branch
        %197 = sbr.rel (%p194) target = $region12
      $region11: #{tpu_custom_call.1} parent=5 // pred_region
        %s198 = ssub.s32 %s18, 1
        // Predicated region
        $region13: #{tpu_custom_call.1} parent=11 // pred_check
          %p199 = pneg %p51
        $region14: #{tpu_custom_call.1} parent=11 // pred_check_branch
          %201 = sbr.rel (%p199) target = $region16
        $region15: #{tpu_custom_call.1} parent=11 // pred_region
          %s203 = ssub.s32 1024, 1024
          %204 = vsyncadd [#allocation6], %s203
          %s205 = sshll.u32 [#allocation5], 4
          %s206 = int_to_ptr.vmem [resolvable:$true] %s205
          %211 = dma.hbm_to_vmem [thread:$0]  %s1, 1024, %s206, [#allocation6], 64, 64, 4
        $region16: #{tpu_custom_call.1} parent=11 // pred_fallthru
          _
        // Predicated region
        $region17: #{tpu_custom_call.1} parent=11 // pred_check
          %p212 = pneg %p72
        $region18: #{tpu_custom_call.1} parent=11 // pred_check_branch
          %214 = sbr.rel (%p212) target = $region20
        $region19: #{tpu_custom_call.1} parent=11 // pred_region
          _
        $region20: #{tpu_custom_call.1} parent=11 // pred_fallthru
          _
        // Predicated region
        $region21: #{tpu_custom_call.1} parent=11 // pred_check
          %p215 = pneg %p93
        $region22: #{tpu_custom_call.1} parent=11 // pred_check_branch
          %217 = sbr.rel (%p215) target = $region24
        $region23: #{tpu_custom_call.1} parent=11 // pred_region
          _
        $region24: #{tpu_custom_call.1} parent=11 // pred_fallthru
          _
        // Predicated region
        $region25: #{tpu_custom_call.1} parent=11 // pred_check
          %p218 = pneg %p114
        $region26: #{tpu_custom_call.1} parent=11 // pred_check_branch
          %220 = sbr.rel (%p218) target = $region28
        $region27: #{tpu_custom_call.1} parent=11 // pred_region
          %s222 = ssub.s32 9216, 9216
          %223 = vsyncadd [#allocation9], %s222
          %s224 = sshll.u32 [#allocation8], 4
          %s225 = int_to_ptr.vmem [resolvable:$true] %s224
          %230 = dma.hbm_to_vmem [thread:$0]  %s4, 9216, %s225, [#allocation9], 64, 64, 4
        $region28: #{tpu_custom_call.1} parent=11 // pred_fallthru
          _
        // Predicated region
        $region29: #{tpu_custom_call.1} parent=11 // pred_check
          %p231 = pneg %p135
        $region30: #{tpu_custom_call.1} parent=11 // pred_check_branch
          %233 = sbr.rel (%p231) target = $region32
        $region31: #{tpu_custom_call.1} parent=11 // pred_region
          _
        $region32: #{tpu_custom_call.1} parent=11 // pred_fallthru
          _
        // Predicated region
        $region33: #{tpu_custom_call.1} parent=11 // pred_check
          %p234 = pneg %p156
        $region34: #{tpu_custom_call.1} parent=11 // pred_check_branch
          %236 = sbr.rel (%p234) target = $region36
        $region35: #{tpu_custom_call.1} parent=11 // pred_region
          _
        $region36: #{tpu_custom_call.1} parent=11 // pred_fallthru
          _
      $region12: #{tpu_custom_call.1} parent=5 // pred_fallthru
        _
      %p237 = scmp.lt.s32.totalorder %s18, 2
      // Predicated region
      $region37: #{tpu_custom_call.1} parent=5 // pred_check
        %p238 = pneg %p237
      $region38: #{tpu_custom_call.1} parent=5 // pred_check_branch
        %240 = sbr.rel (%p238) target = $region40
      $region39: #{tpu_custom_call.1} parent=5 // pred_region
        _
      $region40: #{tpu_custom_call.1} parent=5 // pred_fallthru
        _
      %p241 = scmp.le.s32.totalorder 1, %s18
      %p242 = scmp.lt.s32.totalorder %s18, 3
      %p243 = pnand %p241, %p242
      %p244 = pneg %p243
      // Predicated region
      $region41: #{tpu_custom_call.1} parent=5 // pred_check
        _
      $region42: #{tpu_custom_call.1} parent=5 // pred_check_branch
        %246 = sbr.rel (%p243) target = $region44
      $region43: #{tpu_custom_call.1} parent=5 // pred_region
        %s247 = ssub.s32 %s18, 1
        // Predicated region
        $region45: #{tpu_custom_call.1} parent=43 // pred_check
          %p248 = pneg %p51
        $region46: #{tpu_custom_call.1} parent=43 // pred_check_branch
          %250 = sbr.rel (%p248) target = $region48
        $region47: #{tpu_custom_call.1} parent=43 // pred_region
          %251 = dma.done [#allocation6], 1024
        $region48: #{tpu_custom_call.1} parent=43 // pred_fallthru
          _
        // Predicated region
        $region49: #{tpu_custom_call.1} parent=43 // pred_check
          %p252 = pneg %p114
        $region50: #{tpu_custom_call.1} parent=43 // pred_check_branch
          %254 = sbr.rel (%p252) target = $region52
        $region51: #{tpu_custom_call.1} parent=43 // pred_region
          %255 = dma.done [#allocation9], 9216
        $region52: #{tpu_custom_call.1} parent=43 // pred_fallthru
          _
        %p256 = pneg %p51
        %p257 = pneg %p48
        %p258 = pneg %p72
        %p259 = pneg %p69
        %p260 = pneg %p93
        %p261 = pneg %p90
        %p262 = pneg %p114
        %p263 = pneg %p111
        %p264 = pneg %p135
        %p265 = pneg %p132
        %p266 = pneg %p156
        %p267 = pneg %p153
        %p268 = pneg %p184
        %p269 = pneg %p181
        %s270 = sand.u32 %s171, 1
        %s271 = scalar_lea.sflag [#allocation7], %s270
        %s272 = sand.u32 %s171, 1
        %s273 = smul.addr %s272, 128
        %s274 = scalar_lea.vmem [#allocation10], %s273
        %s275 = smul.u32 16, %s28
        %s277 = smul.u32 %s28, 16
        %s278 = smul.u32 %s277, 2
        %s279 = smul.u32 %s27, 32
        %s280 = sadd.s32 %s278, %s279
        %s281 = smul.addr %s280, 64
        %s282 = scalar_lea.hbm %s0, %s281
        %s283 = scalar_lea.vmem [#allocation2], 8
        // Predicated region
        $region53: #{tpu_custom_call.1} parent=43 // pred_check
          _
        $region54: #{tpu_custom_call.1} parent=43 // pred_check_branch
          %285 = sbr.rel target = $region56
        $region55: #{tpu_custom_call.1} parent=43 // pred_region
          %286 = sst [smem:[#allocation13]] [#allocation12]
          %287 = sst [smem:[#allocation14]] [#allocation11]
        $region56: #{tpu_custom_call.1} parent=43 // pred_fallthru
          _
        %289 = shalt.err (0)
        %s291 = sshll.u32 %s283, 4
        %s292 = int_to_ptr.vmem [resolvable:$true] %s291
        %294 = dma.hbm_to_vmem [thread:$0]  %s282, 2048, %s292, [#allocation4]
        %s295 = ssub.s32 %s277, 1
        %p296 = scmp.ge.s32.totalorder %s295, 0
        // Predicated region
        $region57: #{tpu_custom_call.1} parent=43 // pred_check
          %p297 = pneg %p296
        $region58: #{tpu_custom_call.1} parent=43 // pred_check_branch
          %299 = sbr.rel (%p297) target = $region60
        $region59: #{tpu_custom_call.1} parent=43 // pred_region
          %s300 = smul.u32 %s295, 2
          %s301 = sadd.s32 %s300, %s279
          %s302 = smul.addr %s301, 64
          %s303 = scalar_lea.hbm %s0, %s302
          %s304 = scalar_lea.sflag [#allocation4], 1
          // Predicated region
          $region61: #{tpu_custom_call.1} parent=59 // pred_check
            _
          $region62: #{tpu_custom_call.1} parent=59 // pred_check_branch
            %306 = sbr.rel target = $region64
          $region63: #{tpu_custom_call.1} parent=59 // pred_region
            %307 = sst [smem:[#allocation13]] [#allocation16]
            %308 = sst [smem:[#allocation14]] [#allocation15]
          $region64: #{tpu_custom_call.1} parent=59 // pred_fallthru
            _
          %310 = shalt.err (0)
          %s312 = sshll.u32 [#allocation2], 4
          %s313 = int_to_ptr.vmem [resolvable:$true] %s312
          %315 = dma.hbm_to_vmem [thread:$0]  %s303, 128, %s313, %s304
          %s316 = smul.u32 4, 1
          %s317 = smul.u32 %s316, 2
          %s318 = smul.u32 %s317, 1
          %s319 = sshll.u32 %s318, 4
          %320 = dma.done %s304, %s319
        $region60: #{tpu_custom_call.1} parent=43 // pred_fallthru
          _
        %p321 = scmp.lt.s32.totalorder %s295, 0
        // Predicated region
        $region65: #{tpu_custom_call.1} parent=43 // pred_check
          %p322 = pneg %p321
        $region66: #{tpu_custom_call.1} parent=43 // pred_check_branch
          %324 = sbr.rel (%p322) target = $region68
        $region67: #{tpu_custom_call.1} parent=43 // pred_region
          %325 = vst [vmem:[#allocation2] sm:$0xf] 0
          %326 = vst [vmem:[#allocation2 + $0x4] sm:$0xf] 0
        $region68: #{tpu_custom_call.1} parent=43 // pred_fallthru
          _
        %s327 = sadd.s32 %s277, 16
        %p328 = scmp.lt.s32.totalorder %s327, 16
        // Predicated region
        $region69: #{tpu_custom_call.1} parent=43 // pred_check
          %p329 = pneg %p328
        $region70: #{tpu_custom_call.1} parent=43 // pred_check_branch
          %331 = sbr.rel (%p329) target = $region72
        $region71: #{tpu_custom_call.1} parent=43 // pred_region
          %s332 = smul.u32 %s327, 2
          %s333 = sadd.s32 %s332, %s279
          %s334 = smul.addr %s333, 64
          %s335 = scalar_lea.hbm %s0, %s334
          %s336 = scalar_lea.vmem [#allocation2], 136
          %s337 = scalar_lea.sflag [#allocation4], 2
          // Predicated region
          $region73: #{tpu_custom_call.1} parent=71 // pred_check
            _
          $region74: #{tpu_custom_call.1} parent=71 // pred_check_branch
            %339 = sbr.rel target = $region76
          $region75: #{tpu_custom_call.1} parent=71 // pred_region
            %340 = sst [smem:[#allocation13]] [#allocation18]
            %341 = sst [smem:[#allocation14]] [#allocation17]
          $region76: #{tpu_custom_call.1} parent=71 // pred_fallthru
            _
          %343 = shalt.err (0)
          %s345 = sshll.u32 %s336, 4
          %s346 = int_to_ptr.vmem [resolvable:$true] %s345
          %348 = dma.hbm_to_vmem [thread:$0]  %s335, 128, %s346, %s337
          %s349 = smul.u32 4, 1
          %s350 = smul.u32 %s349, 2
          %s351 = smul.u32 %s350, 1
          %s352 = sshll.u32 %s351, 4
          %353 = dma.done %s337, %s352
        $region72: #{tpu_custom_call.1} parent=43 // pred_fallthru
          _
        %p354 = scmp.ge.s32.totalorder %s327, 16
        // Predicated region
        $region77: #{tpu_custom_call.1} parent=43 // pred_check
          %p355 = pneg %p354
        $region78: #{tpu_custom_call.1} parent=43 // pred_check_branch
          %357 = sbr.rel (%p355) target = $region80
        $region79: #{tpu_custom_call.1} parent=43 // pred_region
          %s358 = scalar_lea.vmem [#allocation2], 136
          %359 = vst [vmem:[%s358] sm:$0xf] 0
          %360 = vst [vmem:[%s358 + $0x4] sm:$0xf] 0
        $region80: #{tpu_custom_call.1} parent=43 // pred_fallthru
          _
        %s361 = smul.u32 4, 16
        %s362 = smul.u32 %s361, 2
        %s363 = smul.u32 %s362, 1
        %s364 = sshll.u32 %s363, 4
        %365 = dma.done [#allocation4], %s364
        %v366 = vld [vmem:[#allocation2] sm:$0xf]
        %v367 = vld [vmem:[#allocation2 + $0x4] sm:$0xf]
        %v368 = vld [vmem:[#allocation2 + $0x8] sm:$0xf]
        %v369 = vld [vmem:[#allocation2 + $0xc] sm:$0xf]
        %v370 = vld [vmem:[#allocation2 + $0x10] sm:$0xf]
        %v371 = vld [vmem:[#allocation2 + $0x14] sm:$0xf]
        %v372 = vld [vmem:[#allocation2 + $0x18] sm:$0xf]
        %v373 = vld [vmem:[#allocation2 + $0x1c] sm:$0xf]
        %v374 = vld [vmem:[#allocation2 + $0x20] sm:$0xf]
        %v375 = vld [vmem:[#allocation2 + $0x24] sm:$0xf]
        %v376 = vld [vmem:[#allocation2 + $0x28] sm:$0xf]
        %v377 = vld [vmem:[#allocation2 + $0x2c] sm:$0xf]
        %v378 = vld [vmem:[#allocation2 + $0x30] sm:$0xf]
        %v379 = vld [vmem:[#allocation2 + $0x34] sm:$0xf]
        %v380 = vld [vmem:[#allocation2 + $0x38] sm:$0xf]
        %v381 = vld [vmem:[#allocation2 + $0x3c] sm:$0xf]
        %v382 = vld [vmem:[#allocation2 + $0x40] sm:$0xf]
        %v383 = vld [vmem:[#allocation2 + $0x44] sm:$0xf]
        %v384 = vld [vmem:[#allocation2 + $0x48] sm:$0xf]
        %v385 = vld [vmem:[#allocation2 + $0x4c] sm:$0xf]
        %v386 = vld [vmem:[#allocation2 + $0x50] sm:$0xf]
        %v387 = vld [vmem:[#allocation2 + $0x54] sm:$0xf]
        %v388 = vld [vmem:[#allocation2 + $0x58] sm:$0xf]
        %v389 = vld [vmem:[#allocation2 + $0x5c] sm:$0xf]
        %v390 = vld [vmem:[#allocation2 + $0x60] sm:$0xf]
        %v391 = vld [vmem:[#allocation2 + $0x64] sm:$0xf]
        %v392 = vld [vmem:[#allocation2 + $0x68] sm:$0xf]
        %v393 = vld [vmem:[#allocation2 + $0x6c] sm:$0xf]
        %v394 = vld [vmem:[#allocation2 + $0x70] sm:$0xf]
        %v395 = vld [vmem:[#allocation2 + $0x74] sm:$0xf]
        %v396 = vld [vmem:[#allocation2 + $0x78] sm:$0xf]
        %v397 = vld [vmem:[#allocation2 + $0x7c] sm:$0xf]
        %v398 = vld [vmem:[#allocation2 + $0x80] sm:$0xf]
        %v399 = vld [vmem:[#allocation2 + $0x84] sm:$0xf]
        %v400 = vld [vmem:[#allocation2 + $0x88] sm:$0xf]
        %v401 = vld [vmem:[#allocation2 + $0x8c] sm:$0xf]
        %v402 = vld [vmem:[#allocation5] sm:$0xf]
        %v403 = vld [vmem:[#allocation5 + $0x4] sm:$0xf]
        %v404 = vld [vmem:[#allocation5 + $0x8] sm:$0xf]
        %v405 = vld [vmem:[#allocation5 + $0xc] sm:$0xf]
        %v406 = vld [vmem:[#allocation5 + $0x10] sm:$0xf]
        %v407 = vld [vmem:[#allocation5 + $0x14] sm:$0xf]
        %v408 = vld [vmem:[#allocation5 + $0x18] sm:$0xf]
        %v409 = vld [vmem:[#allocation5 + $0x1c] sm:$0xf]
        %v410 = vld [vmem:[#allocation5 + $0x20] sm:$0xf]
        %v411 = vld [vmem:[#allocation5 + $0x24] sm:$0xf]
        %v412 = vld [vmem:[#allocation5 + $0x28] sm:$0xf]
        %v413 = vld [vmem:[#allocation5 + $0x2c] sm:$0xf]
        %v414 = vld [vmem:[#allocation5 + $0x30] sm:$0xf]
        %v415 = vld [vmem:[#allocation5 + $0x34] sm:$0xf]
        %v416 = vld [vmem:[#allocation5 + $0x38] sm:$0xf]
        %v417 = vld [vmem:[#allocation5 + $0x3c] sm:$0xf]
        %v454 = vunpack.c.l.b16 %v366
        %v455 = vunpack.c.l.b16 %v367
        %v456 = vunpack.c.l.b16 %v368
        %v457 = vunpack.c.l.b16 %v369
        %v458 = vunpack.c.l.b16 %v370
        %v459 = vunpack.c.l.b16 %v371
        %v460 = vunpack.c.l.b16 %v372
        %v461 = vunpack.c.l.b16 %v373
        %v462 = vunpack.c.l.b16 %v374
        %v463 = vunpack.c.l.b16 %v375
        %v464 = vunpack.c.l.b16 %v376
        %v465 = vunpack.c.l.b16 %v377
        %v466 = vunpack.c.l.b16 %v378
        %v467 = vunpack.c.l.b16 %v379
        %v468 = vunpack.c.l.b16 %v380
        %v469 = vunpack.c.l.b16 %v381
        %v470 = vunpack.c.l.b16 %v382
        %v471 = vunpack.c.l.b16 %v383
        %v472 = vunpack.c.l.b16 %v384
        %v473 = vunpack.c.l.b16 %v385
        %v474 = vunpack.c.l.b16 %v386
        %v475 = vunpack.c.l.b16 %v387
        %v476 = vunpack.c.l.b16 %v388
        %v477 = vunpack.c.l.b16 %v389
        %v478 = vunpack.c.l.b16 %v390
        %v479 = vunpack.c.l.b16 %v391
        %v480 = vunpack.c.l.b16 %v392
        %v481 = vunpack.c.l.b16 %v393
        %v482 = vunpack.c.l.b16 %v394
        %v483 = vunpack.c.l.b16 %v395
        %v484 = vunpack.c.l.b16 %v396
        %v485 = vunpack.c.l.b16 %v397
        %v486 = vunpack.c.l.b16 %v398
        %v487 = vunpack.c.l.b16 %v399
        %v488 = vunpack.c.l.b16 %v400
        %v489 = vunpack.c.l.b16 %v401
        %v490 = vpack.c.b16 %v455, %v454
        %v491 = vpack.c.b16 %v457, %v456
        %v492 = vpack.c.b16 %v459, %v458
        %v493 = vpack.c.b16 %v461, %v460
        %v494 = vpack.c.b16 %v463, %v462
        %v495 = vpack.c.b16 %v465, %v464
        %v496 = vpack.c.b16 %v467, %v466
        %v497 = vpack.c.b16 %v469, %v468
        %v498 = vpack.c.b16 %v471, %v470
        %v499 = vpack.c.b16 %v473, %v472
        %v500 = vpack.c.b16 %v475, %v474
        %v501 = vpack.c.b16 %v477, %v476
        %v502 = vpack.c.b16 %v479, %v478
        %v503 = vpack.c.b16 %v481, %v480
        %v504 = vpack.c.b16 %v483, %v482
        %v505 = vpack.c.b16 %v485, %v484
        %v506 = vpack.c.b16 %v487, %v486
        %v507 = vpack.c.b16 %v489, %v488
        %v542 = vunpack.c.l.b16 %v402
        %v543 = vunpack.c.l.b16 %v403
        %v544 = vunpack.c.l.b16 %v404
        %v545 = vunpack.c.l.b16 %v405
        %v546 = vunpack.c.l.b16 %v406
        %v547 = vunpack.c.l.b16 %v407
        %v548 = vunpack.c.l.b16 %v408
        %v549 = vunpack.c.l.b16 %v409
        %v550 = vunpack.c.l.b16 %v410
        %v551 = vunpack.c.l.b16 %v411
        %v552 = vunpack.c.l.b16 %v412
        %v553 = vunpack.c.l.b16 %v413
        %v554 = vunpack.c.l.b16 %v414
        %v555 = vunpack.c.l.b16 %v415
        %v556 = vunpack.c.l.b16 %v416
        %v557 = vunpack.c.l.b16 %v417
        %v558 = vpack.c.b16 %v543, %v542
        %v559 = vpack.c.b16 %v545, %v544
        %v560 = vpack.c.b16 %v547, %v546
        %v561 = vpack.c.b16 %v549, %v548
        %v562 = vpack.c.b16 %v551, %v550
        %v563 = vpack.c.b16 %v553, %v552
        %v564 = vpack.c.b16 %v555, %v554
        %v565 = vpack.c.b16 %v557, %v556
        %574 = vmatprep.subr.bf16.mxu0 0
        %575 = vmatpush1.bf16.msra.mxu0 %v565
        %576 = vmatprep.subr.bf16.mxu0 0
        %577 = vmatpush1.bf16.msra.mxu0 %v564
        %578 = vmatprep.subr.bf16.mxu0 0
        %579 = vmatpush1.bf16.msra.mxu0 %v563
        %580 = vmatprep.subr.bf16.mxu0 0
        %581 = vmatpush1.bf16.msra.mxu0 %v562
        %582 = vmatprep.subr.bf16.mxu0 0
        %583 = vmatpush1.bf16.msra.mxu0 %v561
        %584 = vmatprep.subr.bf16.mxu0 0
        %585 = vmatpush1.bf16.msra.mxu0 %v560
        %586 = vmatprep.subr.bf16.mxu0 0
        %587 = vmatpush1.bf16.msra.mxu0 %v559
        %588 = vmatprep.subr.bf16.mxu0 0
        %589 = vmatpush1.bf16.msra.mxu0 %v558
        %590 = vmatprep.subr.bf16.mxu0 0
        %591 = vmatpush2.bf16.msra.mxu0 0
        %592 = vmatprep.subr.bf16.mxu0 0
        %593 = vmatpush2.bf16.msra.mxu0 0
        %594 = vmatprep.subr.bf16.mxu0 0
        %595 = vmatpush2.bf16.msra.mxu0 0
        %596 = vmatprep.subr.bf16.mxu0 0
        %597 = vmatpush2.bf16.msra.mxu0 0
        %598 = vmatprep.subr.bf16.mxu0 0
        %599 = vmatpush2.bf16.msra.mxu0 0
        %600 = vmatprep.subr.bf16.mxu0 0
        %601 = vmatpush2.bf16.msra.mxu0 0
        %602 = vmatprep.subr.bf16.mxu0 0
        %603 = vmatpush2.bf16.msra.mxu0 0
        %604 = vmatprep.subr.bf16.mxu0 0
        %605 = vmatpush2.bf16.msra.mxu0 0
        %606 = vmatprep.mubr.bf16.mxu0 0
        %607 = vmatmul.mubr.bf16.gmra.mxu0 %v490
        %v608 = vpop.f32.mrf.mxu0
        %v609 = vadd.f32 0.0, %v608
        %v610 = vpop.f32.mrf.mxu0
        %v611 = vpop.f32.mrf.mxu0
        %v612 = vadd.f32 0.0, %v611
        %v613 = vpop.f32.mrf.mxu0
        %614 = vmatprep.mubr.bf16.mxu0 0
        %615 = vmatmul.mubr.bf16.gmra.mxu0 %v491
        %v616 = vpop.f32.mrf.mxu0
        %v617 = vadd.f32 0.0, %v616
        %v618 = vpop.f32.mrf.mxu0
        %v619 = vpop.f32.mrf.mxu0
        %v620 = vadd.f32 0.0, %v619
        %v621 = vpop.f32.mrf.mxu0
        %622 = vmatprep.mubr.bf16.mxu0 0
        %623 = vmatmul.mubr.bf16.gmra.mxu0 %v492
        %v624 = vpop.f32.mrf.mxu0
        %v625 = vadd.f32 0.0, %v624
        %v626 = vpop.f32.mrf.mxu0
        %v627 = vpop.f32.mrf.mxu0
        %v628 = vadd.f32 0.0, %v627
        %v629 = vpop.f32.mrf.mxu0
        %630 = vmatprep.mubr.bf16.mxu0 0
        %631 = vmatmul.mubr.bf16.gmra.mxu0 %v493
        %v632 = vpop.f32.mrf.mxu0
        %v633 = vadd.f32 0.0, %v632
        %v634 = vpop.f32.mrf.mxu0
        %v635 = vpop.f32.mrf.mxu0
        %v636 = vadd.f32 0.0, %v635
        %v637 = vpop.f32.mrf.mxu0
        %638 = vmatprep.mubr.bf16.mxu0 0
        %639 = vmatmul.mubr.bf16.gmra.mxu0 %v494
        %v640 = vpop.f32.mrf.mxu0
        %v641 = vadd.f32 0.0, %v640
        %v642 = vpop.f32.mrf.mxu0
        %v643 = vpop.f32.mrf.mxu0
        %v644 = vadd.f32 0.0, %v643
        %v645 = vpop.f32.mrf.mxu0
        %646 = vmatprep.mubr.bf16.mxu0 0
        %647 = vmatmul.mubr.bf16.gmra.mxu0 %v495
        %v648 = vpop.f32.mrf.mxu0
        %v649 = vadd.f32 0.0, %v648
        %v650 = vpop.f32.mrf.mxu0
        %v651 = vpop.f32.mrf.mxu0
        %v652 = vadd.f32 0.0, %v651
        %v653 = vpop.f32.mrf.mxu0
        %654 = vmatprep.mubr.bf16.mxu0 0
        %655 = vmatmul.mubr.bf16.gmra.mxu0 %v496
        %v656 = vpop.f32.mrf.mxu0
        %v657 = vadd.f32 0.0, %v656
        %v658 = vpop.f32.mrf.mxu0
        %v659 = vpop.f32.mrf.mxu0
        %v660 = vadd.f32 0.0, %v659
        %v661 = vpop.f32.mrf.mxu0
        %662 = vmatprep.mubr.bf16.mxu0 0
        %663 = vmatmul.mubr.bf16.gmra.mxu0 %v497
        %v664 = vpop.f32.mrf.mxu0
        %v665 = vadd.f32 0.0, %v664
        %v666 = vpop.f32.mrf.mxu0
        %v667 = vpop.f32.mrf.mxu0
        %v668 = vadd.f32 0.0, %v667
        %v669 = vpop.f32.mrf.mxu0
        %670 = vmatprep.mubr.bf16.mxu0 0
        %671 = vmatmul.mubr.bf16.gmra.mxu0 %v498
        %v672 = vpop.f32.mrf.mxu0
        %v673 = vadd.f32 0.0, %v672
        %v674 = vpop.f32.mrf.mxu0
        %v675 = vpop.f32.mrf.mxu0
        %v676 = vadd.f32 0.0, %v675
        %v677 = vpop.f32.mrf.mxu0
        %678 = vmatprep.mubr.bf16.mxu0 0
        %679 = vmatmul.mubr.bf16.gmra.mxu0 %v499
        %v680 = vpop.f32.mrf.mxu0
        %v681 = vadd.f32 0.0, %v680
        %v682 = vpop.f32.mrf.mxu0
        %v683 = vpop.f32.mrf.mxu0
        %v684 = vadd.f32 0.0, %v683
        %v685 = vpop.f32.mrf.mxu0
        %686 = vmatprep.mubr.bf16.mxu0 0
        %687 = vmatmul.mubr.bf16.gmra.mxu0 %v500
        %v688 = vpop.f32.mrf.mxu0
        %v689 = vadd.f32 0.0, %v688
        %v690 = vpop.f32.mrf.mxu0
        %v691 = vpop.f32.mrf.mxu0
        %v692 = vadd.f32 0.0, %v691
        %v693 = vpop.f32.mrf.mxu0
        %694 = vmatprep.mubr.bf16.mxu0 0
        %695 = vmatmul.mubr.bf16.gmra.mxu0 %v501
        %v696 = vpop.f32.mrf.mxu0
        %v697 = vadd.f32 0.0, %v696
        %v698 = vpop.f32.mrf.mxu0
        %v699 = vpop.f32.mrf.mxu0
        %v700 = vadd.f32 0.0, %v699
        %v701 = vpop.f32.mrf.mxu0
        %702 = vmatprep.mubr.bf16.mxu0 0
        %703 = vmatmul.mubr.bf16.gmra.mxu0 %v502
        %v704 = vpop.f32.mrf.mxu0
        %v705 = vadd.f32 0.0, %v704
        %v706 = vpop.f32.mrf.mxu0
        %v707 = vpop.f32.mrf.mxu0
        %v708 = vadd.f32 0.0, %v707
        %v709 = vpop.f32.mrf.mxu0
        %710 = vmatprep.mubr.bf16.mxu0 0
        %711 = vmatmul.mubr.bf16.gmra.mxu0 %v503
        %v712 = vpop.f32.mrf.mxu0
        %v713 = vadd.f32 0.0, %v712
        %v714 = vpop.f32.mrf.mxu0
        %v715 = vpop.f32.mrf.mxu0
        %v716 = vadd.f32 0.0, %v715
        %v717 = vpop.f32.mrf.mxu0
        %718 = vmatprep.mubr.bf16.mxu0 0
        %719 = vmatmul.mubr.bf16.gmra.mxu0 %v504
        %v720 = vpop.f32.mrf.mxu0
        %v721 = vadd.f32 0.0, %v720
        %v722 = vpop.f32.mrf.mxu0
        %v723 = vpop.f32.mrf.mxu0
        %v724 = vadd.f32 0.0, %v723
        %v725 = vpop.f32.mrf.mxu0
        %726 = vmatprep.mubr.bf16.mxu0 0
        %727 = vmatmul.mubr.bf16.gmra.mxu0 %v505
        %v728 = vpop.f32.mrf.mxu0
        %v729 = vadd.f32 0.0, %v728
        %v730 = vpop.f32.mrf.mxu0
        %v731 = vpop.f32.mrf.mxu0
        %v732 = vadd.f32 0.0, %v731
        %v733 = vpop.f32.mrf.mxu0
        %734 = vmatprep.mubr.bf16.mxu0 0
        %735 = vmatmul.mubr.bf16.gmra.mxu0 %v506
        %v736 = vpop.f32.mrf.mxu0
        %v737 = vadd.f32 0.0, %v736
        %v738 = vpop.f32.mrf.mxu0
        %v739 = vpop.f32.mrf.mxu0
        %v740 = vadd.f32 0.0, %v739
        %v741 = vpop.f32.mrf.mxu0
        %742 = vmatprep.mubr.bf16.mxu0 0
        %743 = vmatmul.mubr.bf16.gmra.mxu0 %v507
        %v744 = vpop.f32.mrf.mxu0
        %v745 = vadd.f32 0.0, %v744
        %v746 = vpop.f32.mrf.mxu0
        %v747 = vpop.f32.mrf.mxu0
        %v748 = vadd.f32 0.0, %v747
        %v749 = vpop.f32.mrf.mxu0
        %750 = vdwg.mxu0
        %v751 = vld [vmem:[%s2] sm:$0x1]
        %v753 = vlaneseq
        %v754 = vshrl.u32 %v753, 7
        %v755 = vsub.s32 0, %v754
        %v756 = vrot.slane %v751, %v755
        %v758 = vmul.f32 %v609, %v756
        %v759 = vmul.f32 %v612, %v756
        %v760 = vmul.f32 %v617, %v756
        %v761 = vmul.f32 %v620, %v756
        %v762 = vmul.f32 %v625, %v756
        %v763 = vmul.f32 %v628, %v756
        %v764 = vmul.f32 %v633, %v756
        %v765 = vmul.f32 %v636, %v756
        %v766 = vmul.f32 %v641, %v756
        %v767 = vmul.f32 %v644, %v756
        %v768 = vmul.f32 %v649, %v756
        %v769 = vmul.f32 %v652, %v756
        %v770 = vmul.f32 %v657, %v756
        %v771 = vmul.f32 %v660, %v756
        %v772 = vmul.f32 %v665, %v756
        %v773 = vmul.f32 %v668, %v756
        %v774 = vmul.f32 %v673, %v756
        %v775 = vmul.f32 %v676, %v756
        %v776 = vmul.f32 %v681, %v756
        %v777 = vmul.f32 %v684, %v756
        %v778 = vmul.f32 %v689, %v756
        %v779 = vmul.f32 %v692, %v756
        %v780 = vmul.f32 %v697, %v756
        %v781 = vmul.f32 %v700, %v756
        %v782 = vmul.f32 %v705, %v756
        %v783 = vmul.f32 %v708, %v756
        %v784 = vmul.f32 %v713, %v756
        %v785 = vmul.f32 %v716, %v756
        %v786 = vmul.f32 %v721, %v756
        %v787 = vmul.f32 %v724, %v756
        %v788 = vmul.f32 %v729, %v756
        %v789 = vmul.f32 %v732, %v756
        %v790 = vmul.f32 %v737, %v756
        %v791 = vmul.f32 %v740, %v756
        %v792 = vmul.f32 %v745, %v756
        %v793 = vmul.f32 %v748, %v756
        %v794 = vld [vmem:[%s3] sm:$0x1]
        %v796 = vlaneseq
        %v797 = vshrl.u32 %v796, 7
        %v798 = vsub.s32 0, %v797
        %v799 = vrot.slane %v794, %v798
        %v801 = vadd.f32 %v758, %v799
        %v802 = vadd.f32 %v759, %v799
        %v803 = vadd.f32 %v760, %v799
        %v804 = vadd.f32 %v761, %v799
        %v805 = vadd.f32 %v762, %v799
        %v806 = vadd.f32 %v763, %v799
        %v807 = vadd.f32 %v764, %v799
        %v808 = vadd.f32 %v765, %v799
        %v809 = vadd.f32 %v766, %v799
        %v810 = vadd.f32 %v767, %v799
        %v811 = vadd.f32 %v768, %v799
        %v812 = vadd.f32 %v769, %v799
        %v813 = vadd.f32 %v770, %v799
        %v814 = vadd.f32 %v771, %v799
        %v815 = vadd.f32 %v772, %v799
        %v816 = vadd.f32 %v773, %v799
        %v817 = vadd.f32 %v774, %v799
        %v818 = vadd.f32 %v775, %v799
        %v819 = vadd.f32 %v776, %v799
        %v820 = vadd.f32 %v777, %v799
        %v821 = vadd.f32 %v778, %v799
        %v822 = vadd.f32 %v779, %v799
        %v823 = vadd.f32 %v780, %v799
        %v824 = vadd.f32 %v781, %v799
        %v825 = vadd.f32 %v782, %v799
        %v826 = vadd.f32 %v783, %v799
        %v827 = vadd.f32 %v784, %v799
        %v828 = vadd.f32 %v785, %v799
        %v829 = vadd.f32 %v786, %v799
        %v830 = vadd.f32 %v787, %v799
        %v831 = vadd.f32 %v788, %v799
        %v832 = vadd.f32 %v789, %v799
        %v833 = vadd.f32 %v790, %v799
        %v834 = vadd.f32 %v791, %v799
        %v835 = vadd.f32 %v792, %v799
        %v836 = vadd.f32 %v793, %v799
        %v837 = vmax.f32 %v801, 0.0
        %v838 = vmax.f32 %v802, 0.0
        %v839 = vmax.f32 %v803, 0.0
        %v840 = vmax.f32 %v804, 0.0
        %v841 = vmax.f32 %v805, 0.0
        %v842 = vmax.f32 %v806, 0.0
        %v843 = vmax.f32 %v807, 0.0
        %v844 = vmax.f32 %v808, 0.0
        %v845 = vmax.f32 %v809, 0.0
        %v846 = vmax.f32 %v810, 0.0
        %v847 = vmax.f32 %v811, 0.0
        %v848 = vmax.f32 %v812, 0.0
        %v849 = vmax.f32 %v813, 0.0
        %v850 = vmax.f32 %v814, 0.0
        %v851 = vmax.f32 %v815, 0.0
        %v852 = vmax.f32 %v816, 0.0
        %v853 = vmax.f32 %v817, 0.0
        %v854 = vmax.f32 %v818, 0.0
        %v855 = vmax.f32 %v819, 0.0
        %v856 = vmax.f32 %v820, 0.0
        %v857 = vmax.f32 %v821, 0.0
        %v858 = vmax.f32 %v822, 0.0
        %v859 = vmax.f32 %v823, 0.0
        %v860 = vmax.f32 %v824, 0.0
        %v861 = vmax.f32 %v825, 0.0
        %v862 = vmax.f32 %v826, 0.0
        %v863 = vmax.f32 %v827, 0.0
        %v864 = vmax.f32 %v828, 0.0
        %v865 = vmax.f32 %v829, 0.0
        %v866 = vmax.f32 %v830, 0.0
        %v867 = vmax.f32 %v831, 0.0
        %v868 = vmax.f32 %v832, 0.0
        %v869 = vmax.f32 %v833, 0.0
        %v870 = vmax.f32 %v834, 0.0
        %v871 = vmax.f32 %v835, 0.0
        %v872 = vmax.f32 %v836, 0.0
        %vm873 = vcmask 1043459
        %vm874 = vsmask.f32 7950
        %vm875 = vmand %vm873, %vm874
        %v876 = vld [vmem:[#allocation3 + $0x4] sm:$0x8]
        %v877 = vsel %vm875, 0, %v876
        %878 = vst [vmem:[#allocation3 + $0x4] sm:$0x8] %v877
        %v879 = vld [vmem:[#allocation3 + $0x18] sm:$0x8]
        %v880 = vsel %vm875, 0, %v879
        %881 = vst [vmem:[#allocation3 + $0x18] sm:$0x8] %v880
        %v882 = vld [vmem:[#allocation3 + $0x2c] sm:$0x8]
        %v883 = vsel %vm875, 0, %v882
        %884 = vst [vmem:[#allocation3 + $0x2c] sm:$0x8] %v883
        %v885 = vld [vmem:[#allocation3 + $0x40] sm:$0x8]
        %v886 = vsel %vm875, 0, %v885
        %887 = vst [vmem:[#allocation3 + $0x40] sm:$0x8] %v886
        %v888 = vld [vmem:[#allocation3 + $0x54] sm:$0x8]
        %v889 = vsel %vm875, 0, %v888
        %890 = vst [vmem:[#allocation3 + $0x54] sm:$0x8] %v889
        %v891 = vld [vmem:[#allocation3 + $0x68] sm:$0x8]
        %v892 = vsel %vm875, 0, %v891
        %893 = vst [vmem:[#allocation3 + $0x68] sm:$0x8] %v892
        %v894 = vld [vmem:[#allocation3 + $0x7c] sm:$0x8]
        %v895 = vsel %vm875, 0, %v894
        %896 = vst [vmem:[#allocation3 + $0x7c] sm:$0x8] %v895
        %v897 = vld [vmem:[#allocation3 + $0x90] sm:$0x8]
        %v898 = vsel %vm875, 0, %v897
        %899 = vst [vmem:[#allocation3 + $0x90] sm:$0x8] %v898
        %v900 = vld [vmem:[#allocation3 + $0xa4] sm:$0x8]
        %v901 = vsel %vm875, 0, %v900
        %902 = vst [vmem:[#allocation3 + $0xa4] sm:$0x8] %v901
        %v903 = vld [vmem:[#allocation3 + $0xb8] sm:$0x8]
        %v904 = vsel %vm875, 0, %v903
        %905 = vst [vmem:[#allocation3 + $0xb8] sm:$0x8] %v904
        %v906 = vld [vmem:[#allocation3 + $0xcc] sm:$0x8]
        %v907 = vsel %vm875, 0, %v906
        %908 = vst [vmem:[#allocation3 + $0xcc] sm:$0x8] %v907
        %v909 = vld [vmem:[#allocation3 + $0xe0] sm:$0x8]
        %v910 = vsel %vm875, 0, %v909
        %911 = vst [vmem:[#allocation3 + $0xe0] sm:$0x8] %v910
        %v912 = vld [vmem:[#allocation3 + $0xf4] sm:$0x8]
        %v913 = vsel %vm875, 0, %v912
        %914 = vst [vmem:[#allocation3 + $0xf4] sm:$0x8] %v913
        %v915 = vld [vmem:[#allocation3 + $0x108] sm:$0x8]
        %v916 = vsel %vm875, 0, %v915
        %917 = vst [vmem:[#allocation3 + $0x108] sm:$0x8] %v916
        %v918 = vld [vmem:[#allocation3 + $0x11c] sm:$0x8]
        %v919 = vsel %vm875, 0, %v918
        %920 = vst [vmem:[#allocation3 + $0x11c] sm:$0x8] %v919
        %v921 = vld [vmem:[#allocation3 + $0x130] sm:$0x8]
        %v922 = vsel %vm875, 0, %v921
        %923 = vst [vmem:[#allocation3 + $0x130] sm:$0x8] %v922
        %v924 = vld [vmem:[#allocation3 + $0x144] sm:$0x8]
        %v925 = vsel %vm875, 0, %v924
        %926 = vst [vmem:[#allocation3 + $0x144] sm:$0x8] %v925
        %v927 = vld [vmem:[#allocation3 + $0x158] sm:$0x8]
        %v928 = vsel %vm875, 0, %v927
        %929 = vst [vmem:[#allocation3 + $0x158] sm:$0x8] %v928
        %vm930 = vcmask 1040384
        %vm931 = vsmask.f32 256
        %vm932 = vmand %vm930, %vm931
        %v933 = vld [vmem:[#allocation3 + $0x10] sm:$0x1]
        %v934 = vsel %vm932, 0, %v933
        %935 = vst [vmem:[#allocation3 + $0x10] sm:$0x1] %v934
        %v936 = vld [vmem:[#allocation3 + $0x24] sm:$0x1]
        %v937 = vsel %vm932, 0, %v936
        %938 = vst [vmem:[#allocation3 + $0x24] sm:$0x1] %v937
        %v939 = vld [vmem:[#allocation3 + $0x38] sm:$0x1]
        %v940 = vsel %vm932, 0, %v939
        %941 = vst [vmem:[#allocation3 + $0x38] sm:$0x1] %v940
        %v942 = vld [vmem:[#allocation3 + $0x4c] sm:$0x1]
        %v943 = vsel %vm932, 0, %v942
        %944 = vst [vmem:[#allocation3 + $0x4c] sm:$0x1] %v943
        %v945 = vld [vmem:[#allocation3 + $0x60] sm:$0x1]
        %v946 = vsel %vm932, 0, %v945
        %947 = vst [vmem:[#allocation3 + $0x60] sm:$0x1] %v946
        %v948 = vld [vmem:[#allocation3 + $0x74] sm:$0x1]
        %v949 = vsel %vm932, 0, %v948
        %950 = vst [vmem:[#allocation3 + $0x74] sm:$0x1] %v949
        %v951 = vld [vmem:[#allocation3 + $0x88] sm:$0x1]
        %v952 = vsel %vm932, 0, %v951
        %953 = vst [vmem:[#allocation3 + $0x88] sm:$0x1] %v952
        %v954 = vld [vmem:[#allocation3 + $0x9c] sm:$0x1]
        %v955 = vsel %vm932, 0, %v954
        %956 = vst [vmem:[#allocation3 + $0x9c] sm:$0x1] %v955
        %v957 = vld [vmem:[#allocation3 + $0xb0] sm:$0x1]
        %v958 = vsel %vm932, 0, %v957
        %959 = vst [vmem:[#allocation3 + $0xb0] sm:$0x1] %v958
        %v960 = vld [vmem:[#allocation3 + $0xc4] sm:$0x1]
        %v961 = vsel %vm932, 0, %v960
        %962 = vst [vmem:[#allocation3 + $0xc4] sm:$0x1] %v961
        %v963 = vld [vmem:[#allocation3 + $0xd8] sm:$0x1]
        %v964 = vsel %vm932, 0, %v963
        %965 = vst [vmem:[#allocation3 + $0xd8] sm:$0x1] %v964
        %v966 = vld [vmem:[#allocation3 + $0xec] sm:$0x1]
        %v967 = vsel %vm932, 0, %v966
        %968 = vst [vmem:[#allocation3 + $0xec] sm:$0x1] %v967
        %v969 = vld [vmem:[#allocation3 + $0x100] sm:$0x1]
        %v970 = vsel %vm932, 0, %v969
        %971 = vst [vmem:[#allocation3 + $0x100] sm:$0x1] %v970
        %v972 = vld [vmem:[#allocation3 + $0x114] sm:$0x1]
        %v973 = vsel %vm932, 0, %v972
        %974 = vst [vmem:[#allocation3 + $0x114] sm:$0x1] %v973
        %v975 = vld [vmem:[#allocation3 + $0x128] sm:$0x1]
        %v976 = vsel %vm932, 0, %v975
        %977 = vst [vmem:[#allocation3 + $0x128] sm:$0x1] %v976
        %v978 = vld [vmem:[#allocation3 + $0x13c] sm:$0x1]
        %v979 = vsel %vm932, 0, %v978
        %980 = vst [vmem:[#allocation3 + $0x13c] sm:$0x1] %v979
        %v981 = vld [vmem:[#allocation3 + $0x150] sm:$0x1]
        %v982 = vsel %vm932, 0, %v981
        %983 = vst [vmem:[#allocation3 + $0x150] sm:$0x1] %v982
        %v984 = vld [vmem:[#allocation3 + $0x164] sm:$0x1]
        %v985 = vsel %vm932, 0, %v984
        %986 = vst [vmem:[#allocation3 + $0x164] sm:$0x1] %v985
        %v987 = vpack.c.bf16 %v838, %v837
        %v988 = vpack.c.bf16 %v840, %v839
        %v989 = vpack.c.bf16 %v842, %v841
        %v990 = vpack.c.bf16 %v844, %v843
        %v991 = vpack.c.bf16 %v846, %v845
        %v992 = vpack.c.bf16 %v848, %v847
        %v993 = vpack.c.bf16 %v850, %v849
        %v994 = vpack.c.bf16 %v852, %v851
        %v995 = vpack.c.bf16 %v854, %v853
        %v996 = vpack.c.bf16 %v856, %v855
        %v997 = vpack.c.bf16 %v858, %v857
        %v998 = vpack.c.bf16 %v860, %v859
        %v999 = vpack.c.bf16 %v862, %v861
        %v1000 = vpack.c.bf16 %v864, %v863
        %v1001 = vpack.c.bf16 %v866, %v865
        %v1002 = vpack.c.bf16 %v868, %v867
        %v1003 = vpack.c.bf16 %v870, %v869
        %v1004 = vpack.c.bf16 %v872, %v871
        %v1023 = vunpack.c.l.b16 %v987
        %v1024 = vunpack.c.h.b16 %v987
        %v1025 = vunpack.c.l.b16 %v988
        %v1026 = vunpack.c.h.b16 %v988
        %v1027 = vunpack.c.l.b16 %v989
        %v1028 = vunpack.c.h.b16 %v989
        %v1029 = vunpack.c.l.b16 %v990
        %v1030 = vunpack.c.h.b16 %v990
        %v1031 = vunpack.c.l.b16 %v991
        %v1032 = vunpack.c.h.b16 %v991
        %v1033 = vunpack.c.l.b16 %v992
        %v1034 = vunpack.c.h.b16 %v992
        %v1035 = vunpack.c.l.b16 %v993
        %v1036 = vunpack.c.h.b16 %v993
        %v1037 = vunpack.c.l.b16 %v994
        %v1038 = vunpack.c.h.b16 %v994
        %v1039 = vunpack.c.l.b16 %v995
        %v1040 = vunpack.c.h.b16 %v995
        %v1041 = vunpack.c.l.b16 %v996
        %v1042 = vunpack.c.h.b16 %v996
        %v1043 = vunpack.c.l.b16 %v997
        %v1044 = vunpack.c.h.b16 %v997
        %v1045 = vunpack.c.l.b16 %v998
        %v1046 = vunpack.c.h.b16 %v998
        %v1047 = vunpack.c.l.b16 %v999
        %v1048 = vunpack.c.h.b16 %v999
        %v1049 = vunpack.c.l.b16 %v1000
        %v1050 = vunpack.c.h.b16 %v1000
        %v1051 = vunpack.c.l.b16 %v1001
        %v1052 = vunpack.c.h.b16 %v1001
        %v1053 = vunpack.c.l.b16 %v1002
        %v1054 = vunpack.c.h.b16 %v1002
        %v1055 = vunpack.c.l.b16 %v1003
        %v1056 = vunpack.c.h.b16 %v1003
        %v1057 = vunpack.c.l.b16 %v1004
        %v1058 = vunpack.c.h.b16 %v1004
        %v1059 = vpack.c.b16 %v1023, %v1023
        %v1060 = vpack.c.b16 %v1024, %v1024
        %v1061 = vpack.c.b16 %v1025, %v1025
        %v1062 = vpack.c.b16 %v1026, %v1026
        %v1063 = vpack.c.b16 %v1027, %v1027
        %v1064 = vpack.c.b16 %v1028, %v1028
        %v1065 = vpack.c.b16 %v1029, %v1029
        %v1066 = vpack.c.b16 %v1030, %v1030
        %v1067 = vpack.c.b16 %v1031, %v1031
        %v1068 = vpack.c.b16 %v1032, %v1032
        %v1069 = vpack.c.b16 %v1033, %v1033
        %v1070 = vpack.c.b16 %v1034, %v1034
        %v1071 = vpack.c.b16 %v1035, %v1035
        %v1072 = vpack.c.b16 %v1036, %v1036
        %v1073 = vpack.c.b16 %v1037, %v1037
        %v1074 = vpack.c.b16 %v1038, %v1038
        %v1075 = vpack.c.b16 %v1039, %v1039
        %v1076 = vpack.c.b16 %v1040, %v1040
        %v1077 = vpack.c.b16 %v1041, %v1041
        %v1078 = vpack.c.b16 %v1042, %v1042
        %v1079 = vpack.c.b16 %v1043, %v1043
        %v1080 = vpack.c.b16 %v1044, %v1044
        %v1081 = vpack.c.b16 %v1045, %v1045
        %v1082 = vpack.c.b16 %v1046, %v1046
        %v1083 = vpack.c.b16 %v1047, %v1047
        %v1084 = vpack.c.b16 %v1048, %v1048
        %v1085 = vpack.c.b16 %v1049, %v1049
        %v1086 = vpack.c.b16 %v1050, %v1050
        %v1087 = vpack.c.b16 %v1051, %v1051
        %v1088 = vpack.c.b16 %v1052, %v1052
        %v1089 = vpack.c.b16 %v1053, %v1053
        %v1090 = vpack.c.b16 %v1054, %v1054
        %v1091 = vpack.c.b16 %v1055, %v1055
        %v1092 = vpack.c.b16 %v1056, %v1056
        %v1093 = vpack.c.b16 %v1057, %v1057
        %v1094 = vpack.c.b16 %v1058, %v1058
        %1131 = vst [vmem:[#allocation3 + $0x8] sm:$0xf] %v1059
        %1132 = vst [vmem:[#allocation3 + $0xc] sm:$0xf] %v1060
        %1133 = vst [vmem:[#allocation3 + $0x1c] sm:$0xf] %v1061
        %1134 = vst [vmem:[#allocation3 + $0x20] sm:$0xf] %v1062
        %1135 = vst [vmem:[#allocation3 + $0x30] sm:$0xf] %v1063
        %1136 = vst [vmem:[#allocation3 + $0x34] sm:$0xf] %v1064
        %1137 = vst [vmem:[#allocation3 + $0x44] sm:$0xf] %v1065
        %1138 = vst [vmem:[#allocation3 + $0x48] sm:$0xf] %v1066
        %1139 = vst [vmem:[#allocation3 + $0x58] sm:$0xf] %v1067
        %1140 = vst [vmem:[#allocation3 + $0x5c] sm:$0xf] %v1068
        %1141 = vst [vmem:[#allocation3 + $0x6c] sm:$0xf] %v1069
        %1142 = vst [vmem:[#allocation3 + $0x70] sm:$0xf] %v1070
        %1143 = vst [vmem:[#allocation3 + $0x80] sm:$0xf] %v1071
        %1144 = vst [vmem:[#allocation3 + $0x84] sm:$0xf] %v1072
        %1145 = vst [vmem:[#allocation3 + $0x94] sm:$0xf] %v1073
        %1146 = vst [vmem:[#allocation3 + $0x98] sm:$0xf] %v1074
        %1147 = vst [vmem:[#allocation3 + $0xa8] sm:$0xf] %v1075
        %1148 = vst [vmem:[#allocation3 + $0xac] sm:$0xf] %v1076
        %1149 = vst [vmem:[#allocation3 + $0xbc] sm:$0xf] %v1077
        %1150 = vst [vmem:[#allocation3 + $0xc0] sm:$0xf] %v1078
        %1151 = vst [vmem:[#allocation3 + $0xd0] sm:$0xf] %v1079
        %1152 = vst [vmem:[#allocation3 + $0xd4] sm:$0xf] %v1080
        %1153 = vst [vmem:[#allocation3 + $0xe4] sm:$0xf] %v1081
        %1154 = vst [vmem:[#allocation3 + $0xe8] sm:$0xf] %v1082
        %1155 = vst [vmem:[#allocation3 + $0xf8] sm:$0xf] %v1083
        %1156 = vst [vmem:[#allocation3 + $0xfc] sm:$0xf] %v1084
        %1157 = vst [vmem:[#allocation3 + $0x10c] sm:$0xf] %v1085
        %1158 = vst [vmem:[#allocation3 + $0x110] sm:$0xf] %v1086
        %1159 = vst [vmem:[#allocation3 + $0x120] sm:$0xf] %v1087
        %1160 = vst [vmem:[#allocation3 + $0x124] sm:$0xf] %v1088
        %1161 = vst [vmem:[#allocation3 + $0x134] sm:$0xf] %v1089
        %1162 = vst [vmem:[#allocation3 + $0x138] sm:$0xf] %v1090
        %1163 = vst [vmem:[#allocation3 + $0x148] sm:$0xf] %v1091
        %1164 = vst [vmem:[#allocation3 + $0x14c] sm:$0xf] %v1092
        %1165 = vst [vmem:[#allocation3 + $0x15c] sm:$0xf] %v1093
        %1166 = vst [vmem:[#allocation3 + $0x160] sm:$0xf] %v1094
        %p1167 = scmp.eq.s32.totalorder %s28, 0
        // Predicated region
        $region81: #{tpu_custom_call.1} parent=43 // pred_check
          %p1168 = pneg %p1167
        $region82: #{tpu_custom_call.1} parent=43 // pred_check_branch
          %1170 = sbr.rel (%p1168) target = $region84
        $region83: #{tpu_custom_call.1} parent=43 // pred_region
          %1171 = vst [vmem:[#allocation3 + $0x8] sm:$0xf] 0
          %1172 = vst [vmem:[#allocation3 + $0xc] sm:$0xf] 0
          %s1173 = scalar_lea.vmem [#allocation3], 340
          %1174 = vst [vmem:[%s1173 + $0x8] sm:$0xf] 0
          %1175 = vst [vmem:[%s1173 + $0xc] sm:$0xf] 0
        $region84: #{tpu_custom_call.1} parent=43 // pred_fallthru
          _
        %v1176 = vld [vmem:[#allocation3 + $0x4] sm:$0x8]
        %v1177 = vld [vmem:[#allocation3 + $0x8] sm:$0xf]
        %v1178 = vld [vmem:[#allocation3 + $0xc] sm:$0xf]
        %v1179 = vld [vmem:[#allocation3 + $0x18] sm:$0x8]
        %v1180 = vld [vmem:[#allocation3 + $0x1c] sm:$0xf]
        %v1181 = vld [vmem:[#allocation3 + $0x20] sm:$0xf]
        %v1182 = vld [vmem:[#allocation3 + $0x2c] sm:$0x8]
        %v1183 = vld [vmem:[#allocation3 + $0x30] sm:$0xf]
        %v1184 = vld [vmem:[#allocation3 + $0x34] sm:$0xf]
        %v1185 = vld [vmem:[#allocation3 + $0x40] sm:$0x8]
        %v1186 = vld [vmem:[#allocation3 + $0x44] sm:$0xf]
        %v1187 = vld [vmem:[#allocation3 + $0x48] sm:$0xf]
        %v1188 = vld [vmem:[#allocation3 + $0x54] sm:$0x8]
        %v1189 = vld [vmem:[#allocation3 + $0x58] sm:$0xf]
        %v1190 = vld [vmem:[#allocation3 + $0x5c] sm:$0xf]
        %v1191 = vld [vmem:[#allocation3 + $0x68] sm:$0x8]
        %v1192 = vld [vmem:[#allocation3 + $0x6c] sm:$0xf]
        %v1193 = vld [vmem:[#allocation3 + $0x70] sm:$0xf]
        %v1194 = vld [vmem:[#allocation3 + $0x7c] sm:$0x8]
        %v1195 = vld [vmem:[#allocation3 + $0x80] sm:$0xf]
        %v1196 = vld [vmem:[#allocation3 + $0x84] sm:$0xf]
        %v1197 = vld [vmem:[#allocation3 + $0x90] sm:$0x8]
        %v1198 = vld [vmem:[#allocation3 + $0x94] sm:$0xf]
        %v1199 = vld [vmem:[#allocation3 + $0x98] sm:$0xf]
        %v1200 = vld [vmem:[#allocation3 + $0xa4] sm:$0x8]
        %v1201 = vld [vmem:[#allocation3 + $0xa8] sm:$0xf]
        %v1202 = vld [vmem:[#allocation3 + $0xac] sm:$0xf]
        %v1203 = vld [vmem:[#allocation3 + $0xb8] sm:$0x8]
        %v1204 = vld [vmem:[#allocation3 + $0xbc] sm:$0xf]
        %v1205 = vld [vmem:[#allocation3 + $0xc0] sm:$0xf]
        %v1206 = vld [vmem:[#allocation3 + $0xcc] sm:$0x8]
        %v1207 = vld [vmem:[#allocation3 + $0xd0] sm:$0xf]
        %v1208 = vld [vmem:[#allocation3 + $0xd4] sm:$0xf]
        %v1209 = vld [vmem:[#allocation3 + $0xe0] sm:$0x8]
        %v1210 = vld [vmem:[#allocation3 + $0xe4] sm:$0xf]
        %v1211 = vld [vmem:[#allocation3 + $0xe8] sm:$0xf]
        %v1212 = vld [vmem:[#allocation3 + $0xf4] sm:$0x8]
        %v1213 = vld [vmem:[#allocation3 + $0xf8] sm:$0xf]
        %v1214 = vld [vmem:[#allocation3 + $0xfc] sm:$0xf]
        %v1215 = vld [vmem:[#allocation3 + $0x108] sm:$0x8]
        %v1216 = vld [vmem:[#allocation3 + $0x10c] sm:$0xf]
        %v1217 = vld [vmem:[#allocation3 + $0x110] sm:$0xf]
        %v1218 = vld [vmem:[#allocation3 + $0x11c] sm:$0x8]
        %v1219 = vld [vmem:[#allocation3 + $0x120] sm:$0xf]
        %v1220 = vld [vmem:[#allocation3 + $0x124] sm:$0xf]
        %v1221 = vld [vmem:[#allocation3 + $0x130] sm:$0x8]
        %v1222 = vld [vmem:[#allocation3 + $0x134] sm:$0xf]
        %v1223 = vld [vmem:[#allocation3 + $0x138] sm:$0xf]
        %v1224 = vld [vmem:[#allocation3 + $0x10] sm:$0x1]
        %v1225 = vld [vmem:[#allocation3 + $0x24] sm:$0x1]
        %v1226 = vld [vmem:[#allocation3 + $0x38] sm:$0x1]
        %v1227 = vld [vmem:[#allocation3 + $0x4c] sm:$0x1]
        %v1228 = vld [vmem:[#allocation3 + $0x60] sm:$0x1]
        %v1229 = vld [vmem:[#allocation3 + $0x74] sm:$0x1]
        %v1230 = vld [vmem:[#allocation3 + $0x88] sm:$0x1]
        %v1231 = vld [vmem:[#allocation3 + $0x9c] sm:$0x1]
        %v1232 = vld [vmem:[#allocation3 + $0xb0] sm:$0x1]
        %v1233 = vld [vmem:[#allocation3 + $0xc4] sm:$0x1]
        %v1234 = vld [vmem:[#allocation3 + $0xd8] sm:$0x1]
        %v1235 = vld [vmem:[#allocation3 + $0xec] sm:$0x1]
        %v1236 = vld [vmem:[#allocation3 + $0x100] sm:$0x1]
        %v1237 = vld [vmem:[#allocation3 + $0x114] sm:$0x1]
        %v1238 = vld [vmem:[#allocation3 + $0x128] sm:$0x1]
        %v1239 = vld [vmem:[#allocation3 + $0x13c] sm:$0x1]
        %s1240 = scalar_lea.vmem [#allocation3], 20
        %v1241 = vld [vmem:[%s1240 + $0x4] sm:$0x8]
        %v1242 = vld [vmem:[%s1240 + $0x8] sm:$0xf]
        %v1243 = vld [vmem:[%s1240 + $0xc] sm:$0xf]
        %v1244 = vld [vmem:[%s1240 + $0x18] sm:$0x8]
        %v1245 = vld [vmem:[%s1240 + $0x1c] sm:$0xf]
        %v1246 = vld [vmem:[%s1240 + $0x20] sm:$0xf]
        %v1247 = vld [vmem:[%s1240 + $0x2c] sm:$0x8]
        %v1248 = vld [vmem:[%s1240 + $0x30] sm:$0xf]
        %v1249 = vld [vmem:[%s1240 + $0x34] sm:$0xf]
        %v1250 = vld [vmem:[%s1240 + $0x40] sm:$0x8]
        %v1251 = vld [vmem:[%s1240 + $0x44] sm:$0xf]
        %v1252 = vld [vmem:[%s1240 + $0x48] sm:$0xf]
        %v1253 = vld [vmem:[%s1240 + $0x54] sm:$0x8]
        %v1254 = vld [vmem:[%s1240 + $0x58] sm:$0xf]
        %v1255 = vld [vmem:[%s1240 + $0x5c] sm:$0xf]
        %v1256 = vld [vmem:[%s1240 + $0x68] sm:$0x8]
        %v1257 = vld [vmem:[%s1240 + $0x6c] sm:$0xf]
        %v1258 = vld [vmem:[%s1240 + $0x70] sm:$0xf]
        %v1259 = vld [vmem:[%s1240 + $0x7c] sm:$0x8]
        %v1260 = vld [vmem:[%s1240 + $0x80] sm:$0xf]
        %v1261 = vld [vmem:[%s1240 + $0x84] sm:$0xf]
        %v1262 = vld [vmem:[%s1240 + $0x90] sm:$0x8]
        %v1263 = vld [vmem:[%s1240 + $0x94] sm:$0xf]
        %v1264 = vld [vmem:[%s1240 + $0x98] sm:$0xf]
        %v1265 = vld [vmem:[%s1240 + $0xa4] sm:$0x8]
        %v1266 = vld [vmem:[%s1240 + $0xa8] sm:$0xf]
        %v1267 = vld [vmem:[%s1240 + $0xac] sm:$0xf]
        %v1268 = vld [vmem:[%s1240 + $0xb8] sm:$0x8]
        %v1269 = vld [vmem:[%s1240 + $0xbc] sm:$0xf]
        %v1270 = vld [vmem:[%s1240 + $0xc0] sm:$0xf]
        %v1271 = vld [vmem:[%s1240 + $0xcc] sm:$0x8]
        %v1272 = vld [vmem:[%s1240 + $0xd0] sm:$0xf]
        %v1273 = vld [vmem:[%s1240 + $0xd4] sm:$0xf]
        %v1274 = vld [vmem:[%s1240 + $0xe0] sm:$0x8]
        %v1275 = vld [vmem:[%s1240 + $0xe4] sm:$0xf]
        %v1276 = vld [vmem:[%s1240 + $0xe8] sm:$0xf]
        %v1277 = vld [vmem:[%s1240 + $0xf4] sm:$0x8]
        %v1278 = vld [vmem:[%s1240 + $0xf8] sm:$0xf]
        %v1279 = vld [vmem:[%s1240 + $0xfc] sm:$0xf]
        %v1280 = vld [vmem:[%s1240 + $0x108] sm:$0x8]
        %v1281 = vld [vmem:[%s1240 + $0x10c] sm:$0xf]
        %v1282 = vld [vmem:[%s1240 + $0x110] sm:$0xf]
        %v1283 = vld [vmem:[%s1240 + $0x11c] sm:$0x8]
        %v1284 = vld [vmem:[%s1240 + $0x120] sm:$0xf]
        %v1285 = vld [vmem:[%s1240 + $0x124] sm:$0xf]
        %v1286 = vld [vmem:[%s1240 + $0x130] sm:$0x8]
        %v1287 = vld [vmem:[%s1240 + $0x134] sm:$0xf]
        %v1288 = vld [vmem:[%s1240 + $0x138] sm:$0xf]
        %v1289 = vld [vmem:[%s1240 + $0x10] sm:$0x1]
        %v1290 = vld [vmem:[%s1240 + $0x24] sm:$0x1]
        %v1291 = vld [vmem:[%s1240 + $0x38] sm:$0x1]
        %v1292 = vld [vmem:[%s1240 + $0x4c] sm:$0x1]
        %v1293 = vld [vmem:[%s1240 + $0x60] sm:$0x1]
        %v1294 = vld [vmem:[%s1240 + $0x74] sm:$0x1]
        %v1295 = vld [vmem:[%s1240 + $0x88] sm:$0x1]
        %v1296 = vld [vmem:[%s1240 + $0x9c] sm:$0x1]
        %v1297 = vld [vmem:[%s1240 + $0xb0] sm:$0x1]
        %v1298 = vld [vmem:[%s1240 + $0xc4] sm:$0x1]
        %v1299 = vld [vmem:[%s1240 + $0xd8] sm:$0x1]
        %v1300 = vld [vmem:[%s1240 + $0xec] sm:$0x1]
        %v1301 = vld [vmem:[%s1240 + $0x100] sm:$0x1]
        %v1302 = vld [vmem:[%s1240 + $0x114] sm:$0x1]
        %v1303 = vld [vmem:[%s1240 + $0x128] sm:$0x1]
        %v1304 = vld [vmem:[%s1240 + $0x13c] sm:$0x1]
        %s1305 = scalar_lea.vmem [#allocation3], 40
        %v1306 = vld [vmem:[%s1305 + $0x4] sm:$0x8]
        %v1307 = vld [vmem:[%s1305 + $0x8] sm:$0xf]
        %v1308 = vld [vmem:[%s1305 + $0xc] sm:$0xf]
        %v1309 = vld [vmem:[%s1305 + $0x18] sm:$0x8]
        %v1310 = vld [vmem:[%s1305 + $0x1c] sm:$0xf]
        %v1311 = vld [vmem:[%s1305 + $0x20] sm:$0xf]
        %v1312 = vld [vmem:[%s1305 + $0x2c] sm:$0x8]
        %v1313 = vld [vmem:[%s1305 + $0x30] sm:$0xf]
        %v1314 = vld [vmem:[%s1305 + $0x34] sm:$0xf]
        %v1315 = vld [vmem:[%s1305 + $0x40] sm:$0x8]
        %v1316 = vld [vmem:[%s1305 + $0x44] sm:$0xf]
        %v1317 = vld [vmem:[%s1305 + $0x48] sm:$0xf]
        %v1318 = vld [vmem:[%s1305 + $0x54] sm:$0x8]
        %v1319 = vld [vmem:[%s1305 + $0x58] sm:$0xf]
        %v1320 = vld [vmem:[%s1305 + $0x5c] sm:$0xf]
        %v1321 = vld [vmem:[%s1305 + $0x68] sm:$0x8]
        %v1322 = vld [vmem:[%s1305 + $0x6c] sm:$0xf]
        %v1323 = vld [vmem:[%s1305 + $0x70] sm:$0xf]
        %v1324 = vld [vmem:[%s1305 + $0x7c] sm:$0x8]
        %v1325 = vld [vmem:[%s1305 + $0x80] sm:$0xf]
        %v1326 = vld [vmem:[%s1305 + $0x84] sm:$0xf]
        %v1327 = vld [vmem:[%s1305 + $0x90] sm:$0x8]
        %v1328 = vld [vmem:[%s1305 + $0x94] sm:$0xf]
        %v1329 = vld [vmem:[%s1305 + $0x98] sm:$0xf]
        %v1330 = vld [vmem:[%s1305 + $0xa4] sm:$0x8]
        %v1331 = vld [vmem:[%s1305 + $0xa8] sm:$0xf]
        %v1332 = vld [vmem:[%s1305 + $0xac] sm:$0xf]
        %v1333 = vld [vmem:[%s1305 + $0xb8] sm:$0x8]
        %v1334 = vld [vmem:[%s1305 + $0xbc] sm:$0xf]
        %v1335 = vld [vmem:[%s1305 + $0xc0] sm:$0xf]
        %v1336 = vld [vmem:[%s1305 + $0xcc] sm:$0x8]
        %v1337 = vld [vmem:[%s1305 + $0xd0] sm:$0xf]
        %v1338 = vld [vmem:[%s1305 + $0xd4] sm:$0xf]
        %v1339 = vld [vmem:[%s1305 + $0xe0] sm:$0x8]
        %v1340 = vld [vmem:[%s1305 + $0xe4] sm:$0xf]
        %v1341 = vld [vmem:[%s1305 + $0xe8] sm:$0xf]
        %v1342 = vld [vmem:[%s1305 + $0xf4] sm:$0x8]
        %v1343 = vld [vmem:[%s1305 + $0xf8] sm:$0xf]
        %v1344 = vld [vmem:[%s1305 + $0xfc] sm:$0xf]
        %v1345 = vld [vmem:[%s1305 + $0x108] sm:$0x8]
        %v1346 = vld [vmem:[%s1305 + $0x10c] sm:$0xf]
        %v1347 = vld [vmem:[%s1305 + $0x110] sm:$0xf]
        %v1348 = vld [vmem:[%s1305 + $0x11c] sm:$0x8]
        %v1349 = vld [vmem:[%s1305 + $0x120] sm:$0xf]
        %v1350 = vld [vmem:[%s1305 + $0x124] sm:$0xf]
        %v1351 = vld [vmem:[%s1305 + $0x130] sm:$0x8]
        %v1352 = vld [vmem:[%s1305 + $0x134] sm:$0xf]
        %v1353 = vld [vmem:[%s1305 + $0x138] sm:$0xf]
        %v1354 = vld [vmem:[%s1305 + $0x10] sm:$0x1]
        %v1355 = vld [vmem:[%s1305 + $0x24] sm:$0x1]
        %v1356 = vld [vmem:[%s1305 + $0x38] sm:$0x1]
        %v1357 = vld [vmem:[%s1305 + $0x4c] sm:$0x1]
        %v1358 = vld [vmem:[%s1305 + $0x60] sm:$0x1]
        %v1359 = vld [vmem:[%s1305 + $0x74] sm:$0x1]
        %v1360 = vld [vmem:[%s1305 + $0x88] sm:$0x1]
        %v1361 = vld [vmem:[%s1305 + $0x9c] sm:$0x1]
        %v1362 = vld [vmem:[%s1305 + $0xb0] sm:$0x1]
        %v1363 = vld [vmem:[%s1305 + $0xc4] sm:$0x1]
        %v1364 = vld [vmem:[%s1305 + $0xd8] sm:$0x1]
        %v1365 = vld [vmem:[%s1305 + $0xec] sm:$0x1]
        %v1366 = vld [vmem:[%s1305 + $0x100] sm:$0x1]
        %v1367 = vld [vmem:[%s1305 + $0x114] sm:$0x1]
        %v1368 = vld [vmem:[%s1305 + $0x128] sm:$0x1]
        %v1369 = vld [vmem:[%s1305 + $0x13c] sm:$0x1]
        %v1418 = vunpack.c.l.b16 %v1176
        %v1419 = vunpack.c.l.b16 %v1177
        %v1420 = vunpack.c.l.b16 %v1178
        %v1421 = vunpack.c.l.b16 %v1179
        %v1422 = vunpack.c.l.b16 %v1180
        %v1423 = vunpack.c.l.b16 %v1181
        %v1424 = vunpack.c.l.b16 %v1182
        %v1425 = vunpack.c.l.b16 %v1183
        %v1426 = vunpack.c.l.b16 %v1184
        %v1427 = vunpack.c.l.b16 %v1185
        %v1428 = vunpack.c.l.b16 %v1186
        %v1429 = vunpack.c.l.b16 %v1187
        %v1430 = vunpack.c.l.b16 %v1188
        %v1431 = vunpack.c.l.b16 %v1189
        %v1432 = vunpack.c.l.b16 %v1190
        %v1433 = vunpack.c.l.b16 %v1191
        %v1434 = vunpack.c.l.b16 %v1192
        %v1435 = vunpack.c.l.b16 %v1193
        %v1436 = vunpack.c.l.b16 %v1194
        %v1437 = vunpack.c.l.b16 %v1195
        %v1438 = vunpack.c.l.b16 %v1196
        %v1439 = vunpack.c.l.b16 %v1197
        %v1440 = vunpack.c.l.b16 %v1198
        %v1441 = vunpack.c.l.b16 %v1199
        %v1442 = vunpack.c.l.b16 %v1200
        %v1443 = vunpack.c.l.b16 %v1201
        %v1444 = vunpack.c.l.b16 %v1202
        %v1445 = vunpack.c.l.b16 %v1203
        %v1446 = vunpack.c.l.b16 %v1204
        %v1447 = vunpack.c.l.b16 %v1205
        %v1448 = vunpack.c.l.b16 %v1206
        %v1449 = vunpack.c.l.b16 %v1207
        %v1450 = vunpack.c.l.b16 %v1208
        %v1451 = vunpack.c.l.b16 %v1209
        %v1452 = vunpack.c.l.b16 %v1210
        %v1453 = vunpack.c.l.b16 %v1211
        %v1454 = vunpack.c.l.b16 %v1212
        %v1455 = vunpack.c.l.b16 %v1213
        %v1456 = vunpack.c.l.b16 %v1214
        %v1457 = vunpack.c.l.b16 %v1215
        %v1458 = vunpack.c.l.b16 %v1216
        %v1459 = vunpack.c.l.b16 %v1217
        %v1460 = vunpack.c.l.b16 %v1218
        %v1461 = vunpack.c.l.b16 %v1219
        %v1462 = vunpack.c.l.b16 %v1220
        %v1463 = vunpack.c.l.b16 %v1221
        %v1464 = vunpack.c.l.b16 %v1222
        %v1465 = vunpack.c.l.b16 %v1223
        %v1466 = vpack.c.b16 %v1419, %v1418
        %v1467 = vpack.c.b16 %v1420, %v1420
        %v1468 = vpack.c.b16 %v1422, %v1421
        %v1469 = vpack.c.b16 %v1423, %v1423
        %v1470 = vpack.c.b16 %v1425, %v1424
        %v1471 = vpack.c.b16 %v1426, %v1426
        %v1472 = vpack.c.b16 %v1428, %v1427
        %v1473 = vpack.c.b16 %v1429, %v1429
        %v1474 = vpack.c.b16 %v1431, %v1430
        %v1475 = vpack.c.b16 %v1432, %v1432
        %v1476 = vpack.c.b16 %v1434, %v1433
        %v1477 = vpack.c.b16 %v1435, %v1435
        %v1478 = vpack.c.b16 %v1437, %v1436
        %v1479 = vpack.c.b16 %v1438, %v1438
        %v1480 = vpack.c.b16 %v1440, %v1439
        %v1481 = vpack.c.b16 %v1441, %v1441
        %v1482 = vpack.c.b16 %v1443, %v1442
        %v1483 = vpack.c.b16 %v1444, %v1444
        %v1484 = vpack.c.b16 %v1446, %v1445
        %v1485 = vpack.c.b16 %v1447, %v1447
        %v1486 = vpack.c.b16 %v1449, %v1448
        %v1487 = vpack.c.b16 %v1450, %v1450
        %v1488 = vpack.c.b16 %v1452, %v1451
        %v1489 = vpack.c.b16 %v1453, %v1453
        %v1490 = vpack.c.b16 %v1455, %v1454
        %v1491 = vpack.c.b16 %v1456, %v1456
        %v1492 = vpack.c.b16 %v1458, %v1457
        %v1493 = vpack.c.b16 %v1459, %v1459
        %v1494 = vpack.c.b16 %v1461, %v1460
        %v1495 = vpack.c.b16 %v1462, %v1462
        %v1496 = vpack.c.b16 %v1464, %v1463
        %v1497 = vpack.c.b16 %v1465, %v1465
        %v1498 = vpack.c.b16 %v1420, %v1419
        %v1499 = vpack.c.b16 %v1423, %v1422
        %v1500 = vpack.c.b16 %v1426, %v1425
        %v1501 = vpack.c.b16 %v1429, %v1428
        %v1502 = vpack.c.b16 %v1432, %v1431
        %v1503 = vpack.c.b16 %v1435, %v1434
        %v1504 = vpack.c.b16 %v1438, %v1437
        %v1505 = vpack.c.b16 %v1441, %v1440
        %v1506 = vpack.c.b16 %v1444, %v1443
        %v1507 = vpack.c.b16 %v1447, %v1446
        %v1508 = vpack.c.b16 %v1450, %v1449
        %v1509 = vpack.c.b16 %v1453, %v1452
        %v1510 = vpack.c.b16 %v1456, %v1455
        %v1511 = vpack.c.b16 %v1459, %v1458
        %v1512 = vpack.c.b16 %v1462, %v1461
        %v1513 = vpack.c.b16 %v1465, %v1464
        %v1515 = vshrl.u32 %v1498, 16
        %v1517 = vrot.slane %v1515, 4
        %v1518 = vshll.u32 %v1498, 16
        %v1520 = vrot.slane %v1518, 5
        %v1521 = vor.u32 %v1517, %v1520
        %v1523 = vshrl.u32 %v1499, 16
        %v1525 = vrot.slane %v1523, 4
        %v1526 = vshll.u32 %v1499, 16
        %v1528 = vrot.slane %v1526, 5
        %v1529 = vor.u32 %v1525, %v1528
        %v1531 = vshrl.u32 %v1500, 16
        %v1533 = vrot.slane %v1531, 4
        %v1534 = vshll.u32 %v1500, 16
        %v1536 = vrot.slane %v1534, 5
        %v1537 = vor.u32 %v1533, %v1536
        %v1539 = vshrl.u32 %v1501, 16
        %v1541 = vrot.slane %v1539, 4
        %v1542 = vshll.u32 %v1501, 16
        %v1544 = vrot.slane %v1542, 5
        %v1545 = vor.u32 %v1541, %v1544
        %v1547 = vshrl.u32 %v1502, 16
        %v1549 = vrot.slane %v1547, 4
        %v1550 = vshll.u32 %v1502, 16
        %v1552 = vrot.slane %v1550, 5
        %v1553 = vor.u32 %v1549, %v1552
        %v1555 = vshrl.u32 %v1503, 16
        %v1557 = vrot.slane %v1555, 4
        %v1558 = vshll.u32 %v1503, 16
        %v1560 = vrot.slane %v1558, 5
        %v1561 = vor.u32 %v1557, %v1560
        %v1563 = vshrl.u32 %v1504, 16
        %v1565 = vrot.slane %v1563, 4
        %v1566 = vshll.u32 %v1504, 16
        %v1568 = vrot.slane %v1566, 5
        %v1569 = vor.u32 %v1565, %v1568
        %v1571 = vshrl.u32 %v1505, 16
        %v1573 = vrot.slane %v1571, 4
        %v1574 = vshll.u32 %v1505, 16
        %v1576 = vrot.slane %v1574, 5
        %v1577 = vor.u32 %v1573, %v1576
        %v1579 = vshrl.u32 %v1506, 16
        %v1581 = vrot.slane %v1579, 4
        %v1582 = vshll.u32 %v1506, 16
        %v1584 = vrot.slane %v1582, 5
        %v1585 = vor.u32 %v1581, %v1584
        %v1587 = vshrl.u32 %v1507, 16
        %v1589 = vrot.slane %v1587, 4
        %v1590 = vshll.u32 %v1507, 16
        %v1592 = vrot.slane %v1590, 5
        %v1593 = vor.u32 %v1589, %v1592
        %v1595 = vshrl.u32 %v1508, 16
        %v1597 = vrot.slane %v1595, 4
        %v1598 = vshll.u32 %v1508, 16
        %v1600 = vrot.slane %v1598, 5
        %v1601 = vor.u32 %v1597, %v1600
        %v1603 = vshrl.u32 %v1509, 16
        %v1605 = vrot.slane %v1603, 4
        %v1606 = vshll.u32 %v1509, 16
        %v1608 = vrot.slane %v1606, 5
        %v1609 = vor.u32 %v1605, %v1608
        %v1611 = vshrl.u32 %v1510, 16
        %v1613 = vrot.slane %v1611, 4
        %v1614 = vshll.u32 %v1510, 16
        %v1616 = vrot.slane %v1614, 5
        %v1617 = vor.u32 %v1613, %v1616
        %v1619 = vshrl.u32 %v1511, 16
        %v1621 = vrot.slane %v1619, 4
        %v1622 = vshll.u32 %v1511, 16
        %v1624 = vrot.slane %v1622, 5
        %v1625 = vor.u32 %v1621, %v1624
        %v1627 = vshrl.u32 %v1512, 16
        %v1629 = vrot.slane %v1627, 4
        %v1630 = vshll.u32 %v1512, 16
        %v1632 = vrot.slane %v1630, 5
        %v1633 = vor.u32 %v1629, %v1632
        %v1635 = vshrl.u32 %v1513, 16
        %v1637 = vrot.slane %v1635, 4
        %v1638 = vshll.u32 %v1513, 16
        %v1640 = vrot.slane %v1638, 5
        %v1641 = vor.u32 %v1637, %v1640
        %v1658 = vunpack.c.l.b16 %v1224
        %v1659 = vunpack.c.l.b16 %v1225
        %v1660 = vunpack.c.l.b16 %v1226
        %v1661 = vunpack.c.l.b16 %v1227
        %v1662 = vunpack.c.l.b16 %v1228
        %v1663 = vunpack.c.l.b16 %v1229
        %v1664 = vunpack.c.l.b16 %v1230
        %v1665 = vunpack.c.l.b16 %v1231
        %v1666 = vunpack.c.l.b16 %v1232
        %v1667 = vunpack.c.l.b16 %v1233
        %v1668 = vunpack.c.l.b16 %v1234
        %v1669 = vunpack.c.l.b16 %v1235
        %v1670 = vunpack.c.l.b16 %v1236
        %v1671 = vunpack.c.l.b16 %v1237
        %v1672 = vunpack.c.l.b16 %v1238
        %v1673 = vunpack.c.l.b16 %v1239
        %v1674 = vpack.c.b16 %v1658, %v1658
        %v1675 = vpack.c.b16 %v1659, %v1659
        %v1676 = vpack.c.b16 %v1660, %v1660
        %v1677 = vpack.c.b16 %v1661, %v1661
        %v1678 = vpack.c.b16 %v1662, %v1662
        %v1679 = vpack.c.b16 %v1663, %v1663
        %v1680 = vpack.c.b16 %v1664, %v1664
        %v1681 = vpack.c.b16 %v1665, %v1665
        %v1682 = vpack.c.b16 %v1666, %v1666
        %v1683 = vpack.c.b16 %v1667, %v1667
        %v1684 = vpack.c.b16 %v1668, %v1668
        %v1685 = vpack.c.b16 %v1669, %v1669
        %v1686 = vpack.c.b16 %v1670, %v1670
        %v1687 = vpack.c.b16 %v1671, %v1671
        %v1688 = vpack.c.b16 %v1672, %v1672
        %v1689 = vpack.c.b16 %v1673, %v1673
        %vm1690 = vcmask 1042432
        %v1691 = vrot.slane %v1498, 5
        %v1692 = vrot.slane %v1674, 5
        %v1693 = vsel %vm1690, %v1691, %v1692
        %v1694 = vrot.slane %v1499, 5
        %v1695 = vrot.slane %v1675, 5
        %v1696 = vsel %vm1690, %v1694, %v1695
        %v1697 = vrot.slane %v1500, 5
        %v1698 = vrot.slane %v1676, 5
        %v1699 = vsel %vm1690, %v1697, %v1698
        %v1700 = vrot.slane %v1501, 5
        %v1701 = vrot.slane %v1677, 5
        %v1702 = vsel %vm1690, %v1700, %v1701
        %v1703 = vrot.slane %v1502, 5
        %v1704 = vrot.slane %v1678, 5
        %v1705 = vsel %vm1690, %v1703, %v1704
        %v1706 = vrot.slane %v1503, 5
        %v1707 = vrot.slane %v1679, 5
        %v1708 = vsel %vm1690, %v1706, %v1707
        %v1709 = vrot.slane %v1504, 5
        %v1710 = vrot.slane %v1680, 5
        %v1711 = vsel %vm1690, %v1709, %v1710
        %v1712 = vrot.slane %v1505, 5
        %v1713 = vrot.slane %v1681, 5
        %v1714 = vsel %vm1690, %v1712, %v1713
        %v1715 = vrot.slane %v1506, 5
        %v1716 = vrot.slane %v1682, 5
        %v1717 = vsel %vm1690, %v1715, %v1716
        %v1718 = vrot.slane %v1507, 5
        %v1719 = vrot.slane %v1683, 5
        %v1720 = vsel %vm1690, %v1718, %v1719
        %v1721 = vrot.slane %v1508, 5
        %v1722 = vrot.slane %v1684, 5
        %v1723 = vsel %vm1690, %v1721, %v1722
        %v1724 = vrot.slane %v1509, 5
        %v1725 = vrot.slane %v1685, 5
        %v1726 = vsel %vm1690, %v1724, %v1725
        %v1727 = vrot.slane %v1510, 5
        %v1728 = vrot.slane %v1686, 5
        %v1729 = vsel %vm1690, %v1727, %v1728
        %v1730 = vrot.slane %v1511, 5
        %v1731 = vrot.slane %v1687, 5
        %v1732 = vsel %vm1690, %v1730, %v1731
        %v1733 = vrot.slane %v1512, 5
        %v1734 = vrot.slane %v1688, 5
        %v1735 = vsel %vm1690, %v1733, %v1734
        %v1736 = vrot.slane %v1513, 5
        %v1737 = vrot.slane %v1689, 5
        %v1738 = vsel %vm1690, %v1736, %v1737
        %v1787 = vunpack.c.l.b16 %v1241
        %v1788 = vunpack.c.l.b16 %v1242
        %v1789 = vunpack.c.l.b16 %v1243
        %v1790 = vunpack.c.l.b16 %v1244
        %v1791 = vunpack.c.l.b16 %v1245
        %v1792 = vunpack.c.l.b16 %v1246
        %v1793 = vunpack.c.l.b16 %v1247
        %v1794 = vunpack.c.l.b16 %v1248
        %v1795 = vunpack.c.l.b16 %v1249
        %v1796 = vunpack.c.l.b16 %v1250
        %v1797 = vunpack.c.l.b16 %v1251
        %v1798 = vunpack.c.l.b16 %v1252
        %v1799 = vunpack.c.l.b16 %v1253
        %v1800 = vunpack.c.l.b16 %v1254
        %v1801 = vunpack.c.l.b16 %v1255
        %v1802 = vunpack.c.l.b16 %v1256
        %v1803 = vunpack.c.l.b16 %v1257
        %v1804 = vunpack.c.l.b16 %v1258
        %v1805 = vunpack.c.l.b16 %v1259
        %v1806 = vunpack.c.l.b16 %v1260
        %v1807 = vunpack.c.l.b16 %v1261
        %v1808 = vunpack.c.l.b16 %v1262
        %v1809 = vunpack.c.l.b16 %v1263
        %v1810 = vunpack.c.l.b16 %v1264
        %v1811 = vunpack.c.l.b16 %v1265
        %v1812 = vunpack.c.l.b16 %v1266
        %v1813 = vunpack.c.l.b16 %v1267
        %v1814 = vunpack.c.l.b16 %v1268
        %v1815 = vunpack.c.l.b16 %v1269
        %v1816 = vunpack.c.l.b16 %v1270
        %v1817 = vunpack.c.l.b16 %v1271
        %v1818 = vunpack.c.l.b16 %v1272
        %v1819 = vunpack.c.l.b16 %v1273
        %v1820 = vunpack.c.l.b16 %v1274
        %v1821 = vunpack.c.l.b16 %v1275
        %v1822 = vunpack.c.l.b16 %v1276
        %v1823 = vunpack.c.l.b16 %v1277
        %v1824 = vunpack.c.l.b16 %v1278
        %v1825 = vunpack.c.l.b16 %v1279
        %v1826 = vunpack.c.l.b16 %v1280
        %v1827 = vunpack.c.l.b16 %v1281
        %v1828 = vunpack.c.l.b16 %v1282
        %v1829 = vunpack.c.l.b16 %v1283
        %v1830 = vunpack.c.l.b16 %v1284
        %v1831 = vunpack.c.l.b16 %v1285
        %v1832 = vunpack.c.l.b16 %v1286
        %v1833 = vunpack.c.l.b16 %v1287
        %v1834 = vunpack.c.l.b16 %v1288
        %v1835 = vpack.c.b16 %v1788, %v1787
        %v1836 = vpack.c.b16 %v1789, %v1789
        %v1837 = vpack.c.b16 %v1791, %v1790
        %v1838 = vpack.c.b16 %v1792, %v1792
        %v1839 = vpack.c.b16 %v1794, %v1793
        %v1840 = vpack.c.b16 %v1795, %v1795
        %v1841 = vpack.c.b16 %v1797, %v1796
        %v1842 = vpack.c.b16 %v1798, %v1798
        %v1843 = vpack.c.b16 %v1800, %v1799
        %v1844 = vpack.c.b16 %v1801, %v1801
        %v1845 = vpack.c.b16 %v1803, %v1802
        %v1846 = vpack.c.b16 %v1804, %v1804
        %v1847 = vpack.c.b16 %v1806, %v1805
        %v1848 = vpack.c.b16 %v1807, %v1807
        %v1849 = vpack.c.b16 %v1809, %v1808
        %v1850 = vpack.c.b16 %v1810, %v1810
        %v1851 = vpack.c.b16 %v1812, %v1811
        %v1852 = vpack.c.b16 %v1813, %v1813
        %v1853 = vpack.c.b16 %v1815, %v1814
        %v1854 = vpack.c.b16 %v1816, %v1816
        %v1855 = vpack.c.b16 %v1818, %v1817
        %v1856 = vpack.c.b16 %v1819, %v1819
        %v1857 = vpack.c.b16 %v1821, %v1820
        %v1858 = vpack.c.b16 %v1822, %v1822
        %v1859 = vpack.c.b16 %v1824, %v1823
        %v1860 = vpack.c.b16 %v1825, %v1825
        %v1861 = vpack.c.b16 %v1827, %v1826
        %v1862 = vpack.c.b16 %v1828, %v1828
        %v1863 = vpack.c.b16 %v1830, %v1829
        %v1864 = vpack.c.b16 %v1831, %v1831
        %v1865 = vpack.c.b16 %v1833, %v1832
        %v1866 = vpack.c.b16 %v1834, %v1834
        %v1867 = vpack.c.b16 %v1789, %v1788
        %v1868 = vpack.c.b16 %v1792, %v1791
        %v1869 = vpack.c.b16 %v1795, %v1794
        %v1870 = vpack.c.b16 %v1798, %v1797
        %v1871 = vpack.c.b16 %v1801, %v1800
        %v1872 = vpack.c.b16 %v1804, %v1803
        %v1873 = vpack.c.b16 %v1807, %v1806
        %v1874 = vpack.c.b16 %v1810, %v1809
        %v1875 = vpack.c.b16 %v1813, %v1812
        %v1876 = vpack.c.b16 %v1816, %v1815
        %v1877 = vpack.c.b16 %v1819, %v1818
        %v1878 = vpack.c.b16 %v1822, %v1821
        %v1879 = vpack.c.b16 %v1825, %v1824
        %v1880 = vpack.c.b16 %v1828, %v1827
        %v1881 = vpack.c.b16 %v1831, %v1830
        %v1882 = vpack.c.b16 %v1834, %v1833
        %v1884 = vshrl.u32 %v1867, 16
        %v1886 = vrot.slane %v1884, 4
        %v1887 = vshll.u32 %v1867, 16
        %v1889 = vrot.slane %v1887, 5
        %v1890 = vor.u32 %v1886, %v1889
        %v1892 = vshrl.u32 %v1868, 16
        %v1894 = vrot.slane %v1892, 4
        %v1895 = vshll.u32 %v1868, 16
        %v1897 = vrot.slane %v1895, 5
        %v1898 = vor.u32 %v1894, %v1897
        %v1900 = vshrl.u32 %v1869, 16
        %v1902 = vrot.slane %v1900, 4
        %v1903 = vshll.u32 %v1869, 16
        %v1905 = vrot.slane %v1903, 5
        %v1906 = vor.u32 %v1902, %v1905
        %v1908 = vshrl.u32 %v1870, 16
        %v1910 = vrot.slane %v1908, 4
        %v1911 = vshll.u32 %v1870, 16
        %v1913 = vrot.slane %v1911, 5
        %v1914 = vor.u32 %v1910, %v1913
        %v1916 = vshrl.u32 %v1871, 16
        %v1918 = vrot.slane %v1916, 4
        %v1919 = vshll.u32 %v1871, 16
        %v1921 = vrot.slane %v1919, 5
        %v1922 = vor.u32 %v1918, %v1921
        %v1924 = vshrl.u32 %v1872, 16
        %v1926 = vrot.slane %v1924, 4
        %v1927 = vshll.u32 %v1872, 16
        %v1929 = vrot.slane %v1927, 5
        %v1930 = vor.u32 %v1926, %v1929
        %v1932 = vshrl.u32 %v1873, 16
        %v1934 = vrot.slane %v1932, 4
        %v1935 = vshll.u32 %v1873, 16
        %v1937 = vrot.slane %v1935, 5
        %v1938 = vor.u32 %v1934, %v1937
        %v1940 = vshrl.u32 %v1874, 16
        %v1942 = vrot.slane %v1940, 4
        %v1943 = vshll.u32 %v1874, 16
        %v1945 = vrot.slane %v1943, 5
        %v1946 = vor.u32 %v1942, %v1945
        %v1948 = vshrl.u32 %v1875, 16
        %v1950 = vrot.slane %v1948, 4
        %v1951 = vshll.u32 %v1875, 16
        %v1953 = vrot.slane %v1951, 5
        %v1954 = vor.u32 %v1950, %v1953
        %v1956 = vshrl.u32 %v1876, 16
        %v1958 = vrot.slane %v1956, 4
        %v1959 = vshll.u32 %v1876, 16
        %v1961 = vrot.slane %v1959, 5
        %v1962 = vor.u32 %v1958, %v1961
        %v1964 = vshrl.u32 %v1877, 16
        %v1966 = vrot.slane %v1964, 4
        %v1967 = vshll.u32 %v1877, 16
        %v1969 = vrot.slane %v1967, 5
        %v1970 = vor.u32 %v1966, %v1969
        %v1972 = vshrl.u32 %v1878, 16
        %v1974 = vrot.slane %v1972, 4
        %v1975 = vshll.u32 %v1878, 16
        %v1977 = vrot.slane %v1975, 5
        %v1978 = vor.u32 %v1974, %v1977
        %v1980 = vshrl.u32 %v1879, 16
        %v1982 = vrot.slane %v1980, 4
        %v1983 = vshll.u32 %v1879, 16
        %v1985 = vrot.slane %v1983, 5
        %v1986 = vor.u32 %v1982, %v1985
        %v1988 = vshrl.u32 %v1880, 16
        %v1990 = vrot.slane %v1988, 4
        %v1991 = vshll.u32 %v1880, 16
        %v1993 = vrot.slane %v1991, 5
        %v1994 = vor.u32 %v1990, %v1993
        %v1996 = vshrl.u32 %v1881, 16
        %v1998 = vrot.slane %v1996, 4
        %v1999 = vshll.u32 %v1881, 16
        %v2001 = vrot.slane %v1999, 5
        %v2002 = vor.u32 %v1998, %v2001
        %v2004 = vshrl.u32 %v1882, 16
        %v2006 = vrot.slane %v2004, 4
        %v2007 = vshll.u32 %v1882, 16
        %v2009 = vrot.slane %v2007, 5
        %v2010 = vor.u32 %v2006, %v2009
        %v2027 = vunpack.c.l.b16 %v1289
        %v2028 = vunpack.c.l.b16 %v1290
        %v2029 = vunpack.c.l.b16 %v1291
        %v2030 = vunpack.c.l.b16 %v1292
        %v2031 = vunpack.c.l.b16 %v1293
        %v2032 = vunpack.c.l.b16 %v1294
        %v2033 = vunpack.c.l.b16 %v1295
        %v2034 = vunpack.c.l.b16 %v1296
        %v2035 = vunpack.c.l.b16 %v1297
        %v2036 = vunpack.c.l.b16 %v1298
        %v2037 = vunpack.c.l.b16 %v1299
        %v2038 = vunpack.c.l.b16 %v1300
        %v2039 = vunpack.c.l.b16 %v1301
        %v2040 = vunpack.c.l.b16 %v1302
        %v2041 = vunpack.c.l.b16 %v1303
        %v2042 = vunpack.c.l.b16 %v1304
        %v2043 = vpack.c.b16 %v2027, %v2027
        %v2044 = vpack.c.b16 %v2028, %v2028
        %v2045 = vpack.c.b16 %v2029, %v2029
        %v2046 = vpack.c.b16 %v2030, %v2030
        %v2047 = vpack.c.b16 %v2031, %v2031
        %v2048 = vpack.c.b16 %v2032, %v2032
        %v2049 = vpack.c.b16 %v2033, %v2033
        %v2050 = vpack.c.b16 %v2034, %v2034
        %v2051 = vpack.c.b16 %v2035, %v2035
        %v2052 = vpack.c.b16 %v2036, %v2036
        %v2053 = vpack.c.b16 %v2037, %v2037
        %v2054 = vpack.c.b16 %v2038, %v2038
        %v2055 = vpack.c.b16 %v2039, %v2039
        %v2056 = vpack.c.b16 %v2040, %v2040
        %v2057 = vpack.c.b16 %v2041, %v2041
        %v2058 = vpack.c.b16 %v2042, %v2042
        %v2059 = vrot.slane %v1867, 5
        %v2060 = vrot.slane %v2043, 5
        %v2061 = vsel %vm1690, %v2059, %v2060
        %v2062 = vrot.slane %v1868, 5
        %v2063 = vrot.slane %v2044, 5
        %v2064 = vsel %vm1690, %v2062, %v2063
        %v2065 = vrot.slane %v1869, 5
        %v2066 = vrot.slane %v2045, 5
        %v2067 = vsel %vm1690, %v2065, %v2066
        %v2068 = vrot.slane %v1870, 5
        %v2069 = vrot.slane %v2046, 5
        %v2070 = vsel %vm1690, %v2068, %v2069
        %v2071 = vrot.slane %v1871, 5
        %v2072 = vrot.slane %v2047, 5
        %v2073 = vsel %vm1690, %v2071, %v2072
        %v2074 = vrot.slane %v1872, 5
        %v2075 = vrot.slane %v2048, 5
        %v2076 = vsel %vm1690, %v2074, %v2075
        %v2077 = vrot.slane %v1873, 5
        %v2078 = vrot.slane %v2049, 5
        %v2079 = vsel %vm1690, %v2077, %v2078
        %v2080 = vrot.slane %v1874, 5
        %v2081 = vrot.slane %v2050, 5
        %v2082 = vsel %vm1690, %v2080, %v2081
        %v2083 = vrot.slane %v1875, 5
        %v2084 = vrot.slane %v2051, 5
        %v2085 = vsel %vm1690, %v2083, %v2084
        %v2086 = vrot.slane %v1876, 5
        %v2087 = vrot.slane %v2052, 5
        %v2088 = vsel %vm1690, %v2086, %v2087
        %v2089 = vrot.slane %v1877, 5
        %v2090 = vrot.slane %v2053, 5
        %v2091 = vsel %vm1690, %v2089, %v2090
        %v2092 = vrot.slane %v1878, 5
        %v2093 = vrot.slane %v2054, 5
        %v2094 = vsel %vm1690, %v2092, %v2093
        %v2095 = vrot.slane %v1879, 5
        %v2096 = vrot.slane %v2055, 5
        %v2097 = vsel %vm1690, %v2095, %v2096
        %v2098 = vrot.slane %v1880, 5
        %v2099 = vrot.slane %v2056, 5
        %v2100 = vsel %vm1690, %v2098, %v2099
        %v2101 = vrot.slane %v1881, 5
        %v2102 = vrot.slane %v2057, 5
        %v2103 = vsel %vm1690, %v2101, %v2102
        %v2104 = vrot.slane %v1882, 5
        %v2105 = vrot.slane %v2058, 5
        %v2106 = vsel %vm1690, %v2104, %v2105
        %v2155 = vunpack.c.l.b16 %v1306
        %v2156 = vunpack.c.l.b16 %v1307
        %v2157 = vunpack.c.l.b16 %v1308
        %v2158 = vunpack.c.l.b16 %v1309
        %v2159 = vunpack.c.l.b16 %v1310
        %v2160 = vunpack.c.l.b16 %v1311
        %v2161 = vunpack.c.l.b16 %v1312
        %v2162 = vunpack.c.l.b16 %v1313
        %v2163 = vunpack.c.l.b16 %v1314
        %v2164 = vunpack.c.l.b16 %v1315
        %v2165 = vunpack.c.l.b16 %v1316
        %v2166 = vunpack.c.l.b16 %v1317
        %v2167 = vunpack.c.l.b16 %v1318
        %v2168 = vunpack.c.l.b16 %v1319
        %v2169 = vunpack.c.l.b16 %v1320
        %v2170 = vunpack.c.l.b16 %v1321
        %v2171 = vunpack.c.l.b16 %v1322
        %v2172 = vunpack.c.l.b16 %v1323
        %v2173 = vunpack.c.l.b16 %v1324
        %v2174 = vunpack.c.l.b16 %v1325
        %v2175 = vunpack.c.l.b16 %v1326
        %v2176 = vunpack.c.l.b16 %v1327
        %v2177 = vunpack.c.l.b16 %v1328
        %v2178 = vunpack.c.l.b16 %v1329
        %v2179 = vunpack.c.l.b16 %v1330
        %v2180 = vunpack.c.l.b16 %v1331
        %v2181 = vunpack.c.l.b16 %v1332
        %v2182 = vunpack.c.l.b16 %v1333
        %v2183 = vunpack.c.l.b16 %v1334
        %v2184 = vunpack.c.l.b16 %v1335
        %v2185 = vunpack.c.l.b16 %v1336
        %v2186 = vunpack.c.l.b16 %v1337
        %v2187 = vunpack.c.l.b16 %v1338
        %v2188 = vunpack.c.l.b16 %v1339
        %v2189 = vunpack.c.l.b16 %v1340
        %v2190 = vunpack.c.l.b16 %v1341
        %v2191 = vunpack.c.l.b16 %v1342
        %v2192 = vunpack.c.l.b16 %v1343
        %v2193 = vunpack.c.l.b16 %v1344
        %v2194 = vunpack.c.l.b16 %v1345
        %v2195 = vunpack.c.l.b16 %v1346
        %v2196 = vunpack.c.l.b16 %v1347
        %v2197 = vunpack.c.l.b16 %v1348
        %v2198 = vunpack.c.l.b16 %v1349
        %v2199 = vunpack.c.l.b16 %v1350
        %v2200 = vunpack.c.l.b16 %v1351
        %v2201 = vunpack.c.l.b16 %v1352
        %v2202 = vunpack.c.l.b16 %v1353
        %v2203 = vpack.c.b16 %v2156, %v2155
        %v2204 = vpack.c.b16 %v2157, %v2157
        %v2205 = vpack.c.b16 %v2159, %v2158
        %v2206 = vpack.c.b16 %v2160, %v2160
        %v2207 = vpack.c.b16 %v2162, %v2161
        %v2208 = vpack.c.b16 %v2163, %v2163
        %v2209 = vpack.c.b16 %v2165, %v2164
        %v2210 = vpack.c.b16 %v2166, %v2166
        %v2211 = vpack.c.b16 %v2168, %v2167
        %v2212 = vpack.c.b16 %v2169, %v2169
        %v2213 = vpack.c.b16 %v2171, %v2170
        %v2214 = vpack.c.b16 %v2172, %v2172
        %v2215 = vpack.c.b16 %v2174, %v2173
        %v2216 = vpack.c.b16 %v2175, %v2175
        %v2217 = vpack.c.b16 %v2177, %v2176
        %v2218 = vpack.c.b16 %v2178, %v2178
        %v2219 = vpack.c.b16 %v2180, %v2179
        %v2220 = vpack.c.b16 %v2181, %v2181
        %v2221 = vpack.c.b16 %v2183, %v2182
        %v2222 = vpack.c.b16 %v2184, %v2184
        %v2223 = vpack.c.b16 %v2186, %v2185
        %v2224 = vpack.c.b16 %v2187, %v2187
        %v2225 = vpack.c.b16 %v2189, %v2188
        %v2226 = vpack.c.b16 %v2190, %v2190
        %v2227 = vpack.c.b16 %v2192, %v2191
        %v2228 = vpack.c.b16 %v2193, %v2193
        %v2229 = vpack.c.b16 %v2195, %v2194
        %v2230 = vpack.c.b16 %v2196, %v2196
        %v2231 = vpack.c.b16 %v2198, %v2197
        %v2232 = vpack.c.b16 %v2199, %v2199
        %v2233 = vpack.c.b16 %v2201, %v2200
        %v2234 = vpack.c.b16 %v2202, %v2202
        %v2235 = vpack.c.b16 %v2157, %v2156
        %v2236 = vpack.c.b16 %v2160, %v2159
        %v2237 = vpack.c.b16 %v2163, %v2162
        %v2238 = vpack.c.b16 %v2166, %v2165
        %v2239 = vpack.c.b16 %v2169, %v2168
        %v2240 = vpack.c.b16 %v2172, %v2171
        %v2241 = vpack.c.b16 %v2175, %v2174
        %v2242 = vpack.c.b16 %v2178, %v2177
        %v2243 = vpack.c.b16 %v2181, %v2180
        %v2244 = vpack.c.b16 %v2184, %v2183
        %v2245 = vpack.c.b16 %v2187, %v2186
        %v2246 = vpack.c.b16 %v2190, %v2189
        %v2247 = vpack.c.b16 %v2193, %v2192
        %v2248 = vpack.c.b16 %v2196, %v2195
        %v2249 = vpack.c.b16 %v2199, %v2198
        %v2250 = vpack.c.b16 %v2202, %v2201
        %v2252 = vshrl.u32 %v2235, 16
        %v2254 = vrot.slane %v2252, 4
        %v2255 = vshll.u32 %v2235, 16
        %v2257 = vrot.slane %v2255, 5
        %v2258 = vor.u32 %v2254, %v2257
        %v2260 = vshrl.u32 %v2236, 16
        %v2262 = vrot.slane %v2260, 4
        %v2263 = vshll.u32 %v2236, 16
        %v2265 = vrot.slane %v2263, 5
        %v2266 = vor.u32 %v2262, %v2265
        %v2268 = vshrl.u32 %v2237, 16
        %v2270 = vrot.slane %v2268, 4
        %v2271 = vshll.u32 %v2237, 16
        %v2273 = vrot.slane %v2271, 5
        %v2274 = vor.u32 %v2270, %v2273
        %v2276 = vshrl.u32 %v2238, 16
        %v2278 = vrot.slane %v2276, 4
        %v2279 = vshll.u32 %v2238, 16
        %v2281 = vrot.slane %v2279, 5
        %v2282 = vor.u32 %v2278, %v2281
        %v2284 = vshrl.u32 %v2239, 16
        %v2286 = vrot.slane %v2284, 4
        %v2287 = vshll.u32 %v2239, 16
        %v2289 = vrot.slane %v2287, 5
        %v2290 = vor.u32 %v2286, %v2289
        %v2292 = vshrl.u32 %v2240, 16
        %v2294 = vrot.slane %v2292, 4
        %v2295 = vshll.u32 %v2240, 16
        %v2297 = vrot.slane %v2295, 5
        %v2298 = vor.u32 %v2294, %v2297
        %v2300 = vshrl.u32 %v2241, 16
        %v2302 = vrot.slane %v2300, 4
        %v2303 = vshll.u32 %v2241, 16
        %v2305 = vrot.slane %v2303, 5
        %v2306 = vor.u32 %v2302, %v2305
        %v2308 = vshrl.u32 %v2242, 16
        %v2310 = vrot.slane %v2308, 4
        %v2311 = vshll.u32 %v2242, 16
        %v2313 = vrot.slane %v2311, 5
        %v2314 = vor.u32 %v2310, %v2313
        %v2316 = vshrl.u32 %v2243, 16
        %v2318 = vrot.slane %v2316, 4
        %v2319 = vshll.u32 %v2243, 16
        %v2321 = vrot.slane %v2319, 5
        %v2322 = vor.u32 %v2318, %v2321
        %v2324 = vshrl.u32 %v2244, 16
        %v2326 = vrot.slane %v2324, 4
        %v2327 = vshll.u32 %v2244, 16
        %v2329 = vrot.slane %v2327, 5
        %v2330 = vor.u32 %v2326, %v2329
        %v2332 = vshrl.u32 %v2245, 16
        %v2334 = vrot.slane %v2332, 4
        %v2335 = vshll.u32 %v2245, 16
        %v2337 = vrot.slane %v2335, 5
        %v2338 = vor.u32 %v2334, %v2337
        %v2340 = vshrl.u32 %v2246, 16
        %v2342 = vrot.slane %v2340, 4
        %v2343 = vshll.u32 %v2246, 16
        %v2345 = vrot.slane %v2343, 5
        %v2346 = vor.u32 %v2342, %v2345
        %v2348 = vshrl.u32 %v2247, 16
        %v2350 = vrot.slane %v2348, 4
        %v2351 = vshll.u32 %v2247, 16
        %v2353 = vrot.slane %v2351, 5
        %v2354 = vor.u32 %v2350, %v2353
        %v2356 = vshrl.u32 %v2248, 16
        %v2358 = vrot.slane %v2356, 4
        %v2359 = vshll.u32 %v2248, 16
        %v2361 = vrot.slane %v2359, 5
        %v2362 = vor.u32 %v2358, %v2361
        %v2364 = vshrl.u32 %v2249, 16
        %v2366 = vrot.slane %v2364, 4
        %v2367 = vshll.u32 %v2249, 16
        %v2369 = vrot.slane %v2367, 5
        %v2370 = vor.u32 %v2366, %v2369
        %v2372 = vshrl.u32 %v2250, 16
        %v2374 = vrot.slane %v2372, 4
        %v2375 = vshll.u32 %v2250, 16
        %v2377 = vrot.slane %v2375, 5
        %v2378 = vor.u32 %v2374, %v2377
        %v2395 = vunpack.c.l.b16 %v1354
        %v2396 = vunpack.c.l.b16 %v1355
        %v2397 = vunpack.c.l.b16 %v1356
        %v2398 = vunpack.c.l.b16 %v1357
        %v2399 = vunpack.c.l.b16 %v1358
        %v2400 = vunpack.c.l.b16 %v1359
        %v2401 = vunpack.c.l.b16 %v1360
        %v2402 = vunpack.c.l.b16 %v1361
        %v2403 = vunpack.c.l.b16 %v1362
        %v2404 = vunpack.c.l.b16 %v1363
        %v2405 = vunpack.c.l.b16 %v1364
        %v2406 = vunpack.c.l.b16 %v1365
        %v2407 = vunpack.c.l.b16 %v1366
        %v2408 = vunpack.c.l.b16 %v1367
        %v2409 = vunpack.c.l.b16 %v1368
        %v2410 = vunpack.c.l.b16 %v1369
        %v2411 = vpack.c.b16 %v2395, %v2395
        %v2412 = vpack.c.b16 %v2396, %v2396
        %v2413 = vpack.c.b16 %v2397, %v2397
        %v2414 = vpack.c.b16 %v2398, %v2398
        %v2415 = vpack.c.b16 %v2399, %v2399
        %v2416 = vpack.c.b16 %v2400, %v2400
        %v2417 = vpack.c.b16 %v2401, %v2401
        %v2418 = vpack.c.b16 %v2402, %v2402
        %v2419 = vpack.c.b16 %v2403, %v2403
        %v2420 = vpack.c.b16 %v2404, %v2404
        %v2421 = vpack.c.b16 %v2405, %v2405
        %v2422 = vpack.c.b16 %v2406, %v2406
        %v2423 = vpack.c.b16 %v2407, %v2407
        %v2424 = vpack.c.b16 %v2408, %v2408
        %v2425 = vpack.c.b16 %v2409, %v2409
        %v2426 = vpack.c.b16 %v2410, %v2410
        %v2427 = vrot.slane %v2235, 5
        %v2428 = vrot.slane %v2411, 5
        %v2429 = vsel %vm1690, %v2427, %v2428
        %v2430 = vrot.slane %v2236, 5
        %v2431 = vrot.slane %v2412, 5
        %v2432 = vsel %vm1690, %v2430, %v2431
        %v2433 = vrot.slane %v2237, 5
        %v2434 = vrot.slane %v2413, 5
        %v2435 = vsel %vm1690, %v2433, %v2434
        %v2436 = vrot.slane %v2238, 5
        %v2437 = vrot.slane %v2414, 5
        %v2438 = vsel %vm1690, %v2436, %v2437
        %v2439 = vrot.slane %v2239, 5
        %v2440 = vrot.slane %v2415, 5
        %v2441 = vsel %vm1690, %v2439, %v2440
        %v2442 = vrot.slane %v2240, 5
        %v2443 = vrot.slane %v2416, 5
        %v2444 = vsel %vm1690, %v2442, %v2443
        %v2445 = vrot.slane %v2241, 5
        %v2446 = vrot.slane %v2417, 5
        %v2447 = vsel %vm1690, %v2445, %v2446
        %v2448 = vrot.slane %v2242, 5
        %v2449 = vrot.slane %v2418, 5
        %v2450 = vsel %vm1690, %v2448, %v2449
        %v2451 = vrot.slane %v2243, 5
        %v2452 = vrot.slane %v2419, 5
        %v2453 = vsel %vm1690, %v2451, %v2452
        %v2454 = vrot.slane %v2244, 5
        %v2455 = vrot.slane %v2420, 5
        %v2456 = vsel %vm1690, %v2454, %v2455
        %v2457 = vrot.slane %v2245, 5
        %v2458 = vrot.slane %v2421, 5
        %v2459 = vsel %vm1690, %v2457, %v2458
        %v2460 = vrot.slane %v2246, 5
        %v2461 = vrot.slane %v2422, 5
        %v2462 = vsel %vm1690, %v2460, %v2461
        %v2463 = vrot.slane %v2247, 5
        %v2464 = vrot.slane %v2423, 5
        %v2465 = vsel %vm1690, %v2463, %v2464
        %v2466 = vrot.slane %v2248, 5
        %v2467 = vrot.slane %v2424, 5
        %v2468 = vsel %vm1690, %v2466, %v2467
        %v2469 = vrot.slane %v2249, 5
        %v2470 = vrot.slane %v2425, 5
        %v2471 = vsel %vm1690, %v2469, %v2470
        %v2472 = vrot.slane %v2250, 5
        %v2473 = vrot.slane %v2426, 5
        %v2474 = vsel %vm1690, %v2472, %v2473
        %v2475 = vld [vmem:[#allocation8] sm:$0xf]
        %v2476 = vld [vmem:[#allocation8 + $0x4] sm:$0xf]
        %v2477 = vld [vmem:[#allocation8 + $0x8] sm:$0xf]
        %v2478 = vld [vmem:[#allocation8 + $0xc] sm:$0xf]
        %v2479 = vld [vmem:[#allocation8 + $0x10] sm:$0xf]
        %v2480 = vld [vmem:[#allocation8 + $0x14] sm:$0xf]
        %v2481 = vld [vmem:[#allocation8 + $0x18] sm:$0xf]
        %v2482 = vld [vmem:[#allocation8 + $0x1c] sm:$0xf]
        %v2483 = vld [vmem:[#allocation8 + $0x20] sm:$0xf]
        %v2484 = vld [vmem:[#allocation8 + $0x24] sm:$0xf]
        %v2485 = vld [vmem:[#allocation8 + $0x28] sm:$0xf]
        %v2486 = vld [vmem:[#allocation8 + $0x2c] sm:$0xf]
        %v2487 = vld [vmem:[#allocation8 + $0x30] sm:$0xf]
        %v2488 = vld [vmem:[#allocation8 + $0x34] sm:$0xf]
        %v2489 = vld [vmem:[#allocation8 + $0x38] sm:$0xf]
        %v2490 = vld [vmem:[#allocation8 + $0x3c] sm:$0xf]
        %v2491 = vld [vmem:[#allocation8 + $0x40] sm:$0xf]
        %v2492 = vld [vmem:[#allocation8 + $0x44] sm:$0xf]
        %v2493 = vld [vmem:[#allocation8 + $0x48] sm:$0xf]
        %v2494 = vld [vmem:[#allocation8 + $0x4c] sm:$0xf]
        %v2495 = vld [vmem:[#allocation8 + $0x50] sm:$0xf]
        %v2496 = vld [vmem:[#allocation8 + $0x54] sm:$0xf]
        %v2497 = vld [vmem:[#allocation8 + $0x58] sm:$0xf]
        %v2498 = vld [vmem:[#allocation8 + $0x5c] sm:$0xf]
        %v2499 = vld [vmem:[#allocation8 + $0x60] sm:$0xf]
        %v2500 = vld [vmem:[#allocation8 + $0x64] sm:$0xf]
        %v2501 = vld [vmem:[#allocation8 + $0x68] sm:$0xf]
        %v2502 = vld [vmem:[#allocation8 + $0x6c] sm:$0xf]
        %v2503 = vld [vmem:[#allocation8 + $0x70] sm:$0xf]
        %v2504 = vld [vmem:[#allocation8 + $0x74] sm:$0xf]
        %v2505 = vld [vmem:[#allocation8 + $0x78] sm:$0xf]
        %v2506 = vld [vmem:[#allocation8 + $0x7c] sm:$0xf]
        %v2507 = vld [vmem:[#allocation8 + $0x80] sm:$0xf]
        %v2508 = vld [vmem:[#allocation8 + $0x84] sm:$0xf]
        %v2509 = vld [vmem:[#allocation8 + $0x88] sm:$0xf]
        %v2510 = vld [vmem:[#allocation8 + $0x8c] sm:$0xf]
        %v2511 = vld [vmem:[#allocation8 + $0x90] sm:$0xf]
        %v2512 = vld [vmem:[#allocation8 + $0x94] sm:$0xf]
        %v2513 = vld [vmem:[#allocation8 + $0x98] sm:$0xf]
        %v2514 = vld [vmem:[#allocation8 + $0x9c] sm:$0xf]
        %v2515 = vld [vmem:[#allocation8 + $0xa0] sm:$0xf]
        %v2516 = vld [vmem:[#allocation8 + $0xa4] sm:$0xf]
        %v2517 = vld [vmem:[#allocation8 + $0xa8] sm:$0xf]
        %v2518 = vld [vmem:[#allocation8 + $0xac] sm:$0xf]
        %v2519 = vld [vmem:[#allocation8 + $0xb0] sm:$0xf]
        %v2520 = vld [vmem:[#allocation8 + $0xb4] sm:$0xf]
        %v2521 = vld [vmem:[#allocation8 + $0xb8] sm:$0xf]
        %v2522 = vld [vmem:[#allocation8 + $0xbc] sm:$0xf]
        %v2523 = vld [vmem:[#allocation8 + $0xc0] sm:$0xf]
        %v2524 = vld [vmem:[#allocation8 + $0xc4] sm:$0xf]
        %v2525 = vld [vmem:[#allocation8 + $0xc8] sm:$0xf]
        %v2526 = vld [vmem:[#allocation8 + $0xcc] sm:$0xf]
        %v2527 = vld [vmem:[#allocation8 + $0xd0] sm:$0xf]
        %v2528 = vld [vmem:[#allocation8 + $0xd4] sm:$0xf]
        %v2529 = vld [vmem:[#allocation8 + $0xd8] sm:$0xf]
        %v2530 = vld [vmem:[#allocation8 + $0xdc] sm:$0xf]
        %v2531 = vld [vmem:[#allocation8 + $0xe0] sm:$0xf]
        %v2532 = vld [vmem:[#allocation8 + $0xe4] sm:$0xf]
        %v2533 = vld [vmem:[#allocation8 + $0xe8] sm:$0xf]
        %v2534 = vld [vmem:[#allocation8 + $0xec] sm:$0xf]
        %v2535 = vld [vmem:[#allocation8 + $0xf0] sm:$0xf]
        %v2536 = vld [vmem:[#allocation8 + $0xf4] sm:$0xf]
        %v2537 = vld [vmem:[#allocation8 + $0xf8] sm:$0xf]
        %v2538 = vld [vmem:[#allocation8 + $0xfc] sm:$0xf]
        %v2539 = vld [vmem:[#allocation8 + $0x100] sm:$0xf]
        %v2540 = vld [vmem:[#allocation8 + $0x104] sm:$0xf]
        %v2541 = vld [vmem:[#allocation8 + $0x108] sm:$0xf]
        %v2542 = vld [vmem:[#allocation8 + $0x10c] sm:$0xf]
        %v2543 = vld [vmem:[#allocation8 + $0x110] sm:$0xf]
        %v2544 = vld [vmem:[#allocation8 + $0x114] sm:$0xf]
        %v2545 = vld [vmem:[#allocation8 + $0x118] sm:$0xf]
        %v2546 = vld [vmem:[#allocation8 + $0x11c] sm:$0xf]
        %v2547 = vld [vmem:[#allocation8 + $0x120] sm:$0xf]
        %v2548 = vld [vmem:[#allocation8 + $0x124] sm:$0xf]
        %v2549 = vld [vmem:[#allocation8 + $0x128] sm:$0xf]
        %v2550 = vld [vmem:[#allocation8 + $0x12c] sm:$0xf]
        %v2551 = vld [vmem:[#allocation8 + $0x130] sm:$0xf]
        %v2552 = vld [vmem:[#allocation8 + $0x134] sm:$0xf]
        %v2553 = vld [vmem:[#allocation8 + $0x138] sm:$0xf]
        %v2554 = vld [vmem:[#allocation8 + $0x13c] sm:$0xf]
        %v2555 = vld [vmem:[#allocation8 + $0x140] sm:$0xf]
        %v2556 = vld [vmem:[#allocation8 + $0x144] sm:$0xf]
        %v2557 = vld [vmem:[#allocation8 + $0x148] sm:$0xf]
        %v2558 = vld [vmem:[#allocation8 + $0x14c] sm:$0xf]
        %v2559 = vld [vmem:[#allocation8 + $0x150] sm:$0xf]
        %v2560 = vld [vmem:[#allocation8 + $0x154] sm:$0xf]
        %v2561 = vld [vmem:[#allocation8 + $0x158] sm:$0xf]
        %v2562 = vld [vmem:[#allocation8 + $0x15c] sm:$0xf]
        %v2563 = vld [vmem:[#allocation8 + $0x160] sm:$0xf]
        %v2564 = vld [vmem:[#allocation8 + $0x164] sm:$0xf]
        %v2565 = vld [vmem:[#allocation8 + $0x168] sm:$0xf]
        %v2566 = vld [vmem:[#allocation8 + $0x16c] sm:$0xf]
        %v2567 = vld [vmem:[#allocation8 + $0x170] sm:$0xf]
        %v2568 = vld [vmem:[#allocation8 + $0x174] sm:$0xf]
        %v2569 = vld [vmem:[#allocation8 + $0x178] sm:$0xf]
        %v2570 = vld [vmem:[#allocation8 + $0x17c] sm:$0xf]
        %v2571 = vld [vmem:[#allocation8 + $0x180] sm:$0xf]
        %v2572 = vld [vmem:[#allocation8 + $0x184] sm:$0xf]
        %v2573 = vld [vmem:[#allocation8 + $0x188] sm:$0xf]
        %v2574 = vld [vmem:[#allocation8 + $0x18c] sm:$0xf]
        %v2575 = vld [vmem:[#allocation8 + $0x190] sm:$0xf]
        %v2576 = vld [vmem:[#allocation8 + $0x194] sm:$0xf]
        %v2577 = vld [vmem:[#allocation8 + $0x198] sm:$0xf]
        %v2578 = vld [vmem:[#allocation8 + $0x19c] sm:$0xf]
        %v2579 = vld [vmem:[#allocation8 + $0x1a0] sm:$0xf]
        %v2580 = vld [vmem:[#allocation8 + $0x1a4] sm:$0xf]
        %v2581 = vld [vmem:[#allocation8 + $0x1a8] sm:$0xf]
        %v2582 = vld [vmem:[#allocation8 + $0x1ac] sm:$0xf]
        %v2583 = vld [vmem:[#allocation8 + $0x1b0] sm:$0xf]
        %v2584 = vld [vmem:[#allocation8 + $0x1b4] sm:$0xf]
        %v2585 = vld [vmem:[#allocation8 + $0x1b8] sm:$0xf]
        %v2586 = vld [vmem:[#allocation8 + $0x1bc] sm:$0xf]
        %v2587 = vld [vmem:[#allocation8 + $0x1c0] sm:$0xf]
        %v2588 = vld [vmem:[#allocation8 + $0x1c4] sm:$0xf]
        %v2589 = vld [vmem:[#allocation8 + $0x1c8] sm:$0xf]
        %v2590 = vld [vmem:[#allocation8 + $0x1cc] sm:$0xf]
        %v2591 = vld [vmem:[#allocation8 + $0x1d0] sm:$0xf]
        %v2592 = vld [vmem:[#allocation8 + $0x1d4] sm:$0xf]
        %v2593 = vld [vmem:[#allocation8 + $0x1d8] sm:$0xf]
        %v2594 = vld [vmem:[#allocation8 + $0x1dc] sm:$0xf]
        %v2595 = vld [vmem:[#allocation8 + $0x1e0] sm:$0xf]
        %v2596 = vld [vmem:[#allocation8 + $0x1e4] sm:$0xf]
        %v2597 = vld [vmem:[#allocation8 + $0x1e8] sm:$0xf]
        %v2598 = vld [vmem:[#allocation8 + $0x1ec] sm:$0xf]
        %v2599 = vld [vmem:[#allocation8 + $0x1f0] sm:$0xf]
        %v2600 = vld [vmem:[#allocation8 + $0x1f4] sm:$0xf]
        %v2601 = vld [vmem:[#allocation8 + $0x1f8] sm:$0xf]
        %v2602 = vld [vmem:[#allocation8 + $0x1fc] sm:$0xf]
        %v2603 = vld [vmem:[#allocation8 + $0x200] sm:$0xf]
        %v2604 = vld [vmem:[#allocation8 + $0x204] sm:$0xf]
        %v2605 = vld [vmem:[#allocation8 + $0x208] sm:$0xf]
        %v2606 = vld [vmem:[#allocation8 + $0x20c] sm:$0xf]
        %v2607 = vld [vmem:[#allocation8 + $0x210] sm:$0xf]
        %v2608 = vld [vmem:[#allocation8 + $0x214] sm:$0xf]
        %v2609 = vld [vmem:[#allocation8 + $0x218] sm:$0xf]
        %v2610 = vld [vmem:[#allocation8 + $0x21c] sm:$0xf]
        %v2611 = vld [vmem:[#allocation8 + $0x220] sm:$0xf]
        %v2612 = vld [vmem:[#allocation8 + $0x224] sm:$0xf]
        %v2613 = vld [vmem:[#allocation8 + $0x228] sm:$0xf]
        %v2614 = vld [vmem:[#allocation8 + $0x22c] sm:$0xf]
        %v2615 = vld [vmem:[#allocation8 + $0x230] sm:$0xf]
        %v2616 = vld [vmem:[#allocation8 + $0x234] sm:$0xf]
        %v2617 = vld [vmem:[#allocation8 + $0x238] sm:$0xf]
        %v2618 = vld [vmem:[#allocation8 + $0x23c] sm:$0xf]
        %vm2619 = vsmask.f32 4352
        %v2621 = vshrl.u32 %v1466, 16
        %v2623 = vrot.slane %v2621, 3
        %v2624 = vshll.u32 %v1466, 16
        %v2626 = vrot.slane %v2624, 4
        %v2627 = vor.u32 %v2623, %v2626
        %v2629 = vshrl.u32 %v1467, 16
        %v2631 = vrot.slane %v2629, 3
        %v2632 = vshll.u32 %v1467, 16
        %v2634 = vrot.slane %v2632, 4
        %v2635 = vor.u32 %v2631, %v2634
        %v2636 = vsel %vm2619, %v2627, %v2635
        %v2638 = vshrl.u32 %v1521, 16
        %v2640 = vrot.slane %v2638, 3
        %v2641 = vshll.u32 %v1521, 16
        %v2643 = vrot.slane %v2641, 4
        %v2644 = vor.u32 %v2640, %v2643
        %v2645 = vsel %vm2619, %v2644, %v2644
        %v2647 = vshrl.u32 %v1691, 16
        %v2649 = vrot.slane %v2647, 3
        %v2650 = vshll.u32 %v1691, 16
        %v2652 = vrot.slane %v2650, 4
        %v2653 = vor.u32 %v2649, %v2652
        %v2655 = vshrl.u32 %v1693, 16
        %v2657 = vrot.slane %v2655, 3
        %v2658 = vshll.u32 %v1693, 16
        %v2660 = vrot.slane %v2658, 4
        %v2661 = vor.u32 %v2657, %v2660
        %v2662 = vsel %vm2619, %v2653, %v2661
        %v2664 = vshrl.u32 %v1835, 16
        %v2666 = vrot.slane %v2664, 3
        %v2667 = vshll.u32 %v1835, 16
        %v2669 = vrot.slane %v2667, 4
        %v2670 = vor.u32 %v2666, %v2669
        %v2672 = vshrl.u32 %v1836, 16
        %v2674 = vrot.slane %v2672, 3
        %v2675 = vshll.u32 %v1836, 16
        %v2677 = vrot.slane %v2675, 4
        %v2678 = vor.u32 %v2674, %v2677
        %v2679 = vsel %vm2619, %v2670, %v2678
        %v2681 = vshrl.u32 %v1890, 16
        %v2683 = vrot.slane %v2681, 3
        %v2684 = vshll.u32 %v1890, 16
        %v2686 = vrot.slane %v2684, 4
        %v2687 = vor.u32 %v2683, %v2686
        %v2688 = vsel %vm2619, %v2687, %v2687
        %v2690 = vshrl.u32 %v2059, 16
        %v2692 = vrot.slane %v2690, 3
        %v2693 = vshll.u32 %v2059, 16
        %v2695 = vrot.slane %v2693, 4
        %v2696 = vor.u32 %v2692, %v2695
        %v2698 = vshrl.u32 %v2061, 16
        %v2700 = vrot.slane %v2698, 3
        %v2701 = vshll.u32 %v2061, 16
        %v2703 = vrot.slane %v2701, 4
        %v2704 = vor.u32 %v2700, %v2703
        %v2705 = vsel %vm2619, %v2696, %v2704
        %v2707 = vshrl.u32 %v2203, 16
        %v2709 = vrot.slane %v2707, 3
        %v2710 = vshll.u32 %v2203, 16
        %v2712 = vrot.slane %v2710, 4
        %v2713 = vor.u32 %v2709, %v2712
        %v2715 = vshrl.u32 %v2204, 16
        %v2717 = vrot.slane %v2715, 3
        %v2718 = vshll.u32 %v2204, 16
        %v2720 = vrot.slane %v2718, 4
        %v2721 = vor.u32 %v2717, %v2720
        %v2722 = vsel %vm2619, %v2713, %v2721
        %v2724 = vshrl.u32 %v2258, 16
        %v2726 = vrot.slane %v2724, 3
        %v2727 = vshll.u32 %v2258, 16
        %v2729 = vrot.slane %v2727, 4
        %v2730 = vor.u32 %v2726, %v2729
        %v2731 = vsel %vm2619, %v2730, %v2730
        %v2733 = vshrl.u32 %v2427, 16
        %v2735 = vrot.slane %v2733, 3
        %v2736 = vshll.u32 %v2427, 16
        %v2738 = vrot.slane %v2736, 4
        %v2739 = vor.u32 %v2735, %v2738
        %v2741 = vshrl.u32 %v2429, 16
        %v2743 = vrot.slane %v2741, 3
        %v2744 = vshll.u32 %v2429, 16
        %v2746 = vrot.slane %v2744, 4
        %v2747 = vor.u32 %v2743, %v2746
        %v2748 = vsel %vm2619, %v2739, %v2747
        %v2750 = vshrl.u32 %v1468, 16
        %v2752 = vrot.slane %v2750, 3
        %v2753 = vshll.u32 %v1468, 16
        %v2755 = vrot.slane %v2753, 4
        %v2756 = vor.u32 %v2752, %v2755
        %v2758 = vshrl.u32 %v1469, 16
        %v2760 = vrot.slane %v2758, 3
        %v2761 = vshll.u32 %v1469, 16
        %v2763 = vrot.slane %v2761, 4
        %v2764 = vor.u32 %v2760, %v2763
        %v2765 = vsel %vm2619, %v2756, %v2764
        %v2767 = vshrl.u32 %v1529, 16
        %v2769 = vrot.slane %v2767, 3
        %v2770 = vshll.u32 %v1529, 16
        %v2772 = vrot.slane %v2770, 4
        %v2773 = vor.u32 %v2769, %v2772
        %v2774 = vsel %vm2619, %v2773, %v2773
        %v2776 = vshrl.u32 %v1694, 16
        %v2778 = vrot.slane %v2776, 3
        %v2779 = vshll.u32 %v1694, 16
        %v2781 = vrot.slane %v2779, 4
        %v2782 = vor.u32 %v2778, %v2781
        %v2784 = vshrl.u32 %v1696, 16
        %v2786 = vrot.slane %v2784, 3
        %v2787 = vshll.u32 %v1696, 16
        %v2789 = vrot.slane %v2787, 4
        %v2790 = vor.u32 %v2786, %v2789
        %v2791 = vsel %vm2619, %v2782, %v2790
        %v2793 = vshrl.u32 %v1837, 16
        %v2795 = vrot.slane %v2793, 3
        %v2796 = vshll.u32 %v1837, 16
        %v2798 = vrot.slane %v2796, 4
        %v2799 = vor.u32 %v2795, %v2798
        %v2801 = vshrl.u32 %v1838, 16
        %v2803 = vrot.slane %v2801, 3
        %v2804 = vshll.u32 %v1838, 16
        %v2806 = vrot.slane %v2804, 4
        %v2807 = vor.u32 %v2803, %v2806
        %v2808 = vsel %vm2619, %v2799, %v2807
        %v2810 = vshrl.u32 %v1898, 16
        %v2812 = vrot.slane %v2810, 3
        %v2813 = vshll.u32 %v1898, 16
        %v2815 = vrot.slane %v2813, 4
        %v2816 = vor.u32 %v2812, %v2815
        %v2817 = vsel %vm2619, %v2816, %v2816
        %v2819 = vshrl.u32 %v2062, 16
        %v2821 = vrot.slane %v2819, 3
        %v2822 = vshll.u32 %v2062, 16
        %v2824 = vrot.slane %v2822, 4
        %v2825 = vor.u32 %v2821, %v2824
        %v2827 = vshrl.u32 %v2064, 16
        %v2829 = vrot.slane %v2827, 3
        %v2830 = vshll.u32 %v2064, 16
        %v2832 = vrot.slane %v2830, 4
        %v2833 = vor.u32 %v2829, %v2832
        %v2834 = vsel %vm2619, %v2825, %v2833
        %v2836 = vshrl.u32 %v2205, 16
        %v2838 = vrot.slane %v2836, 3
        %v2839 = vshll.u32 %v2205, 16
        %v2841 = vrot.slane %v2839, 4
        %v2842 = vor.u32 %v2838, %v2841
        %v2844 = vshrl.u32 %v2206, 16
        %v2846 = vrot.slane %v2844, 3
        %v2847 = vshll.u32 %v2206, 16
        %v2849 = vrot.slane %v2847, 4
        %v2850 = vor.u32 %v2846, %v2849
        %v2851 = vsel %vm2619, %v2842, %v2850
        %v2853 = vshrl.u32 %v2266, 16
        %v2855 = vrot.slane %v2853, 3
        %v2856 = vshll.u32 %v2266, 16
        %v2858 = vrot.slane %v2856, 4
        %v2859 = vor.u32 %v2855, %v2858
        %v2860 = vsel %vm2619, %v2859, %v2859
        %v2862 = vshrl.u32 %v2430, 16
        %v2864 = vrot.slane %v2862, 3
        %v2865 = vshll.u32 %v2430, 16
        %v2867 = vrot.slane %v2865, 4
        %v2868 = vor.u32 %v2864, %v2867
        %v2870 = vshrl.u32 %v2432, 16
        %v2872 = vrot.slane %v2870, 3
        %v2873 = vshll.u32 %v2432, 16
        %v2875 = vrot.slane %v2873, 4
        %v2876 = vor.u32 %v2872, %v2875
        %v2877 = vsel %vm2619, %v2868, %v2876
        %v2879 = vshrl.u32 %v1470, 16
        %v2881 = vrot.slane %v2879, 3
        %v2882 = vshll.u32 %v1470, 16
        %v2884 = vrot.slane %v2882, 4
        %v2885 = vor.u32 %v2881, %v2884
        %v2887 = vshrl.u32 %v1471, 16
        %v2889 = vrot.slane %v2887, 3
        %v2890 = vshll.u32 %v1471, 16
        %v2892 = vrot.slane %v2890, 4
        %v2893 = vor.u32 %v2889, %v2892
        %v2894 = vsel %vm2619, %v2885, %v2893
        %v2896 = vshrl.u32 %v1537, 16
        %v2898 = vrot.slane %v2896, 3
        %v2899 = vshll.u32 %v1537, 16
        %v2901 = vrot.slane %v2899, 4
        %v2902 = vor.u32 %v2898, %v2901
        %v2903 = vsel %vm2619, %v2902, %v2902
        %v2905 = vshrl.u32 %v1697, 16
        %v2907 = vrot.slane %v2905, 3
        %v2908 = vshll.u32 %v1697, 16
        %v2910 = vrot.slane %v2908, 4
        %v2911 = vor.u32 %v2907, %v2910
        %v2913 = vshrl.u32 %v1699, 16
        %v2915 = vrot.slane %v2913, 3
        %v2916 = vshll.u32 %v1699, 16
        %v2918 = vrot.slane %v2916, 4
        %v2919 = vor.u32 %v2915, %v2918
        %v2920 = vsel %vm2619, %v2911, %v2919
        %v2922 = vshrl.u32 %v1839, 16
        %v2924 = vrot.slane %v2922, 3
        %v2925 = vshll.u32 %v1839, 16
        %v2927 = vrot.slane %v2925, 4
        %v2928 = vor.u32 %v2924, %v2927
        %v2930 = vshrl.u32 %v1840, 16
        %v2932 = vrot.slane %v2930, 3
        %v2933 = vshll.u32 %v1840, 16
        %v2935 = vrot.slane %v2933, 4
        %v2936 = vor.u32 %v2932, %v2935
        %v2937 = vsel %vm2619, %v2928, %v2936
        %v2939 = vshrl.u32 %v1906, 16
        %v2941 = vrot.slane %v2939, 3
        %v2942 = vshll.u32 %v1906, 16
        %v2944 = vrot.slane %v2942, 4
        %v2945 = vor.u32 %v2941, %v2944
        %v2946 = vsel %vm2619, %v2945, %v2945
        %v2948 = vshrl.u32 %v2065, 16
        %v2950 = vrot.slane %v2948, 3
        %v2951 = vshll.u32 %v2065, 16
        %v2953 = vrot.slane %v2951, 4
        %v2954 = vor.u32 %v2950, %v2953
        %v2956 = vshrl.u32 %v2067, 16
        %v2958 = vrot.slane %v2956, 3
        %v2959 = vshll.u32 %v2067, 16
        %v2961 = vrot.slane %v2959, 4
        %v2962 = vor.u32 %v2958, %v2961
        %v2963 = vsel %vm2619, %v2954, %v2962
        %v2965 = vshrl.u32 %v2207, 16
        %v2967 = vrot.slane %v2965, 3
        %v2968 = vshll.u32 %v2207, 16
        %v2970 = vrot.slane %v2968, 4
        %v2971 = vor.u32 %v2967, %v2970
        %v2973 = vshrl.u32 %v2208, 16
        %v2975 = vrot.slane %v2973, 3
        %v2976 = vshll.u32 %v2208, 16
        %v2978 = vrot.slane %v2976, 4
        %v2979 = vor.u32 %v2975, %v2978
        %v2980 = vsel %vm2619, %v2971, %v2979
        %v2982 = vshrl.u32 %v2274, 16
        %v2984 = vrot.slane %v2982, 3
        %v2985 = vshll.u32 %v2274, 16
        %v2987 = vrot.slane %v2985, 4
        %v2988 = vor.u32 %v2984, %v2987
        %v2989 = vsel %vm2619, %v2988, %v2988
        %v2991 = vshrl.u32 %v2433, 16
        %v2993 = vrot.slane %v2991, 3
        %v2994 = vshll.u32 %v2433, 16
        %v2996 = vrot.slane %v2994, 4
        %v2997 = vor.u32 %v2993, %v2996
        %v2999 = vshrl.u32 %v2435, 16
        %v3001 = vrot.slane %v2999, 3
        %v3002 = vshll.u32 %v2435, 16
        %v3004 = vrot.slane %v3002, 4
        %v3005 = vor.u32 %v3001, %v3004
        %v3006 = vsel %vm2619, %v2997, %v3005
        %v3008 = vshrl.u32 %v1472, 16
        %v3010 = vrot.slane %v3008, 3
        %v3011 = vshll.u32 %v1472, 16
        %v3013 = vrot.slane %v3011, 4
        %v3014 = vor.u32 %v3010, %v3013
        %v3016 = vshrl.u32 %v1473, 16
        %v3018 = vrot.slane %v3016, 3
        %v3019 = vshll.u32 %v1473, 16
        %v3021 = vrot.slane %v3019, 4
        %v3022 = vor.u32 %v3018, %v3021
        %v3023 = vsel %vm2619, %v3014, %v3022
        %v3025 = vshrl.u32 %v1545, 16
        %v3027 = vrot.slane %v3025, 3
        %v3028 = vshll.u32 %v1545, 16
        %v3030 = vrot.slane %v3028, 4
        %v3031 = vor.u32 %v3027, %v3030
        %v3032 = vsel %vm2619, %v3031, %v3031
        %v3034 = vshrl.u32 %v1700, 16
        %v3036 = vrot.slane %v3034, 3
        %v3037 = vshll.u32 %v1700, 16
        %v3039 = vrot.slane %v3037, 4
        %v3040 = vor.u32 %v3036, %v3039
        %v3042 = vshrl.u32 %v1702, 16
        %v3044 = vrot.slane %v3042, 3
        %v3045 = vshll.u32 %v1702, 16
        %v3047 = vrot.slane %v3045, 4
        %v3048 = vor.u32 %v3044, %v3047
        %v3049 = vsel %vm2619, %v3040, %v3048
        %v3051 = vshrl.u32 %v1841, 16
        %v3053 = vrot.slane %v3051, 3
        %v3054 = vshll.u32 %v1841, 16
        %v3056 = vrot.slane %v3054, 4
        %v3057 = vor.u32 %v3053, %v3056
        %v3059 = vshrl.u32 %v1842, 16
        %v3061 = vrot.slane %v3059, 3
        %v3062 = vshll.u32 %v1842, 16
        %v3064 = vrot.slane %v3062, 4
        %v3065 = vor.u32 %v3061, %v3064
        %v3066 = vsel %vm2619, %v3057, %v3065
        %v3068 = vshrl.u32 %v1914, 16
        %v3070 = vrot.slane %v3068, 3
        %v3071 = vshll.u32 %v1914, 16
        %v3073 = vrot.slane %v3071, 4
        %v3074 = vor.u32 %v3070, %v3073
        %v3075 = vsel %vm2619, %v3074, %v3074
        %v3077 = vshrl.u32 %v2068, 16
        %v3079 = vrot.slane %v3077, 3
        %v3080 = vshll.u32 %v2068, 16
        %v3082 = vrot.slane %v3080, 4
        %v3083 = vor.u32 %v3079, %v3082
        %v3085 = vshrl.u32 %v2070, 16
        %v3087 = vrot.slane %v3085, 3
        %v3088 = vshll.u32 %v2070, 16
        %v3090 = vrot.slane %v3088, 4
        %v3091 = vor.u32 %v3087, %v3090
        %v3092 = vsel %vm2619, %v3083, %v3091
        %v3094 = vshrl.u32 %v2209, 16
        %v3096 = vrot.slane %v3094, 3
        %v3097 = vshll.u32 %v2209, 16
        %v3099 = vrot.slane %v3097, 4
        %v3100 = vor.u32 %v3096, %v3099
        %v3102 = vshrl.u32 %v2210, 16
        %v3104 = vrot.slane %v3102, 3
        %v3105 = vshll.u32 %v2210, 16
        %v3107 = vrot.slane %v3105, 4
        %v3108 = vor.u32 %v3104, %v3107
        %v3109 = vsel %vm2619, %v3100, %v3108
        %v3111 = vshrl.u32 %v2282, 16
        %v3113 = vrot.slane %v3111, 3
        %v3114 = vshll.u32 %v2282, 16
        %v3116 = vrot.slane %v3114, 4
        %v3117 = vor.u32 %v3113, %v3116
        %v3118 = vsel %vm2619, %v3117, %v3117
        %v3120 = vshrl.u32 %v2436, 16
        %v3122 = vrot.slane %v3120, 3
        %v3123 = vshll.u32 %v2436, 16
        %v3125 = vrot.slane %v3123, 4
        %v3126 = vor.u32 %v3122, %v3125
        %v3128 = vshrl.u32 %v2438, 16
        %v3130 = vrot.slane %v3128, 3
        %v3131 = vshll.u32 %v2438, 16
        %v3133 = vrot.slane %v3131, 4
        %v3134 = vor.u32 %v3130, %v3133
        %v3135 = vsel %vm2619, %v3126, %v3134
        %v3137 = vshrl.u32 %v1474, 16
        %v3139 = vrot.slane %v3137, 3
        %v3140 = vshll.u32 %v1474, 16
        %v3142 = vrot.slane %v3140, 4
        %v3143 = vor.u32 %v3139, %v3142
        %v3145 = vshrl.u32 %v1475, 16
        %v3147 = vrot.slane %v3145, 3
        %v3148 = vshll.u32 %v1475, 16
        %v3150 = vrot.slane %v3148, 4
        %v3151 = vor.u32 %v3147, %v3150
        %v3152 = vsel %vm2619, %v3143, %v3151
        %v3154 = vshrl.u32 %v1553, 16
        %v3156 = vrot.slane %v3154, 3
        %v3157 = vshll.u32 %v1553, 16
        %v3159 = vrot.slane %v3157, 4
        %v3160 = vor.u32 %v3156, %v3159
        %v3161 = vsel %vm2619, %v3160, %v3160
        %v3163 = vshrl.u32 %v1703, 16
        %v3165 = vrot.slane %v3163, 3
        %v3166 = vshll.u32 %v1703, 16
        %v3168 = vrot.slane %v3166, 4
        %v3169 = vor.u32 %v3165, %v3168
        %v3171 = vshrl.u32 %v1705, 16
        %v3173 = vrot.slane %v3171, 3
        %v3174 = vshll.u32 %v1705, 16
        %v3176 = vrot.slane %v3174, 4
        %v3177 = vor.u32 %v3173, %v3176
        %v3178 = vsel %vm2619, %v3169, %v3177
        %v3180 = vshrl.u32 %v1843, 16
        %v3182 = vrot.slane %v3180, 3
        %v3183 = vshll.u32 %v1843, 16
        %v3185 = vrot.slane %v3183, 4
        %v3186 = vor.u32 %v3182, %v3185
        %v3188 = vshrl.u32 %v1844, 16
        %v3190 = vrot.slane %v3188, 3
        %v3191 = vshll.u32 %v1844, 16
        %v3193 = vrot.slane %v3191, 4
        %v3194 = vor.u32 %v3190, %v3193
        %v3195 = vsel %vm2619, %v3186, %v3194
        %v3197 = vshrl.u32 %v1922, 16
        %v3199 = vrot.slane %v3197, 3
        %v3200 = vshll.u32 %v1922, 16
        %v3202 = vrot.slane %v3200, 4
        %v3203 = vor.u32 %v3199, %v3202
        %v3204 = vsel %vm2619, %v3203, %v3203
        %v3206 = vshrl.u32 %v2071, 16
        %v3208 = vrot.slane %v3206, 3
        %v3209 = vshll.u32 %v2071, 16
        %v3211 = vrot.slane %v3209, 4
        %v3212 = vor.u32 %v3208, %v3211
        %v3214 = vshrl.u32 %v2073, 16
        %v3216 = vrot.slane %v3214, 3
        %v3217 = vshll.u32 %v2073, 16
        %v3219 = vrot.slane %v3217, 4
        %v3220 = vor.u32 %v3216, %v3219
        %v3221 = vsel %vm2619, %v3212, %v3220
        %v3223 = vshrl.u32 %v2211, 16
        %v3225 = vrot.slane %v3223, 3
        %v3226 = vshll.u32 %v2211, 16
        %v3228 = vrot.slane %v3226, 4
        %v3229 = vor.u32 %v3225, %v3228
        %v3231 = vshrl.u32 %v2212, 16
        %v3233 = vrot.slane %v3231, 3
        %v3234 = vshll.u32 %v2212, 16
        %v3236 = vrot.slane %v3234, 4
        %v3237 = vor.u32 %v3233, %v3236
        %v3238 = vsel %vm2619, %v3229, %v3237
        %v3240 = vshrl.u32 %v2290, 16
        %v3242 = vrot.slane %v3240, 3
        %v3243 = vshll.u32 %v2290, 16
        %v3245 = vrot.slane %v3243, 4
        %v3246 = vor.u32 %v3242, %v3245
        %v3247 = vsel %vm2619, %v3246, %v3246
        %v3249 = vshrl.u32 %v2439, 16
        %v3251 = vrot.slane %v3249, 3
        %v3252 = vshll.u32 %v2439, 16
        %v3254 = vrot.slane %v3252, 4
        %v3255 = vor.u32 %v3251, %v3254
        %v3257 = vshrl.u32 %v2441, 16
        %v3259 = vrot.slane %v3257, 3
        %v3260 = vshll.u32 %v2441, 16
        %v3262 = vrot.slane %v3260, 4
        %v3263 = vor.u32 %v3259, %v3262
        %v3264 = vsel %vm2619, %v3255, %v3263
        %v3266 = vshrl.u32 %v1476, 16
        %v3268 = vrot.slane %v3266, 3
        %v3269 = vshll.u32 %v1476, 16
        %v3271 = vrot.slane %v3269, 4
        %v3272 = vor.u32 %v3268, %v3271
        %v3274 = vshrl.u32 %v1477, 16
        %v3276 = vrot.slane %v3274, 3
        %v3277 = vshll.u32 %v1477, 16
        %v3279 = vrot.slane %v3277, 4
        %v3280 = vor.u32 %v3276, %v3279
        %v3281 = vsel %vm2619, %v3272, %v3280
        %v3283 = vshrl.u32 %v1561, 16
        %v3285 = vrot.slane %v3283, 3
        %v3286 = vshll.u32 %v1561, 16
        %v3288 = vrot.slane %v3286, 4
        %v3289 = vor.u32 %v3285, %v3288
        %v3290 = vsel %vm2619, %v3289, %v3289
        %v3292 = vshrl.u32 %v1706, 16
        %v3294 = vrot.slane %v3292, 3
        %v3295 = vshll.u32 %v1706, 16
        %v3297 = vrot.slane %v3295, 4
        %v3298 = vor.u32 %v3294, %v3297
        %v3300 = vshrl.u32 %v1708, 16
        %v3302 = vrot.slane %v3300, 3
        %v3303 = vshll.u32 %v1708, 16
        %v3305 = vrot.slane %v3303, 4
        %v3306 = vor.u32 %v3302, %v3305
        %v3307 = vsel %vm2619, %v3298, %v3306
        %v3309 = vshrl.u32 %v1845, 16
        %v3311 = vrot.slane %v3309, 3
        %v3312 = vshll.u32 %v1845, 16
        %v3314 = vrot.slane %v3312, 4
        %v3315 = vor.u32 %v3311, %v3314
        %v3317 = vshrl.u32 %v1846, 16
        %v3319 = vrot.slane %v3317, 3
        %v3320 = vshll.u32 %v1846, 16
        %v3322 = vrot.slane %v3320, 4
        %v3323 = vor.u32 %v3319, %v3322
        %v3324 = vsel %vm2619, %v3315, %v3323
        %v3326 = vshrl.u32 %v1930, 16
        %v3328 = vrot.slane %v3326, 3
        %v3329 = vshll.u32 %v1930, 16
        %v3331 = vrot.slane %v3329, 4
        %v3332 = vor.u32 %v3328, %v3331
        %v3333 = vsel %vm2619, %v3332, %v3332
        %v3335 = vshrl.u32 %v2074, 16
        %v3337 = vrot.slane %v3335, 3
        %v3338 = vshll.u32 %v2074, 16
        %v3340 = vrot.slane %v3338, 4
        %v3341 = vor.u32 %v3337, %v3340
        %v3343 = vshrl.u32 %v2076, 16
        %v3345 = vrot.slane %v3343, 3
        %v3346 = vshll.u32 %v2076, 16
        %v3348 = vrot.slane %v3346, 4
        %v3349 = vor.u32 %v3345, %v3348
        %v3350 = vsel %vm2619, %v3341, %v3349
        %v3352 = vshrl.u32 %v2213, 16
        %v3354 = vrot.slane %v3352, 3
        %v3355 = vshll.u32 %v2213, 16
        %v3357 = vrot.slane %v3355, 4
        %v3358 = vor.u32 %v3354, %v3357
        %v3360 = vshrl.u32 %v2214, 16
        %v3362 = vrot.slane %v3360, 3
        %v3363 = vshll.u32 %v2214, 16
        %v3365 = vrot.slane %v3363, 4
        %v3366 = vor.u32 %v3362, %v3365
        %v3367 = vsel %vm2619, %v3358, %v3366
        %v3369 = vshrl.u32 %v2298, 16
        %v3371 = vrot.slane %v3369, 3
        %v3372 = vshll.u32 %v2298, 16
        %v3374 = vrot.slane %v3372, 4
        %v3375 = vor.u32 %v3371, %v3374
        %v3376 = vsel %vm2619, %v3375, %v3375
        %v3378 = vshrl.u32 %v2442, 16
        %v3380 = vrot.slane %v3378, 3
        %v3381 = vshll.u32 %v2442, 16
        %v3383 = vrot.slane %v3381, 4
        %v3384 = vor.u32 %v3380, %v3383
        %v3386 = vshrl.u32 %v2444, 16
        %v3388 = vrot.slane %v3386, 3
        %v3389 = vshll.u32 %v2444, 16
        %v3391 = vrot.slane %v3389, 4
        %v3392 = vor.u32 %v3388, %v3391
        %v3393 = vsel %vm2619, %v3384, %v3392
        %v3395 = vshrl.u32 %v1478, 16
        %v3397 = vrot.slane %v3395, 3
        %v3398 = vshll.u32 %v1478, 16
        %v3400 = vrot.slane %v3398, 4
        %v3401 = vor.u32 %v3397, %v3400
        %v3403 = vshrl.u32 %v1479, 16
        %v3405 = vrot.slane %v3403, 3
        %v3406 = vshll.u32 %v1479, 16
        %v3408 = vrot.slane %v3406, 4
        %v3409 = vor.u32 %v3405, %v3408
        %v3410 = vsel %vm2619, %v3401, %v3409
        %v3412 = vshrl.u32 %v1569, 16
        %v3414 = vrot.slane %v3412, 3
        %v3415 = vshll.u32 %v1569, 16
        %v3417 = vrot.slane %v3415, 4
        %v3418 = vor.u32 %v3414, %v3417
        %v3419 = vsel %vm2619, %v3418, %v3418
        %v3421 = vshrl.u32 %v1709, 16
        %v3423 = vrot.slane %v3421, 3
        %v3424 = vshll.u32 %v1709, 16
        %v3426 = vrot.slane %v3424, 4
        %v3427 = vor.u32 %v3423, %v3426
        %v3429 = vshrl.u32 %v1711, 16
        %v3431 = vrot.slane %v3429, 3
        %v3432 = vshll.u32 %v1711, 16
        %v3434 = vrot.slane %v3432, 4
        %v3435 = vor.u32 %v3431, %v3434
        %v3436 = vsel %vm2619, %v3427, %v3435
        %v3438 = vshrl.u32 %v1847, 16
        %v3440 = vrot.slane %v3438, 3
        %v3441 = vshll.u32 %v1847, 16
        %v3443 = vrot.slane %v3441, 4
        %v3444 = vor.u32 %v3440, %v3443
        %v3446 = vshrl.u32 %v1848, 16
        %v3448 = vrot.slane %v3446, 3
        %v3449 = vshll.u32 %v1848, 16
        %v3451 = vrot.slane %v3449, 4
        %v3452 = vor.u32 %v3448, %v3451
        %v3453 = vsel %vm2619, %v3444, %v3452
        %v3455 = vshrl.u32 %v1938, 16
        %v3457 = vrot.slane %v3455, 3
        %v3458 = vshll.u32 %v1938, 16
        %v3460 = vrot.slane %v3458, 4
        %v3461 = vor.u32 %v3457, %v3460
        %v3462 = vsel %vm2619, %v3461, %v3461
        %v3464 = vshrl.u32 %v2077, 16
        %v3466 = vrot.slane %v3464, 3
        %v3467 = vshll.u32 %v2077, 16
        %v3469 = vrot.slane %v3467, 4
        %v3470 = vor.u32 %v3466, %v3469
        %v3472 = vshrl.u32 %v2079, 16
        %v3474 = vrot.slane %v3472, 3
        %v3475 = vshll.u32 %v2079, 16
        %v3477 = vrot.slane %v3475, 4
        %v3478 = vor.u32 %v3474, %v3477
        %v3479 = vsel %vm2619, %v3470, %v3478
        %v3481 = vshrl.u32 %v2215, 16
        %v3483 = vrot.slane %v3481, 3
        %v3484 = vshll.u32 %v2215, 16
        %v3486 = vrot.slane %v3484, 4
        %v3487 = vor.u32 %v3483, %v3486
        %v3489 = vshrl.u32 %v2216, 16
        %v3491 = vrot.slane %v3489, 3
        %v3492 = vshll.u32 %v2216, 16
        %v3494 = vrot.slane %v3492, 4
        %v3495 = vor.u32 %v3491, %v3494
        %v3496 = vsel %vm2619, %v3487, %v3495
        %v3498 = vshrl.u32 %v2306, 16
        %v3500 = vrot.slane %v3498, 3
        %v3501 = vshll.u32 %v2306, 16
        %v3503 = vrot.slane %v3501, 4
        %v3504 = vor.u32 %v3500, %v3503
        %v3505 = vsel %vm2619, %v3504, %v3504
        %v3507 = vshrl.u32 %v2445, 16
        %v3509 = vrot.slane %v3507, 3
        %v3510 = vshll.u32 %v2445, 16
        %v3512 = vrot.slane %v3510, 4
        %v3513 = vor.u32 %v3509, %v3512
        %v3515 = vshrl.u32 %v2447, 16
        %v3517 = vrot.slane %v3515, 3
        %v3518 = vshll.u32 %v2447, 16
        %v3520 = vrot.slane %v3518, 4
        %v3521 = vor.u32 %v3517, %v3520
        %v3522 = vsel %vm2619, %v3513, %v3521
        %v3524 = vshrl.u32 %v1480, 16
        %v3526 = vrot.slane %v3524, 3
        %v3527 = vshll.u32 %v1480, 16
        %v3529 = vrot.slane %v3527, 4
        %v3530 = vor.u32 %v3526, %v3529
        %v3532 = vshrl.u32 %v1481, 16
        %v3534 = vrot.slane %v3532, 3
        %v3535 = vshll.u32 %v1481, 16
        %v3537 = vrot.slane %v3535, 4
        %v3538 = vor.u32 %v3534, %v3537
        %v3539 = vsel %vm2619, %v3530, %v3538
        %v3541 = vshrl.u32 %v1577, 16
        %v3543 = vrot.slane %v3541, 3
        %v3544 = vshll.u32 %v1577, 16
        %v3546 = vrot.slane %v3544, 4
        %v3547 = vor.u32 %v3543, %v3546
        %v3548 = vsel %vm2619, %v3547, %v3547
        %v3550 = vshrl.u32 %v1712, 16
        %v3552 = vrot.slane %v3550, 3
        %v3553 = vshll.u32 %v1712, 16
        %v3555 = vrot.slane %v3553, 4
        %v3556 = vor.u32 %v3552, %v3555
        %v3558 = vshrl.u32 %v1714, 16
        %v3560 = vrot.slane %v3558, 3
        %v3561 = vshll.u32 %v1714, 16
        %v3563 = vrot.slane %v3561, 4
        %v3564 = vor.u32 %v3560, %v3563
        %v3565 = vsel %vm2619, %v3556, %v3564
        %v3567 = vshrl.u32 %v1849, 16
        %v3569 = vrot.slane %v3567, 3
        %v3570 = vshll.u32 %v1849, 16
        %v3572 = vrot.slane %v3570, 4
        %v3573 = vor.u32 %v3569, %v3572
        %v3575 = vshrl.u32 %v1850, 16
        %v3577 = vrot.slane %v3575, 3
        %v3578 = vshll.u32 %v1850, 16
        %v3580 = vrot.slane %v3578, 4
        %v3581 = vor.u32 %v3577, %v3580
        %v3582 = vsel %vm2619, %v3573, %v3581
        %v3584 = vshrl.u32 %v1946, 16
        %v3586 = vrot.slane %v3584, 3
        %v3587 = vshll.u32 %v1946, 16
        %v3589 = vrot.slane %v3587, 4
        %v3590 = vor.u32 %v3586, %v3589
        %v3591 = vsel %vm2619, %v3590, %v3590
        %v3593 = vshrl.u32 %v2080, 16
        %v3595 = vrot.slane %v3593, 3
        %v3596 = vshll.u32 %v2080, 16
        %v3598 = vrot.slane %v3596, 4
        %v3599 = vor.u32 %v3595, %v3598
        %v3601 = vshrl.u32 %v2082, 16
        %v3603 = vrot.slane %v3601, 3
        %v3604 = vshll.u32 %v2082, 16
        %v3606 = vrot.slane %v3604, 4
        %v3607 = vor.u32 %v3603, %v3606
        %v3608 = vsel %vm2619, %v3599, %v3607
        %v3610 = vshrl.u32 %v2217, 16
        %v3612 = vrot.slane %v3610, 3
        %v3613 = vshll.u32 %v2217, 16
        %v3615 = vrot.slane %v3613, 4
        %v3616 = vor.u32 %v3612, %v3615
        %v3618 = vshrl.u32 %v2218, 16
        %v3620 = vrot.slane %v3618, 3
        %v3621 = vshll.u32 %v2218, 16
        %v3623 = vrot.slane %v3621, 4
        %v3624 = vor.u32 %v3620, %v3623
        %v3625 = vsel %vm2619, %v3616, %v3624
        %v3627 = vshrl.u32 %v2314, 16
        %v3629 = vrot.slane %v3627, 3
        %v3630 = vshll.u32 %v2314, 16
        %v3632 = vrot.slane %v3630, 4
        %v3633 = vor.u32 %v3629, %v3632
        %v3634 = vsel %vm2619, %v3633, %v3633
        %v3636 = vshrl.u32 %v2448, 16
        %v3638 = vrot.slane %v3636, 3
        %v3639 = vshll.u32 %v2448, 16
        %v3641 = vrot.slane %v3639, 4
        %v3642 = vor.u32 %v3638, %v3641
        %v3644 = vshrl.u32 %v2450, 16
        %v3646 = vrot.slane %v3644, 3
        %v3647 = vshll.u32 %v2450, 16
        %v3649 = vrot.slane %v3647, 4
        %v3650 = vor.u32 %v3646, %v3649
        %v3651 = vsel %vm2619, %v3642, %v3650
        %v3653 = vshrl.u32 %v1482, 16
        %v3655 = vrot.slane %v3653, 3
        %v3656 = vshll.u32 %v1482, 16
        %v3658 = vrot.slane %v3656, 4
        %v3659 = vor.u32 %v3655, %v3658
        %v3661 = vshrl.u32 %v1483, 16
        %v3663 = vrot.slane %v3661, 3
        %v3664 = vshll.u32 %v1483, 16
        %v3666 = vrot.slane %v3664, 4
        %v3667 = vor.u32 %v3663, %v3666
        %v3668 = vsel %vm2619, %v3659, %v3667
        %v3670 = vshrl.u32 %v1585, 16
        %v3672 = vrot.slane %v3670, 3
        %v3673 = vshll.u32 %v1585, 16
        %v3675 = vrot.slane %v3673, 4
        %v3676 = vor.u32 %v3672, %v3675
        %v3677 = vsel %vm2619, %v3676, %v3676
        %v3679 = vshrl.u32 %v1715, 16
        %v3681 = vrot.slane %v3679, 3
        %v3682 = vshll.u32 %v1715, 16
        %v3684 = vrot.slane %v3682, 4
        %v3685 = vor.u32 %v3681, %v3684
        %v3687 = vshrl.u32 %v1717, 16
        %v3689 = vrot.slane %v3687, 3
        %v3690 = vshll.u32 %v1717, 16
        %v3692 = vrot.slane %v3690, 4
        %v3693 = vor.u32 %v3689, %v3692
        %v3694 = vsel %vm2619, %v3685, %v3693
        %v3696 = vshrl.u32 %v1851, 16
        %v3698 = vrot.slane %v3696, 3
        %v3699 = vshll.u32 %v1851, 16
        %v3701 = vrot.slane %v3699, 4
        %v3702 = vor.u32 %v3698, %v3701
        %v3704 = vshrl.u32 %v1852, 16
        %v3706 = vrot.slane %v3704, 3
        %v3707 = vshll.u32 %v1852, 16
        %v3709 = vrot.slane %v3707, 4
        %v3710 = vor.u32 %v3706, %v3709
        %v3711 = vsel %vm2619, %v3702, %v3710
        %v3713 = vshrl.u32 %v1954, 16
        %v3715 = vrot.slane %v3713, 3
        %v3716 = vshll.u32 %v1954, 16
        %v3718 = vrot.slane %v3716, 4
        %v3719 = vor.u32 %v3715, %v3718
        %v3720 = vsel %vm2619, %v3719, %v3719
        %v3722 = vshrl.u32 %v2083, 16
        %v3724 = vrot.slane %v3722, 3
        %v3725 = vshll.u32 %v2083, 16
        %v3727 = vrot.slane %v3725, 4
        %v3728 = vor.u32 %v3724, %v3727
        %v3730 = vshrl.u32 %v2085, 16
        %v3732 = vrot.slane %v3730, 3
        %v3733 = vshll.u32 %v2085, 16
        %v3735 = vrot.slane %v3733, 4
        %v3736 = vor.u32 %v3732, %v3735
        %v3737 = vsel %vm2619, %v3728, %v3736
        %v3739 = vshrl.u32 %v2219, 16
        %v3741 = vrot.slane %v3739, 3
        %v3742 = vshll.u32 %v2219, 16
        %v3744 = vrot.slane %v3742, 4
        %v3745 = vor.u32 %v3741, %v3744
        %v3747 = vshrl.u32 %v2220, 16
        %v3749 = vrot.slane %v3747, 3
        %v3750 = vshll.u32 %v2220, 16
        %v3752 = vrot.slane %v3750, 4
        %v3753 = vor.u32 %v3749, %v3752
        %v3754 = vsel %vm2619, %v3745, %v3753
        %v3756 = vshrl.u32 %v2322, 16
        %v3758 = vrot.slane %v3756, 3
        %v3759 = vshll.u32 %v2322, 16
        %v3761 = vrot.slane %v3759, 4
        %v3762 = vor.u32 %v3758, %v3761
        %v3763 = vsel %vm2619, %v3762, %v3762
        %v3765 = vshrl.u32 %v2451, 16
        %v3767 = vrot.slane %v3765, 3
        %v3768 = vshll.u32 %v2451, 16
        %v3770 = vrot.slane %v3768, 4
        %v3771 = vor.u32 %v3767, %v3770
        %v3773 = vshrl.u32 %v2453, 16
        %v3775 = vrot.slane %v3773, 3
        %v3776 = vshll.u32 %v2453, 16
        %v3778 = vrot.slane %v3776, 4
        %v3779 = vor.u32 %v3775, %v3778
        %v3780 = vsel %vm2619, %v3771, %v3779
        %v3782 = vshrl.u32 %v1484, 16
        %v3784 = vrot.slane %v3782, 3
        %v3785 = vshll.u32 %v1484, 16
        %v3787 = vrot.slane %v3785, 4
        %v3788 = vor.u32 %v3784, %v3787
        %v3790 = vshrl.u32 %v1485, 16
        %v3792 = vrot.slane %v3790, 3
        %v3793 = vshll.u32 %v1485, 16
        %v3795 = vrot.slane %v3793, 4
        %v3796 = vor.u32 %v3792, %v3795
        %v3797 = vsel %vm2619, %v3788, %v3796
        %v3799 = vshrl.u32 %v1593, 16
        %v3801 = vrot.slane %v3799, 3
        %v3802 = vshll.u32 %v1593, 16
        %v3804 = vrot.slane %v3802, 4
        %v3805 = vor.u32 %v3801, %v3804
        %v3806 = vsel %vm2619, %v3805, %v3805
        %v3808 = vshrl.u32 %v1718, 16
        %v3810 = vrot.slane %v3808, 3
        %v3811 = vshll.u32 %v1718, 16
        %v3813 = vrot.slane %v3811, 4
        %v3814 = vor.u32 %v3810, %v3813
        %v3816 = vshrl.u32 %v1720, 16
        %v3818 = vrot.slane %v3816, 3
        %v3819 = vshll.u32 %v1720, 16
        %v3821 = vrot.slane %v3819, 4
        %v3822 = vor.u32 %v3818, %v3821
        %v3823 = vsel %vm2619, %v3814, %v3822
        %v3825 = vshrl.u32 %v1853, 16
        %v3827 = vrot.slane %v3825, 3
        %v3828 = vshll.u32 %v1853, 16
        %v3830 = vrot.slane %v3828, 4
        %v3831 = vor.u32 %v3827, %v3830
        %v3833 = vshrl.u32 %v1854, 16
        %v3835 = vrot.slane %v3833, 3
        %v3836 = vshll.u32 %v1854, 16
        %v3838 = vrot.slane %v3836, 4
        %v3839 = vor.u32 %v3835, %v3838
        %v3840 = vsel %vm2619, %v3831, %v3839
        %v3842 = vshrl.u32 %v1962, 16
        %v3844 = vrot.slane %v3842, 3
        %v3845 = vshll.u32 %v1962, 16
        %v3847 = vrot.slane %v3845, 4
        %v3848 = vor.u32 %v3844, %v3847
        %v3849 = vsel %vm2619, %v3848, %v3848
        %v3851 = vshrl.u32 %v2086, 16
        %v3853 = vrot.slane %v3851, 3
        %v3854 = vshll.u32 %v2086, 16
        %v3856 = vrot.slane %v3854, 4
        %v3857 = vor.u32 %v3853, %v3856
        %v3859 = vshrl.u32 %v2088, 16
        %v3861 = vrot.slane %v3859, 3
        %v3862 = vshll.u32 %v2088, 16
        %v3864 = vrot.slane %v3862, 4
        %v3865 = vor.u32 %v3861, %v3864
        %v3866 = vsel %vm2619, %v3857, %v3865
        %v3868 = vshrl.u32 %v2221, 16
        %v3870 = vrot.slane %v3868, 3
        %v3871 = vshll.u32 %v2221, 16
        %v3873 = vrot.slane %v3871, 4
        %v3874 = vor.u32 %v3870, %v3873
        %v3876 = vshrl.u32 %v2222, 16
        %v3878 = vrot.slane %v3876, 3
        %v3879 = vshll.u32 %v2222, 16
        %v3881 = vrot.slane %v3879, 4
        %v3882 = vor.u32 %v3878, %v3881
        %v3883 = vsel %vm2619, %v3874, %v3882
        %v3885 = vshrl.u32 %v2330, 16
        %v3887 = vrot.slane %v3885, 3
        %v3888 = vshll.u32 %v2330, 16
        %v3890 = vrot.slane %v3888, 4
        %v3891 = vor.u32 %v3887, %v3890
        %v3892 = vsel %vm2619, %v3891, %v3891
        %v3894 = vshrl.u32 %v2454, 16
        %v3896 = vrot.slane %v3894, 3
        %v3897 = vshll.u32 %v2454, 16
        %v3899 = vrot.slane %v3897, 4
        %v3900 = vor.u32 %v3896, %v3899
        %v3902 = vshrl.u32 %v2456, 16
        %v3904 = vrot.slane %v3902, 3
        %v3905 = vshll.u32 %v2456, 16
        %v3907 = vrot.slane %v3905, 4
        %v3908 = vor.u32 %v3904, %v3907
        %v3909 = vsel %vm2619, %v3900, %v3908
        %v3911 = vshrl.u32 %v1486, 16
        %v3913 = vrot.slane %v3911, 3
        %v3914 = vshll.u32 %v1486, 16
        %v3916 = vrot.slane %v3914, 4
        %v3917 = vor.u32 %v3913, %v3916
        %v3919 = vshrl.u32 %v1487, 16
        %v3921 = vrot.slane %v3919, 3
        %v3922 = vshll.u32 %v1487, 16
        %v3924 = vrot.slane %v3922, 4
        %v3925 = vor.u32 %v3921, %v3924
        %v3926 = vsel %vm2619, %v3917, %v3925
        %v3928 = vshrl.u32 %v1601, 16
        %v3930 = vrot.slane %v3928, 3
        %v3931 = vshll.u32 %v1601, 16
        %v3933 = vrot.slane %v3931, 4
        %v3934 = vor.u32 %v3930, %v3933
        %v3935 = vsel %vm2619, %v3934, %v3934
        %v3937 = vshrl.u32 %v1721, 16
        %v3939 = vrot.slane %v3937, 3
        %v3940 = vshll.u32 %v1721, 16
        %v3942 = vrot.slane %v3940, 4
        %v3943 = vor.u32 %v3939, %v3942
        %v3945 = vshrl.u32 %v1723, 16
        %v3947 = vrot.slane %v3945, 3
        %v3948 = vshll.u32 %v1723, 16
        %v3950 = vrot.slane %v3948, 4
        %v3951 = vor.u32 %v3947, %v3950
        %v3952 = vsel %vm2619, %v3943, %v3951
        %v3954 = vshrl.u32 %v1855, 16
        %v3956 = vrot.slane %v3954, 3
        %v3957 = vshll.u32 %v1855, 16
        %v3959 = vrot.slane %v3957, 4
        %v3960 = vor.u32 %v3956, %v3959
        %v3962 = vshrl.u32 %v1856, 16
        %v3964 = vrot.slane %v3962, 3
        %v3965 = vshll.u32 %v1856, 16
        %v3967 = vrot.slane %v3965, 4
        %v3968 = vor.u32 %v3964, %v3967
        %v3969 = vsel %vm2619, %v3960, %v3968
        %v3971 = vshrl.u32 %v1970, 16
        %v3973 = vrot.slane %v3971, 3
        %v3974 = vshll.u32 %v1970, 16
        %v3976 = vrot.slane %v3974, 4
        %v3977 = vor.u32 %v3973, %v3976
        %v3978 = vsel %vm2619, %v3977, %v3977
        %v3980 = vshrl.u32 %v2089, 16
        %v3982 = vrot.slane %v3980, 3
        %v3983 = vshll.u32 %v2089, 16
        %v3985 = vrot.slane %v3983, 4
        %v3986 = vor.u32 %v3982, %v3985
        %v3988 = vshrl.u32 %v2091, 16
        %v3990 = vrot.slane %v3988, 3
        %v3991 = vshll.u32 %v2091, 16
        %v3993 = vrot.slane %v3991, 4
        %v3994 = vor.u32 %v3990, %v3993
        %v3995 = vsel %vm2619, %v3986, %v3994
        %v3997 = vshrl.u32 %v2223, 16
        %v3999 = vrot.slane %v3997, 3
        %v4000 = vshll.u32 %v2223, 16
        %v4002 = vrot.slane %v4000, 4
        %v4003 = vor.u32 %v3999, %v4002
        %v4005 = vshrl.u32 %v2224, 16
        %v4007 = vrot.slane %v4005, 3
        %v4008 = vshll.u32 %v2224, 16
        %v4010 = vrot.slane %v4008, 4
        %v4011 = vor.u32 %v4007, %v4010
        %v4012 = vsel %vm2619, %v4003, %v4011
        %v4014 = vshrl.u32 %v2338, 16
        %v4016 = vrot.slane %v4014, 3
        %v4017 = vshll.u32 %v2338, 16
        %v4019 = vrot.slane %v4017, 4
        %v4020 = vor.u32 %v4016, %v4019
        %v4021 = vsel %vm2619, %v4020, %v4020
        %v4023 = vshrl.u32 %v2457, 16
        %v4025 = vrot.slane %v4023, 3
        %v4026 = vshll.u32 %v2457, 16
        %v4028 = vrot.slane %v4026, 4
        %v4029 = vor.u32 %v4025, %v4028
        %v4031 = vshrl.u32 %v2459, 16
        %v4033 = vrot.slane %v4031, 3
        %v4034 = vshll.u32 %v2459, 16
        %v4036 = vrot.slane %v4034, 4
        %v4037 = vor.u32 %v4033, %v4036
        %v4038 = vsel %vm2619, %v4029, %v4037
        %v4040 = vshrl.u32 %v1488, 16
        %v4042 = vrot.slane %v4040, 3
        %v4043 = vshll.u32 %v1488, 16
        %v4045 = vrot.slane %v4043, 4
        %v4046 = vor.u32 %v4042, %v4045
        %v4048 = vshrl.u32 %v1489, 16
        %v4050 = vrot.slane %v4048, 3
        %v4051 = vshll.u32 %v1489, 16
        %v4053 = vrot.slane %v4051, 4
        %v4054 = vor.u32 %v4050, %v4053
        %v4055 = vsel %vm2619, %v4046, %v4054
        %v4057 = vshrl.u32 %v1609, 16
        %v4059 = vrot.slane %v4057, 3
        %v4060 = vshll.u32 %v1609, 16
        %v4062 = vrot.slane %v4060, 4
        %v4063 = vor.u32 %v4059, %v4062
        %v4064 = vsel %vm2619, %v4063, %v4063
        %v4066 = vshrl.u32 %v1724, 16
        %v4068 = vrot.slane %v4066, 3
        %v4069 = vshll.u32 %v1724, 16
        %v4071 = vrot.slane %v4069, 4
        %v4072 = vor.u32 %v4068, %v4071
        %v4074 = vshrl.u32 %v1726, 16
        %v4076 = vrot.slane %v4074, 3
        %v4077 = vshll.u32 %v1726, 16
        %v4079 = vrot.slane %v4077, 4
        %v4080 = vor.u32 %v4076, %v4079
        %v4081 = vsel %vm2619, %v4072, %v4080
        %v4083 = vshrl.u32 %v1857, 16
        %v4085 = vrot.slane %v4083, 3
        %v4086 = vshll.u32 %v1857, 16
        %v4088 = vrot.slane %v4086, 4
        %v4089 = vor.u32 %v4085, %v4088
        %v4091 = vshrl.u32 %v1858, 16
        %v4093 = vrot.slane %v4091, 3
        %v4094 = vshll.u32 %v1858, 16
        %v4096 = vrot.slane %v4094, 4
        %v4097 = vor.u32 %v4093, %v4096
        %v4098 = vsel %vm2619, %v4089, %v4097
        %v4100 = vshrl.u32 %v1978, 16
        %v4102 = vrot.slane %v4100, 3
        %v4103 = vshll.u32 %v1978, 16
        %v4105 = vrot.slane %v4103, 4
        %v4106 = vor.u32 %v4102, %v4105
        %v4107 = vsel %vm2619, %v4106, %v4106
        %v4109 = vshrl.u32 %v2092, 16
        %v4111 = vrot.slane %v4109, 3
        %v4112 = vshll.u32 %v2092, 16
        %v4114 = vrot.slane %v4112, 4
        %v4115 = vor.u32 %v4111, %v4114
        %v4117 = vshrl.u32 %v2094, 16
        %v4119 = vrot.slane %v4117, 3
        %v4120 = vshll.u32 %v2094, 16
        %v4122 = vrot.slane %v4120, 4
        %v4123 = vor.u32 %v4119, %v4122
        %v4124 = vsel %vm2619, %v4115, %v4123
        %v4126 = vshrl.u32 %v2225, 16
        %v4128 = vrot.slane %v4126, 3
        %v4129 = vshll.u32 %v2225, 16
        %v4131 = vrot.slane %v4129, 4
        %v4132 = vor.u32 %v4128, %v4131
        %v4134 = vshrl.u32 %v2226, 16
        %v4136 = vrot.slane %v4134, 3
        %v4137 = vshll.u32 %v2226, 16
        %v4139 = vrot.slane %v4137, 4
        %v4140 = vor.u32 %v4136, %v4139
        %v4141 = vsel %vm2619, %v4132, %v4140
        %v4143 = vshrl.u32 %v2346, 16
        %v4145 = vrot.slane %v4143, 3
        %v4146 = vshll.u32 %v2346, 16
        %v4148 = vrot.slane %v4146, 4
        %v4149 = vor.u32 %v4145, %v4148
        %v4150 = vsel %vm2619, %v4149, %v4149
        %v4152 = vshrl.u32 %v2460, 16
        %v4154 = vrot.slane %v4152, 3
        %v4155 = vshll.u32 %v2460, 16
        %v4157 = vrot.slane %v4155, 4
        %v4158 = vor.u32 %v4154, %v4157
        %v4160 = vshrl.u32 %v2462, 16
        %v4162 = vrot.slane %v4160, 3
        %v4163 = vshll.u32 %v2462, 16
        %v4165 = vrot.slane %v4163, 4
        %v4166 = vor.u32 %v4162, %v4165
        %v4167 = vsel %vm2619, %v4158, %v4166
        %v4169 = vshrl.u32 %v1490, 16
        %v4171 = vrot.slane %v4169, 3
        %v4172 = vshll.u32 %v1490, 16
        %v4174 = vrot.slane %v4172, 4
        %v4175 = vor.u32 %v4171, %v4174
        %v4177 = vshrl.u32 %v1491, 16
        %v4179 = vrot.slane %v4177, 3
        %v4180 = vshll.u32 %v1491, 16
        %v4182 = vrot.slane %v4180, 4
        %v4183 = vor.u32 %v4179, %v4182
        %v4184 = vsel %vm2619, %v4175, %v4183
        %v4186 = vshrl.u32 %v1617, 16
        %v4188 = vrot.slane %v4186, 3
        %v4189 = vshll.u32 %v1617, 16
        %v4191 = vrot.slane %v4189, 4
        %v4192 = vor.u32 %v4188, %v4191
        %v4193 = vsel %vm2619, %v4192, %v4192
        %v4195 = vshrl.u32 %v1727, 16
        %v4197 = vrot.slane %v4195, 3
        %v4198 = vshll.u32 %v1727, 16
        %v4200 = vrot.slane %v4198, 4
        %v4201 = vor.u32 %v4197, %v4200
        %v4203 = vshrl.u32 %v1729, 16
        %v4205 = vrot.slane %v4203, 3
        %v4206 = vshll.u32 %v1729, 16
        %v4208 = vrot.slane %v4206, 4
        %v4209 = vor.u32 %v4205, %v4208
        %v4210 = vsel %vm2619, %v4201, %v4209
        %v4212 = vshrl.u32 %v1859, 16
        %v4214 = vrot.slane %v4212, 3
        %v4215 = vshll.u32 %v1859, 16
        %v4217 = vrot.slane %v4215, 4
        %v4218 = vor.u32 %v4214, %v4217
        %v4220 = vshrl.u32 %v1860, 16
        %v4222 = vrot.slane %v4220, 3
        %v4223 = vshll.u32 %v1860, 16
        %v4225 = vrot.slane %v4223, 4
        %v4226 = vor.u32 %v4222, %v4225
        %v4227 = vsel %vm2619, %v4218, %v4226
        %v4229 = vshrl.u32 %v1986, 16
        %v4231 = vrot.slane %v4229, 3
        %v4232 = vshll.u32 %v1986, 16
        %v4234 = vrot.slane %v4232, 4
        %v4235 = vor.u32 %v4231, %v4234
        %v4236 = vsel %vm2619, %v4235, %v4235
        %v4238 = vshrl.u32 %v2095, 16
        %v4240 = vrot.slane %v4238, 3
        %v4241 = vshll.u32 %v2095, 16
        %v4243 = vrot.slane %v4241, 4
        %v4244 = vor.u32 %v4240, %v4243
        %v4246 = vshrl.u32 %v2097, 16
        %v4248 = vrot.slane %v4246, 3
        %v4249 = vshll.u32 %v2097, 16
        %v4251 = vrot.slane %v4249, 4
        %v4252 = vor.u32 %v4248, %v4251
        %v4253 = vsel %vm2619, %v4244, %v4252
        %v4255 = vshrl.u32 %v2227, 16
        %v4257 = vrot.slane %v4255, 3
        %v4258 = vshll.u32 %v2227, 16
        %v4260 = vrot.slane %v4258, 4
        %v4261 = vor.u32 %v4257, %v4260
        %v4263 = vshrl.u32 %v2228, 16
        %v4265 = vrot.slane %v4263, 3
        %v4266 = vshll.u32 %v2228, 16
        %v4268 = vrot.slane %v4266, 4
        %v4269 = vor.u32 %v4265, %v4268
        %v4270 = vsel %vm2619, %v4261, %v4269
        %v4272 = vshrl.u32 %v2354, 16
        %v4274 = vrot.slane %v4272, 3
        %v4275 = vshll.u32 %v2354, 16
        %v4277 = vrot.slane %v4275, 4
        %v4278 = vor.u32 %v4274, %v4277
        %v4279 = vsel %vm2619, %v4278, %v4278
        %v4281 = vshrl.u32 %v2463, 16
        %v4283 = vrot.slane %v4281, 3
        %v4284 = vshll.u32 %v2463, 16
        %v4286 = vrot.slane %v4284, 4
        %v4287 = vor.u32 %v4283, %v4286
        %v4289 = vshrl.u32 %v2465, 16
        %v4291 = vrot.slane %v4289, 3
        %v4292 = vshll.u32 %v2465, 16
        %v4294 = vrot.slane %v4292, 4
        %v4295 = vor.u32 %v4291, %v4294
        %v4296 = vsel %vm2619, %v4287, %v4295
        %v4298 = vshrl.u32 %v1492, 16
        %v4300 = vrot.slane %v4298, 3
        %v4301 = vshll.u32 %v1492, 16
        %v4303 = vrot.slane %v4301, 4
        %v4304 = vor.u32 %v4300, %v4303
        %v4306 = vshrl.u32 %v1493, 16
        %v4308 = vrot.slane %v4306, 3
        %v4309 = vshll.u32 %v1493, 16
        %v4311 = vrot.slane %v4309, 4
        %v4312 = vor.u32 %v4308, %v4311
        %v4313 = vsel %vm2619, %v4304, %v4312
        %v4315 = vshrl.u32 %v1625, 16
        %v4317 = vrot.slane %v4315, 3
        %v4318 = vshll.u32 %v1625, 16
        %v4320 = vrot.slane %v4318, 4
        %v4321 = vor.u32 %v4317, %v4320
        %v4322 = vsel %vm2619, %v4321, %v4321
        %v4324 = vshrl.u32 %v1730, 16
        %v4326 = vrot.slane %v4324, 3
        %v4327 = vshll.u32 %v1730, 16
        %v4329 = vrot.slane %v4327, 4
        %v4330 = vor.u32 %v4326, %v4329
        %v4332 = vshrl.u32 %v1732, 16
        %v4334 = vrot.slane %v4332, 3
        %v4335 = vshll.u32 %v1732, 16
        %v4337 = vrot.slane %v4335, 4
        %v4338 = vor.u32 %v4334, %v4337
        %v4339 = vsel %vm2619, %v4330, %v4338
        %v4341 = vshrl.u32 %v1861, 16
        %v4343 = vrot.slane %v4341, 3
        %v4344 = vshll.u32 %v1861, 16
        %v4346 = vrot.slane %v4344, 4
        %v4347 = vor.u32 %v4343, %v4346
        %v4349 = vshrl.u32 %v1862, 16
        %v4351 = vrot.slane %v4349, 3
        %v4352 = vshll.u32 %v1862, 16
        %v4354 = vrot.slane %v4352, 4
        %v4355 = vor.u32 %v4351, %v4354
        %v4356 = vsel %vm2619, %v4347, %v4355
        %v4358 = vshrl.u32 %v1994, 16
        %v4360 = vrot.slane %v4358, 3
        %v4361 = vshll.u32 %v1994, 16
        %v4363 = vrot.slane %v4361, 4
        %v4364 = vor.u32 %v4360, %v4363
        %v4365 = vsel %vm2619, %v4364, %v4364
        %v4367 = vshrl.u32 %v2098, 16
        %v4369 = vrot.slane %v4367, 3
        %v4370 = vshll.u32 %v2098, 16
        %v4372 = vrot.slane %v4370, 4
        %v4373 = vor.u32 %v4369, %v4372
        %v4375 = vshrl.u32 %v2100, 16
        %v4377 = vrot.slane %v4375, 3
        %v4378 = vshll.u32 %v2100, 16
        %v4380 = vrot.slane %v4378, 4
        %v4381 = vor.u32 %v4377, %v4380
        %v4382 = vsel %vm2619, %v4373, %v4381
        %v4384 = vshrl.u32 %v2229, 16
        %v4386 = vrot.slane %v4384, 3
        %v4387 = vshll.u32 %v2229, 16
        %v4389 = vrot.slane %v4387, 4
        %v4390 = vor.u32 %v4386, %v4389
        %v4392 = vshrl.u32 %v2230, 16
        %v4394 = vrot.slane %v4392, 3
        %v4395 = vshll.u32 %v2230, 16
        %v4397 = vrot.slane %v4395, 4
        %v4398 = vor.u32 %v4394, %v4397
        %v4399 = vsel %vm2619, %v4390, %v4398
        %v4401 = vshrl.u32 %v2362, 16
        %v4403 = vrot.slane %v4401, 3
        %v4404 = vshll.u32 %v2362, 16
        %v4406 = vrot.slane %v4404, 4
        %v4407 = vor.u32 %v4403, %v4406
        %v4408 = vsel %vm2619, %v4407, %v4407
        %v4410 = vshrl.u32 %v2466, 16
        %v4412 = vrot.slane %v4410, 3
        %v4413 = vshll.u32 %v2466, 16
        %v4415 = vrot.slane %v4413, 4
        %v4416 = vor.u32 %v4412, %v4415
        %v4418 = vshrl.u32 %v2468, 16
        %v4420 = vrot.slane %v4418, 3
        %v4421 = vshll.u32 %v2468, 16
        %v4423 = vrot.slane %v4421, 4
        %v4424 = vor.u32 %v4420, %v4423
        %v4425 = vsel %vm2619, %v4416, %v4424
        %v4427 = vshrl.u32 %v1494, 16
        %v4429 = vrot.slane %v4427, 3
        %v4430 = vshll.u32 %v1494, 16
        %v4432 = vrot.slane %v4430, 4
        %v4433 = vor.u32 %v4429, %v4432
        %v4435 = vshrl.u32 %v1495, 16
        %v4437 = vrot.slane %v4435, 3
        %v4438 = vshll.u32 %v1495, 16
        %v4440 = vrot.slane %v4438, 4
        %v4441 = vor.u32 %v4437, %v4440
        %v4442 = vsel %vm2619, %v4433, %v4441
        %v4444 = vshrl.u32 %v1633, 16
        %v4446 = vrot.slane %v4444, 3
        %v4447 = vshll.u32 %v1633, 16
        %v4449 = vrot.slane %v4447, 4
        %v4450 = vor.u32 %v4446, %v4449
        %v4451 = vsel %vm2619, %v4450, %v4450
        %v4453 = vshrl.u32 %v1733, 16
        %v4455 = vrot.slane %v4453, 3
        %v4456 = vshll.u32 %v1733, 16
        %v4458 = vrot.slane %v4456, 4
        %v4459 = vor.u32 %v4455, %v4458
        %v4461 = vshrl.u32 %v1735, 16
        %v4463 = vrot.slane %v4461, 3
        %v4464 = vshll.u32 %v1735, 16
        %v4466 = vrot.slane %v4464, 4
        %v4467 = vor.u32 %v4463, %v4466
        %v4468 = vsel %vm2619, %v4459, %v4467
        %v4470 = vshrl.u32 %v1863, 16
        %v4472 = vrot.slane %v4470, 3
        %v4473 = vshll.u32 %v1863, 16
        %v4475 = vrot.slane %v4473, 4
        %v4476 = vor.u32 %v4472, %v4475
        %v4478 = vshrl.u32 %v1864, 16
        %v4480 = vrot.slane %v4478, 3
        %v4481 = vshll.u32 %v1864, 16
        %v4483 = vrot.slane %v4481, 4
        %v4484 = vor.u32 %v4480, %v4483
        %v4485 = vsel %vm2619, %v4476, %v4484
        %v4487 = vshrl.u32 %v2002, 16
        %v4489 = vrot.slane %v4487, 3
        %v4490 = vshll.u32 %v2002, 16
        %v4492 = vrot.slane %v4490, 4
        %v4493 = vor.u32 %v4489, %v4492
        %v4494 = vsel %vm2619, %v4493, %v4493
        %v4496 = vshrl.u32 %v2101, 16
        %v4498 = vrot.slane %v4496, 3
        %v4499 = vshll.u32 %v2101, 16
        %v4501 = vrot.slane %v4499, 4
        %v4502 = vor.u32 %v4498, %v4501
        %v4504 = vshrl.u32 %v2103, 16
        %v4506 = vrot.slane %v4504, 3
        %v4507 = vshll.u32 %v2103, 16
        %v4509 = vrot.slane %v4507, 4
        %v4510 = vor.u32 %v4506, %v4509
        %v4511 = vsel %vm2619, %v4502, %v4510
        %v4513 = vshrl.u32 %v2231, 16
        %v4515 = vrot.slane %v4513, 3
        %v4516 = vshll.u32 %v2231, 16
        %v4518 = vrot.slane %v4516, 4
        %v4519 = vor.u32 %v4515, %v4518
        %v4521 = vshrl.u32 %v2232, 16
        %v4523 = vrot.slane %v4521, 3
        %v4524 = vshll.u32 %v2232, 16
        %v4526 = vrot.slane %v4524, 4
        %v4527 = vor.u32 %v4523, %v4526
        %v4528 = vsel %vm2619, %v4519, %v4527
        %v4530 = vshrl.u32 %v2370, 16
        %v4532 = vrot.slane %v4530, 3
        %v4533 = vshll.u32 %v2370, 16
        %v4535 = vrot.slane %v4533, 4
        %v4536 = vor.u32 %v4532, %v4535
        %v4537 = vsel %vm2619, %v4536, %v4536
        %v4539 = vshrl.u32 %v2469, 16
        %v4541 = vrot.slane %v4539, 3
        %v4542 = vshll.u32 %v2469, 16
        %v4544 = vrot.slane %v4542, 4
        %v4545 = vor.u32 %v4541, %v4544
        %v4547 = vshrl.u32 %v2471, 16
        %v4549 = vrot.slane %v4547, 3
        %v4550 = vshll.u32 %v2471, 16
        %v4552 = vrot.slane %v4550, 4
        %v4553 = vor.u32 %v4549, %v4552
        %v4554 = vsel %vm2619, %v4545, %v4553
        %v4556 = vshrl.u32 %v1496, 16
        %v4558 = vrot.slane %v4556, 3
        %v4559 = vshll.u32 %v1496, 16
        %v4561 = vrot.slane %v4559, 4
        %v4562 = vor.u32 %v4558, %v4561
        %v4564 = vshrl.u32 %v1497, 16
        %v4566 = vrot.slane %v4564, 3
        %v4567 = vshll.u32 %v1497, 16
        %v4569 = vrot.slane %v4567, 4
        %v4570 = vor.u32 %v4566, %v4569
        %v4571 = vsel %vm2619, %v4562, %v4570
        %v4573 = vshrl.u32 %v1641, 16
        %v4575 = vrot.slane %v4573, 3
        %v4576 = vshll.u32 %v1641, 16
        %v4578 = vrot.slane %v4576, 4
        %v4579 = vor.u32 %v4575, %v4578
        %v4580 = vsel %vm2619, %v4579, %v4579
        %v4582 = vshrl.u32 %v1736, 16
        %v4584 = vrot.slane %v4582, 3
        %v4585 = vshll.u32 %v1736, 16
        %v4587 = vrot.slane %v4585, 4
        %v4588 = vor.u32 %v4584, %v4587
        %v4590 = vshrl.u32 %v1738, 16
        %v4592 = vrot.slane %v4590, 3
        %v4593 = vshll.u32 %v1738, 16
        %v4595 = vrot.slane %v4593, 4
        %v4596 = vor.u32 %v4592, %v4595
        %v4597 = vsel %vm2619, %v4588, %v4596
        %v4599 = vshrl.u32 %v1865, 16
        %v4601 = vrot.slane %v4599, 3
        %v4602 = vshll.u32 %v1865, 16
        %v4604 = vrot.slane %v4602, 4
        %v4605 = vor.u32 %v4601, %v4604
        %v4607 = vshrl.u32 %v1866, 16
        %v4609 = vrot.slane %v4607, 3
        %v4610 = vshll.u32 %v1866, 16
        %v4612 = vrot.slane %v4610, 4
        %v4613 = vor.u32 %v4609, %v4612
        %v4614 = vsel %vm2619, %v4605, %v4613
        %v4616 = vshrl.u32 %v2010, 16
        %v4618 = vrot.slane %v4616, 3
        %v4619 = vshll.u32 %v2010, 16
        %v4621 = vrot.slane %v4619, 4
        %v4622 = vor.u32 %v4618, %v4621
        %v4623 = vsel %vm2619, %v4622, %v4622
        %v4625 = vshrl.u32 %v2104, 16
        %v4627 = vrot.slane %v4625, 3
        %v4628 = vshll.u32 %v2104, 16
        %v4630 = vrot.slane %v4628, 4
        %v4631 = vor.u32 %v4627, %v4630
        %v4633 = vshrl.u32 %v2106, 16
        %v4635 = vrot.slane %v4633, 3
        %v4636 = vshll.u32 %v2106, 16
        %v4638 = vrot.slane %v4636, 4
        %v4639 = vor.u32 %v4635, %v4638
        %v4640 = vsel %vm2619, %v4631, %v4639
        %v4642 = vshrl.u32 %v2233, 16
        %v4644 = vrot.slane %v4642, 3
        %v4645 = vshll.u32 %v2233, 16
        %v4647 = vrot.slane %v4645, 4
        %v4648 = vor.u32 %v4644, %v4647
        %v4650 = vshrl.u32 %v2234, 16
        %v4652 = vrot.slane %v4650, 3
        %v4653 = vshll.u32 %v2234, 16
        %v4655 = vrot.slane %v4653, 4
        %v4656 = vor.u32 %v4652, %v4655
        %v4657 = vsel %vm2619, %v4648, %v4656
        %v4659 = vshrl.u32 %v2378, 16
        %v4661 = vrot.slane %v4659, 3
        %v4662 = vshll.u32 %v2378, 16
        %v4664 = vrot.slane %v4662, 4
        %v4665 = vor.u32 %v4661, %v4664
        %v4666 = vsel %vm2619, %v4665, %v4665
        %v4668 = vshrl.u32 %v2472, 16
        %v4670 = vrot.slane %v4668, 3
        %v4671 = vshll.u32 %v2472, 16
        %v4673 = vrot.slane %v4671, 4
        %v4674 = vor.u32 %v4670, %v4673
        %v4676 = vshrl.u32 %v2474, 16
        %v4678 = vrot.slane %v4676, 3
        %v4679 = vshll.u32 %v2474, 16
        %v4681 = vrot.slane %v4679, 4
        %v4682 = vor.u32 %v4678, %v4681
        %v4683 = vsel %vm2619, %v4674, %v4682
        %v4972 = vunpack.c.l.b16 %v2475
        %v4973 = vunpack.c.l.b16 %v2476
        %v4974 = vunpack.c.l.b16 %v2477
        %v4975 = vunpack.c.l.b16 %v2478
        %v4976 = vunpack.c.l.b16 %v2479
        %v4977 = vunpack.c.l.b16 %v2480
        %v4978 = vunpack.c.l.b16 %v2481
        %v4979 = vunpack.c.l.b16 %v2482
        %v4980 = vunpack.c.l.b16 %v2483
        %v4981 = vunpack.c.l.b16 %v2484
        %v4982 = vunpack.c.l.b16 %v2485
        %v4983 = vunpack.c.l.b16 %v2486
        %v4984 = vunpack.c.l.b16 %v2487
        %v4985 = vunpack.c.l.b16 %v2488
        %v4986 = vunpack.c.l.b16 %v2489
        %v4987 = vunpack.c.l.b16 %v2490
        %v4988 = vunpack.c.l.b16 %v2491
        %v4989 = vunpack.c.l.b16 %v2492
        %v4990 = vunpack.c.l.b16 %v2493
        %v4991 = vunpack.c.l.b16 %v2494
        %v4992 = vunpack.c.l.b16 %v2495
        %v4993 = vunpack.c.l.b16 %v2496
        %v4994 = vunpack.c.l.b16 %v2497
        %v4995 = vunpack.c.l.b16 %v2498
        %v4996 = vunpack.c.l.b16 %v2499
        %v4997 = vunpack.c.l.b16 %v2500
        %v4998 = vunpack.c.l.b16 %v2501
        %v4999 = vunpack.c.l.b16 %v2502
        %v5000 = vunpack.c.l.b16 %v2503
        %v5001 = vunpack.c.l.b16 %v2504
        %v5002 = vunpack.c.l.b16 %v2505
        %v5003 = vunpack.c.l.b16 %v2506
        %v5004 = vunpack.c.l.b16 %v2507
        %v5005 = vunpack.c.l.b16 %v2508
        %v5006 = vunpack.c.l.b16 %v2509
        %v5007 = vunpack.c.l.b16 %v2510
        %v5008 = vunpack.c.l.b16 %v2511
        %v5009 = vunpack.c.l.b16 %v2512
        %v5010 = vunpack.c.l.b16 %v2513
        %v5011 = vunpack.c.l.b16 %v2514
        %v5012 = vunpack.c.l.b16 %v2515
        %v5013 = vunpack.c.l.b16 %v2516
        %v5014 = vunpack.c.l.b16 %v2517
        %v5015 = vunpack.c.l.b16 %v2518
        %v5016 = vunpack.c.l.b16 %v2519
        %v5017 = vunpack.c.l.b16 %v2520
        %v5018 = vunpack.c.l.b16 %v2521
        %v5019 = vunpack.c.l.b16 %v2522
        %v5020 = vunpack.c.l.b16 %v2523
        %v5021 = vunpack.c.l.b16 %v2524
        %v5022 = vunpack.c.l.b16 %v2525
        %v5023 = vunpack.c.l.b16 %v2526
        %v5024 = vunpack.c.l.b16 %v2527
        %v5025 = vunpack.c.l.b16 %v2528
        %v5026 = vunpack.c.l.b16 %v2529
        %v5027 = vunpack.c.l.b16 %v2530
        %v5028 = vunpack.c.l.b16 %v2531
        %v5029 = vunpack.c.l.b16 %v2532
        %v5030 = vunpack.c.l.b16 %v2533
        %v5031 = vunpack.c.l.b16 %v2534
        %v5032 = vunpack.c.l.b16 %v2535
        %v5033 = vunpack.c.l.b16 %v2536
        %v5034 = vunpack.c.l.b16 %v2537
        %v5035 = vunpack.c.l.b16 %v2538
        %v5036 = vunpack.c.l.b16 %v2539
        %v5037 = vunpack.c.l.b16 %v2540
        %v5038 = vunpack.c.l.b16 %v2541
        %v5039 = vunpack.c.l.b16 %v2542
        %v5040 = vunpack.c.l.b16 %v2543
        %v5041 = vunpack.c.l.b16 %v2544
        %v5042 = vunpack.c.l.b16 %v2545
        %v5043 = vunpack.c.l.b16 %v2546
        %v5044 = vunpack.c.l.b16 %v2547
        %v5045 = vunpack.c.l.b16 %v2548
        %v5046 = vunpack.c.l.b16 %v2549
        %v5047 = vunpack.c.l.b16 %v2550
        %v5048 = vunpack.c.l.b16 %v2551
        %v5049 = vunpack.c.l.b16 %v2552
        %v5050 = vunpack.c.l.b16 %v2553
        %v5051 = vunpack.c.l.b16 %v2554
        %v5052 = vunpack.c.l.b16 %v2555
        %v5053 = vunpack.c.l.b16 %v2556
        %v5054 = vunpack.c.l.b16 %v2557
        %v5055 = vunpack.c.l.b16 %v2558
        %v5056 = vunpack.c.l.b16 %v2559
        %v5057 = vunpack.c.l.b16 %v2560
        %v5058 = vunpack.c.l.b16 %v2561
        %v5059 = vunpack.c.l.b16 %v2562
        %v5060 = vunpack.c.l.b16 %v2563
        %v5061 = vunpack.c.l.b16 %v2564
        %v5062 = vunpack.c.l.b16 %v2565
        %v5063 = vunpack.c.l.b16 %v2566
        %v5064 = vunpack.c.l.b16 %v2567
        %v5065 = vunpack.c.l.b16 %v2568
        %v5066 = vunpack.c.l.b16 %v2569
        %v5067 = vunpack.c.l.b16 %v2570
        %v5068 = vunpack.c.l.b16 %v2571
        %v5069 = vunpack.c.l.b16 %v2572
        %v5070 = vunpack.c.l.b16 %v2573
        %v5071 = vunpack.c.l.b16 %v2574
        %v5072 = vunpack.c.l.b16 %v2575
        %v5073 = vunpack.c.l.b16 %v2576
        %v5074 = vunpack.c.l.b16 %v2577
        %v5075 = vunpack.c.l.b16 %v2578
        %v5076 = vunpack.c.l.b16 %v2579
        %v5077 = vunpack.c.l.b16 %v2580
        %v5078 = vunpack.c.l.b16 %v2581
        %v5079 = vunpack.c.l.b16 %v2582
        %v5080 = vunpack.c.l.b16 %v2583
        %v5081 = vunpack.c.l.b16 %v2584
        %v5082 = vunpack.c.l.b16 %v2585
        %v5083 = vunpack.c.l.b16 %v2586
        %v5084 = vunpack.c.l.b16 %v2587
        %v5085 = vunpack.c.l.b16 %v2588
        %v5086 = vunpack.c.l.b16 %v2589
        %v5087 = vunpack.c.l.b16 %v2590
        %v5088 = vunpack.c.l.b16 %v2591
        %v5089 = vunpack.c.l.b16 %v2592
        %v5090 = vunpack.c.l.b16 %v2593
        %v5091 = vunpack.c.l.b16 %v2594
        %v5092 = vunpack.c.l.b16 %v2595
        %v5093 = vunpack.c.l.b16 %v2596
        %v5094 = vunpack.c.l.b16 %v2597
        %v5095 = vunpack.c.l.b16 %v2598
        %v5096 = vunpack.c.l.b16 %v2599
        %v5097 = vunpack.c.l.b16 %v2600
        %v5098 = vunpack.c.l.b16 %v2601
        %v5099 = vunpack.c.l.b16 %v2602
        %v5100 = vunpack.c.l.b16 %v2603
        %v5101 = vunpack.c.l.b16 %v2604
        %v5102 = vunpack.c.l.b16 %v2605
        %v5103 = vunpack.c.l.b16 %v2606
        %v5104 = vunpack.c.l.b16 %v2607
        %v5105 = vunpack.c.l.b16 %v2608
        %v5106 = vunpack.c.l.b16 %v2609
        %v5107 = vunpack.c.l.b16 %v2610
        %v5108 = vunpack.c.l.b16 %v2611
        %v5109 = vunpack.c.l.b16 %v2612
        %v5110 = vunpack.c.l.b16 %v2613
        %v5111 = vunpack.c.l.b16 %v2614
        %v5112 = vunpack.c.l.b16 %v2615
        %v5113 = vunpack.c.l.b16 %v2616
        %v5114 = vunpack.c.l.b16 %v2617
        %v5115 = vunpack.c.l.b16 %v2618
        %v5116 = vpack.c.b16 %v4973, %v4972
        %v5117 = vpack.c.b16 %v4975, %v4974
        %v5118 = vpack.c.b16 %v4977, %v4976
        %v5119 = vpack.c.b16 %v4979, %v4978
        %v5120 = vpack.c.b16 %v4981, %v4980
        %v5121 = vpack.c.b16 %v4983, %v4982
        %v5122 = vpack.c.b16 %v4985, %v4984
        %v5123 = vpack.c.b16 %v4987, %v4986
        %v5124 = vpack.c.b16 %v4989, %v4988
        %v5125 = vpack.c.b16 %v4991, %v4990
        %v5126 = vpack.c.b16 %v4993, %v4992
        %v5127 = vpack.c.b16 %v4995, %v4994
        %v5128 = vpack.c.b16 %v4997, %v4996
        %v5129 = vpack.c.b16 %v4999, %v4998
        %v5130 = vpack.c.b16 %v5001, %v5000
        %v5131 = vpack.c.b16 %v5003, %v5002
        %v5132 = vpack.c.b16 %v5005, %v5004
        %v5133 = vpack.c.b16 %v5007, %v5006
        %v5134 = vpack.c.b16 %v5009, %v5008
        %v5135 = vpack.c.b16 %v5011, %v5010
        %v5136 = vpack.c.b16 %v5013, %v5012
        %v5137 = vpack.c.b16 %v5015, %v5014
        %v5138 = vpack.c.b16 %v5017, %v5016
        %v5139 = vpack.c.b16 %v5019, %v5018
        %v5140 = vpack.c.b16 %v5021, %v5020
        %v5141 = vpack.c.b16 %v5023, %v5022
        %v5142 = vpack.c.b16 %v5025, %v5024
        %v5143 = vpack.c.b16 %v5027, %v5026
        %v5144 = vpack.c.b16 %v5029, %v5028
        %v5145 = vpack.c.b16 %v5031, %v5030
        %v5146 = vpack.c.b16 %v5033, %v5032
        %v5147 = vpack.c.b16 %v5035, %v5034
        %v5148 = vpack.c.b16 %v5037, %v5036
        %v5149 = vpack.c.b16 %v5039, %v5038
        %v5150 = vpack.c.b16 %v5041, %v5040
        %v5151 = vpack.c.b16 %v5043, %v5042
        %v5152 = vpack.c.b16 %v5045, %v5044
        %v5153 = vpack.c.b16 %v5047, %v5046
        %v5154 = vpack.c.b16 %v5049, %v5048
        %v5155 = vpack.c.b16 %v5051, %v5050
        %v5156 = vpack.c.b16 %v5053, %v5052
        %v5157 = vpack.c.b16 %v5055, %v5054
        %v5158 = vpack.c.b16 %v5057, %v5056
        %v5159 = vpack.c.b16 %v5059, %v5058
        %v5160 = vpack.c.b16 %v5061, %v5060
        %v5161 = vpack.c.b16 %v5063, %v5062
        %v5162 = vpack.c.b16 %v5065, %v5064
        %v5163 = vpack.c.b16 %v5067, %v5066
        %v5164 = vpack.c.b16 %v5069, %v5068
        %v5165 = vpack.c.b16 %v5071, %v5070
        %v5166 = vpack.c.b16 %v5073, %v5072
        %v5167 = vpack.c.b16 %v5075, %v5074
        %v5168 = vpack.c.b16 %v5077, %v5076
        %v5169 = vpack.c.b16 %v5079, %v5078
        %v5170 = vpack.c.b16 %v5081, %v5080
        %v5171 = vpack.c.b16 %v5083, %v5082
        %v5172 = vpack.c.b16 %v5085, %v5084
        %v5173 = vpack.c.b16 %v5087, %v5086
        %v5174 = vpack.c.b16 %v5089, %v5088
        %v5175 = vpack.c.b16 %v5091, %v5090
        %v5176 = vpack.c.b16 %v5093, %v5092
        %v5177 = vpack.c.b16 %v5095, %v5094
        %v5178 = vpack.c.b16 %v5097, %v5096
        %v5179 = vpack.c.b16 %v5099, %v5098
        %v5180 = vpack.c.b16 %v5101, %v5100
        %v5181 = vpack.c.b16 %v5103, %v5102
        %v5182 = vpack.c.b16 %v5105, %v5104
        %v5183 = vpack.c.b16 %v5107, %v5106
        %v5184 = vpack.c.b16 %v5109, %v5108
        %v5185 = vpack.c.b16 %v5111, %v5110
        %v5186 = vpack.c.b16 %v5113, %v5112
        %v5187 = vpack.c.b16 %v5115, %v5114
        %5260 = vmatprep.subr.bf16.mxu0 0
        %5261 = vmatpush1.bf16.msra.mxu0 %v5123
        %5262 = vmatprep.subr.bf16.mxu0 0
        %5263 = vmatpush1.bf16.msra.mxu0 %v5122
        %5264 = vmatprep.subr.bf16.mxu0 0
        %5265 = vmatpush1.bf16.msra.mxu0 %v5121
        %5266 = vmatprep.subr.bf16.mxu0 0
        %5267 = vmatpush1.bf16.msra.mxu0 %v5120
        %5268 = vmatprep.subr.bf16.mxu0 0
        %5269 = vmatpush1.bf16.msra.mxu0 %v5119
        %5270 = vmatprep.subr.bf16.mxu0 0
        %5271 = vmatpush1.bf16.msra.mxu0 %v5118
        %5272 = vmatprep.subr.bf16.mxu0 0
        %5273 = vmatpush1.bf16.msra.mxu0 %v5117
        %5274 = vmatprep.subr.bf16.mxu0 0
        %5275 = vmatpush1.bf16.msra.mxu0 %v5116
        %5276 = vmatprep.subr.bf16.mxu0 0
        %5277 = vmatpush2.bf16.msra.mxu0 %v5131
        %5278 = vmatprep.subr.bf16.mxu0 0
        %5279 = vmatpush2.bf16.msra.mxu0 %v5130
        %5280 = vmatprep.subr.bf16.mxu0 0
        %5281 = vmatpush2.bf16.msra.mxu0 %v5129
        %5282 = vmatprep.subr.bf16.mxu0 0
        %5283 = vmatpush2.bf16.msra.mxu0 %v5128
        %5284 = vmatprep.subr.bf16.mxu0 0
        %5285 = vmatpush2.bf16.msra.mxu0 %v5127
        %5286 = vmatprep.subr.bf16.mxu0 0
        %5287 = vmatpush2.bf16.msra.mxu0 %v5126
        %5288 = vmatprep.subr.bf16.mxu0 0
        %5289 = vmatpush2.bf16.msra.mxu0 %v5125
        %5290 = vmatprep.subr.bf16.mxu0 0
        %5291 = vmatpush2.bf16.msra.mxu0 %v5124
        %5292 = vmatprep.mubr.bf16.mxu0 %v2645
        %5293 = vmatmul.mubr.bf16.gmra.mxu0 %v2636
        %v5294 = vpop.f32.mrf.mxu0
        %v5295 = vadd.f32 0.0, %v5294
        %v5296 = vpop.f32.mrf.mxu0
        %v5297 = vpop.f32.mrf.mxu0
        %v5298 = vadd.f32 0.0, %v5297
        %v5299 = vpop.f32.mrf.mxu0
        %5300 = vmatprep.mubr.bf16.mxu0 %v2774
        %5301 = vmatmul.mubr.bf16.gmra.mxu0 %v2765
        %v5302 = vpop.f32.mrf.mxu0
        %v5303 = vadd.f32 0.0, %v5302
        %v5304 = vpop.f32.mrf.mxu0
        %v5305 = vpop.f32.mrf.mxu0
        %v5306 = vadd.f32 0.0, %v5305
        %v5307 = vpop.f32.mrf.mxu0
        %5308 = vmatprep.mubr.bf16.mxu0 %v2903
        %5309 = vmatmul.mubr.bf16.gmra.mxu0 %v2894
        %v5310 = vpop.f32.mrf.mxu0
        %v5311 = vadd.f32 0.0, %v5310
        %v5312 = vpop.f32.mrf.mxu0
        %v5313 = vpop.f32.mrf.mxu0
        %v5314 = vadd.f32 0.0, %v5313
        %v5315 = vpop.f32.mrf.mxu0
        %5316 = vmatprep.mubr.bf16.mxu0 %v3032
        %5317 = vmatmul.mubr.bf16.gmra.mxu0 %v3023
        %v5318 = vpop.f32.mrf.mxu0
        %v5319 = vadd.f32 0.0, %v5318
        %v5320 = vpop.f32.mrf.mxu0
        %v5321 = vpop.f32.mrf.mxu0
        %v5322 = vadd.f32 0.0, %v5321
        %v5323 = vpop.f32.mrf.mxu0
        %5324 = vmatprep.mubr.bf16.mxu0 %v3161
        %5325 = vmatmul.mubr.bf16.gmra.mxu0 %v3152
        %v5326 = vpop.f32.mrf.mxu0
        %v5327 = vadd.f32 0.0, %v5326
        %v5328 = vpop.f32.mrf.mxu0
        %v5329 = vpop.f32.mrf.mxu0
        %v5330 = vadd.f32 0.0, %v5329
        %v5331 = vpop.f32.mrf.mxu0
        %5332 = vmatprep.mubr.bf16.mxu0 %v3290
        %5333 = vmatmul.mubr.bf16.gmra.mxu0 %v3281
        %v5334 = vpop.f32.mrf.mxu0
        %v5335 = vadd.f32 0.0, %v5334
        %v5336 = vpop.f32.mrf.mxu0
        %v5337 = vpop.f32.mrf.mxu0
        %v5338 = vadd.f32 0.0, %v5337
        %v5339 = vpop.f32.mrf.mxu0
        %5340 = vmatprep.mubr.bf16.mxu0 %v3419
        %5341 = vmatmul.mubr.bf16.gmra.mxu0 %v3410
        %v5342 = vpop.f32.mrf.mxu0
        %v5343 = vadd.f32 0.0, %v5342
        %v5344 = vpop.f32.mrf.mxu0
        %v5345 = vpop.f32.mrf.mxu0
        %v5346 = vadd.f32 0.0, %v5345
        %v5347 = vpop.f32.mrf.mxu0
        %5348 = vmatprep.mubr.bf16.mxu0 %v3548
        %5349 = vmatmul.mubr.bf16.gmra.mxu0 %v3539
        %v5350 = vpop.f32.mrf.mxu0
        %v5351 = vadd.f32 0.0, %v5350
        %v5352 = vpop.f32.mrf.mxu0
        %v5353 = vpop.f32.mrf.mxu0
        %v5354 = vadd.f32 0.0, %v5353
        %v5355 = vpop.f32.mrf.mxu0
        %5356 = vmatprep.mubr.bf16.mxu0 %v3677
        %5357 = vmatmul.mubr.bf16.gmra.mxu0 %v3668
        %v5358 = vpop.f32.mrf.mxu0
        %v5359 = vadd.f32 0.0, %v5358
        %v5360 = vpop.f32.mrf.mxu0
        %v5361 = vpop.f32.mrf.mxu0
        %v5362 = vadd.f32 0.0, %v5361
        %v5363 = vpop.f32.mrf.mxu0
        %5364 = vmatprep.mubr.bf16.mxu0 %v3806
        %5365 = vmatmul.mubr.bf16.gmra.mxu0 %v3797
        %v5366 = vpop.f32.mrf.mxu0
        %v5367 = vadd.f32 0.0, %v5366
        %v5368 = vpop.f32.mrf.mxu0
        %v5369 = vpop.f32.mrf.mxu0
        %v5370 = vadd.f32 0.0, %v5369
        %v5371 = vpop.f32.mrf.mxu0
        %5372 = vmatprep.mubr.bf16.mxu0 %v3935
        %5373 = vmatmul.mubr.bf16.gmra.mxu0 %v3926
        %v5374 = vpop.f32.mrf.mxu0
        %v5375 = vadd.f32 0.0, %v5374
        %v5376 = vpop.f32.mrf.mxu0
        %v5377 = vpop.f32.mrf.mxu0
        %v5378 = vadd.f32 0.0, %v5377
        %v5379 = vpop.f32.mrf.mxu0
        %5380 = vmatprep.mubr.bf16.mxu0 %v4064
        %5381 = vmatmul.mubr.bf16.gmra.mxu0 %v4055
        %v5382 = vpop.f32.mrf.mxu0
        %v5383 = vadd.f32 0.0, %v5382
        %v5384 = vpop.f32.mrf.mxu0
        %v5385 = vpop.f32.mrf.mxu0
        %v5386 = vadd.f32 0.0, %v5385
        %v5387 = vpop.f32.mrf.mxu0
        %5388 = vmatprep.mubr.bf16.mxu0 %v4193
        %5389 = vmatmul.mubr.bf16.gmra.mxu0 %v4184
        %v5390 = vpop.f32.mrf.mxu0
        %v5391 = vadd.f32 0.0, %v5390
        %v5392 = vpop.f32.mrf.mxu0
        %v5393 = vpop.f32.mrf.mxu0
        %v5394 = vadd.f32 0.0, %v5393
        %v5395 = vpop.f32.mrf.mxu0
        %5396 = vmatprep.mubr.bf16.mxu0 %v4322
        %5397 = vmatmul.mubr.bf16.gmra.mxu0 %v4313
        %v5398 = vpop.f32.mrf.mxu0
        %v5399 = vadd.f32 0.0, %v5398
        %v5400 = vpop.f32.mrf.mxu0
        %v5401 = vpop.f32.mrf.mxu0
        %v5402 = vadd.f32 0.0, %v5401
        %v5403 = vpop.f32.mrf.mxu0
        %5404 = vmatprep.mubr.bf16.mxu0 %v4451
        %5405 = vmatmul.mubr.bf16.gmra.mxu0 %v4442
        %v5406 = vpop.f32.mrf.mxu0
        %v5407 = vadd.f32 0.0, %v5406
        %v5408 = vpop.f32.mrf.mxu0
        %v5409 = vpop.f32.mrf.mxu0
        %v5410 = vadd.f32 0.0, %v5409
        %v5411 = vpop.f32.mrf.mxu0
        %5412 = vmatprep.mubr.bf16.mxu0 %v4580
        %5413 = vmatmul.mubr.bf16.gmra.mxu0 %v4571
        %v5414 = vpop.f32.mrf.mxu0
        %v5415 = vadd.f32 0.0, %v5414
        %v5416 = vpop.f32.mrf.mxu0
        %v5417 = vpop.f32.mrf.mxu0
        %v5418 = vadd.f32 0.0, %v5417
        %v5419 = vpop.f32.mrf.mxu0
        %5420 = vdwg.mxu0
        %5421 = vmatprep.subr.bf16.mxu0 0
        %5422 = vmatpush1.bf16.msra.mxu0 %v5139
        %5423 = vmatprep.subr.bf16.mxu0 0
        %5424 = vmatpush1.bf16.msra.mxu0 %v5138
        %5425 = vmatprep.subr.bf16.mxu0 0
        %5426 = vmatpush1.bf16.msra.mxu0 %v5137
        %5427 = vmatprep.subr.bf16.mxu0 0
        %5428 = vmatpush1.bf16.msra.mxu0 %v5136
        %5429 = vmatprep.subr.bf16.mxu0 0
        %5430 = vmatpush1.bf16.msra.mxu0 %v5135
        %5431 = vmatprep.subr.bf16.mxu0 0
        %5432 = vmatpush1.bf16.msra.mxu0 %v5134
        %5433 = vmatprep.subr.bf16.mxu0 0
        %5434 = vmatpush1.bf16.msra.mxu0 %v5133
        %5435 = vmatprep.subr.bf16.mxu0 0
        %5436 = vmatpush1.bf16.msra.mxu0 %v5132
        %5437 = vmatprep.subr.bf16.mxu0 0
        %5438 = vmatpush2.bf16.msra.mxu0 %v5147
        %5439 = vmatprep.subr.bf16.mxu0 0
        %5440 = vmatpush2.bf16.msra.mxu0 %v5146
        %5441 = vmatprep.subr.bf16.mxu0 0
        %5442 = vmatpush2.bf16.msra.mxu0 %v5145
        %5443 = vmatprep.subr.bf16.mxu0 0
        %5444 = vmatpush2.bf16.msra.mxu0 %v5144
        %5445 = vmatprep.subr.bf16.mxu0 0
        %5446 = vmatpush2.bf16.msra.mxu0 %v5143
        %5447 = vmatprep.subr.bf16.mxu0 0
        %5448 = vmatpush2.bf16.msra.mxu0 %v5142
        %5449 = vmatprep.subr.bf16.mxu0 0
        %5450 = vmatpush2.bf16.msra.mxu0 %v5141
        %5451 = vmatprep.subr.bf16.mxu0 0
        %5452 = vmatpush2.bf16.msra.mxu0 %v5140
        %5453 = vmatprep.mubr.bf16.mxu0 %v2679
        %5454 = vmatmul.mubr.bf16.gmra.mxu0 %v2662
        %v5455 = vpop.f32.mrf.mxu0
        %v5456 = vadd.f32 %v5295, %v5455
        %v5457 = vpop.f32.mrf.mxu0
        %v5458 = vpop.f32.mrf.mxu0
        %v5459 = vadd.f32 %v5298, %v5458
        %v5460 = vpop.f32.mrf.mxu0
        %5461 = vmatprep.mubr.bf16.mxu0 %v2808
        %5462 = vmatmul.mubr.bf16.gmra.mxu0 %v2791
        %v5463 = vpop.f32.mrf.mxu0
        %v5464 = vadd.f32 %v5303, %v5463
        %v5465 = vpop.f32.mrf.mxu0
        %v5466 = vpop.f32.mrf.mxu0
        %v5467 = vadd.f32 %v5306, %v5466
        %v5468 = vpop.f32.mrf.mxu0
        %5469 = vmatprep.mubr.bf16.mxu0 %v2937
        %5470 = vmatmul.mubr.bf16.gmra.mxu0 %v2920
        %v5471 = vpop.f32.mrf.mxu0
        %v5472 = vadd.f32 %v5311, %v5471
        %v5473 = vpop.f32.mrf.mxu0
        %v5474 = vpop.f32.mrf.mxu0
        %v5475 = vadd.f32 %v5314, %v5474
        %v5476 = vpop.f32.mrf.mxu0
        %5477 = vmatprep.mubr.bf16.mxu0 %v3066
        %5478 = vmatmul.mubr.bf16.gmra.mxu0 %v3049
        %v5479 = vpop.f32.mrf.mxu0
        %v5480 = vadd.f32 %v5319, %v5479
        %v5481 = vpop.f32.mrf.mxu0
        %v5482 = vpop.f32.mrf.mxu0
        %v5483 = vadd.f32 %v5322, %v5482
        %v5484 = vpop.f32.mrf.mxu0
        %5485 = vmatprep.mubr.bf16.mxu0 %v3195
        %5486 = vmatmul.mubr.bf16.gmra.mxu0 %v3178
        %v5487 = vpop.f32.mrf.mxu0
        %v5488 = vadd.f32 %v5327, %v5487
        %v5489 = vpop.f32.mrf.mxu0
        %v5490 = vpop.f32.mrf.mxu0
        %v5491 = vadd.f32 %v5330, %v5490
        %v5492 = vpop.f32.mrf.mxu0
        %5493 = vmatprep.mubr.bf16.mxu0 %v3324
        %5494 = vmatmul.mubr.bf16.gmra.mxu0 %v3307
        %v5495 = vpop.f32.mrf.mxu0
        %v5496 = vadd.f32 %v5335, %v5495
        %v5497 = vpop.f32.mrf.mxu0
        %v5498 = vpop.f32.mrf.mxu0
        %v5499 = vadd.f32 %v5338, %v5498
        %v5500 = vpop.f32.mrf.mxu0
        %5501 = vmatprep.mubr.bf16.mxu0 %v3453
        %5502 = vmatmul.mubr.bf16.gmra.mxu0 %v3436
        %v5503 = vpop.f32.mrf.mxu0
        %v5504 = vadd.f32 %v5343, %v5503
        %v5505 = vpop.f32.mrf.mxu0
        %v5506 = vpop.f32.mrf.mxu0
        %v5507 = vadd.f32 %v5346, %v5506
        %v5508 = vpop.f32.mrf.mxu0
        %5509 = vmatprep.mubr.bf16.mxu0 %v3582
        %5510 = vmatmul.mubr.bf16.gmra.mxu0 %v3565
        %v5511 = vpop.f32.mrf.mxu0
        %v5512 = vadd.f32 %v5351, %v5511
        %v5513 = vpop.f32.mrf.mxu0
        %v5514 = vpop.f32.mrf.mxu0
        %v5515 = vadd.f32 %v5354, %v5514
        %v5516 = vpop.f32.mrf.mxu0
        %5517 = vmatprep.mubr.bf16.mxu0 %v3711
        %5518 = vmatmul.mubr.bf16.gmra.mxu0 %v3694
        %v5519 = vpop.f32.mrf.mxu0
        %v5520 = vadd.f32 %v5359, %v5519
        %v5521 = vpop.f32.mrf.mxu0
        %v5522 = vpop.f32.mrf.mxu0
        %v5523 = vadd.f32 %v5362, %v5522
        %v5524 = vpop.f32.mrf.mxu0
        %5525 = vmatprep.mubr.bf16.mxu0 %v3840
        %5526 = vmatmul.mubr.bf16.gmra.mxu0 %v3823
        %v5527 = vpop.f32.mrf.mxu0
        %v5528 = vadd.f32 %v5367, %v5527
        %v5529 = vpop.f32.mrf.mxu0
        %v5530 = vpop.f32.mrf.mxu0
        %v5531 = vadd.f32 %v5370, %v5530
        %v5532 = vpop.f32.mrf.mxu0
        %5533 = vmatprep.mubr.bf16.mxu0 %v3969
        %5534 = vmatmul.mubr.bf16.gmra.mxu0 %v3952
        %v5535 = vpop.f32.mrf.mxu0
        %v5536 = vadd.f32 %v5375, %v5535
        %v5537 = vpop.f32.mrf.mxu0
        %v5538 = vpop.f32.mrf.mxu0
        %v5539 = vadd.f32 %v5378, %v5538
        %v5540 = vpop.f32.mrf.mxu0
        %5541 = vmatprep.mubr.bf16.mxu0 %v4098
        %5542 = vmatmul.mubr.bf16.gmra.mxu0 %v4081
        %v5543 = vpop.f32.mrf.mxu0
        %v5544 = vadd.f32 %v5383, %v5543
        %v5545 = vpop.f32.mrf.mxu0
        %v5546 = vpop.f32.mrf.mxu0
        %v5547 = vadd.f32 %v5386, %v5546
        %v5548 = vpop.f32.mrf.mxu0
        %5549 = vmatprep.mubr.bf16.mxu0 %v4227
        %5550 = vmatmul.mubr.bf16.gmra.mxu0 %v4210
        %v5551 = vpop.f32.mrf.mxu0
        %v5552 = vadd.f32 %v5391, %v5551
        %v5553 = vpop.f32.mrf.mxu0
        %v5554 = vpop.f32.mrf.mxu0
        %v5555 = vadd.f32 %v5394, %v5554
        %v5556 = vpop.f32.mrf.mxu0
        %5557 = vmatprep.mubr.bf16.mxu0 %v4356
        %5558 = vmatmul.mubr.bf16.gmra.mxu0 %v4339
        %v5559 = vpop.f32.mrf.mxu0
        %v5560 = vadd.f32 %v5399, %v5559
        %v5561 = vpop.f32.mrf.mxu0
        %v5562 = vpop.f32.mrf.mxu0
        %v5563 = vadd.f32 %v5402, %v5562
        %v5564 = vpop.f32.mrf.mxu0
        %5565 = vmatprep.mubr.bf16.mxu0 %v4485
        %5566 = vmatmul.mubr.bf16.gmra.mxu0 %v4468
        %v5567 = vpop.f32.mrf.mxu0
        %v5568 = vadd.f32 %v5407, %v5567
        %v5569 = vpop.f32.mrf.mxu0
        %v5570 = vpop.f32.mrf.mxu0
        %v5571 = vadd.f32 %v5410, %v5570
        %v5572 = vpop.f32.mrf.mxu0
        %5573 = vmatprep.mubr.bf16.mxu0 %v4614
        %5574 = vmatmul.mubr.bf16.gmra.mxu0 %v4597
        %v5575 = vpop.f32.mrf.mxu0
        %v5576 = vadd.f32 %v5415, %v5575
        %v5577 = vpop.f32.mrf.mxu0
        %v5578 = vpop.f32.mrf.mxu0
        %v5579 = vadd.f32 %v5418, %v5578
        %v5580 = vpop.f32.mrf.mxu0
        %5581 = vdwg.mxu0
        %5582 = vmatprep.subr.bf16.mxu0 0
        %5583 = vmatpush1.bf16.msra.mxu0 %v5155
        %5584 = vmatprep.subr.bf16.mxu0 0
        %5585 = vmatpush1.bf16.msra.mxu0 %v5154
        %5586 = vmatprep.subr.bf16.mxu0 0
        %5587 = vmatpush1.bf16.msra.mxu0 %v5153
        %5588 = vmatprep.subr.bf16.mxu0 0
        %5589 = vmatpush1.bf16.msra.mxu0 %v5152
        %5590 = vmatprep.subr.bf16.mxu0 0
        %5591 = vmatpush1.bf16.msra.mxu0 %v5151
        %5592 = vmatprep.subr.bf16.mxu0 0
        %5593 = vmatpush1.bf16.msra.mxu0 %v5150
        %5594 = vmatprep.subr.bf16.mxu0 0
        %5595 = vmatpush1.bf16.msra.mxu0 %v5149
        %5596 = vmatprep.subr.bf16.mxu0 0
        %5597 = vmatpush1.bf16.msra.mxu0 %v5148
        %5598 = vmatprep.subr.bf16.mxu0 0
        %5599 = vmatpush2.bf16.msra.mxu0 %v5163
        %5600 = vmatprep.subr.bf16.mxu0 0
        %5601 = vmatpush2.bf16.msra.mxu0 %v5162
        %5602 = vmatprep.subr.bf16.mxu0 0
        %5603 = vmatpush2.bf16.msra.mxu0 %v5161
        %5604 = vmatprep.subr.bf16.mxu0 0
        %5605 = vmatpush2.bf16.msra.mxu0 %v5160
        %5606 = vmatprep.subr.bf16.mxu0 0
        %5607 = vmatpush2.bf16.msra.mxu0 %v5159
        %5608 = vmatprep.subr.bf16.mxu0 0
        %5609 = vmatpush2.bf16.msra.mxu0 %v5158
        %5610 = vmatprep.subr.bf16.mxu0 0
        %5611 = vmatpush2.bf16.msra.mxu0 %v5157
        %5612 = vmatprep.subr.bf16.mxu0 0
        %5613 = vmatpush2.bf16.msra.mxu0 %v5156
        %5614 = vmatprep.mubr.bf16.mxu0 %v2705
        %5615 = vmatmul.mubr.bf16.gmra.mxu0 %v2688
        %v5616 = vpop.f32.mrf.mxu0
        %v5617 = vadd.f32 %v5456, %v5616
        %v5618 = vpop.f32.mrf.mxu0
        %v5619 = vpop.f32.mrf.mxu0
        %v5620 = vadd.f32 %v5459, %v5619
        %v5621 = vpop.f32.mrf.mxu0
        %5622 = vmatprep.mubr.bf16.mxu0 %v2834
        %5623 = vmatmul.mubr.bf16.gmra.mxu0 %v2817
        %v5624 = vpop.f32.mrf.mxu0
        %v5625 = vadd.f32 %v5464, %v5624
        %v5626 = vpop.f32.mrf.mxu0
        %v5627 = vpop.f32.mrf.mxu0
        %v5628 = vadd.f32 %v5467, %v5627
        %v5629 = vpop.f32.mrf.mxu0
        %5630 = vmatprep.mubr.bf16.mxu0 %v2963
        %5631 = vmatmul.mubr.bf16.gmra.mxu0 %v2946
        %v5632 = vpop.f32.mrf.mxu0
        %v5633 = vadd.f32 %v5472, %v5632
        %v5634 = vpop.f32.mrf.mxu0
        %v5635 = vpop.f32.mrf.mxu0
        %v5636 = vadd.f32 %v5475, %v5635
        %v5637 = vpop.f32.mrf.mxu0
        %5638 = vmatprep.mubr.bf16.mxu0 %v3092
        %5639 = vmatmul.mubr.bf16.gmra.mxu0 %v3075
        %v5640 = vpop.f32.mrf.mxu0
        %v5641 = vadd.f32 %v5480, %v5640
        %v5642 = vpop.f32.mrf.mxu0
        %v5643 = vpop.f32.mrf.mxu0
        %v5644 = vadd.f32 %v5483, %v5643
        %v5645 = vpop.f32.mrf.mxu0
        %5646 = vmatprep.mubr.bf16.mxu0 %v3221
        %5647 = vmatmul.mubr.bf16.gmra.mxu0 %v3204
        %v5648 = vpop.f32.mrf.mxu0
        %v5649 = vadd.f32 %v5488, %v5648
        %v5650 = vpop.f32.mrf.mxu0
        %v5651 = vpop.f32.mrf.mxu0
        %v5652 = vadd.f32 %v5491, %v5651
        %v5653 = vpop.f32.mrf.mxu0
        %5654 = vmatprep.mubr.bf16.mxu0 %v3350
        %5655 = vmatmul.mubr.bf16.gmra.mxu0 %v3333
        %v5656 = vpop.f32.mrf.mxu0
        %v5657 = vadd.f32 %v5496, %v5656
        %v5658 = vpop.f32.mrf.mxu0
        %v5659 = vpop.f32.mrf.mxu0
        %v5660 = vadd.f32 %v5499, %v5659
        %v5661 = vpop.f32.mrf.mxu0
        %5662 = vmatprep.mubr.bf16.mxu0 %v3479
        %5663 = vmatmul.mubr.bf16.gmra.mxu0 %v3462
        %v5664 = vpop.f32.mrf.mxu0
        %v5665 = vadd.f32 %v5504, %v5664
        %v5666 = vpop.f32.mrf.mxu0
        %v5667 = vpop.f32.mrf.mxu0
        %v5668 = vadd.f32 %v5507, %v5667
        %v5669 = vpop.f32.mrf.mxu0
        %5670 = vmatprep.mubr.bf16.mxu0 %v3608
        %5671 = vmatmul.mubr.bf16.gmra.mxu0 %v3591
        %v5672 = vpop.f32.mrf.mxu0
        %v5673 = vadd.f32 %v5512, %v5672
        %v5674 = vpop.f32.mrf.mxu0
        %v5675 = vpop.f32.mrf.mxu0
        %v5676 = vadd.f32 %v5515, %v5675
        %v5677 = vpop.f32.mrf.mxu0
        %5678 = vmatprep.mubr.bf16.mxu0 %v3737
        %5679 = vmatmul.mubr.bf16.gmra.mxu0 %v3720
        %v5680 = vpop.f32.mrf.mxu0
        %v5681 = vadd.f32 %v5520, %v5680
        %v5682 = vpop.f32.mrf.mxu0
        %v5683 = vpop.f32.mrf.mxu0
        %v5684 = vadd.f32 %v5523, %v5683
        %v5685 = vpop.f32.mrf.mxu0
        %5686 = vmatprep.mubr.bf16.mxu0 %v3866
        %5687 = vmatmul.mubr.bf16.gmra.mxu0 %v3849
        %v5688 = vpop.f32.mrf.mxu0
        %v5689 = vadd.f32 %v5528, %v5688
        %v5690 = vpop.f32.mrf.mxu0
        %v5691 = vpop.f32.mrf.mxu0
        %v5692 = vadd.f32 %v5531, %v5691
        %v5693 = vpop.f32.mrf.mxu0
        %5694 = vmatprep.mubr.bf16.mxu0 %v3995
        %5695 = vmatmul.mubr.bf16.gmra.mxu0 %v3978
        %v5696 = vpop.f32.mrf.mxu0
        %v5697 = vadd.f32 %v5536, %v5696
        %v5698 = vpop.f32.mrf.mxu0
        %v5699 = vpop.f32.mrf.mxu0
        %v5700 = vadd.f32 %v5539, %v5699
        %v5701 = vpop.f32.mrf.mxu0
        %5702 = vmatprep.mubr.bf16.mxu0 %v4124
        %5703 = vmatmul.mubr.bf16.gmra.mxu0 %v4107
        %v5704 = vpop.f32.mrf.mxu0
        %v5705 = vadd.f32 %v5544, %v5704
        %v5706 = vpop.f32.mrf.mxu0
        %v5707 = vpop.f32.mrf.mxu0
        %v5708 = vadd.f32 %v5547, %v5707
        %v5709 = vpop.f32.mrf.mxu0
        %5710 = vmatprep.mubr.bf16.mxu0 %v4253
        %5711 = vmatmul.mubr.bf16.gmra.mxu0 %v4236
        %v5712 = vpop.f32.mrf.mxu0
        %v5713 = vadd.f32 %v5552, %v5712
        %v5714 = vpop.f32.mrf.mxu0
        %v5715 = vpop.f32.mrf.mxu0
        %v5716 = vadd.f32 %v5555, %v5715
        %v5717 = vpop.f32.mrf.mxu0
        %5718 = vmatprep.mubr.bf16.mxu0 %v4382
        %5719 = vmatmul.mubr.bf16.gmra.mxu0 %v4365
        %v5720 = vpop.f32.mrf.mxu0
        %v5721 = vadd.f32 %v5560, %v5720
        %v5722 = vpop.f32.mrf.mxu0
        %v5723 = vpop.f32.mrf.mxu0
        %v5724 = vadd.f32 %v5563, %v5723
        %v5725 = vpop.f32.mrf.mxu0
        %5726 = vmatprep.mubr.bf16.mxu0 %v4511
        %5727 = vmatmul.mubr.bf16.gmra.mxu0 %v4494
        %v5728 = vpop.f32.mrf.mxu0
        %v5729 = vadd.f32 %v5568, %v5728
        %v5730 = vpop.f32.mrf.mxu0
        %v5731 = vpop.f32.mrf.mxu0
        %v5732 = vadd.f32 %v5571, %v5731
        %v5733 = vpop.f32.mrf.mxu0
        %5734 = vmatprep.mubr.bf16.mxu0 %v4640
        %5735 = vmatmul.mubr.bf16.gmra.mxu0 %v4623
        %v5736 = vpop.f32.mrf.mxu0
        %v5737 = vadd.f32 %v5576, %v5736
        %v5738 = vpop.f32.mrf.mxu0
        %v5739 = vpop.f32.mrf.mxu0
        %v5740 = vadd.f32 %v5579, %v5739
        %v5741 = vpop.f32.mrf.mxu0
        %5742 = vdwg.mxu0
        %5743 = vmatprep.subr.bf16.mxu0 0
        %5744 = vmatpush1.bf16.msra.mxu0 %v5171
        %5745 = vmatprep.subr.bf16.mxu0 0
        %5746 = vmatpush1.bf16.msra.mxu0 %v5170
        %5747 = vmatprep.subr.bf16.mxu0 0
        %5748 = vmatpush1.bf16.msra.mxu0 %v5169
        %5749 = vmatprep.subr.bf16.mxu0 0
        %5750 = vmatpush1.bf16.msra.mxu0 %v5168
        %5751 = vmatprep.subr.bf16.mxu0 0
        %5752 = vmatpush1.bf16.msra.mxu0 %v5167
        %5753 = vmatprep.subr.bf16.mxu0 0
        %5754 = vmatpush1.bf16.msra.mxu0 %v5166
        %5755 = vmatprep.subr.bf16.mxu0 0
        %5756 = vmatpush1.bf16.msra.mxu0 %v5165
        %5757 = vmatprep.subr.bf16.mxu0 0
        %5758 = vmatpush1.bf16.msra.mxu0 %v5164
        %5759 = vmatprep.subr.bf16.mxu0 0
        %5760 = vmatpush2.bf16.msra.mxu0 %v5179
        %5761 = vmatprep.subr.bf16.mxu0 0
        %5762 = vmatpush2.bf16.msra.mxu0 %v5178
        %5763 = vmatprep.subr.bf16.mxu0 0
        %5764 = vmatpush2.bf16.msra.mxu0 %v5177
        %5765 = vmatprep.subr.bf16.mxu0 0
        %5766 = vmatpush2.bf16.msra.mxu0 %v5176
        %5767 = vmatprep.subr.bf16.mxu0 0
        %5768 = vmatpush2.bf16.msra.mxu0 %v5175
        %5769 = vmatprep.subr.bf16.mxu0 0
        %5770 = vmatpush2.bf16.msra.mxu0 %v5174
        %5771 = vmatprep.subr.bf16.mxu0 0
        %5772 = vmatpush2.bf16.msra.mxu0 %v5173
        %5773 = vmatprep.subr.bf16.mxu0 0
        %5774 = vmatpush2.bf16.msra.mxu0 %v5172
        %5775 = vmatprep.mubr.bf16.mxu0 %v2731
        %5776 = vmatmul.mubr.bf16.gmra.mxu0 %v2722
        %v5777 = vpop.f32.mrf.mxu0
        %v5778 = vadd.f32 %v5617, %v5777
        %v5779 = vpop.f32.mrf.mxu0
        %v5780 = vpop.f32.mrf.mxu0
        %v5781 = vadd.f32 %v5620, %v5780
        %v5782 = vpop.f32.mrf.mxu0
        %5783 = vmatprep.mubr.bf16.mxu0 %v2860
        %5784 = vmatmul.mubr.bf16.gmra.mxu0 %v2851
        %v5785 = vpop.f32.mrf.mxu0
        %v5786 = vadd.f32 %v5625, %v5785
        %v5787 = vpop.f32.mrf.mxu0
        %v5788 = vpop.f32.mrf.mxu0
        %v5789 = vadd.f32 %v5628, %v5788
        %v5790 = vpop.f32.mrf.mxu0
        %5791 = vmatprep.mubr.bf16.mxu0 %v2989
        %5792 = vmatmul.mubr.bf16.gmra.mxu0 %v2980
        %v5793 = vpop.f32.mrf.mxu0
        %v5794 = vadd.f32 %v5633, %v5793
        %v5795 = vpop.f32.mrf.mxu0
        %v5796 = vpop.f32.mrf.mxu0
        %v5797 = vadd.f32 %v5636, %v5796
        %v5798 = vpop.f32.mrf.mxu0
        %5799 = vmatprep.mubr.bf16.mxu0 %v3118
        %5800 = vmatmul.mubr.bf16.gmra.mxu0 %v3109
        %v5801 = vpop.f32.mrf.mxu0
        %v5802 = vadd.f32 %v5641, %v5801
        %v5803 = vpop.f32.mrf.mxu0
        %v5804 = vpop.f32.mrf.mxu0
        %v5805 = vadd.f32 %v5644, %v5804
        %v5806 = vpop.f32.mrf.mxu0
        %5807 = vmatprep.mubr.bf16.mxu0 %v3247
        %5808 = vmatmul.mubr.bf16.gmra.mxu0 %v3238
        %v5809 = vpop.f32.mrf.mxu0
        %v5810 = vadd.f32 %v5649, %v5809
        %v5811 = vpop.f32.mrf.mxu0
        %v5812 = vpop.f32.mrf.mxu0
        %v5813 = vadd.f32 %v5652, %v5812
        %v5814 = vpop.f32.mrf.mxu0
        %5815 = vmatprep.mubr.bf16.mxu0 %v3376
        %5816 = vmatmul.mubr.bf16.gmra.mxu0 %v3367
        %v5817 = vpop.f32.mrf.mxu0
        %v5818 = vadd.f32 %v5657, %v5817
        %v5819 = vpop.f32.mrf.mxu0
        %v5820 = vpop.f32.mrf.mxu0
        %v5821 = vadd.f32 %v5660, %v5820
        %v5822 = vpop.f32.mrf.mxu0
        %5823 = vmatprep.mubr.bf16.mxu0 %v3505
        %5824 = vmatmul.mubr.bf16.gmra.mxu0 %v3496
        %v5825 = vpop.f32.mrf.mxu0
        %v5826 = vadd.f32 %v5665, %v5825
        %v5827 = vpop.f32.mrf.mxu0
        %v5828 = vpop.f32.mrf.mxu0
        %v5829 = vadd.f32 %v5668, %v5828
        %v5830 = vpop.f32.mrf.mxu0
        %5831 = vmatprep.mubr.bf16.mxu0 %v3634
        %5832 = vmatmul.mubr.bf16.gmra.mxu0 %v3625
        %v5833 = vpop.f32.mrf.mxu0
        %v5834 = vadd.f32 %v5673, %v5833
        %v5835 = vpop.f32.mrf.mxu0
        %v5836 = vpop.f32.mrf.mxu0
        %v5837 = vadd.f32 %v5676, %v5836
        %v5838 = vpop.f32.mrf.mxu0
        %5839 = vmatprep.mubr.bf16.mxu0 %v3763
        %5840 = vmatmul.mubr.bf16.gmra.mxu0 %v3754
        %v5841 = vpop.f32.mrf.mxu0
        %v5842 = vadd.f32 %v5681, %v5841
        %v5843 = vpop.f32.mrf.mxu0
        %v5844 = vpop.f32.mrf.mxu0
        %v5845 = vadd.f32 %v5684, %v5844
        %v5846 = vpop.f32.mrf.mxu0
        %5847 = vmatprep.mubr.bf16.mxu0 %v3892
        %5848 = vmatmul.mubr.bf16.gmra.mxu0 %v3883
        %v5849 = vpop.f32.mrf.mxu0
        %v5850 = vadd.f32 %v5689, %v5849
        %v5851 = vpop.f32.mrf.mxu0
        %v5852 = vpop.f32.mrf.mxu0
        %v5853 = vadd.f32 %v5692, %v5852
        %v5854 = vpop.f32.mrf.mxu0
        %5855 = vmatprep.mubr.bf16.mxu0 %v4021
        %5856 = vmatmul.mubr.bf16.gmra.mxu0 %v4012
        %v5857 = vpop.f32.mrf.mxu0
        %v5858 = vadd.f32 %v5697, %v5857
        %v5859 = vpop.f32.mrf.mxu0
        %v5860 = vpop.f32.mrf.mxu0
        %v5861 = vadd.f32 %v5700, %v5860
        %v5862 = vpop.f32.mrf.mxu0
        %5863 = vmatprep.mubr.bf16.mxu0 %v4150
        %5864 = vmatmul.mubr.bf16.gmra.mxu0 %v4141
        %v5865 = vpop.f32.mrf.mxu0
        %v5866 = vadd.f32 %v5705, %v5865
        %v5867 = vpop.f32.mrf.mxu0
        %v5868 = vpop.f32.mrf.mxu0
        %v5869 = vadd.f32 %v5708, %v5868
        %v5870 = vpop.f32.mrf.mxu0
        %5871 = vmatprep.mubr.bf16.mxu0 %v4279
        %5872 = vmatmul.mubr.bf16.gmra.mxu0 %v4270
        %v5873 = vpop.f32.mrf.mxu0
        %v5874 = vadd.f32 %v5713, %v5873
        %v5875 = vpop.f32.mrf.mxu0
        %v5876 = vpop.f32.mrf.mxu0
        %v5877 = vadd.f32 %v5716, %v5876
        %v5878 = vpop.f32.mrf.mxu0
        %5879 = vmatprep.mubr.bf16.mxu0 %v4408
        %5880 = vmatmul.mubr.bf16.gmra.mxu0 %v4399
        %v5881 = vpop.f32.mrf.mxu0
        %v5882 = vadd.f32 %v5721, %v5881
        %v5883 = vpop.f32.mrf.mxu0
        %v5884 = vpop.f32.mrf.mxu0
        %v5885 = vadd.f32 %v5724, %v5884
        %v5886 = vpop.f32.mrf.mxu0
        %5887 = vmatprep.mubr.bf16.mxu0 %v4537
        %5888 = vmatmul.mubr.bf16.gmra.mxu0 %v4528
        %v5889 = vpop.f32.mrf.mxu0
        %v5890 = vadd.f32 %v5729, %v5889
        %v5891 = vpop.f32.mrf.mxu0
        %v5892 = vpop.f32.mrf.mxu0
        %v5893 = vadd.f32 %v5732, %v5892
        %v5894 = vpop.f32.mrf.mxu0
        %5895 = vmatprep.mubr.bf16.mxu0 %v4666
        %5896 = vmatmul.mubr.bf16.gmra.mxu0 %v4657
        %v5897 = vpop.f32.mrf.mxu0
        %v5898 = vadd.f32 %v5737, %v5897
        %v5899 = vpop.f32.mrf.mxu0
        %v5900 = vpop.f32.mrf.mxu0
        %v5901 = vadd.f32 %v5740, %v5900
        %v5902 = vpop.f32.mrf.mxu0
        %5903 = vdwg.mxu0
        %5904 = vmatprep.subr.bf16.mxu0 0
        %5905 = vmatpush1.bf16.msra.mxu0 %v5187
        %5906 = vmatprep.subr.bf16.mxu0 0
        %5907 = vmatpush1.bf16.msra.mxu0 %v5186
        %5908 = vmatprep.subr.bf16.mxu0 0
        %5909 = vmatpush1.bf16.msra.mxu0 %v5185
        %5910 = vmatprep.subr.bf16.mxu0 0
        %5911 = vmatpush1.bf16.msra.mxu0 %v5184
        %5912 = vmatprep.subr.bf16.mxu0 0
        %5913 = vmatpush1.bf16.msra.mxu0 %v5183
        %5914 = vmatprep.subr.bf16.mxu0 0
        %5915 = vmatpush1.bf16.msra.mxu0 %v5182
        %5916 = vmatprep.subr.bf16.mxu0 0
        %5917 = vmatpush1.bf16.msra.mxu0 %v5181
        %5918 = vmatprep.subr.bf16.mxu0 0
        %5919 = vmatpush1.bf16.msra.mxu0 %v5180
        %5920 = vmatprep.subr.bf16.mxu0 0
        %5921 = vmatpush2.bf16.msra.mxu0 0
        %5922 = vmatprep.subr.bf16.mxu0 0
        %5923 = vmatpush2.bf16.msra.mxu0 0
        %5924 = vmatprep.subr.bf16.mxu0 0
        %5925 = vmatpush2.bf16.msra.mxu0 0
        %5926 = vmatprep.subr.bf16.mxu0 0
        %5927 = vmatpush2.bf16.msra.mxu0 0
        %5928 = vmatprep.subr.bf16.mxu0 0
        %5929 = vmatpush2.bf16.msra.mxu0 0
        %5930 = vmatprep.subr.bf16.mxu0 0
        %5931 = vmatpush2.bf16.msra.mxu0 0
        %5932 = vmatprep.subr.bf16.mxu0 0
        %5933 = vmatpush2.bf16.msra.mxu0 0
        %5934 = vmatprep.subr.bf16.mxu0 0
        %5935 = vmatpush2.bf16.msra.mxu0 0
        %5936 = vmatprep.mubr.bf16.mxu0 0
        %5937 = vmatmul.mubr.bf16.gmra.mxu0 %v2748
        %v5938 = vpop.f32.mrf.mxu0
        %v5939 = vadd.f32 %v5778, %v5938
        %v5940 = vpop.f32.mrf.mxu0
        %v5941 = vpop.f32.mrf.mxu0
        %v5942 = vadd.f32 %v5781, %v5941
        %v5943 = vpop.f32.mrf.mxu0
        %5944 = vmatprep.mubr.bf16.mxu0 0
        %5945 = vmatmul.mubr.bf16.gmra.mxu0 %v2877
        %v5946 = vpop.f32.mrf.mxu0
        %v5947 = vadd.f32 %v5786, %v5946
        %v5948 = vpop.f32.mrf.mxu0
        %v5949 = vpop.f32.mrf.mxu0
        %v5950 = vadd.f32 %v5789, %v5949
        %v5951 = vpop.f32.mrf.mxu0
        %5952 = vmatprep.mubr.bf16.mxu0 0
        %5953 = vmatmul.mubr.bf16.gmra.mxu0 %v3006
        %v5954 = vpop.f32.mrf.mxu0
        %v5955 = vadd.f32 %v5794, %v5954
        %v5956 = vpop.f32.mrf.mxu0
        %v5957 = vpop.f32.mrf.mxu0
        %v5958 = vadd.f32 %v5797, %v5957
        %v5959 = vpop.f32.mrf.mxu0
        %5960 = vmatprep.mubr.bf16.mxu0 0
        %5961 = vmatmul.mubr.bf16.gmra.mxu0 %v3135
        %v5962 = vpop.f32.mrf.mxu0
        %v5963 = vadd.f32 %v5802, %v5962
        %v5964 = vpop.f32.mrf.mxu0
        %v5965 = vpop.f32.mrf.mxu0
        %v5966 = vadd.f32 %v5805, %v5965
        %v5967 = vpop.f32.mrf.mxu0
        %5968 = vmatprep.mubr.bf16.mxu0 0
        %5969 = vmatmul.mubr.bf16.gmra.mxu0 %v3264
        %v5970 = vpop.f32.mrf.mxu0
        %v5971 = vadd.f32 %v5810, %v5970
        %v5972 = vpop.f32.mrf.mxu0
        %v5973 = vpop.f32.mrf.mxu0
        %v5974 = vadd.f32 %v5813, %v5973
        %v5975 = vpop.f32.mrf.mxu0
        %5976 = vmatprep.mubr.bf16.mxu0 0
        %5977 = vmatmul.mubr.bf16.gmra.mxu0 %v3393
        %v5978 = vpop.f32.mrf.mxu0
        %v5979 = vadd.f32 %v5818, %v5978
        %v5980 = vpop.f32.mrf.mxu0
        %v5981 = vpop.f32.mrf.mxu0
        %v5982 = vadd.f32 %v5821, %v5981
        %v5983 = vpop.f32.mrf.mxu0
        %5984 = vmatprep.mubr.bf16.mxu0 0
        %5985 = vmatmul.mubr.bf16.gmra.mxu0 %v3522
        %v5986 = vpop.f32.mrf.mxu0
        %v5987 = vadd.f32 %v5826, %v5986
        %v5988 = vpop.f32.mrf.mxu0
        %v5989 = vpop.f32.mrf.mxu0
        %v5990 = vadd.f32 %v5829, %v5989
        %v5991 = vpop.f32.mrf.mxu0
        %5992 = vmatprep.mubr.bf16.mxu0 0
        %5993 = vmatmul.mubr.bf16.gmra.mxu0 %v3651
        %v5994 = vpop.f32.mrf.mxu0
        %v5995 = vadd.f32 %v5834, %v5994
        %v5996 = vpop.f32.mrf.mxu0
        %v5997 = vpop.f32.mrf.mxu0
        %v5998 = vadd.f32 %v5837, %v5997
        %v5999 = vpop.f32.mrf.mxu0
        %6000 = vmatprep.mubr.bf16.mxu0 0
        %6001 = vmatmul.mubr.bf16.gmra.mxu0 %v3780
        %v6002 = vpop.f32.mrf.mxu0
        %v6003 = vadd.f32 %v5842, %v6002
        %v6004 = vpop.f32.mrf.mxu0
        %v6005 = vpop.f32.mrf.mxu0
        %v6006 = vadd.f32 %v5845, %v6005
        %v6007 = vpop.f32.mrf.mxu0
        %6008 = vmatprep.mubr.bf16.mxu0 0
        %6009 = vmatmul.mubr.bf16.gmra.mxu0 %v3909
        %v6010 = vpop.f32.mrf.mxu0
        %v6011 = vadd.f32 %v5850, %v6010
        %v6012 = vpop.f32.mrf.mxu0
        %v6013 = vpop.f32.mrf.mxu0
        %v6014 = vadd.f32 %v5853, %v6013
        %v6015 = vpop.f32.mrf.mxu0
        %6016 = vmatprep.mubr.bf16.mxu0 0
        %6017 = vmatmul.mubr.bf16.gmra.mxu0 %v4038
        %v6018 = vpop.f32.mrf.mxu0
        %v6019 = vadd.f32 %v5858, %v6018
        %v6020 = vpop.f32.mrf.mxu0
        %v6021 = vpop.f32.mrf.mxu0
        %v6022 = vadd.f32 %v5861, %v6021
        %v6023 = vpop.f32.mrf.mxu0
        %6024 = vmatprep.mubr.bf16.mxu0 0
        %6025 = vmatmul.mubr.bf16.gmra.mxu0 %v4167
        %v6026 = vpop.f32.mrf.mxu0
        %v6027 = vadd.f32 %v5866, %v6026
        %v6028 = vpop.f32.mrf.mxu0
        %v6029 = vpop.f32.mrf.mxu0
        %v6030 = vadd.f32 %v5869, %v6029
        %v6031 = vpop.f32.mrf.mxu0
        %6032 = vmatprep.mubr.bf16.mxu0 0
        %6033 = vmatmul.mubr.bf16.gmra.mxu0 %v4296
        %v6034 = vpop.f32.mrf.mxu0
        %v6035 = vadd.f32 %v5874, %v6034
        %v6036 = vpop.f32.mrf.mxu0
        %v6037 = vpop.f32.mrf.mxu0
        %v6038 = vadd.f32 %v5877, %v6037
        %v6039 = vpop.f32.mrf.mxu0
        %6040 = vmatprep.mubr.bf16.mxu0 0
        %6041 = vmatmul.mubr.bf16.gmra.mxu0 %v4425
        %v6042 = vpop.f32.mrf.mxu0
        %v6043 = vadd.f32 %v5882, %v6042
        %v6044 = vpop.f32.mrf.mxu0
        %v6045 = vpop.f32.mrf.mxu0
        %v6046 = vadd.f32 %v5885, %v6045
        %v6047 = vpop.f32.mrf.mxu0
        %6048 = vmatprep.mubr.bf16.mxu0 0
        %6049 = vmatmul.mubr.bf16.gmra.mxu0 %v4554
        %v6050 = vpop.f32.mrf.mxu0
        %v6051 = vadd.f32 %v5890, %v6050
        %v6052 = vpop.f32.mrf.mxu0
        %v6053 = vpop.f32.mrf.mxu0
        %v6054 = vadd.f32 %v5893, %v6053
        %v6055 = vpop.f32.mrf.mxu0
        %6056 = vmatprep.mubr.bf16.mxu0 0
        %6057 = vmatmul.mubr.bf16.gmra.mxu0 %v4683
        %v6058 = vpop.f32.mrf.mxu0
        %v6059 = vadd.f32 %v5898, %v6058
        %v6060 = vpop.f32.mrf.mxu0
        %v6061 = vpop.f32.mrf.mxu0
        %v6062 = vadd.f32 %v5901, %v6061
        %v6063 = vpop.f32.mrf.mxu0
        %6064 = vdwg.mxu0
        %v6065 = vld [vmem:[%s5] sm:$0x1]
        %v6067 = vlaneseq
        %v6068 = vshrl.u32 %v6067, 7
        %v6069 = vsub.s32 0, %v6068
        %v6070 = vrot.slane %v6065, %v6069
        %v6072 = vmul.f32 %v5939, %v6070
        %v6073 = vmul.f32 %v5942, %v6070
        %v6074 = vmul.f32 %v5947, %v6070
        %v6075 = vmul.f32 %v5950, %v6070
        %v6076 = vmul.f32 %v5955, %v6070
        %v6077 = vmul.f32 %v5958, %v6070
        %v6078 = vmul.f32 %v5963, %v6070
        %v6079 = vmul.f32 %v5966, %v6070
        %v6080 = vmul.f32 %v5971, %v6070
        %v6081 = vmul.f32 %v5974, %v6070
        %v6082 = vmul.f32 %v5979, %v6070
        %v6083 = vmul.f32 %v5982, %v6070
        %v6084 = vmul.f32 %v5987, %v6070
        %v6085 = vmul.f32 %v5990, %v6070
        %v6086 = vmul.f32 %v5995, %v6070
        %v6087 = vmul.f32 %v5998, %v6070
        %v6088 = vmul.f32 %v6003, %v6070
        %v6089 = vmul.f32 %v6006, %v6070
        %v6090 = vmul.f32 %v6011, %v6070
        %v6091 = vmul.f32 %v6014, %v6070
        %v6092 = vmul.f32 %v6019, %v6070
        %v6093 = vmul.f32 %v6022, %v6070
        %v6094 = vmul.f32 %v6027, %v6070
        %v6095 = vmul.f32 %v6030, %v6070
        %v6096 = vmul.f32 %v6035, %v6070
        %v6097 = vmul.f32 %v6038, %v6070
        %v6098 = vmul.f32 %v6043, %v6070
        %v6099 = vmul.f32 %v6046, %v6070
        %v6100 = vmul.f32 %v6051, %v6070
        %v6101 = vmul.f32 %v6054, %v6070
        %v6102 = vmul.f32 %v6059, %v6070
        %v6103 = vmul.f32 %v6062, %v6070
        %v6104 = vld [vmem:[%s6] sm:$0x1]
        %v6106 = vlaneseq
        %v6107 = vshrl.u32 %v6106, 7
        %v6108 = vsub.s32 0, %v6107
        %v6109 = vrot.slane %v6104, %v6108
        %v6111 = vadd.f32 %v6072, %v6109
        %v6112 = vadd.f32 %v6073, %v6109
        %v6113 = vadd.f32 %v6074, %v6109
        %v6114 = vadd.f32 %v6075, %v6109
        %v6115 = vadd.f32 %v6076, %v6109
        %v6116 = vadd.f32 %v6077, %v6109
        %v6117 = vadd.f32 %v6078, %v6109
        %v6118 = vadd.f32 %v6079, %v6109
        %v6119 = vadd.f32 %v6080, %v6109
        %v6120 = vadd.f32 %v6081, %v6109
        %v6121 = vadd.f32 %v6082, %v6109
        %v6122 = vadd.f32 %v6083, %v6109
        %v6123 = vadd.f32 %v6084, %v6109
        %v6124 = vadd.f32 %v6085, %v6109
        %v6125 = vadd.f32 %v6086, %v6109
        %v6126 = vadd.f32 %v6087, %v6109
        %v6127 = vadd.f32 %v6088, %v6109
        %v6128 = vadd.f32 %v6089, %v6109
        %v6129 = vadd.f32 %v6090, %v6109
        %v6130 = vadd.f32 %v6091, %v6109
        %v6131 = vadd.f32 %v6092, %v6109
        %v6132 = vadd.f32 %v6093, %v6109
        %v6133 = vadd.f32 %v6094, %v6109
        %v6134 = vadd.f32 %v6095, %v6109
        %v6135 = vadd.f32 %v6096, %v6109
        %v6136 = vadd.f32 %v6097, %v6109
        %v6137 = vadd.f32 %v6098, %v6109
        %v6138 = vadd.f32 %v6099, %v6109
        %v6139 = vadd.f32 %v6100, %v6109
        %v6140 = vadd.f32 %v6101, %v6109
        %v6141 = vadd.f32 %v6102, %v6109
        %v6142 = vadd.f32 %v6103, %v6109
        %v6143 = vmax.f32 %v6111, 0.0
        %v6144 = vmax.f32 %v6112, 0.0
        %v6145 = vmax.f32 %v6113, 0.0
        %v6146 = vmax.f32 %v6114, 0.0
        %v6147 = vmax.f32 %v6115, 0.0
        %v6148 = vmax.f32 %v6116, 0.0
        %v6149 = vmax.f32 %v6117, 0.0
        %v6150 = vmax.f32 %v6118, 0.0
        %v6151 = vmax.f32 %v6119, 0.0
        %v6152 = vmax.f32 %v6120, 0.0
        %v6153 = vmax.f32 %v6121, 0.0
        %v6154 = vmax.f32 %v6122, 0.0
        %v6155 = vmax.f32 %v6123, 0.0
        %v6156 = vmax.f32 %v6124, 0.0
        %v6157 = vmax.f32 %v6125, 0.0
        %v6158 = vmax.f32 %v6126, 0.0
        %v6159 = vmax.f32 %v6127, 0.0
        %v6160 = vmax.f32 %v6128, 0.0
        %v6161 = vmax.f32 %v6129, 0.0
        %v6162 = vmax.f32 %v6130, 0.0
        %v6163 = vmax.f32 %v6131, 0.0
        %v6164 = vmax.f32 %v6132, 0.0
        %v6165 = vmax.f32 %v6133, 0.0
        %v6166 = vmax.f32 %v6134, 0.0
        %v6167 = vmax.f32 %v6135, 0.0
        %v6168 = vmax.f32 %v6136, 0.0
        %v6169 = vmax.f32 %v6137, 0.0
        %v6170 = vmax.f32 %v6138, 0.0
        %v6171 = vmax.f32 %v6139, 0.0
        %v6172 = vmax.f32 %v6140, 0.0
        %v6173 = vmax.f32 %v6141, 0.0
        %v6174 = vmax.f32 %v6142, 0.0
        %v6175 = vpack.c.bf16 %v6144, %v6143
        %v6176 = vpack.c.bf16 %v6146, %v6145
        %v6177 = vpack.c.bf16 %v6148, %v6147
        %v6178 = vpack.c.bf16 %v6150, %v6149
        %v6179 = vpack.c.bf16 %v6152, %v6151
        %v6180 = vpack.c.bf16 %v6154, %v6153
        %v6181 = vpack.c.bf16 %v6156, %v6155
        %v6182 = vpack.c.bf16 %v6158, %v6157
        %v6183 = vpack.c.bf16 %v6160, %v6159
        %v6184 = vpack.c.bf16 %v6162, %v6161
        %v6185 = vpack.c.bf16 %v6164, %v6163
        %v6186 = vpack.c.bf16 %v6166, %v6165
        %v6187 = vpack.c.bf16 %v6168, %v6167
        %v6188 = vpack.c.bf16 %v6170, %v6169
        %v6189 = vpack.c.bf16 %v6172, %v6171
        %v6190 = vpack.c.bf16 %v6174, %v6173
        %v6207 = vunpack.c.l.b16 %v6175
        %v6208 = vunpack.c.h.b16 %v6175
        %v6209 = vunpack.c.l.b16 %v6176
        %v6210 = vunpack.c.h.b16 %v6176
        %v6211 = vunpack.c.l.b16 %v6177
        %v6212 = vunpack.c.h.b16 %v6177
        %v6213 = vunpack.c.l.b16 %v6178
        %v6214 = vunpack.c.h.b16 %v6178
        %v6215 = vunpack.c.l.b16 %v6179
        %v6216 = vunpack.c.h.b16 %v6179
        %v6217 = vunpack.c.l.b16 %v6180
        %v6218 = vunpack.c.h.b16 %v6180
        %v6219 = vunpack.c.l.b16 %v6181
        %v6220 = vunpack.c.h.b16 %v6181
        %v6221 = vunpack.c.l.b16 %v6182
        %v6222 = vunpack.c.h.b16 %v6182
        %v6223 = vunpack.c.l.b16 %v6183
        %v6224 = vunpack.c.h.b16 %v6183
        %v6225 = vunpack.c.l.b16 %v6184
        %v6226 = vunpack.c.h.b16 %v6184
        %v6227 = vunpack.c.l.b16 %v6185
        %v6228 = vunpack.c.h.b16 %v6185
        %v6229 = vunpack.c.l.b16 %v6186
        %v6230 = vunpack.c.h.b16 %v6186
        %v6231 = vunpack.c.l.b16 %v6187
        %v6232 = vunpack.c.h.b16 %v6187
        %v6233 = vunpack.c.l.b16 %v6188
        %v6234 = vunpack.c.h.b16 %v6188
        %v6235 = vunpack.c.l.b16 %v6189
        %v6236 = vunpack.c.h.b16 %v6189
        %v6237 = vunpack.c.l.b16 %v6190
        %v6238 = vunpack.c.h.b16 %v6190
        %v6239 = vpack.c.b16 %v6207, %v6207
        %v6240 = vpack.c.b16 %v6208, %v6208
        %v6241 = vpack.c.b16 %v6209, %v6209
        %v6242 = vpack.c.b16 %v6210, %v6210
        %v6243 = vpack.c.b16 %v6211, %v6211
        %v6244 = vpack.c.b16 %v6212, %v6212
        %v6245 = vpack.c.b16 %v6213, %v6213
        %v6246 = vpack.c.b16 %v6214, %v6214
        %v6247 = vpack.c.b16 %v6215, %v6215
        %v6248 = vpack.c.b16 %v6216, %v6216
        %v6249 = vpack.c.b16 %v6217, %v6217
        %v6250 = vpack.c.b16 %v6218, %v6218
        %v6251 = vpack.c.b16 %v6219, %v6219
        %v6252 = vpack.c.b16 %v6220, %v6220
        %v6253 = vpack.c.b16 %v6221, %v6221
        %v6254 = vpack.c.b16 %v6222, %v6222
        %v6255 = vpack.c.b16 %v6223, %v6223
        %v6256 = vpack.c.b16 %v6224, %v6224
        %v6257 = vpack.c.b16 %v6225, %v6225
        %v6258 = vpack.c.b16 %v6226, %v6226
        %v6259 = vpack.c.b16 %v6227, %v6227
        %v6260 = vpack.c.b16 %v6228, %v6228
        %v6261 = vpack.c.b16 %v6229, %v6229
        %v6262 = vpack.c.b16 %v6230, %v6230
        %v6263 = vpack.c.b16 %v6231, %v6231
        %v6264 = vpack.c.b16 %v6232, %v6232
        %v6265 = vpack.c.b16 %v6233, %v6233
        %v6266 = vpack.c.b16 %v6234, %v6234
        %v6267 = vpack.c.b16 %v6235, %v6235
        %v6268 = vpack.c.b16 %v6236, %v6236
        %v6269 = vpack.c.b16 %v6237, %v6237
        %v6270 = vpack.c.b16 %v6238, %v6238
        %6303 = vst [vmem:[%s274] sm:$0xf] %v6239
        %6304 = vst [vmem:[%s274 + $0x4] sm:$0xf] %v6240
        %6305 = vst [vmem:[%s274 + $0x8] sm:$0xf] %v6241
        %6306 = vst [vmem:[%s274 + $0xc] sm:$0xf] %v6242
        %6307 = vst [vmem:[%s274 + $0x10] sm:$0xf] %v6243
        %6308 = vst [vmem:[%s274 + $0x14] sm:$0xf] %v6244
        %6309 = vst [vmem:[%s274 + $0x18] sm:$0xf] %v6245
        %6310 = vst [vmem:[%s274 + $0x1c] sm:$0xf] %v6246
        %6311 = vst [vmem:[%s274 + $0x20] sm:$0xf] %v6247
        %6312 = vst [vmem:[%s274 + $0x24] sm:$0xf] %v6248
        %6313 = vst [vmem:[%s274 + $0x28] sm:$0xf] %v6249
        %6314 = vst [vmem:[%s274 + $0x2c] sm:$0xf] %v6250
        %6315 = vst [vmem:[%s274 + $0x30] sm:$0xf] %v6251
        %6316 = vst [vmem:[%s274 + $0x34] sm:$0xf] %v6252
        %6317 = vst [vmem:[%s274 + $0x38] sm:$0xf] %v6253
        %6318 = vst [vmem:[%s274 + $0x3c] sm:$0xf] %v6254
        %6319 = vst [vmem:[%s274 + $0x40] sm:$0xf] %v6255
        %6320 = vst [vmem:[%s274 + $0x44] sm:$0xf] %v6256
        %6321 = vst [vmem:[%s274 + $0x48] sm:$0xf] %v6257
        %6322 = vst [vmem:[%s274 + $0x4c] sm:$0xf] %v6258
        %6323 = vst [vmem:[%s274 + $0x50] sm:$0xf] %v6259
        %6324 = vst [vmem:[%s274 + $0x54] sm:$0xf] %v6260
        %6325 = vst [vmem:[%s274 + $0x58] sm:$0xf] %v6261
        %6326 = vst [vmem:[%s274 + $0x5c] sm:$0xf] %v6262
        %6327 = vst [vmem:[%s274 + $0x60] sm:$0xf] %v6263
        %6328 = vst [vmem:[%s274 + $0x64] sm:$0xf] %v6264
        %6329 = vst [vmem:[%s274 + $0x68] sm:$0xf] %v6265
        %6330 = vst [vmem:[%s274 + $0x6c] sm:$0xf] %v6266
        %6331 = vst [vmem:[%s274 + $0x70] sm:$0xf] %v6267
        %6332 = vst [vmem:[%s274 + $0x74] sm:$0xf] %v6268
        %6333 = vst [vmem:[%s274 + $0x78] sm:$0xf] %v6269
        %6334 = vst [vmem:[%s274 + $0x7c] sm:$0xf] %v6270
        %s6335 = sand.u32 %s171, 1
        %s6336 = scalar_lea.sflag [#allocation7], %s6335
        %s6337 = sand.u32 %s171, 1
        %s6338 = smul.addr %s6337, 128
        %s6339 = scalar_lea.vmem [#allocation10], %s6338
        // Predicated region
        $region85: #{tpu_custom_call.1} parent=43 // pred_check
          %p6340 = pneg %p181
        $region86: #{tpu_custom_call.1} parent=43 // pred_check_branch
          %6342 = sbr.rel (%p6340) target = $region88
        $region87: #{tpu_custom_call.1} parent=43 // pred_region
          %s6343 = smul.u32 16, %s28
          %s6345 = ssub.s32 2048, 2048
          %6346 = vsyncadd %s6336, %s6345
          %s6347 = smul.addr %s6343, 2
          %s6348 = smul.addr %s27, 32
          %s6349 = sadd.s32 %s6347, %s6348
          %s6350 = smul.addr %s6349, 64
          %s6351 = scalar_lea.hbm %s7, %s6350
          %s6352 = sshll.u32 %s6339, 4
          %s6353 = int_to_ptr.vmem [resolvable:$true] %s6352
          %6358 = dma.vmem_to_hbm [thread:$0]  %s6353, 2048, %s6351, %s6336, 64, 64, 4
        $region88: #{tpu_custom_call.1} parent=43 // pred_fallthru
          _
      $region44: #{tpu_custom_call.1} parent=5 // pred_fallthru
        _
      %p6359 = scmp.le.s32.totalorder 2, %s18
      // Predicated region
      $region89: #{tpu_custom_call.1} parent=5 // pred_check
        %p6360 = pneg %p6359
      $region90: #{tpu_custom_call.1} parent=5 // pred_check_branch
        %6362 = sbr.rel (%p6360) target = $region92
      $region91: #{tpu_custom_call.1} parent=5 // pred_region
        %s6363 = ssub.s32 %s18, 2
        // Predicated region
        $region93: #{tpu_custom_call.1} parent=91 // pred_check
          %p6364 = pneg %p187
        $region94: #{tpu_custom_call.1} parent=91 // pred_check_branch
          %6366 = sbr.rel (%p6364) target = $region96
        $region95: #{tpu_custom_call.1} parent=91 // pred_region
          %s6367 = sand.u32 %s172, 1
          %s6368 = scalar_lea.sflag [#allocation7], %s6367
          %s6369 = sand.u32 %s172, 1
          %s6370 = smul.addr %s6369, 128
          %s6371 = scalar_lea.vmem [#allocation10], %s6370
          %6372 = dma.done %s6368, 2048
        $region96: #{tpu_custom_call.1} parent=91 // pred_fallthru
          _
      $region92: #{tpu_custom_call.1} parent=5 // pred_fallthru
        _
    $region6: #{tpu_custom_call.1} parent=1 // loop_footer
      %s22 = sadd.s32 1, %s18
    $region7: #{tpu_custom_call.1} parent=1 // loop_footer_branch
      %17 = sbr.rel target = $region3
    $region8: #{tpu_custom_call.1} parent=1 // loop_exit
      _
    %6373 = vsyncpa [#allocation6], 1
    %s6374 = scalar_lea.sflag [#allocation6], 1
    %6375 = vsyncpa %s6374, 1
    %6376 = vsyncpa [#allocation9], 1
    %6377 = vsyncpa [#allocation7], 1
    %s6378 = scalar_lea.sflag [#allocation7], 1
    %6379 = vsyncpa %s6378, 1
  %6380 = vsyncmov [#allocation4]
  %s6381 = vpop.sfrf %6380
  %p6382 = scmp.eq.s32.totalorder %s6381, 0
  %p6383 = pneg %p6382
  %6385 = shalt.err (%p6383)
  %s6386 = scalar_lea.sflag [#allocation4], 1
  %6387 = vsyncmov %s6386
  %s6388 = vpop.sfrf %6387
  %p6389 = scmp.eq.s32.totalorder %s6388, 0
  %p6390 = pneg %p6389
  %6392 = shalt.err (%p6390)
  %s6393 = scalar_lea.sflag [#allocation4], 2
  %6394 = vsyncmov %s6393
  %s6395 = vpop.sfrf %6394
  %p6396 = scmp.eq.s32.totalorder %s6395, 0
  %p6397 = pneg %p6396
  %6399 = shalt.err (%p6397)
  %s6400 = scalar_lea.sflag [#allocation4], 3
  %6401 = vsyncmov %s6400
  %s6402 = vpop.sfrf %6401
  %p6403 = scmp.eq.s32.totalorder %s6402, 0
  %p6404 = pneg %p6403
  %6406 = shalt.err (%p6404)
  %s6407 = scalar_lea.sflag [#allocation4], 4
  %6408 = vsyncmov %s6407
  %s6409 = vpop.sfrf %6408
  %p6410 = scmp.eq.s32.totalorder %s6409, 0
  %p6411 = pneg %p6410
  %6413 = shalt.err (%p6411)

</llo_original>
